<compile_context>
chip_gen: v7x
topology: tpu7x:2x2x1
jax: 0.10.0
libtpu: 0.0.40
codegen_flags: <defaults>
</compile_context>

<pallas_src>
import functools

import jax
import jax.numpy as jnp
from jax.experimental import pallas as pl
from jax.experimental.pallas import tpu as pltpu

_BN_EPS = 1e-5
_OFF = 16      # sublane-aligned interior column offset for haloed VMEM buffers


def _round_up(v, m):
    return (v + m - 1) // m * m


# ------------------------------- Pallas kernel ------------------------------ #

def _stage_with_halo(dst_ref, interior, h, w):
    """Write `interior` (h, w, c) into dst_ref at rows [1, h+1), cols
    [_OFF, _OFF+w) and zero only the 1-px halo strips around it.  The interior
    is fully rewritten every grid step, so no full-buffer clear is needed, and
    the _OFF offset keeps the large interior store sublane-aligned."""
    hp, wp, c = dst_ref.shape
    zrow = jnp.zeros((1, wp, c), dst_ref.dtype)
    zcol = jnp.zeros((hp, 1, c), dst_ref.dtype)
    dst_ref[0:1, :, :] = zrow                          # top halo row
    dst_ref[h + 1:h + 2, :, :] = zrow                  # bottom halo row
    dst_ref[:, _OFF - 1:_OFF, :] = zcol                # left halo column
    dst_ref[:, _OFF + w:_OFF + w + 1, :] = zcol        # right halo column
    dst_ref[1:h + 1, _OFF:_OFF + w, :] = interior


def _basic_block_kernel(x_ref, w1_ref, w2_ref, *args, stride, matmul_shortcut):
    """Fused ResNet basic block for one batch image.

    x_ref   : (1, H, W, Cin)  bf16 unpadded input image
    w1_ref  : (9, Cin, Cp)    bf16 conv1 weights, one (Cin, Cp) slab per tap
    w2_ref  : (9, Cp,  Cp)    bf16 conv2 weights
    wsc_ref : (Cin, Cp)       bf16 1x1 shortcut (or padded-eye) weights, optional
    bn_ref  : (8, Cp)  f32    rows: s1, b1, s2, b2, ssc, bsc, 0, 0
    out_ref : (1, Ho, Wo, Cp) f32
    x_halo  : VMEM (H+2,  _OFF+W+1,  Cin) bf16   input staged with zero halo
    y1_halo : VMEM (Ho+2, _OFF+Wo+1, Cp)  bf16   conv1 output staged with halo
    """
    if matmul_shortcut:
        wsc_ref, bn_ref, out_ref, x_halo, y1_halo = args
    else:
        wsc_ref = None
        bn_ref, out_ref, x_halo, y1_halo = args

    _, ho, wo, cp = out_ref.shape
    _, h, w, cin = x_ref.shape
    rows = ho * wo

    # Stage the unpadded input with a 1-px zero halo (no HBM pad round-trip).
    _stage_with_halo(x_halo, x_ref[0], h, w)

    def tap(src_ref, dh, dw, st):
        """3x3-conv tap (dh, dw): shifted (Ho, Wo, C) view flattened to (rows, C)."""
        c0 = _OFF - 1 + dw
        if st == 1:
            v = src_ref[dh:dh + ho, c0:c0 + wo, :]
        else:
            # TODO(synk): stride > 1 (strided slice on the sublane axis) is
            # implemented but not exercised by the self-test; validate on HW.
            v = src_ref[dh:dh + st * (ho - 1) + 1, c0:c0 + st * (wo - 1) + 1, :]
            v = jax.lax.slice(v, (0, 0, 0), v.shape, (st, st, 1))
        return v.reshape(rows, src_ref.shape[-1])

    bn = bn_ref[...]                                      # (8, Cp) f32
    s1, b1, s2, b2 = bn[0:1], bn[1:2], bn[2:3], bn[3:4]

    # ---- conv1: nine bf16 tap matmuls accumulated in f32 (no im2col) --------
    acc1 = jnp.zeros((rows, cp), jnp.float32)
    for t in range(9):
        acc1 = acc1 + jnp.dot(tap(x_halo, t // 3, t % 3, stride), w1_ref[t],
                              preferred_element_type=jnp.float32)
    y1 = jnp.maximum(acc1 * s1 + b1, 0.0)                 # BN1 + ReLU (f32)

    # ---- shortcut: center tap of the input -----------------------------------
    xs = tap(x_halo, 1, 1, stride)                        # (rows, Cin) bf16
    if matmul_shortcut:
        ssc, bsc = bn[4:5], bn[5:6]
        sc = jnp.dot(xs, wsc_ref[...], preferred_element_type=jnp.float32)
        sc = sc * ssc + bsc
    else:                                                 # identity, Cin == Cp
        sc = xs.astype(jnp.float32)

    # ---- stage conv1 output (bf16) with a zero halo for conv2's taps ---------
    _stage_with_halo(y1_halo, y1.astype(y1_halo.dtype).reshape(ho, wo, cp), ho, wo)

    # ---- conv2 (stride 1) + BN2 + residual add + ReLU -------------------------
    acc2 = jnp.zeros((rows, cp), jnp.float32)
    for t in range(9):
        acc2 = acc2 + jnp.dot(tap(y1_halo, t // 3, t % 3, 1), w2_ref[t],
                              preferred_element_type=jnp.float32)
    y2 = acc2 * s2 + b2 + sc
    out_ref[...] = jnp.maximum(y2, 0.0).reshape(1, ho, wo, cp).astype(out_ref.dtype)


# ------------------------------ wrapper (JAX) ------------------------------- #

def _fold_bn(bn, cp):
    gamma, beta, mean, var = bn
    scale = gamma * jax.lax.rsqrt(var + _BN_EPS)
    bias = beta - mean * scale
    c = gamma.shape[0]
    return (jnp.zeros((cp,), jnp.float32).at[:c].set(scale),
            jnp.zeros((cp,), jnp.float32).at[:c].set(bias))


def basic_block_origin(x_nchw, params, stride=1):
    """Forward pass of BasicBlockOrigin (eval-mode BN). NCHW in / NCHW out."""
    x = jnp.transpose(x_nchw, (0, 2, 3, 1))               # NHWC
    n, h, w, cin = x.shape
    planes = params["w1"].shape[-1]
    cp = _round_up(planes, 128)                           # lane-dense outputs
    ho = (h - 1) // stride + 1
    wo = (w - 1) // stride + 1

    # bf16 MXU operands (BN / residual / ReLU are done in f32 in-kernel).
    x_bf = x.astype(jnp.bfloat16)
    w1 = (jnp.zeros((3, 3, cin, cp), jnp.float32)
          .at[:, :, :, :planes].set(params["w1"])
          .reshape(9, cin, cp).astype(jnp.bfloat16))
    w2 = (jnp.zeros((3, 3, cp, cp), jnp.float32)
          .at[:, :, :planes, :planes].set(params["w2"])
          .reshape(9, cp, cp).astype(jnp.bfloat16))

    s1, b1 = _fold_bn(params["bn1"], cp)
    s2, b2 = _fold_bn(params["bn2"], cp)

    has_conv_sc = (stride != 1) or (cin != planes)
    matmul_shortcut = has_conv_sc or (cin != cp)
    if has_conv_sc:
        wsc = (jnp.zeros((cin, cp), jnp.float32)
               .at[:, :planes].set(params["w_sc"].reshape(cin, planes))
               .astype(jnp.bfloat16))
        ssc, bsc = _fold_bn(params["bn_sc"], cp)
    elif matmul_shortcut:
        # Identity shortcut but planes not a lane multiple: keep it as a cheap
        # padded-eye matmul so the residual stays lane-aligned.  When planes is
        # 128/256/512 the kernel adds the input directly (no matmul).
        wsc = (jnp.zeros((cin, cp), jnp.float32)
               .at[:, :planes].set(jnp.eye(planes, dtype=jnp.float32))
               .astype(jnp.bfloat16))
        ssc = jnp.zeros((cp,), jnp.float32).at[:planes].set(1.0)
        bsc = jnp.zeros((cp,), jnp.float32)
    else:
        wsc = None
        ssc = jnp.zeros((cp,), jnp.float32)
        bsc = jnp.zeros((cp,), jnp.float32)

    zc = jnp.zeros((cp,), jnp.float32)
    bn_pack = jnp.stack([s1, b1, s2, b2, ssc, bsc, zc, zc], axis=0)   # (8, Cp)

    res3 = lambda i: (0, 0, 0)
    res2 = lambda i: (0, 0)
    # TODO(synk): on v7x mark the resident weight specs pipeline_mode=
    # pl.Buffered(1) (single buffer) once confirmed supported.
    in_specs = [pl.BlockSpec((1, h, w, cin), lambda i: (i, 0, 0, 0)),
                pl.BlockSpec((9, cin, cp), res3),
                pl.BlockSpec((9, cp, cp), res3)]
    args = [x_bf, w1, w2]
    if matmul_shortcut:
        in_specs.append(pl.BlockSpec((cin, cp), res2))
        args.append(wsc)
    in_specs.append(pl.BlockSpec((8, cp), res2))
    args.append(bn_pack)

    try:   # derive the VMEM budget per TPU generation, leaving headroom
        vmem_limit = int(pltpu.get_tpu_info().vmem_capacity_bytes * 3 // 4)
    except Exception:
        vmem_limit = 48 * 1024 * 1024                     # safe on v5e/v6e/v7x

    n_sc = cin * cp if matmul_shortcut else 0
    flops = 2 * n * ho * wo * (9 * cin * cp + 9 * cp * cp + n_sc)
    bytes_accessed = int(2 * (x_bf.size + w1.size + w2.size
                              + (0 if wsc is None else wsc.size))
                         + 4 * (bn_pack.size + n * ho * wo * cp))

    out_padded = pl.pallas_call(
        functools.partial(_basic_block_kernel, stride=stride,
                          matmul_shortcut=matmul_shortcut),
        out_shape=jax.ShapeDtypeStruct((n, ho, wo, cp), jnp.float32),
        grid_spec=pltpu.PrefetchScalarGridSpec(
            num_scalar_prefetch=0,
            grid=(n,),               # pipelined over batch; weights stay resident
            in_specs=in_specs,
            out_specs=pl.BlockSpec((1, ho, wo, cp), lambda i: (i, 0, 0, 0)),
            scratch_shapes=[
                pltpu.VMEM((h + 2, _OFF + w + 1, cin), jnp.bfloat16),
                pltpu.VMEM((ho + 2, _OFF + wo + 1, cp), jnp.bfloat16),
            ]),
        compiler_params=pltpu.CompilerParams(
            dimension_semantics=("parallel",),
            vmem_limit_bytes=vmem_limit),
        cost_estimate=pl.CostEstimate(flops=int(flops), transcendentals=0,
                                      bytes_accessed=bytes_accessed),
    )(*args)

    out = out_padded[..., :planes]                        # drop channel padding
    return jnp.transpose(out, (0, 3, 1, 2))               # back to NCHW


# ------------------------------ pure-JAX reference -------------------------- #

def _ref_block(x_nchw, params, stride=1):
    x = jnp.transpose(x_nchw, (0, 2, 3, 1)).astype(jnp.float32)

    def conv(inp, wgt, s, pad):
        return jax.lax.conv_general_dilated(
            inp, wgt, (s, s), ((pad, pad), (pad, pad)),
            dimension_numbers=("NHWC", "HWIO", "NHWC"))

    def bn(inp, p):
        g, b, m, v = p
        return g * (inp - m) / jnp.sqrt(v + _BN_EPS) + b

    planes = params["w1"].shape[-1]
    o = jax.nn.relu(bn(conv(x, params["w1"], stride, 1), params["bn1"]))
    o = bn(conv(o, params["w2"], 1, 1), params["bn2"])
    if stride != 1 or x.shape[-1] != planes:
        sc = bn(conv(x, params["w_sc"], stride, 0), params["bn_sc"])
    else:
        sc = x
    return jnp.transpose(jax.nn.relu(o + sc), (0, 3, 1, 2))


# ----------------------------------- main ----------------------------------- #

def _make_bn_params(key, c):
    k1, k2, k3, k4 = jax.random.split(key, 4)
    gamma = 1.0 + 0.1 * jax.random.normal(k1, (c,), jnp.float32)
    beta = 0.1 * jax.random.normal(k2, (c,), jnp.float32)
    mean = 0.1 * jax.random.normal(k3, (c,), jnp.float32)
    var = 0.5 + jnp.abs(jax.random.normal(k4, (c,), jnp.float32))
    return (gamma, beta, mean, var)


def _make_params(key, in_planes, planes, conv_shortcut):
    ks = jax.random.split(key, 6)
    p = {
        "w1": 0.1 * jax.random.normal(ks[0], (3, 3, in_planes, planes), jnp.float32),
        "bn1": _make_bn_params(ks[1], planes),
        "w2": 0.1 * jax.random.normal(ks[2], (3, 3, planes, planes), jnp.float32),
        "bn2": _make_bn_params(ks[3], planes),
    }
    if conv_shortcut:
        p["w_sc"] = 0.1 * jax.random.normal(ks[4], (1, 1, in_planes, planes),
                                            jnp.float32)
        p["bn_sc"] = _make_bn_params(ks[5], planes)
    return p


def _assert_close(out, ref, tag):
    ref = jax.block_until_ready(ref)
    max_ref = float(jnp.max(jnp.abs(ref))) + 1e-6
    mean_ref = float(jnp.mean(jnp.abs(ref))) + 1e-6
    max_err = float(jnp.max(jnp.abs(out - ref)))
    mean_err = float(jnp.mean(jnp.abs(out - ref)))
    # bf16 matmul operands with f32 accumulation -> loosened tolerances.
    assert max_err < 4e-2 * max_ref, (tag, max_err, max_ref)
    assert mean_err < 3e-2 * mean_ref, (tag, mean_err, mean_ref)


if __name__ == "__main__":
    key = jax.random.PRNGKey(0)
    k_x1, k_p1, k_x2, k_p2, k_x3, k_p3 = jax.random.split(key, 6)

    # 1) conv-1x1 shortcut path (in_planes != planes), stride 1.
    N, Cin, H, W, planes = 2, 4, 16, 16, 8
    x1 = jax.random.normal(k_x1, (N, Cin, H, W), jnp.float32)
    p1 = _make_params(k_p1, Cin, planes, conv_shortcut=True)
    o1 = jax.block_until_ready(basic_block_origin(x1, p1, stride=1))
    assert o1.shape == (N, planes, H, W), o1.shape
    _assert_close(o1, _ref_block(x1, p1, 1), "conv_shortcut")

    # 2) identity shortcut, planes not a lane multiple (padded-eye matmul path).
    x2 = jax.random.normal(k_x2, (2, 8, 16, 16), jnp.float32)
    p2 = _make_params(k_p2, 8, 8, conv_shortcut=False)
    o2 = jax.block_until_ready(basic_block_origin(x2, p2, stride=1))
    _assert_close(o2, _ref_block(x2, p2, 1), "identity_eye")

    # 3) identity shortcut with planes == 128 (direct residual-add path).
    x3 = jax.random.normal(k_x3, (1, 128, 8, 8), jnp.float32)
    p3 = _make_params(k_p3, 128, 128, conv_shortcut=False)
    o3 = jax.block_until_ready(basic_block_origin(x3, p3, stride=1))
    _assert_close(o3, _ref_block(x3, p3, 1), "identity_direct")

    print("KERNEL_OK")
</pallas_src>

<mosaic_0001>
module attributes {stable_mosaic.version = 11 : i64} {
  func.func @_basic_block_kernel(%arg0: i32, %arg1: memref<1x16x16x4xbf16, #tpu.memory_space<vmem>>, %arg2: memref<9x4x128xbf16, #tpu.memory_space<vmem>>, %arg3: memref<9x128x128xbf16, #tpu.memory_space<vmem>>, %arg4: memref<4x128xbf16, #tpu.memory_space<vmem>>, %arg5: memref<8x128xf32, #tpu.memory_space<vmem>>, %arg6: memref<1x16x16x128xf32, #tpu.memory_space<vmem>>, %arg7: memref<18x33x4xbf16, #tpu.memory_space<vmem>>, %arg8: memref<18x33x128xbf16, #tpu.memory_space<vmem>>) attributes {dimension_semantics = [#tpu.dimension_semantics<parallel>], iteration_bounds = array<i64: 2>, scalar_prefetch = 0 : i64, scratch_operands = 2 : i64, tpu.core_type = #tpu.core_type<tc>, window_params = [{transform_indices = @transform_0, window_bounds = array<i64: 1, 16, 16, 4>}, {pipeline_mode = #tpu.pipeline_mode<synchronous>, transform_indices = @transform_1, window_bounds = array<i64: 9, 4, 128>}, {pipeline_mode = #tpu.pipeline_mode<synchronous>, transform_indices = @transform_2, window_bounds = array<i64: 9, 128, 128>}, {pipeline_mode = #tpu.pipeline_mode<synchronous>, transform_indices = @transform_3, window_bounds = array<i64: 4, 128>}, {pipeline_mode = #tpu.pipeline_mode<synchronous>, transform_indices = @transform_4, window_bounds = array<i64: 8, 128>}, {transform_indices = @transform_5, window_bounds = array<i64: 1, 16, 16, 128>}]} {
    %c0 = arith.constant 0 : index
    %c0_0 = arith.constant 0 : index
    %c0_1 = arith.constant 0 : index
    %c0_2 = arith.constant 0 : index
    %0 = vector.load %arg1[%c0, %c0_0, %c0_1, %c0_2] : memref<1x16x16x4xbf16, #tpu.memory_space<vmem>>, vector<1x16x16x4xbf16>
    %1 = vector.shape_cast %0 : vector<1x16x16x4xbf16> to vector<16x16x4xbf16>
    %cst = arith.constant 0.000000e+00 : bf16
    %2 = vector.broadcast %cst : bf16 to vector<1x33x4xbf16>
    %cst_3 = arith.constant 0.000000e+00 : bf16
    %3 = vector.broadcast %cst_3 : bf16 to vector<18x1x4xbf16>
    %c0_4 = arith.constant 0 : index
    %c0_5 = arith.constant 0 : index
    %c0_6 = arith.constant 0 : index
    %4 = vector.load %arg7[%c0_4, %c0_5, %c0_6] : memref<18x33x4xbf16, #tpu.memory_space<vmem>>, vector<1x33x4xbf16>
    tpu.vector_store %arg7[%c0_4, %c0_5, %c0_6], %2 {strides = array<i32>} : memref<18x33x4xbf16, #tpu.memory_space<vmem>>, vector<1x33x4xbf16>,
    %c17 = arith.constant 17 : index
    %c0_7 = arith.constant 0 : index
    %c0_8 = arith.constant 0 : index
    %5 = vector.load %arg7[%c17, %c0_7, %c0_8] : memref<18x33x4xbf16, #tpu.memory_space<vmem>>, vector<1x33x4xbf16>
    tpu.vector_store %arg7[%c17, %c0_7, %c0_8], %2 {strides = array<i32>} : memref<18x33x4xbf16, #tpu.memory_space<vmem>>, vector<1x33x4xbf16>,
    %c0_9 = arith.constant 0 : index
    %c15 = arith.constant 15 : index
    %c0_10 = arith.constant 0 : index
    %6 = vector.load %arg7[%c0_9, %c15, %c0_10] : memref<18x33x4xbf16, #tpu.memory_space<vmem>>, vector<18x1x4xbf16>
    tpu.vector_store %arg7[%c0_9, %c15, %c0_10], %3 {strides = array<i32>} : memref<18x33x4xbf16, #tpu.memory_space<vmem>>, vector<18x1x4xbf16>,
    %c0_11 = arith.constant 0 : index
    %c32 = arith.constant 32 : index
    %c0_12 = arith.constant 0 : index
    %7 = vector.load %arg7[%c0_11, %c32, %c0_12] : memref<18x33x4xbf16, #tpu.memory_space<vmem>>, vector<18x1x4xbf16>
    tpu.vector_store %arg7[%c0_11, %c32, %c0_12], %3 {strides = array<i32>} : memref<18x33x4xbf16, #tpu.memory_space<vmem>>, vector<18x1x4xbf16>,
    %c1 = arith.constant 1 : index
    %c16 = arith.constant 16 : index
    %c0_13 = arith.constant 0 : index
    %8 = vector.load %arg7[%c1, %c16, %c0_13] : memref<18x33x4xbf16, #tpu.memory_space<vmem>>, vector<16x16x4xbf16>
    tpu.vector_store %arg7[%c1, %c16, %c0_13], %1 {strides = array<i32>} : memref<18x33x4xbf16, #tpu.memory_space<vmem>>, vector<16x16x4xbf16>,
    %c0_14 = arith.constant 0 : index
    %c0_15 = arith.constant 0 : index
    %9 = vector.load %arg5[%c0_14, %c0_15] : memref<8x128xf32, #tpu.memory_space<vmem>>, vector<8x128xf32>
    %10 = vector.extract_strided_slice %9 {offsets = [0, 0], sizes = [1, 128], strides = [1, 1]} : vector<8x128xf32> to vector<1x128xf32>
    %11 = vector.extract_strided_slice %9 {offsets = [1, 0], sizes = [1, 128], strides = [1, 1]} : vector<8x128xf32> to vector<1x128xf32>
    %12 = vector.extract_strided_slice %9 {offsets = [2, 0], sizes = [1, 128], strides = [1, 1]} : vector<8x128xf32> to vector<1x128xf32>
    %13 = vector.extract_strided_slice %9 {offsets = [3, 0], sizes = [1, 128], strides = [1, 1]} : vector<8x128xf32> to vector<1x128xf32>
    %cst_16 = arith.constant 0.000000e+00 : f32
    %14 = vector.broadcast %cst_16 : f32 to vector<256x128xf32>
    %c0_17 = arith.constant 0 : index
    %c15_18 = arith.constant 15 : index
    %c0_19 = arith.constant 0 : index
    %15 = vector.load %arg7[%c0_17, %c15_18, %c0_19] : memref<18x33x4xbf16, #tpu.memory_space<vmem>>, vector<16x16x4xbf16>
    %16 = vector.shape_cast %15 : vector<16x16x4xbf16> to vector<256x4xbf16>
    %c0_20 = arith.constant 0 : index
    %c0_21 = arith.constant 0 : index
    %c0_22 = arith.constant 0 : index
    %17 = vector.load %arg2[%c0_20, %c0_21, %c0_22] : memref<9x4x128xbf16, #tpu.memory_space<vmem>>, vector<1x4x128xbf16>
    %18 = vector.shape_cast %17 : vector<1x4x128xbf16> to vector<4x128xbf16>
    %cst_23 = arith.constant dense<0.000000e+00> : vector<256x128xf32>
    %19 = tpu.matmul %16, %18, %cst_23 {dimension_numbers = #tpu.dot_dimension_numbers<[1], [0], [0], [1], [0, 0, 1, 1], [], []>} : vector<256x4xbf16>, vector<4x128xbf16>, vector<256x128xf32> -> vector<256x128xf32>
    %20 = arith.addf %14, %19 : vector<256x128xf32>
    %c0_24 = arith.constant 0 : index
    %c16_25 = arith.constant 16 : index
    %c0_26 = arith.constant 0 : index
    %21 = vector.load %arg7[%c0_24, %c16_25, %c0_26] : memref<18x33x4xbf16, #tpu.memory_space<vmem>>, vector<16x16x4xbf16>
    %22 = vector.shape_cast %21 : vector<16x16x4xbf16> to vector<256x4xbf16>
    %c1_27 = arith.constant 1 : index
    %c0_28 = arith.constant 0 : index
    %c0_29 = arith.constant 0 : index
    %23 = vector.load %arg2[%c1_27, %c0_28, %c0_29] : memref<9x4x128xbf16, #tpu.memory_space<vmem>>, vector<1x4x128xbf16>
    %24 = vector.shape_cast %23 : vector<1x4x128xbf16> to vector<4x128xbf16>
    %cst_30 = arith.constant dense<0.000000e+00> : vector<256x128xf32>
    %25 = tpu.matmul %22, %24, %cst_30 {dimension_numbers = #tpu.dot_dimension_numbers<[1], [0], [0], [1], [0, 0, 1, 1], [], []>} : vector<256x4xbf16>, vector<4x128xbf16>, vector<256x128xf32> -> vector<256x128xf32>
    %26 = arith.addf %20, %25 : vector<256x128xf32>
    %c0_31 = arith.constant 0 : index
    %c17_32 = arith.constant 17 : index
    %c0_33 = arith.constant 0 : index
    %27 = vector.load %arg7[%c0_31, %c17_32, %c0_33] : memref<18x33x4xbf16, #tpu.memory_space<vmem>>, vector<16x16x4xbf16>
    %28 = vector.shape_cast %27 : vector<16x16x4xbf16> to vector<256x4xbf16>
    %c2 = arith.constant 2 : index
    %c0_34 = arith.constant 0 : index
    %c0_35 = arith.constant 0 : index
    %29 = vector.load %arg2[%c2, %c0_34, %c0_35] : memref<9x4x128xbf16, #tpu.memory_space<vmem>>, vector<1x4x128xbf16>
    %30 = vector.shape_cast %29 : vector<1x4x128xbf16> to vector<4x128xbf16>
    %cst_36 = arith.constant dense<0.000000e+00> : vector<256x128xf32>
    %31 = tpu.matmul %28, %30, %cst_36 {dimension_numbers = #tpu.dot_dimension_numbers<[1], [0], [0], [1], [0, 0, 1, 1], [], []>} : vector<256x4xbf16>, vector<4x128xbf16>, vector<256x128xf32> -> vector<256x128xf32>
    %32 = arith.addf %26, %31 : vector<256x128xf32>
    %c1_37 = arith.constant 1 : index
    %c15_38 = arith.constant 15 : index
    %c0_39 = arith.constant 0 : index
    %33 = vector.load %arg7[%c1_37, %c15_38, %c0_39] : memref<18x33x4xbf16, #tpu.memory_space<vmem>>, vector<16x16x4xbf16>
    %34 = vector.shape_cast %33 : vector<16x16x4xbf16> to vector<256x4xbf16>
    %c3 = arith.constant 3 : index
    %c0_40 = arith.constant 0 : index
    %c0_41 = arith.constant 0 : index
    %35 = vector.load %arg2[%c3, %c0_40, %c0_41] : memref<9x4x128xbf16, #tpu.memory_space<vmem>>, vector<1x4x128xbf16>
    %36 = vector.shape_cast %35 : vector<1x4x128xbf16> to vector<4x128xbf16>
    %cst_42 = arith.constant dense<0.000000e+00> : vector<256x128xf32>
    %37 = tpu.matmul %34, %36, %cst_42 {dimension_numbers = #tpu.dot_dimension_numbers<[1], [0], [0], [1], [0, 0, 1, 1], [], []>} : vector<256x4xbf16>, vector<4x128xbf16>, vector<256x128xf32> -> vector<256x128xf32>
    %38 = arith.addf %32, %37 : vector<256x128xf32>
    %c1_43 = arith.constant 1 : index
    %c16_44 = arith.constant 16 : index
    %c0_45 = arith.constant 0 : index
    %39 = vector.load %arg7[%c1_43, %c16_44, %c0_45] : memref<18x33x4xbf16, #tpu.memory_space<vmem>>, vector<16x16x4xbf16>
    %40 = vector.shape_cast %39 : vector<16x16x4xbf16> to vector<256x4xbf16>
    %c4 = arith.constant 4 : index
    %c0_46 = arith.constant 0 : index
    %c0_47 = arith.constant 0 : index
    %41 = vector.load %arg2[%c4, %c0_46, %c0_47] : memref<9x4x128xbf16, #tpu.memory_space<vmem>>, vector<1x4x128xbf16>
    %42 = vector.shape_cast %41 : vector<1x4x128xbf16> to vector<4x128xbf16>
    %cst_48 = arith.constant dense<0.000000e+00> : vector<256x128xf32>
    %43 = tpu.matmul %40, %42, %cst_48 {dimension_numbers = #tpu.dot_dimension_numbers<[1], [0], [0], [1], [0, 0, 1, 1], [], []>} : vector<256x4xbf16>, vector<4x128xbf16>, vector<256x128xf32> -> vector<256x128xf32>
    %44 = arith.addf %38, %43 : vector<256x128xf32>
    %c1_49 = arith.constant 1 : index
    %c17_50 = arith.constant 17 : index
    %c0_51 = arith.constant 0 : index
    %45 = vector.load %arg7[%c1_49, %c17_50, %c0_51] : memref<18x33x4xbf16, #tpu.memory_space<vmem>>, vector<16x16x4xbf16>
    %46 = vector.shape_cast %45 : vector<16x16x4xbf16> to vector<256x4xbf16>
    %c5 = arith.constant 5 : index
    %c0_52 = arith.constant 0 : index
    %c0_53 = arith.constant 0 : index
    %47 = vector.load %arg2[%c5, %c0_52, %c0_53] : memref<9x4x128xbf16, #tpu.memory_space<vmem>>, vector<1x4x128xbf16>
    %48 = vector.shape_cast %47 : vector<1x4x128xbf16> to vector<4x128xbf16>
    %cst_54 = arith.constant dense<0.000000e+00> : vector<256x128xf32>
    %49 = tpu.matmul %46, %48, %cst_54 {dimension_numbers = #tpu.dot_dimension_numbers<[1], [0], [0], [1], [0, 0, 1, 1], [], []>} : vector<256x4xbf16>, vector<4x128xbf16>, vector<256x128xf32> -> vector<256x128xf32>
    %50 = arith.addf %44, %49 : vector<256x128xf32>
    %c2_55 = arith.constant 2 : index
    %c15_56 = arith.constant 15 : index
    %c0_57 = arith.constant 0 : index
    %51 = vector.load %arg7[%c2_55, %c15_56, %c0_57] : memref<18x33x4xbf16, #tpu.memory_space<vmem>>, vector<16x16x4xbf16>
    %52 = vector.shape_cast %51 : vector<16x16x4xbf16> to vector<256x4xbf16>
    %c6 = arith.constant 6 : index
    %c0_58 = arith.constant 0 : index
    %c0_59 = arith.constant 0 : index
    %53 = vector.load %arg2[%c6, %c0_58, %c0_59] : memref<9x4x128xbf16, #tpu.memory_space<vmem>>, vector<1x4x128xbf16>
    %54 = vector.shape_cast %53 : vector<1x4x128xbf16> to vector<4x128xbf16>
    %cst_60 = arith.constant dense<0.000000e+00> : vector<256x128xf32>
    %55 = tpu.matmul %52, %54, %cst_60 {dimension_numbers = #tpu.dot_dimension_numbers<[1], [0], [0], [1], [0, 0, 1, 1], [], []>} : vector<256x4xbf16>, vector<4x128xbf16>, vector<256x128xf32> -> vector<256x128xf32>
    %56 = arith.addf %50, %55 : vector<256x128xf32>
    %c2_61 = arith.constant 2 : index
    %c16_62 = arith.constant 16 : index
    %c0_63 = arith.constant 0 : index
    %57 = vector.load %arg7[%c2_61, %c16_62, %c0_63] : memref<18x33x4xbf16, #tpu.memory_space<vmem>>, vector<16x16x4xbf16>
    %58 = vector.shape_cast %57 : vector<16x16x4xbf16> to vector<256x4xbf16>
    %c7 = arith.constant 7 : index
    %c0_64 = arith.constant 0 : index
    %c0_65 = arith.constant 0 : index
    %59 = vector.load %arg2[%c7, %c0_64, %c0_65] : memref<9x4x128xbf16, #tpu.memory_space<vmem>>, vector<1x4x128xbf16>
    %60 = vector.shape_cast %59 : vector<1x4x128xbf16> to vector<4x128xbf16>
    %cst_66 = arith.constant dense<0.000000e+00> : vector<256x128xf32>
    %61 = tpu.matmul %58, %60, %cst_66 {dimension_numbers = #tpu.dot_dimension_numbers<[1], [0], [0], [1], [0, 0, 1, 1], [], []>} : vector<256x4xbf16>, vector<4x128xbf16>, vector<256x128xf32> -> vector<256x128xf32>
    %62 = arith.addf %56, %61 : vector<256x128xf32>
    %c2_67 = arith.constant 2 : index
    %c17_68 = arith.constant 17 : index
    %c0_69 = arith.constant 0 : index
    %63 = vector.load %arg7[%c2_67, %c17_68, %c0_69] : memref<18x33x4xbf16, #tpu.memory_space<vmem>>, vector<16x16x4xbf16>
    %64 = vector.shape_cast %63 : vector<16x16x4xbf16> to vector<256x4xbf16>
    %c8 = arith.constant 8 : index
    %c0_70 = arith.constant 0 : index
    %c0_71 = arith.constant 0 : index
    %65 = vector.load %arg2[%c8, %c0_70, %c0_71] : memref<9x4x128xbf16, #tpu.memory_space<vmem>>, vector<1x4x128xbf16>
    %66 = vector.shape_cast %65 : vector<1x4x128xbf16> to vector<4x128xbf16>
    %cst_72 = arith.constant dense<0.000000e+00> : vector<256x128xf32>
    %67 = tpu.matmul %64, %66, %cst_72 {dimension_numbers = #tpu.dot_dimension_numbers<[1], [0], [0], [1], [0, 0, 1, 1], [], []>} : vector<256x4xbf16>, vector<4x128xbf16>, vector<256x128xf32> -> vector<256x128xf32>
    %68 = arith.addf %62, %67 : vector<256x128xf32>
    %69 = vector.broadcast %10 : vector<1x128xf32> to vector<256x128xf32>
    %70 = arith.mulf %68, %69 : vector<256x128xf32>
    %71 = vector.broadcast %11 : vector<1x128xf32> to vector<256x128xf32>
    %72 = arith.addf %70, %71 : vector<256x128xf32>
    %cst_73 = arith.constant 0.000000e+00 : f32
    %73 = vector.broadcast %cst_73 : f32 to vector<256x128xf32>
    %74 = arith.maximumf %72, %73 : vector<256x128xf32>
    %c1_74 = arith.constant 1 : index
    %c16_75 = arith.constant 16 : index
    %c0_76 = arith.constant 0 : index
    %75 = vector.load %arg7[%c1_74, %c16_75, %c0_76] : memref<18x33x4xbf16, #tpu.memory_space<vmem>>, vector<16x16x4xbf16>
    %76 = vector.shape_cast %75 : vector<16x16x4xbf16> to vector<256x4xbf16>
    %77 = vector.extract_strided_slice %9 {offsets = [4, 0], sizes = [1, 128], strides = [1, 1]} : vector<8x128xf32> to vector<1x128xf32>
    %78 = vector.extract_strided_slice %9 {offsets = [5, 0], sizes = [1, 128], strides = [1, 1]} : vector<8x128xf32> to vector<1x128xf32>
    %c0_77 = arith.constant 0 : index
    %c0_78 = arith.constant 0 : index
    %79 = vector.load %arg4[%c0_77, %c0_78] : memref<4x128xbf16, #tpu.memory_space<vmem>>, vector<4x128xbf16>
    %cst_79 = arith.constant dense<0.000000e+00> : vector<256x128xf32>
    %80 = tpu.matmul %76, %79, %cst_79 {dimension_numbers = #tpu.dot_dimension_numbers<[1], [0], [0], [1], [0, 0, 1, 1], [], []>} : vector<256x4xbf16>, vector<4x128xbf16>, vector<256x128xf32> -> vector<256x128xf32>
    %81 = vector.broadcast %77 : vector<1x128xf32> to vector<256x128xf32>
    %82 = arith.mulf %80, %81 : vector<256x128xf32>
    %83 = vector.broadcast %78 : vector<1x128xf32> to vector<256x128xf32>
    %84 = arith.addf %82, %83 : vector<256x128xf32>
    %85 = arith.truncf %74 : vector<256x128xf32> to vector<256x128xbf16>
    %86 = vector.shape_cast %85 : vector<256x128xbf16> to vector<16x16x128xbf16>
    %cst_80 = arith.constant 0.000000e+00 : bf16
    %87 = vector.broadcast %cst_80 : bf16 to vector<1x33x128xbf16>
    %cst_81 = arith.constant 0.000000e+00 : bf16
    %88 = vector.broadcast %cst_81 : bf16 to vector<18x1x128xbf16>
    %c0_82 = arith.constant 0 : index
    %c0_83 = arith.constant 0 : index
    %c0_84 = arith.constant 0 : index
    %89 = vector.load %arg8[%c0_82, %c0_83, %c0_84] : memref<18x33x128xbf16, #tpu.memory_space<vmem>>, vector<1x33x128xbf16>
    tpu.vector_store %arg8[%c0_82, %c0_83, %c0_84], %87 {strides = array<i32>} : memref<18x33x128xbf16, #tpu.memory_space<vmem>>, vector<1x33x128xbf16>,
    %c17_85 = arith.constant 17 : index
    %c0_86 = arith.constant 0 : index
    %c0_87 = arith.constant 0 : index
    %90 = vector.load %arg8[%c17_85, %c0_86, %c0_87] : memref<18x33x128xbf16, #tpu.memory_space<vmem>>, vector<1x33x128xbf16>
    tpu.vector_store %arg8[%c17_85, %c0_86, %c0_87], %87 {strides = array<i32>} : memref<18x33x128xbf16, #tpu.memory_space<vmem>>, vector<1x33x128xbf16>,
    %c0_88 = arith.constant 0 : index
    %c15_89 = arith.constant 15 : index
    %c0_90 = arith.constant 0 : index
    %91 = vector.load %arg8[%c0_88, %c15_89, %c0_90] : memref<18x33x128xbf16, #tpu.memory_space<vmem>>, vector<18x1x128xbf16>
    tpu.vector_store %arg8[%c0_88, %c15_89, %c0_90], %88 {strides = array<i32>} : memref<18x33x128xbf16, #tpu.memory_space<vmem>>, vector<18x1x128xbf16>,
    %c0_91 = arith.constant 0 : index
    %c32_92 = arith.constant 32 : index
    %c0_93 = arith.constant 0 : index
    %92 = vector.load %arg8[%c0_91, %c32_92, %c0_93] : memref<18x33x128xbf16, #tpu.memory_space<vmem>>, vector<18x1x128xbf16>
    tpu.vector_store %arg8[%c0_91, %c32_92, %c0_93], %88 {strides = array<i32>} : memref<18x33x128xbf16, #tpu.memory_space<vmem>>, vector<18x1x128xbf16>,
    %c1_94 = arith.constant 1 : index
    %c16_95 = arith.constant 16 : index
    %c0_96 = arith.constant 0 : index
    %93 = vector.load %arg8[%c1_94, %c16_95, %c0_96] : memref<18x33x128xbf16, #tpu.memory_space<vmem>>, vector<16x16x128xbf16>
    tpu.vector_store %arg8[%c1_94, %c16_95, %c0_96], %86 {strides = array<i32>} : memref<18x33x128xbf16, #tpu.memory_space<vmem>>, vector<16x16x128xbf16>,
    %cst_97 = arith.constant 0.000000e+00 : f32
    %94 = vector.broadcast %cst_97 : f32 to vector<256x128xf32>
    %c0_98 = arith.constant 0 : index
    %c15_99 = arith.constant 15 : index
    %c0_100 = arith.constant 0 : index
    %95 = vector.load %arg8[%c0_98, %c15_99, %c0_100] : memref<18x33x128xbf16, #tpu.memory_space<vmem>>, vector<16x16x128xbf16>
    %96 = vector.shape_cast %95 : vector<16x16x128xbf16> to vector<256x128xbf16>
    %c0_101 = arith.constant 0 : index
    %c0_102 = arith.constant 0 : index
    %c0_103 = arith.constant 0 : index
    %97 = vector.load %arg3[%c0_101, %c0_102, %c0_103] : memref<9x128x128xbf16, #tpu.memory_space<vmem>>, vector<1x128x128xbf16>
    %98 = vector.shape_cast %97 : vector<1x128x128xbf16> to vector<128x128xbf16>
    %cst_104 = arith.constant dense<0.000000e+00> : vector<256x128xf32>
    %99 = tpu.matmul %96, %98, %cst_104 {dimension_numbers = #tpu.dot_dimension_numbers<[1], [0], [0], [1], [0, 0, 1, 1], [], []>} : vector<256x128xbf16>, vector<128x128xbf16>, vector<256x128xf32> -> vector<256x128xf32>
    %100 = arith.addf %94, %99 : vector<256x128xf32>
    %c0_105 = arith.constant 0 : index
    %c16_106 = arith.constant 16 : index
    %c0_107 = arith.constant 0 : index
    %101 = vector.load %arg8[%c0_105, %c16_106, %c0_107] : memref<18x33x128xbf16, #tpu.memory_space<vmem>>, vector<16x16x128xbf16>
    %102 = vector.shape_cast %101 : vector<16x16x128xbf16> to vector<256x128xbf16>
    %c1_108 = arith.constant 1 : index
    %c0_109 = arith.constant 0 : index
    %c0_110 = arith.constant 0 : index
    %103 = vector.load %arg3[%c1_108, %c0_109, %c0_110] : memref<9x128x128xbf16, #tpu.memory_space<vmem>>, vector<1x128x128xbf16>
    %104 = vector.shape_cast %103 : vector<1x128x128xbf16> to vector<128x128xbf16>
    %cst_111 = arith.constant dense<0.000000e+00> : vector<256x128xf32>
    %105 = tpu.matmul %102, %104, %cst_111 {dimension_numbers = #tpu.dot_dimension_numbers<[1], [0], [0], [1], [0, 0, 1, 1], [], []>} : vector<256x128xbf16>, vector<128x128xbf16>, vector<256x128xf32> -> vector<256x128xf32>
    %106 = arith.addf %100, %105 : vector<256x128xf32>
    %c0_112 = arith.constant 0 : index
    %c17_113 = arith.constant 17 : index
    %c0_114 = arith.constant 0 : index
    %107 = vector.load %arg8[%c0_112, %c17_113, %c0_114] : memref<18x33x128xbf16, #tpu.memory_space<vmem>>, vector<16x16x128xbf16>
    %108 = vector.shape_cast %107 : vector<16x16x128xbf16> to vector<256x128xbf16>
    %c2_115 = arith.constant 2 : index
    %c0_116 = arith.constant 0 : index
    %c0_117 = arith.constant 0 : index
    %109 = vector.load %arg3[%c2_115, %c0_116, %c0_117] : memref<9x128x128xbf16, #tpu.memory_space<vmem>>, vector<1x128x128xbf16>
    %110 = vector.shape_cast %109 : vector<1x128x128xbf16> to vector<128x128xbf16>
    %cst_118 = arith.constant dense<0.000000e+00> : vector<256x128xf32>
    %111 = tpu.matmul %108, %110, %cst_118 {dimension_numbers = #tpu.dot_dimension_numbers<[1], [0], [0], [1], [0, 0, 1, 1], [], []>} : vector<256x128xbf16>, vector<128x128xbf16>, vector<256x128xf32> -> vector<256x128xf32>
    %112 = arith.addf %106, %111 : vector<256x128xf32>
    %c1_119 = arith.constant 1 : index
    %c15_120 = arith.constant 15 : index
    %c0_121 = arith.constant 0 : index
    %113 = vector.load %arg8[%c1_119, %c15_120, %c0_121] : memref<18x33x128xbf16, #tpu.memory_space<vmem>>, vector<16x16x128xbf16>
    %114 = vector.shape_cast %113 : vector<16x16x128xbf16> to vector<256x128xbf16>
    %c3_122 = arith.constant 3 : index
    %c0_123 = arith.constant 0 : index
    %c0_124 = arith.constant 0 : index
    %115 = vector.load %arg3[%c3_122, %c0_123, %c0_124] : memref<9x128x128xbf16, #tpu.memory_space<vmem>>, vector<1x128x128xbf16>
    %116 = vector.shape_cast %115 : vector<1x128x128xbf16> to vector<128x128xbf16>
    %cst_125 = arith.constant dense<0.000000e+00> : vector<256x128xf32>
    %117 = tpu.matmul %114, %116, %cst_125 {dimension_numbers = #tpu.dot_dimension_numbers<[1], [0], [0], [1], [0, 0, 1, 1], [], []>} : vector<256x128xbf16>, vector<128x128xbf16>, vector<256x128xf32> -> vector<256x128xf32>
    %118 = arith.addf %112, %117 : vector<256x128xf32>
    %c1_126 = arith.constant 1 : index
    %c16_127 = arith.constant 16 : index
    %c0_128 = arith.constant 0 : index
    %119 = vector.load %arg8[%c1_126, %c16_127, %c0_128] : memref<18x33x128xbf16, #tpu.memory_space<vmem>>, vector<16x16x128xbf16>
    %120 = vector.shape_cast %119 : vector<16x16x128xbf16> to vector<256x128xbf16>
    %c4_129 = arith.constant 4 : index
    %c0_130 = arith.constant 0 : index
    %c0_131 = arith.constant 0 : index
    %121 = vector.load %arg3[%c4_129, %c0_130, %c0_131] : memref<9x128x128xbf16, #tpu.memory_space<vmem>>, vector<1x128x128xbf16>
    %122 = vector.shape_cast %121 : vector<1x128x128xbf16> to vector<128x128xbf16>
    %cst_132 = arith.constant dense<0.000000e+00> : vector<256x128xf32>
    %123 = tpu.matmul %120, %122, %cst_132 {dimension_numbers = #tpu.dot_dimension_numbers<[1], [0], [0], [1], [0, 0, 1, 1], [], []>} : vector<256x128xbf16>, vector<128x128xbf16>, vector<256x128xf32> -> vector<256x128xf32>
    %124 = arith.addf %118, %123 : vector<256x128xf32>
    %c1_133 = arith.constant 1 : index
    %c17_134 = arith.constant 17 : index
    %c0_135 = arith.constant 0 : index
    %125 = vector.load %arg8[%c1_133, %c17_134, %c0_135] : memref<18x33x128xbf16, #tpu.memory_space<vmem>>, vector<16x16x128xbf16>
    %126 = vector.shape_cast %125 : vector<16x16x128xbf16> to vector<256x128xbf16>
    %c5_136 = arith.constant 5 : index
    %c0_137 = arith.constant 0 : index
    %c0_138 = arith.constant 0 : index
    %127 = vector.load %arg3[%c5_136, %c0_137, %c0_138] : memref<9x128x128xbf16, #tpu.memory_space<vmem>>, vector<1x128x128xbf16>
    %128 = vector.shape_cast %127 : vector<1x128x128xbf16> to vector<128x128xbf16>
    %cst_139 = arith.constant dense<0.000000e+00> : vector<256x128xf32>
    %129 = tpu.matmul %126, %128, %cst_139 {dimension_numbers = #tpu.dot_dimension_numbers<[1], [0], [0], [1], [0, 0, 1, 1], [], []>} : vector<256x128xbf16>, vector<128x128xbf16>, vector<256x128xf32> -> vector<256x128xf32>
    %130 = arith.addf %124, %129 : vector<256x128xf32>
    %c2_140 = arith.constant 2 : index
    %c15_141 = arith.constant 15 : index
    %c0_142 = arith.constant 0 : index
    %131 = vector.load %arg8[%c2_140, %c15_141, %c0_142] : memref<18x33x128xbf16, #tpu.memory_space<vmem>>, vector<16x16x128xbf16>
    %132 = vector.shape_cast %131 : vector<16x16x128xbf16> to vector<256x128xbf16>
    %c6_143 = arith.constant 6 : index
    %c0_144 = arith.constant 0 : index
    %c0_145 = arith.constant 0 : index
    %133 = vector.load %arg3[%c6_143, %c0_144, %c0_145] : memref<9x128x128xbf16, #tpu.memory_space<vmem>>, vector<1x128x128xbf16>
    %134 = vector.shape_cast %133 : vector<1x128x128xbf16> to vector<128x128xbf16>
    %cst_146 = arith.constant dense<0.000000e+00> : vector<256x128xf32>
    %135 = tpu.matmul %132, %134, %cst_146 {dimension_numbers = #tpu.dot_dimension_numbers<[1], [0], [0], [1], [0, 0, 1, 1], [], []>} : vector<256x128xbf16>, vector<128x128xbf16>, vector<256x128xf32> -> vector<256x128xf32>
    %136 = arith.addf %130, %135 : vector<256x128xf32>
    %c2_147 = arith.constant 2 : index
    %c16_148 = arith.constant 16 : index
    %c0_149 = arith.constant 0 : index
    %137 = vector.load %arg8[%c2_147, %c16_148, %c0_149] : memref<18x33x128xbf16, #tpu.memory_space<vmem>>, vector<16x16x128xbf16>
    %138 = vector.shape_cast %137 : vector<16x16x128xbf16> to vector<256x128xbf16>
    %c7_150 = arith.constant 7 : index
    %c0_151 = arith.constant 0 : index
    %c0_152 = arith.constant 0 : index
    %139 = vector.load %arg3[%c7_150, %c0_151, %c0_152] : memref<9x128x128xbf16, #tpu.memory_space<vmem>>, vector<1x128x128xbf16>
    %140 = vector.shape_cast %139 : vector<1x128x128xbf16> to vector<128x128xbf16>
    %cst_153 = arith.constant dense<0.000000e+00> : vector<256x128xf32>
    %141 = tpu.matmul %138, %140, %cst_153 {dimension_numbers = #tpu.dot_dimension_numbers<[1], [0], [0], [1], [0, 0, 1, 1], [], []>} : vector<256x128xbf16>, vector<128x128xbf16>, vector<256x128xf32> -> vector<256x128xf32>
    %142 = arith.addf %136, %141 : vector<256x128xf32>
    %c2_154 = arith.constant 2 : index
    %c17_155 = arith.constant 17 : index
    %c0_156 = arith.constant 0 : index
    %143 = vector.load %arg8[%c2_154, %c17_155, %c0_156] : memref<18x33x128xbf16, #tpu.memory_space<vmem>>, vector<16x16x128xbf16>
    %144 = vector.shape_cast %143 : vector<16x16x128xbf16> to vector<256x128xbf16>
    %c8_157 = arith.constant 8 : index
    %c0_158 = arith.constant 0 : index
    %c0_159 = arith.constant 0 : index
    %145 = vector.load %arg3[%c8_157, %c0_158, %c0_159] : memref<9x128x128xbf16, #tpu.memory_space<vmem>>, vector<1x128x128xbf16>
    %146 = vector.shape_cast %145 : vector<1x128x128xbf16> to vector<128x128xbf16>
    %cst_160 = arith.constant dense<0.000000e+00> : vector<256x128xf32>
    %147 = tpu.matmul %144, %146, %cst_160 {dimension_numbers = #tpu.dot_dimension_numbers<[1], [0], [0], [1], [0, 0, 1, 1], [], []>} : vector<256x128xbf16>, vector<128x128xbf16>, vector<256x128xf32> -> vector<256x128xf32>
    %148 = arith.addf %142, %147 : vector<256x128xf32>
    %149 = vector.broadcast %12 : vector<1x128xf32> to vector<256x128xf32>
    %150 = arith.mulf %148, %149 : vector<256x128xf32>
    %151 = vector.broadcast %13 : vector<1x128xf32> to vector<256x128xf32>
    %152 = arith.addf %150, %151 : vector<256x128xf32>
    %153 = arith.addf %152, %84 : vector<256x128xf32>
    %cst_161 = arith.constant 0.000000e+00 : f32
    %154 = vector.broadcast %cst_161 : f32 to vector<256x128xf32>
    %155 = arith.maximumf %153, %154 : vector<256x128xf32>
    %156 = vector.shape_cast %155 : vector<256x128xf32> to vector<1x16x16x128xf32>
    %c0_162 = arith.constant 0 : index
    %c0_163 = arith.constant 0 : index
    %c0_164 = arith.constant 0 : index
    %c0_165 = arith.constant 0 : index
    %157 = vector.load %arg6[%c0_162, %c0_163, %c0_164, %c0_165] : memref<1x16x16x128xf32, #tpu.memory_space<vmem>>, vector<1x16x16x128xf32>
    tpu.vector_store %arg6[%c0_162, %c0_163, %c0_164, %c0_165], %156 {strides = array<i32>} : memref<1x16x16x128xf32, #tpu.memory_space<vmem>>, vector<1x16x16x128xf32>,
    return
  }
  func.func @transform_0(%arg0: i32) -> (i32, i32, i32, i32) {
    %c0_i32 = arith.constant 0 : i32
    %c0_i32_0 = arith.constant 0 : i32
    %c0_i32_1 = arith.constant 0 : i32
    %c0_i32_2 = arith.constant 0 : i32
    return %arg0, %c0_i32, %c0_i32_0, %c0_i32_1 : i32, i32, i32, i32
  }
  func.func @transform_1(%arg0: i32) -> (i32, i32, i32) {
    %c0_i32 = arith.constant 0 : i32
    %c0_i32_0 = arith.constant 0 : i32
    %c0_i32_1 = arith.constant 0 : i32
    %c0_i32_2 = arith.constant 0 : i32
    return %c0_i32, %c0_i32_0, %c0_i32_1 : i32, i32, i32
  }
  func.func @transform_2(%arg0: i32) -> (i32, i32, i32) {
    %c0_i32 = arith.constant 0 : i32
    %c0_i32_0 = arith.constant 0 : i32
    %c0_i32_1 = arith.constant 0 : i32
    %c0_i32_2 = arith.constant 0 : i32
    return %c0_i32, %c0_i32_0, %c0_i32_1 : i32, i32, i32
  }
  func.func @transform_3(%arg0: i32) -> (i32, i32) {
    %c0_i32 = arith.constant 0 : i32
    %c0_i32_0 = arith.constant 0 : i32
    %c0_i32_1 = arith.constant 0 : i32
    return %c0_i32, %c0_i32_0 : i32, i32
  }
  func.func @transform_4(%arg0: i32) -> (i32, i32) {
    %c0_i32 = arith.constant 0 : i32
    %c0_i32_0 = arith.constant 0 : i32
    %c0_i32_1 = arith.constant 0 : i32
    return %c0_i32, %c0_i32_0 : i32, i32
  }
  func.func @transform_5(%arg0: i32) -> (i32, i32, i32, i32) {
    %c0_i32 = arith.constant 0 : i32
    %c0_i32_0 = arith.constant 0 : i32
    %c0_i32_1 = arith.constant 0 : i32
    %c0_i32_2 = arith.constant 0 : i32
    return %arg0, %c0_i32, %c0_i32_0, %c0_i32_1 : i32, i32, i32, i32
  }
}

</mosaic_0001>

<llo_original>
// kernel: tpu_custom_call.1
$region0: #{tpu_custom_call.1}
  #allocation0 [shape = 'u32[]', space=smem, size = 0x4, offset = 0x4, fixed_abs, tag = 'smem constant byte address 0x4 - core index']
  #allocation1 [shape = 'u32[144,128]{1,0:T(1,128)}', space=vmem, size = 0x12000, scoped, tag = 'internal scratch']
  #allocation2 [shape = 'bf16[18,33,4]{2,1,0:T(8,128)(2,1)}', space=vmem, size = 0x2d000, scoped, tag = 'scratch operand']
  #allocation3 [shape = 'bf16[18,33,128]{2,1,0:T(8,128)(2,1)}', space=vmem, size = 0x2d000, scoped, tag = 'scratch operand']
  %s0 = inlined_call_operand.vmem [shape: bf16[2,16,16,4], index: 0, kind: input, shape index: {}]
  %s1 = inlined_call_operand.vmem [shape: bf16[9,4,128], index: 1, kind: input, shape index: {}]
  %s2 = inlined_call_operand.hbm [shape: bf16[9,128,128], index: 2, kind: input, shape index: {}]
  %s3 = inlined_call_operand.vmem [shape: bf16[4,128], index: 3, kind: input, shape index: {}]
  %s4 = inlined_call_operand.vmem [shape: f32[8,128], index: 4, kind: input, shape index: {}]
  %s5 = inlined_call_operand.hbm [shape: f32[2,16,16,128], index: 5, kind: output, shape index: {}]
  %s6 = sld [smem:[#allocation0]]
  $region57: #{tpu_custom_call.1} parent=0
    _
  %s8 = ssub.s32 1, %s6
  %s9 = scalar_select 0, %s8, %s6
  $region1: #{tpu_custom_call.1} parent=0
    #allocation4 [shape = 'u8[294912]{0}', space=vmem, size = 0x48000, scoped, tag = 'input window, operand 2, single buffered']
    #allocation5 [shape = 's32[2]{0}', space=sflag, size = 0x8, scoped, tag = 'scoped memory for tpu_custom_call.1']
    #allocation6 [shape = 's32[2]{0}', space=sflag, size = 0x8, scoped, tag = 'scoped memory for tpu_custom_call.1']
    #allocation7 [shape = 'u8[262144]{0}', space=vmem, size = 0x40000, scoped, tag = 'output window, operand 0']
    %10 = vsyncpa [#allocation5], 0
    %11 = vsyncpa [#allocation6], 0
    %s12 = scalar_lea.sflag [#allocation6], 1
    %13 = vsyncpa %s12, 0
    loop: start=0, step=1, limit=4
    $region2: #{tpu_custom_call.1} parent=1 // loop_pre_header
      _
    $region3: #{tpu_custom_call.1} parent=1 // loop_header
      %s15 = sphi 0, %s19
      %p16 = scmp.ge.s32.totalorder %s15, 4
      %s25 = sphi 0, %s27
      %s28 = sphi 0, %s25
      %s29 = sphi 0, %s28
      %s45 = sphi 0, %s29
      %s49 = sphi 0, %s49
      %s51 = sphi 0, %s49
      %s52 = sphi 0, %s51
      %s66 = sphi 0, %s52
      %s70 = sphi 0, %s70
      %s72 = sphi 0, %s70
      %s73 = sphi 0, %s72
      %s87 = sphi 0, %s73
      %s91 = sphi 0, %s91
      %s93 = sphi 0, %s91
      %s94 = sphi 0, %s93
      %s108 = sphi 0, %s94
      %s112 = sphi 0, %s112
      %s114 = sphi 0, %s112
      %s115 = sphi 0, %s114
      %s129 = sphi 0, %s115
      %s135 = sphi 0, %s137
      %s138 = sphi 0, %s135
      %s139 = sphi 0, %s138
      %s155 = sphi 0, %s139
    $region4: #{tpu_custom_call.1} parent=1 // loop_header_branch
      %18 = sbr.rel (%p16) target = $region8
    $region5: #{tpu_custom_call.1} parent=1 // loop_body
      %s20 = ssub.s32 %s15, 1
      %s21 = ssub.s32 %s15, 2
      %s22 = sadd.s32 %s15, 1
      %s23 = ssub.s32 %s15, %s22
      %p24 = scmp.eq.s32.totalorder %s23, 0
      %s26 = sadd.s32 %s25, 1
      %s27 = scalar_select %p24, %s25, %s26
      %p30 = pneg %p24
      %p31 = scmp.eq.s32.totalorder %s15, 1
      %p32 = por %p30, %p31
      %p33 = scmp.ne.s32.totalorder %s25, %s28
      %p34 = scmp.eq.s32.totalorder %s15, 0
      %p35 = por %p33, %p34
      %p36 = scmp.ne.s32.totalorder %s25, %s28
      %p37 = scmp.eq.s32.totalorder %s20, 1
      %p38 = por %p36, %p37
      %p39 = scmp.ne.s32.totalorder %s28, %s29
      %p40 = scmp.eq.s32.totalorder %s20, 0
      %p41 = por %p39, %p40
      %p42 = scmp.ne.s32.totalorder %s28, %s29
      %p43 = scmp.eq.s32.totalorder %s21, 1
      %p44 = por %p42, %p43
      %p46 = scmp.ne.s32.totalorder %s29, %s45
      %p47 = scmp.eq.s32.totalorder %s21, 0
      %p48 = por %p46, %p47
      %s50 = sadd.s32 %s49, 1
      %p53 = scmp.eq.s32.totalorder %s15, 1
      %p54 = scmp.ne.s32.totalorder %s49, %s51
      %p55 = scmp.eq.s32.totalorder %s15, 0
      %p56 = por %p54, %p55
      %p57 = scmp.ne.s32.totalorder %s49, %s51
      %p58 = scmp.eq.s32.totalorder %s20, 1
      %p59 = por %p57, %p58
      %p60 = scmp.ne.s32.totalorder %s51, %s52
      %p61 = scmp.eq.s32.totalorder %s20, 0
      %p62 = por %p60, %p61
      %p63 = scmp.ne.s32.totalorder %s51, %s52
      %p64 = scmp.eq.s32.totalorder %s21, 1
      %p65 = por %p63, %p64
      %p67 = scmp.ne.s32.totalorder %s52, %s66
      %p68 = scmp.eq.s32.totalorder %s21, 0
      %p69 = por %p67, %p68
      %s71 = sadd.s32 %s70, 1
      %p74 = scmp.eq.s32.totalorder %s15, 1
      %p75 = scmp.ne.s32.totalorder %s70, %s72
      %p76 = scmp.eq.s32.totalorder %s15, 0
      %p77 = por %p75, %p76
      %p78 = scmp.ne.s32.totalorder %s70, %s72
      %p79 = scmp.eq.s32.totalorder %s20, 1
      %p80 = por %p78, %p79
      %p81 = scmp.ne.s32.totalorder %s72, %s73
      %p82 = scmp.eq.s32.totalorder %s20, 0
      %p83 = por %p81, %p82
      %p84 = scmp.ne.s32.totalorder %s72, %s73
      %p85 = scmp.eq.s32.totalorder %s21, 1
      %p86 = por %p84, %p85
      %p88 = scmp.ne.s32.totalorder %s73, %s87
      %p89 = scmp.eq.s32.totalorder %s21, 0
      %p90 = por %p88, %p89
      %s92 = sadd.s32 %s91, 1
      %p95 = scmp.eq.s32.totalorder %s15, 1
      %p96 = scmp.ne.s32.totalorder %s91, %s93
      %p97 = scmp.eq.s32.totalorder %s15, 0
      %p98 = por %p96, %p97
      %p99 = scmp.ne.s32.totalorder %s91, %s93
      %p100 = scmp.eq.s32.totalorder %s20, 1
      %p101 = por %p99, %p100
      %p102 = scmp.ne.s32.totalorder %s93, %s94
      %p103 = scmp.eq.s32.totalorder %s20, 0
      %p104 = por %p102, %p103
      %p105 = scmp.ne.s32.totalorder %s93, %s94
      %p106 = scmp.eq.s32.totalorder %s21, 1
      %p107 = por %p105, %p106
      %p109 = scmp.ne.s32.totalorder %s94, %s108
      %p110 = scmp.eq.s32.totalorder %s21, 0
      %p111 = por %p109, %p110
      %s113 = sadd.s32 %s112, 1
      %p116 = scmp.eq.s32.totalorder %s15, 1
      %p117 = scmp.ne.s32.totalorder %s112, %s114
      %p118 = scmp.eq.s32.totalorder %s15, 0
      %p119 = por %p117, %p118
      %p120 = scmp.ne.s32.totalorder %s112, %s114
      %p121 = scmp.eq.s32.totalorder %s20, 1
      %p122 = por %p120, %p121
      %p123 = scmp.ne.s32.totalorder %s114, %s115
      %p124 = scmp.eq.s32.totalorder %s20, 0
      %p125 = por %p123, %p124
      %p126 = scmp.ne.s32.totalorder %s114, %s115
      %p127 = scmp.eq.s32.totalorder %s21, 1
      %p128 = por %p126, %p127
      %p130 = scmp.ne.s32.totalorder %s115, %s129
      %p131 = scmp.eq.s32.totalorder %s21, 0
      %p132 = por %p130, %p131
      %s133 = ssub.s32 %s15, %s22
      %p134 = scmp.eq.s32.totalorder %s133, 0
      %s136 = sadd.s32 %s135, 1
      %s137 = scalar_select %p134, %s135, %s136
      %p140 = pneg %p134
      %p141 = scmp.eq.s32.totalorder %s15, 1
      %p142 = por %p140, %p141
      %p143 = scmp.ne.s32.totalorder %s135, %s138
      %p144 = scmp.eq.s32.totalorder %s15, 0
      %p145 = por %p143, %p144
      %p146 = scmp.ne.s32.totalorder %s135, %s138
      %p147 = scmp.eq.s32.totalorder %s20, 1
      %p148 = por %p146, %p147
      %p149 = scmp.ne.s32.totalorder %s138, %s139
      %p150 = scmp.eq.s32.totalorder %s20, 0
      %p151 = por %p149, %p150
      %p152 = scmp.ne.s32.totalorder %s138, %s139
      %p153 = scmp.eq.s32.totalorder %s21, 1
      %p154 = por %p152, %p153
      %p156 = scmp.ne.s32.totalorder %s139, %s155
      %p157 = scmp.eq.s32.totalorder %s21, 0
      %p158 = por %p156, %p157
      %p159 = scmp.le.s32.totalorder 1, %s15
      %p160 = scmp.lt.s32.totalorder %s15, 3
      %p161 = pnand %p159, %p160
      %p162 = pneg %p161
      // Predicated region
      $region9: #{tpu_custom_call.1} parent=5 // pred_check
        _
      $region10: #{tpu_custom_call.1} parent=5 // pred_check_branch
        %164 = sbr.rel (%p161) target = $region12
      $region11: #{tpu_custom_call.1} parent=5 // pred_region
        %s165 = ssub.s32 %s15, 1
        // Predicated region
        $region13: #{tpu_custom_call.1} parent=11 // pred_check
          %p166 = pneg %p62
        $region14: #{tpu_custom_call.1} parent=11 // pred_check_branch
          %168 = sbr.rel (%p166) target = $region16
        $region15: #{tpu_custom_call.1} parent=11 // pred_region
          _
        $region16: #{tpu_custom_call.1} parent=11 // pred_fallthru
          _
        // Predicated region
        $region17: #{tpu_custom_call.1} parent=11 // pred_check
          %p169 = pneg %p83
        $region18: #{tpu_custom_call.1} parent=11 // pred_check_branch
          %171 = sbr.rel (%p169) target = $region20
        $region19: #{tpu_custom_call.1} parent=11 // pred_region
          %s173 = ssub.s32 9216, 9216
          %174 = vsyncadd [#allocation5], %s173
          %s175 = sshll.u32 [#allocation4], 4
          %s176 = int_to_ptr.vmem [resolvable:$true] %s175
          %181 = dma.hbm_to_vmem [thread:$0]  %s2, 9216, %s176, [#allocation5], 64, 64, 4
        $region20: #{tpu_custom_call.1} parent=11 // pred_fallthru
          _
        // Predicated region
        $region21: #{tpu_custom_call.1} parent=11 // pred_check
          %p182 = pneg %p104
        $region22: #{tpu_custom_call.1} parent=11 // pred_check_branch
          %184 = sbr.rel (%p182) target = $region24
        $region23: #{tpu_custom_call.1} parent=11 // pred_region
          _
        $region24: #{tpu_custom_call.1} parent=11 // pred_fallthru
          _
        // Predicated region
        $region25: #{tpu_custom_call.1} parent=11 // pred_check
          %p185 = pneg %p125
        $region26: #{tpu_custom_call.1} parent=11 // pred_check_branch
          %187 = sbr.rel (%p185) target = $region28
        $region27: #{tpu_custom_call.1} parent=11 // pred_region
          _
        $region28: #{tpu_custom_call.1} parent=11 // pred_fallthru
          _
      $region12: #{tpu_custom_call.1} parent=5 // pred_fallthru
        _
      %p188 = scmp.lt.s32.totalorder %s15, 2
      // Predicated region
      $region29: #{tpu_custom_call.1} parent=5 // pred_check
        %p189 = pneg %p188
      $region30: #{tpu_custom_call.1} parent=5 // pred_check_branch
        %191 = sbr.rel (%p189) target = $region32
      $region31: #{tpu_custom_call.1} parent=5 // pred_region
        // Predicated region
        $region33: #{tpu_custom_call.1} parent=31 // pred_check
          %p192 = pneg %p35
        $region34: #{tpu_custom_call.1} parent=31 // pred_check_branch
          %194 = sbr.rel (%p192) target = $region36
        $region35: #{tpu_custom_call.1} parent=31 // pred_region
          %p195 = scmp.lt.s32.totalorder %s15, 1
          %s196 = scalar_select %p195, %s15, 1
          %s197 = smul.addr %s196, 32
          %s198 = smul.addr %s197, 4
          %s199 = scalar_lea.vmem %s0, %s198
        $region36: #{tpu_custom_call.1} parent=31 // pred_fallthru
          _
      $region32: #{tpu_custom_call.1} parent=5 // pred_fallthru
        _
      %p200 = scmp.le.s32.totalorder 1, %s15
      %p201 = scmp.lt.s32.totalorder %s15, 3
      %p202 = pnand %p200, %p201
      %p203 = pneg %p202
      // Predicated region
      $region37: #{tpu_custom_call.1} parent=5 // pred_check
        _
      $region38: #{tpu_custom_call.1} parent=5 // pred_check_branch
        %205 = sbr.rel (%p202) target = $region40
      $region39: #{tpu_custom_call.1} parent=5 // pred_region
        %s206 = ssub.s32 %s15, 1
        // Predicated region
        $region41: #{tpu_custom_call.1} parent=39 // pred_check
          %p207 = pneg %p83
        $region42: #{tpu_custom_call.1} parent=39 // pred_check_branch
          %209 = sbr.rel (%p207) target = $region44
        $region43: #{tpu_custom_call.1} parent=39 // pred_region
          %210 = dma.done [#allocation5], 9216
        $region44: #{tpu_custom_call.1} parent=39 // pred_fallthru
          _
        %p211 = scmp.lt.s32.totalorder %s20, 1
        %s212 = scalar_select %p211, %s20, 1
        %s213 = smul.addr %s212, 32
        %s214 = smul.addr %s213, 4
        %s215 = scalar_lea.vmem %s0, %s214
        %p216 = pneg %p41
        %p217 = pneg %p38
        %p218 = pneg %p62
        %p219 = pneg %p59
        %p220 = pneg %p83
        %p221 = pneg %p80
        %p222 = pneg %p104
        %p223 = pneg %p101
        %p224 = pneg %p125
        %p225 = pneg %p122
        %p226 = pneg %p151
        %p227 = pneg %p148
        %s228 = sand.u32 %s138, 1
        %s229 = scalar_lea.sflag [#allocation6], %s228
        %s230 = sand.u32 %s138, 1
        %s231 = smul.addr %s230, 256
        %s232 = scalar_lea.vmem [#allocation7], %s231
        %p233 = scmp.lt.s32.totalorder %s20, 1
        %s234 = scalar_select %p233, %s20, 1
        %s235 = smul.addr %s234, 32
        %s236 = smul.addr %s235, 4
        %s237 = scalar_lea.vmem %s0, %s236
        %v239 = vld [vmem:[%s237] sm:$0xf]
        %v240 = vld [vmem:[%s237 + $0x4] sm:$0xf]
        %v241 = vld [vmem:[%s237 + $0x8] sm:$0xf]
        %v242 = vld [vmem:[%s237 + $0xc] sm:$0xf]
        %v243 = vld [vmem:[%s237 + $0x10] sm:$0xf]
        %v244 = vld [vmem:[%s237 + $0x14] sm:$0xf]
        %v245 = vld [vmem:[%s237 + $0x18] sm:$0xf]
        %v246 = vld [vmem:[%s237 + $0x1c] sm:$0xf]
        %v247 = vld [vmem:[%s237 + $0x20] sm:$0xf]
        %v248 = vld [vmem:[%s237 + $0x24] sm:$0xf]
        %v249 = vld [vmem:[%s237 + $0x28] sm:$0xf]
        %v250 = vld [vmem:[%s237 + $0x2c] sm:$0xf]
        %v251 = vld [vmem:[%s237 + $0x30] sm:$0xf]
        %v252 = vld [vmem:[%s237 + $0x34] sm:$0xf]
        %v253 = vld [vmem:[%s237 + $0x38] sm:$0xf]
        %v254 = vld [vmem:[%s237 + $0x3c] sm:$0xf]
        %v255 = vld [vmem:[%s237 + $0x40] sm:$0xf]
        %v256 = vld [vmem:[%s237 + $0x44] sm:$0xf]
        %v257 = vld [vmem:[%s237 + $0x48] sm:$0xf]
        %v258 = vld [vmem:[%s237 + $0x4c] sm:$0xf]
        %v259 = vld [vmem:[%s237 + $0x50] sm:$0xf]
        %v260 = vld [vmem:[%s237 + $0x54] sm:$0xf]
        %v261 = vld [vmem:[%s237 + $0x58] sm:$0xf]
        %v262 = vld [vmem:[%s237 + $0x5c] sm:$0xf]
        %v263 = vld [vmem:[%s237 + $0x60] sm:$0xf]
        %v264 = vld [vmem:[%s237 + $0x64] sm:$0xf]
        %v265 = vld [vmem:[%s237 + $0x68] sm:$0xf]
        %v266 = vld [vmem:[%s237 + $0x6c] sm:$0xf]
        %v267 = vld [vmem:[%s237 + $0x70] sm:$0xf]
        %v268 = vld [vmem:[%s237 + $0x74] sm:$0xf]
        %v269 = vld [vmem:[%s237 + $0x78] sm:$0xf]
        %v270 = vld [vmem:[%s237 + $0x7c] sm:$0xf]
        %vm271 = vcmask 27648
        %272 = vst.msk [vmem:[#allocation2] sm:$0xf] %vm271, 0
        %273 = vst.msk [vmem:[#allocation2 + $0x4] sm:$0xf] %vm271, 0
        %274 = vst.msk [vmem:[#allocation2 + $0x8] sm:$0xf] %vm271, 0
        %275 = vst.msk [vmem:[#allocation2 + $0xc] sm:$0xf] %vm271, 0
        %vm276 = vcmask 24576
        %vm277 = vsmask.f32 256
        %vm278 = vmand %vm276, %vm277
        %v279 = vld [vmem:[#allocation2 + $0x10] sm:$0x1]
        %v280 = vsel %vm278, 0, %v279
        %281 = vst [vmem:[#allocation2 + $0x10] sm:$0x1] %v280
        %s282 = scalar_lea.vmem [#allocation2], 340
        %283 = vst.msk [vmem:[%s282] sm:$0xf] %vm271, 0
        %284 = vst.msk [vmem:[%s282 + $0x4] sm:$0xf] %vm271, 0
        %285 = vst.msk [vmem:[%s282 + $0x8] sm:$0xf] %vm271, 0
        %286 = vst.msk [vmem:[%s282 + $0xc] sm:$0xf] %vm271, 0
        %v287 = vld [vmem:[%s282 + $0x10] sm:$0x1]
        %v288 = vsel %vm278, 0, %v287
        %289 = vst [vmem:[%s282 + $0x10] sm:$0x1] %v288
        %vm290 = vcmask 27651
        %vm291 = vsmask.f32 7950
        %vm292 = vmand %vm290, %vm291
        %v293 = vld [vmem:[#allocation2 + $0x4] sm:$0x8]
        %v294 = vsel %vm292, 0, %v293
        %295 = vst [vmem:[#allocation2 + $0x4] sm:$0x8] %v294
        %v296 = vld [vmem:[#allocation2 + $0x18] sm:$0x8]
        %v297 = vsel %vm292, 0, %v296
        %298 = vst [vmem:[#allocation2 + $0x18] sm:$0x8] %v297
        %v299 = vld [vmem:[#allocation2 + $0x2c] sm:$0x8]
        %v300 = vsel %vm292, 0, %v299
        %301 = vst [vmem:[#allocation2 + $0x2c] sm:$0x8] %v300
        %v302 = vld [vmem:[#allocation2 + $0x40] sm:$0x8]
        %v303 = vsel %vm292, 0, %v302
        %304 = vst [vmem:[#allocation2 + $0x40] sm:$0x8] %v303
        %v305 = vld [vmem:[#allocation2 + $0x54] sm:$0x8]
        %v306 = vsel %vm292, 0, %v305
        %307 = vst [vmem:[#allocation2 + $0x54] sm:$0x8] %v306
        %v308 = vld [vmem:[#allocation2 + $0x68] sm:$0x8]
        %v309 = vsel %vm292, 0, %v308
        %310 = vst [vmem:[#allocation2 + $0x68] sm:$0x8] %v309
        %v311 = vld [vmem:[#allocation2 + $0x7c] sm:$0x8]
        %v312 = vsel %vm292, 0, %v311
        %313 = vst [vmem:[#allocation2 + $0x7c] sm:$0x8] %v312
        %v314 = vld [vmem:[#allocation2 + $0x90] sm:$0x8]
        %v315 = vsel %vm292, 0, %v314
        %316 = vst [vmem:[#allocation2 + $0x90] sm:$0x8] %v315
        %v317 = vld [vmem:[#allocation2 + $0xa4] sm:$0x8]
        %v318 = vsel %vm292, 0, %v317
        %319 = vst [vmem:[#allocation2 + $0xa4] sm:$0x8] %v318
        %v320 = vld [vmem:[#allocation2 + $0xb8] sm:$0x8]
        %v321 = vsel %vm292, 0, %v320
        %322 = vst [vmem:[#allocation2 + $0xb8] sm:$0x8] %v321
        %v323 = vld [vmem:[#allocation2 + $0xcc] sm:$0x8]
        %v324 = vsel %vm292, 0, %v323
        %325 = vst [vmem:[#allocation2 + $0xcc] sm:$0x8] %v324
        %v326 = vld [vmem:[#allocation2 + $0xe0] sm:$0x8]
        %v327 = vsel %vm292, 0, %v326
        %328 = vst [vmem:[#allocation2 + $0xe0] sm:$0x8] %v327
        %v329 = vld [vmem:[#allocation2 + $0xf4] sm:$0x8]
        %v330 = vsel %vm292, 0, %v329
        %331 = vst [vmem:[#allocation2 + $0xf4] sm:$0x8] %v330
        %v332 = vld [vmem:[#allocation2 + $0x108] sm:$0x8]
        %v333 = vsel %vm292, 0, %v332
        %334 = vst [vmem:[#allocation2 + $0x108] sm:$0x8] %v333
        %v335 = vld [vmem:[#allocation2 + $0x11c] sm:$0x8]
        %v336 = vsel %vm292, 0, %v335
        %337 = vst [vmem:[#allocation2 + $0x11c] sm:$0x8] %v336
        %v338 = vld [vmem:[#allocation2 + $0x130] sm:$0x8]
        %v339 = vsel %vm292, 0, %v338
        %340 = vst [vmem:[#allocation2 + $0x130] sm:$0x8] %v339
        %v341 = vld [vmem:[#allocation2 + $0x144] sm:$0x8]
        %v342 = vsel %vm292, 0, %v341
        %343 = vst [vmem:[#allocation2 + $0x144] sm:$0x8] %v342
        %v344 = vld [vmem:[#allocation2 + $0x158] sm:$0x8]
        %v345 = vsel %vm292, 0, %v344
        %346 = vst [vmem:[#allocation2 + $0x158] sm:$0x8] %v345
        %v347 = vld [vmem:[#allocation2 + $0x10] sm:$0x1]
        %v348 = vsel %vm278, 0, %v347
        %349 = vst [vmem:[#allocation2 + $0x10] sm:$0x1] %v348
        %v350 = vld [vmem:[#allocation2 + $0x24] sm:$0x1]
        %v351 = vsel %vm278, 0, %v350
        %352 = vst [vmem:[#allocation2 + $0x24] sm:$0x1] %v351
        %v353 = vld [vmem:[#allocation2 + $0x38] sm:$0x1]
        %v354 = vsel %vm278, 0, %v353
        %355 = vst [vmem:[#allocation2 + $0x38] sm:$0x1] %v354
        %v356 = vld [vmem:[#allocation2 + $0x4c] sm:$0x1]
        %v357 = vsel %vm278, 0, %v356
        %358 = vst [vmem:[#allocation2 + $0x4c] sm:$0x1] %v357
        %v359 = vld [vmem:[#allocation2 + $0x60] sm:$0x1]
        %v360 = vsel %vm278, 0, %v359
        %361 = vst [vmem:[#allocation2 + $0x60] sm:$0x1] %v360
        %v362 = vld [vmem:[#allocation2 + $0x74] sm:$0x1]
        %v363 = vsel %vm278, 0, %v362
        %364 = vst [vmem:[#allocation2 + $0x74] sm:$0x1] %v363
        %v365 = vld [vmem:[#allocation2 + $0x88] sm:$0x1]
        %v366 = vsel %vm278, 0, %v365
        %367 = vst [vmem:[#allocation2 + $0x88] sm:$0x1] %v366
        %v368 = vld [vmem:[#allocation2 + $0x9c] sm:$0x1]
        %v369 = vsel %vm278, 0, %v368
        %370 = vst [vmem:[#allocation2 + $0x9c] sm:$0x1] %v369
        %v371 = vld [vmem:[#allocation2 + $0xb0] sm:$0x1]
        %v372 = vsel %vm278, 0, %v371
        %373 = vst [vmem:[#allocation2 + $0xb0] sm:$0x1] %v372
        %v374 = vld [vmem:[#allocation2 + $0xc4] sm:$0x1]
        %v375 = vsel %vm278, 0, %v374
        %376 = vst [vmem:[#allocation2 + $0xc4] sm:$0x1] %v375
        %v377 = vld [vmem:[#allocation2 + $0xd8] sm:$0x1]
        %v378 = vsel %vm278, 0, %v377
        %379 = vst [vmem:[#allocation2 + $0xd8] sm:$0x1] %v378
        %v380 = vld [vmem:[#allocation2 + $0xec] sm:$0x1]
        %v381 = vsel %vm278, 0, %v380
        %382 = vst [vmem:[#allocation2 + $0xec] sm:$0x1] %v381
        %v383 = vld [vmem:[#allocation2 + $0x100] sm:$0x1]
        %v384 = vsel %vm278, 0, %v383
        %385 = vst [vmem:[#allocation2 + $0x100] sm:$0x1] %v384
        %v386 = vld [vmem:[#allocation2 + $0x114] sm:$0x1]
        %v387 = vsel %vm278, 0, %v386
        %388 = vst [vmem:[#allocation2 + $0x114] sm:$0x1] %v387
        %v389 = vld [vmem:[#allocation2 + $0x128] sm:$0x1]
        %v390 = vsel %vm278, 0, %v389
        %391 = vst [vmem:[#allocation2 + $0x128] sm:$0x1] %v390
        %v392 = vld [vmem:[#allocation2 + $0x13c] sm:$0x1]
        %v393 = vsel %vm278, 0, %v392
        %394 = vst [vmem:[#allocation2 + $0x13c] sm:$0x1] %v393
        %v395 = vld [vmem:[#allocation2 + $0x150] sm:$0x1]
        %v396 = vsel %vm278, 0, %v395
        %397 = vst [vmem:[#allocation2 + $0x150] sm:$0x1] %v396
        %v398 = vld [vmem:[#allocation2 + $0x164] sm:$0x1]
        %v399 = vsel %vm278, 0, %v398
        %400 = vst [vmem:[#allocation2 + $0x164] sm:$0x1] %v399
        %s401 = scalar_lea.vmem [#allocation2], 20
        %402 = vst.msk [vmem:[%s401 + $0x8] sm:$0xf] %vm271, %v239
        %403 = vst.msk [vmem:[%s401 + $0xc] sm:$0xf] %vm271, %v240
        %404 = vst.msk [vmem:[%s401 + $0x1c] sm:$0xf] %vm271, %v241
        %405 = vst.msk [vmem:[%s401 + $0x20] sm:$0xf] %vm271, %v242
        %406 = vst.msk [vmem:[%s401 + $0x30] sm:$0xf] %vm271, %v243
        %407 = vst.msk [vmem:[%s401 + $0x34] sm:$0xf] %vm271, %v244
        %408 = vst.msk [vmem:[%s401 + $0x44] sm:$0xf] %vm271, %v245
        %409 = vst.msk [vmem:[%s401 + $0x48] sm:$0xf] %vm271, %v246
        %410 = vst.msk [vmem:[%s401 + $0x58] sm:$0xf] %vm271, %v247
        %411 = vst.msk [vmem:[%s401 + $0x5c] sm:$0xf] %vm271, %v248
        %412 = vst.msk [vmem:[%s401 + $0x6c] sm:$0xf] %vm271, %v249
        %413 = vst.msk [vmem:[%s401 + $0x70] sm:$0xf] %vm271, %v250
        %414 = vst.msk [vmem:[%s401 + $0x80] sm:$0xf] %vm271, %v251
        %415 = vst.msk [vmem:[%s401 + $0x84] sm:$0xf] %vm271, %v252
        %416 = vst.msk [vmem:[%s401 + $0x94] sm:$0xf] %vm271, %v253
        %417 = vst.msk [vmem:[%s401 + $0x98] sm:$0xf] %vm271, %v254
        %418 = vst.msk [vmem:[%s401 + $0xa8] sm:$0xf] %vm271, %v255
        %419 = vst.msk [vmem:[%s401 + $0xac] sm:$0xf] %vm271, %v256
        %420 = vst.msk [vmem:[%s401 + $0xbc] sm:$0xf] %vm271, %v257
        %421 = vst.msk [vmem:[%s401 + $0xc0] sm:$0xf] %vm271, %v258
        %422 = vst.msk [vmem:[%s401 + $0xd0] sm:$0xf] %vm271, %v259
        %423 = vst.msk [vmem:[%s401 + $0xd4] sm:$0xf] %vm271, %v260
        %424 = vst.msk [vmem:[%s401 + $0xe4] sm:$0xf] %vm271, %v261
        %425 = vst.msk [vmem:[%s401 + $0xe8] sm:$0xf] %vm271, %v262
        %426 = vst.msk [vmem:[%s401 + $0xf8] sm:$0xf] %vm271, %v263
        %427 = vst.msk [vmem:[%s401 + $0xfc] sm:$0xf] %vm271, %v264
        %428 = vst.msk [vmem:[%s401 + $0x10c] sm:$0xf] %vm271, %v265
        %429 = vst.msk [vmem:[%s401 + $0x110] sm:$0xf] %vm271, %v266
        %430 = vst.msk [vmem:[%s401 + $0x120] sm:$0xf] %vm271, %v267
        %431 = vst.msk [vmem:[%s401 + $0x124] sm:$0xf] %vm271, %v268
        %432 = vst.msk [vmem:[%s401 + $0x134] sm:$0xf] %vm271, %v269
        %433 = vst.msk [vmem:[%s401 + $0x138] sm:$0xf] %vm271, %v270
        %v434 = vld [vmem:[%s4] sm:$0xff]
        %v435 = vld [vmem:[#allocation2 + $0x4] sm:$0x8]
        %v436 = vld [vmem:[#allocation2 + $0x8] sm:$0xf]
        %v437 = vld [vmem:[#allocation2 + $0xc] sm:$0xf]
        %v438 = vld [vmem:[#allocation2 + $0x18] sm:$0x8]
        %v439 = vld [vmem:[#allocation2 + $0x1c] sm:$0xf]
        %v440 = vld [vmem:[#allocation2 + $0x20] sm:$0xf]
        %v441 = vld [vmem:[#allocation2 + $0x2c] sm:$0x8]
        %v442 = vld [vmem:[#allocation2 + $0x30] sm:$0xf]
        %v443 = vld [vmem:[#allocation2 + $0x34] sm:$0xf]
        %v444 = vld [vmem:[#allocation2 + $0x40] sm:$0x8]
        %v445 = vld [vmem:[#allocation2 + $0x44] sm:$0xf]
        %v446 = vld [vmem:[#allocation2 + $0x48] sm:$0xf]
        %v447 = vld [vmem:[#allocation2 + $0x54] sm:$0x8]
        %v448 = vld [vmem:[#allocation2 + $0x58] sm:$0xf]
        %v449 = vld [vmem:[#allocation2 + $0x5c] sm:$0xf]
        %v450 = vld [vmem:[#allocation2 + $0x68] sm:$0x8]
        %v451 = vld [vmem:[#allocation2 + $0x6c] sm:$0xf]
        %v452 = vld [vmem:[#allocation2 + $0x70] sm:$0xf]
        %v453 = vld [vmem:[#allocation2 + $0x7c] sm:$0x8]
        %v454 = vld [vmem:[#allocation2 + $0x80] sm:$0xf]
        %v455 = vld [vmem:[#allocation2 + $0x84] sm:$0xf]
        %v456 = vld [vmem:[#allocation2 + $0x90] sm:$0x8]
        %v457 = vld [vmem:[#allocation2 + $0x94] sm:$0xf]
        %v458 = vld [vmem:[#allocation2 + $0x98] sm:$0xf]
        %v459 = vld [vmem:[#allocation2 + $0xa4] sm:$0x8]
        %v460 = vld [vmem:[#allocation2 + $0xa8] sm:$0xf]
        %v461 = vld [vmem:[#allocation2 + $0xac] sm:$0xf]
        %v462 = vld [vmem:[#allocation2 + $0xb8] sm:$0x8]
        %v463 = vld [vmem:[#allocation2 + $0xbc] sm:$0xf]
        %v464 = vld [vmem:[#allocation2 + $0xc0] sm:$0xf]
        %v465 = vld [vmem:[#allocation2 + $0xcc] sm:$0x8]
        %v466 = vld [vmem:[#allocation2 + $0xd0] sm:$0xf]
        %v467 = vld [vmem:[#allocation2 + $0xd4] sm:$0xf]
        %v468 = vld [vmem:[#allocation2 + $0xe0] sm:$0x8]
        %v469 = vld [vmem:[#allocation2 + $0xe4] sm:$0xf]
        %v470 = vld [vmem:[#allocation2 + $0xe8] sm:$0xf]
        %v471 = vld [vmem:[#allocation2 + $0xf4] sm:$0x8]
        %v472 = vld [vmem:[#allocation2 + $0xf8] sm:$0xf]
        %v473 = vld [vmem:[#allocation2 + $0xfc] sm:$0xf]
        %v474 = vld [vmem:[#allocation2 + $0x108] sm:$0x8]
        %v475 = vld [vmem:[#allocation2 + $0x10c] sm:$0xf]
        %v476 = vld [vmem:[#allocation2 + $0x110] sm:$0xf]
        %v477 = vld [vmem:[#allocation2 + $0x11c] sm:$0x8]
        %v478 = vld [vmem:[#allocation2 + $0x120] sm:$0xf]
        %v479 = vld [vmem:[#allocation2 + $0x124] sm:$0xf]
        %v480 = vld [vmem:[#allocation2 + $0x130] sm:$0x8]
        %v481 = vld [vmem:[#allocation2 + $0x134] sm:$0xf]
        %v482 = vld [vmem:[#allocation2 + $0x138] sm:$0xf]
        %vm483 = vsmask.f32 4368
        %vm484 = vmor %vm277, %vm483
        %v486 = vshrl.u32 %v435, 16
        %v488 = vrot.slane %v486, 7
        %v489 = vrot.slane %v488, 4
        %v491 = vshrl.u32 %v436, 16
        %v493 = vrot.slane %v491, 7
        %v494 = vshll.u32 %v436, 16
        %v496 = vor.u32 %v493, %v494
        %v497 = vsel %vm484, %v489, %v496
        %v498 = vrot.slane %v493, 4
        %v500 = vshrl.u32 %v437, 16
        %v502 = vrot.slane %v500, 7
        %v503 = vshll.u32 %v437, 16
        %v505 = vor.u32 %v502, %v503
        %v506 = vsel %vm484, %v498, %v505
        %v508 = vshrl.u32 %v438, 16
        %v510 = vrot.slane %v508, 7
        %v511 = vrot.slane %v510, 4
        %v513 = vshrl.u32 %v439, 16
        %v515 = vrot.slane %v513, 7
        %v516 = vshll.u32 %v439, 16
        %v518 = vor.u32 %v515, %v516
        %v519 = vsel %vm484, %v511, %v518
        %v520 = vrot.slane %v515, 4
        %v522 = vshrl.u32 %v440, 16
        %v524 = vrot.slane %v522, 7
        %v525 = vshll.u32 %v440, 16
        %v527 = vor.u32 %v524, %v525
        %v528 = vsel %vm484, %v520, %v527
        %v530 = vshrl.u32 %v441, 16
        %v532 = vrot.slane %v530, 7
        %v533 = vrot.slane %v532, 4
        %v535 = vshrl.u32 %v442, 16
        %v537 = vrot.slane %v535, 7
        %v538 = vshll.u32 %v442, 16
        %v540 = vor.u32 %v537, %v538
        %v541 = vsel %vm484, %v533, %v540
        %v542 = vrot.slane %v537, 4
        %v544 = vshrl.u32 %v443, 16
        %v546 = vrot.slane %v544, 7
        %v547 = vshll.u32 %v443, 16
        %v549 = vor.u32 %v546, %v547
        %v550 = vsel %vm484, %v542, %v549
        %v552 = vshrl.u32 %v444, 16
        %v554 = vrot.slane %v552, 7
        %v555 = vrot.slane %v554, 4
        %v557 = vshrl.u32 %v445, 16
        %v559 = vrot.slane %v557, 7
        %v560 = vshll.u32 %v445, 16
        %v562 = vor.u32 %v559, %v560
        %v563 = vsel %vm484, %v555, %v562
        %v564 = vrot.slane %v559, 4
        %v566 = vshrl.u32 %v446, 16
        %v568 = vrot.slane %v566, 7
        %v569 = vshll.u32 %v446, 16
        %v571 = vor.u32 %v568, %v569
        %v572 = vsel %vm484, %v564, %v571
        %v574 = vshrl.u32 %v447, 16
        %v576 = vrot.slane %v574, 7
        %v577 = vrot.slane %v576, 4
        %v579 = vshrl.u32 %v448, 16
        %v581 = vrot.slane %v579, 7
        %v582 = vshll.u32 %v448, 16
        %v584 = vor.u32 %v581, %v582
        %v585 = vsel %vm484, %v577, %v584
        %v586 = vrot.slane %v581, 4
        %v588 = vshrl.u32 %v449, 16
        %v590 = vrot.slane %v588, 7
        %v591 = vshll.u32 %v449, 16
        %v593 = vor.u32 %v590, %v591
        %v594 = vsel %vm484, %v586, %v593
        %v596 = vshrl.u32 %v450, 16
        %v598 = vrot.slane %v596, 7
        %v599 = vrot.slane %v598, 4
        %v601 = vshrl.u32 %v451, 16
        %v603 = vrot.slane %v601, 7
        %v604 = vshll.u32 %v451, 16
        %v606 = vor.u32 %v603, %v604
        %v607 = vsel %vm484, %v599, %v606
        %v608 = vrot.slane %v603, 4
        %v610 = vshrl.u32 %v452, 16
        %v612 = vrot.slane %v610, 7
        %v613 = vshll.u32 %v452, 16
        %v615 = vor.u32 %v612, %v613
        %v616 = vsel %vm484, %v608, %v615
        %v618 = vshrl.u32 %v453, 16
        %v620 = vrot.slane %v618, 7
        %v621 = vrot.slane %v620, 4
        %v623 = vshrl.u32 %v454, 16
        %v625 = vrot.slane %v623, 7
        %v626 = vshll.u32 %v454, 16
        %v628 = vor.u32 %v625, %v626
        %v629 = vsel %vm484, %v621, %v628
        %v630 = vrot.slane %v625, 4
        %v632 = vshrl.u32 %v455, 16
        %v634 = vrot.slane %v632, 7
        %v635 = vshll.u32 %v455, 16
        %v637 = vor.u32 %v634, %v635
        %v638 = vsel %vm484, %v630, %v637
        %v640 = vshrl.u32 %v456, 16
        %v642 = vrot.slane %v640, 7
        %v643 = vrot.slane %v642, 4
        %v645 = vshrl.u32 %v457, 16
        %v647 = vrot.slane %v645, 7
        %v648 = vshll.u32 %v457, 16
        %v650 = vor.u32 %v647, %v648
        %v651 = vsel %vm484, %v643, %v650
        %v652 = vrot.slane %v647, 4
        %v654 = vshrl.u32 %v458, 16
        %v656 = vrot.slane %v654, 7
        %v657 = vshll.u32 %v458, 16
        %v659 = vor.u32 %v656, %v657
        %v660 = vsel %vm484, %v652, %v659
        %v662 = vshrl.u32 %v459, 16
        %v664 = vrot.slane %v662, 7
        %v665 = vrot.slane %v664, 4
        %v667 = vshrl.u32 %v460, 16
        %v669 = vrot.slane %v667, 7
        %v670 = vshll.u32 %v460, 16
        %v672 = vor.u32 %v669, %v670
        %v673 = vsel %vm484, %v665, %v672
        %v674 = vrot.slane %v669, 4
        %v676 = vshrl.u32 %v461, 16
        %v678 = vrot.slane %v676, 7
        %v679 = vshll.u32 %v461, 16
        %v681 = vor.u32 %v678, %v679
        %v682 = vsel %vm484, %v674, %v681
        %v684 = vshrl.u32 %v462, 16
        %v686 = vrot.slane %v684, 7
        %v687 = vrot.slane %v686, 4
        %v689 = vshrl.u32 %v463, 16
        %v691 = vrot.slane %v689, 7
        %v692 = vshll.u32 %v463, 16
        %v694 = vor.u32 %v691, %v692
        %v695 = vsel %vm484, %v687, %v694
        %v696 = vrot.slane %v691, 4
        %v698 = vshrl.u32 %v464, 16
        %v700 = vrot.slane %v698, 7
        %v701 = vshll.u32 %v464, 16
        %v703 = vor.u32 %v700, %v701
        %v704 = vsel %vm484, %v696, %v703
        %v706 = vshrl.u32 %v465, 16
        %v708 = vrot.slane %v706, 7
        %v709 = vrot.slane %v708, 4
        %v711 = vshrl.u32 %v466, 16
        %v713 = vrot.slane %v711, 7
        %v714 = vshll.u32 %v466, 16
        %v716 = vor.u32 %v713, %v714
        %v717 = vsel %vm484, %v709, %v716
        %v718 = vrot.slane %v713, 4
        %v720 = vshrl.u32 %v467, 16
        %v722 = vrot.slane %v720, 7
        %v723 = vshll.u32 %v467, 16
        %v725 = vor.u32 %v722, %v723
        %v726 = vsel %vm484, %v718, %v725
        %v728 = vshrl.u32 %v468, 16
        %v730 = vrot.slane %v728, 7
        %v731 = vrot.slane %v730, 4
        %v733 = vshrl.u32 %v469, 16
        %v735 = vrot.slane %v733, 7
        %v736 = vshll.u32 %v469, 16
        %v738 = vor.u32 %v735, %v736
        %v739 = vsel %vm484, %v731, %v738
        %v740 = vrot.slane %v735, 4
        %v742 = vshrl.u32 %v470, 16
        %v744 = vrot.slane %v742, 7
        %v745 = vshll.u32 %v470, 16
        %v747 = vor.u32 %v744, %v745
        %v748 = vsel %vm484, %v740, %v747
        %v750 = vshrl.u32 %v471, 16
        %v752 = vrot.slane %v750, 7
        %v753 = vrot.slane %v752, 4
        %v755 = vshrl.u32 %v472, 16
        %v757 = vrot.slane %v755, 7
        %v758 = vshll.u32 %v472, 16
        %v760 = vor.u32 %v757, %v758
        %v761 = vsel %vm484, %v753, %v760
        %v762 = vrot.slane %v757, 4
        %v764 = vshrl.u32 %v473, 16
        %v766 = vrot.slane %v764, 7
        %v767 = vshll.u32 %v473, 16
        %v769 = vor.u32 %v766, %v767
        %v770 = vsel %vm484, %v762, %v769
        %v772 = vshrl.u32 %v474, 16
        %v774 = vrot.slane %v772, 7
        %v775 = vrot.slane %v774, 4
        %v777 = vshrl.u32 %v475, 16
        %v779 = vrot.slane %v777, 7
        %v780 = vshll.u32 %v475, 16
        %v782 = vor.u32 %v779, %v780
        %v783 = vsel %vm484, %v775, %v782
        %v784 = vrot.slane %v779, 4
        %v786 = vshrl.u32 %v476, 16
        %v788 = vrot.slane %v786, 7
        %v789 = vshll.u32 %v476, 16
        %v791 = vor.u32 %v788, %v789
        %v792 = vsel %vm484, %v784, %v791
        %v794 = vshrl.u32 %v477, 16
        %v796 = vrot.slane %v794, 7
        %v797 = vrot.slane %v796, 4
        %v799 = vshrl.u32 %v478, 16
        %v801 = vrot.slane %v799, 7
        %v802 = vshll.u32 %v478, 16
        %v804 = vor.u32 %v801, %v802
        %v805 = vsel %vm484, %v797, %v804
        %v806 = vrot.slane %v801, 4
        %v808 = vshrl.u32 %v479, 16
        %v810 = vrot.slane %v808, 7
        %v811 = vshll.u32 %v479, 16
        %v813 = vor.u32 %v810, %v811
        %v814 = vsel %vm484, %v806, %v813
        %v816 = vshrl.u32 %v480, 16
        %v818 = vrot.slane %v816, 7
        %v819 = vrot.slane %v818, 4
        %v821 = vshrl.u32 %v481, 16
        %v823 = vrot.slane %v821, 7
        %v824 = vshll.u32 %v481, 16
        %v826 = vor.u32 %v823, %v824
        %v827 = vsel %vm484, %v819, %v826
        %v828 = vrot.slane %v823, 4
        %v830 = vshrl.u32 %v482, 16
        %v832 = vrot.slane %v830, 7
        %v833 = vshll.u32 %v482, 16
        %v835 = vor.u32 %v832, %v833
        %v836 = vsel %vm484, %v828, %v835
        %v837 = vld [vmem:[%s1] sm:$0x3]
        %s838 = scalar_lea.vmem %s1, 2
        %v839 = vld [vmem:[%s838] sm:$0x3]
        %v872 = vunpack.c.l.b16 %v436
        %v873 = vunpack.c.l.b16 %v437
        %v874 = vunpack.c.l.b16 %v439
        %v875 = vunpack.c.l.b16 %v440
        %v876 = vunpack.c.l.b16 %v442
        %v877 = vunpack.c.l.b16 %v443
        %v878 = vunpack.c.l.b16 %v445
        %v879 = vunpack.c.l.b16 %v446
        %v880 = vunpack.c.l.b16 %v448
        %v881 = vunpack.c.l.b16 %v449
        %v882 = vunpack.c.l.b16 %v451
        %v883 = vunpack.c.l.b16 %v452
        %v884 = vunpack.c.l.b16 %v454
        %v885 = vunpack.c.l.b16 %v455
        %v886 = vunpack.c.l.b16 %v457
        %v887 = vunpack.c.l.b16 %v458
        %v888 = vunpack.c.l.b16 %v460
        %v889 = vunpack.c.l.b16 %v461
        %v890 = vunpack.c.l.b16 %v463
        %v891 = vunpack.c.l.b16 %v464
        %v892 = vunpack.c.l.b16 %v466
        %v893 = vunpack.c.l.b16 %v467
        %v894 = vunpack.c.l.b16 %v469
        %v895 = vunpack.c.l.b16 %v470
        %v896 = vunpack.c.l.b16 %v472
        %v897 = vunpack.c.l.b16 %v473
        %v898 = vunpack.c.l.b16 %v475
        %v899 = vunpack.c.l.b16 %v476
        %v900 = vunpack.c.l.b16 %v478
        %v901 = vunpack.c.l.b16 %v479
        %v902 = vunpack.c.l.b16 %v481
        %v903 = vunpack.c.l.b16 %v482
        %v904 = vpack.c.b16 %v873, %v872
        %v905 = vpack.c.b16 %v875, %v874
        %v906 = vpack.c.b16 %v877, %v876
        %v907 = vpack.c.b16 %v879, %v878
        %v908 = vpack.c.b16 %v881, %v880
        %v909 = vpack.c.b16 %v883, %v882
        %v910 = vpack.c.b16 %v885, %v884
        %v911 = vpack.c.b16 %v887, %v886
        %v912 = vpack.c.b16 %v889, %v888
        %v913 = vpack.c.b16 %v891, %v890
        %v914 = vpack.c.b16 %v893, %v892
        %v915 = vpack.c.b16 %v895, %v894
        %v916 = vpack.c.b16 %v897, %v896
        %v917 = vpack.c.b16 %v899, %v898
        %v918 = vpack.c.b16 %v901, %v900
        %v919 = vpack.c.b16 %v903, %v902
        %vm920 = vcmask 31744
        %v922 = vsel %vm920, %v904, 0
        %v925 = vsel %vm920, %v905, 0
        %v928 = vsel %vm920, %v906, 0
        %v931 = vsel %vm920, %v907, 0
        %v934 = vsel %vm920, %v908, 0
        %v937 = vsel %vm920, %v909, 0
        %v940 = vsel %vm920, %v910, 0
        %v943 = vsel %vm920, %v911, 0
        %v946 = vsel %vm920, %v912, 0
        %v949 = vsel %vm920, %v913, 0
        %v952 = vsel %vm920, %v914, 0
        %v955 = vsel %vm920, %v915, 0
        %v958 = vsel %vm920, %v916, 0
        %v961 = vsel %vm920, %v917, 0
        %v964 = vsel %vm920, %v918, 0
        %v967 = vsel %vm920, %v919, 0
        %vm969 = vcmask 1041408
        %v971 = vsel %vm969, %v839, 0
        %973 = vmatprep.subr.bf16.mxu0 0
        %974 = vmatpush1.bf16.msra.mxu0 %v971
        %975 = vmatprep.subr.bf16.mxu0 0
        %976 = vmatpush1.bf16.msra.mxu0 0
        %977 = vmatprep.subr.bf16.mxu0 0
        %978 = vmatpush1.bf16.msra.mxu0 0
        %979 = vmatprep.subr.bf16.mxu0 0
        %980 = vmatpush1.bf16.msra.mxu0 0
        %981 = vmatprep.subr.bf16.mxu0 0
        %982 = vmatpush1.bf16.msra.mxu0 0
        %983 = vmatprep.subr.bf16.mxu0 0
        %984 = vmatpush1.bf16.msra.mxu0 0
        %985 = vmatprep.subr.bf16.mxu0 0
        %986 = vmatpush1.bf16.msra.mxu0 0
        %987 = vmatprep.subr.bf16.mxu0 0
        %988 = vmatpush1.bf16.msra.mxu0 0
        %989 = vmatprep.subr.bf16.mxu0 0
        %990 = vmatpush1.bf16.msra.mxu0 0
        %991 = vmatprep.subr.bf16.mxu0 0
        %992 = vmatpush1.bf16.msra.mxu0 0
        %993 = vmatprep.subr.bf16.mxu0 0
        %994 = vmatpush1.bf16.msra.mxu0 0
        %995 = vmatprep.subr.bf16.mxu0 0
        %996 = vmatpush1.bf16.msra.mxu0 0
        %997 = vmatprep.subr.bf16.mxu0 0
        %998 = vmatpush1.bf16.msra.mxu0 0
        %999 = vmatprep.subr.bf16.mxu0 0
        %1000 = vmatpush1.bf16.msra.mxu0 0
        %1001 = vmatprep.subr.bf16.mxu0 0
        %1002 = vmatpush1.bf16.msra.mxu0 0
        %1003 = vmatprep.subr.bf16.mxu0 0
        %1004 = vmatpush1.bf16.msra.mxu0 0
        %1005 = vmatprep.mubr.bf16.mxu0 0
        %1006 = vmatmul.mubr.bf16.gmra.mrb[0].mxu0 %v922
        %v1007 = vpop.f32.mrb[0].mxu0
        %v1008 = vadd.f32 0.0, %v1007
        %v1009 = vpop.f32.mrb[0].mxu0
        %v1010 = vpop.f32.mrb[0].mxu0
        %v1011 = vadd.f32 0.0, %v1010
        %v1012 = vpop.f32.mrb[0].mxu0
        %1013 = vmatprep.mubr.bf16.mxu0 0
        %1014 = vmatmul.mubr.bf16.gmra.mrb[0].mxu0 %v925
        %v1015 = vpop.f32.mrb[0].mxu0
        %v1016 = vadd.f32 0.0, %v1015
        %v1017 = vpop.f32.mrb[0].mxu0
        %v1018 = vpop.f32.mrb[0].mxu0
        %v1019 = vadd.f32 0.0, %v1018
        %v1020 = vpop.f32.mrb[0].mxu0
        %1021 = vmatprep.mubr.bf16.mxu0 0
        %1022 = vmatmul.mubr.bf16.gmra.mrb[0].mxu0 %v928
        %v1023 = vpop.f32.mrb[0].mxu0
        %v1024 = vadd.f32 0.0, %v1023
        %v1025 = vpop.f32.mrb[0].mxu0
        %v1026 = vpop.f32.mrb[0].mxu0
        %v1027 = vadd.f32 0.0, %v1026
        %v1028 = vpop.f32.mrb[0].mxu0
        %1029 = vmatprep.mubr.bf16.mxu0 0
        %1030 = vmatmul.mubr.bf16.gmra.mrb[0].mxu0 %v931
        %v1031 = vpop.f32.mrb[0].mxu0
        %v1032 = vadd.f32 0.0, %v1031
        %v1033 = vpop.f32.mrb[0].mxu0
        %v1034 = vpop.f32.mrb[0].mxu0
        %v1035 = vadd.f32 0.0, %v1034
        %v1036 = vpop.f32.mrb[0].mxu0
        %1037 = vmatprep.mubr.bf16.mxu0 0
        %1038 = vmatmul.mubr.bf16.gmra.mrb[0].mxu0 %v934
        %v1039 = vpop.f32.mrb[0].mxu0
        %v1040 = vadd.f32 0.0, %v1039
        %v1041 = vpop.f32.mrb[0].mxu0
        %v1042 = vpop.f32.mrb[0].mxu0
        %v1043 = vadd.f32 0.0, %v1042
        %v1044 = vpop.f32.mrb[0].mxu0
        %1045 = vmatprep.mubr.bf16.mxu0 0
        %1046 = vmatmul.mubr.bf16.gmra.mrb[0].mxu0 %v937
        %v1047 = vpop.f32.mrb[0].mxu0
        %v1048 = vadd.f32 0.0, %v1047
        %v1049 = vpop.f32.mrb[0].mxu0
        %v1050 = vpop.f32.mrb[0].mxu0
        %v1051 = vadd.f32 0.0, %v1050
        %v1052 = vpop.f32.mrb[0].mxu0
        %1053 = vmatprep.mubr.bf16.mxu0 0
        %1054 = vmatmul.mubr.bf16.gmra.mrb[0].mxu0 %v940
        %v1055 = vpop.f32.mrb[0].mxu0
        %v1056 = vadd.f32 0.0, %v1055
        %v1057 = vpop.f32.mrb[0].mxu0
        %v1058 = vpop.f32.mrb[0].mxu0
        %v1059 = vadd.f32 0.0, %v1058
        %v1060 = vpop.f32.mrb[0].mxu0
        %1061 = vmatprep.mubr.bf16.mxu0 0
        %1062 = vmatmul.mubr.bf16.gmra.mrb[0].mxu0 %v943
        %v1063 = vpop.f32.mrb[0].mxu0
        %v1064 = vadd.f32 0.0, %v1063
        %v1065 = vpop.f32.mrb[0].mxu0
        %v1066 = vpop.f32.mrb[0].mxu0
        %v1067 = vadd.f32 0.0, %v1066
        %v1068 = vpop.f32.mrb[0].mxu0
        %1069 = vmatprep.mubr.bf16.mxu0 0
        %1070 = vmatmul.mubr.bf16.gmra.mrb[0].mxu0 %v946
        %v1071 = vpop.f32.mrb[0].mxu0
        %v1072 = vadd.f32 0.0, %v1071
        %v1073 = vpop.f32.mrb[0].mxu0
        %v1074 = vpop.f32.mrb[0].mxu0
        %v1075 = vadd.f32 0.0, %v1074
        %v1076 = vpop.f32.mrb[0].mxu0
        %1077 = vmatprep.mubr.bf16.mxu0 0
        %1078 = vmatmul.mubr.bf16.gmra.mrb[0].mxu0 %v949
        %v1079 = vpop.f32.mrb[0].mxu0
        %v1080 = vadd.f32 0.0, %v1079
        %v1081 = vpop.f32.mrb[0].mxu0
        %v1082 = vpop.f32.mrb[0].mxu0
        %v1083 = vadd.f32 0.0, %v1082
        %v1084 = vpop.f32.mrb[0].mxu0
        %1085 = vmatprep.mubr.bf16.mxu0 0
        %1086 = vmatmul.mubr.bf16.gmra.mrb[0].mxu0 %v952
        %v1087 = vpop.f32.mrb[0].mxu0
        %v1088 = vadd.f32 0.0, %v1087
        %v1089 = vpop.f32.mrb[0].mxu0
        %v1090 = vpop.f32.mrb[0].mxu0
        %v1091 = vadd.f32 0.0, %v1090
        %v1092 = vpop.f32.mrb[0].mxu0
        %1093 = vmatprep.mubr.bf16.mxu0 0
        %1094 = vmatmul.mubr.bf16.gmra.mrb[0].mxu0 %v955
        %v1095 = vpop.f32.mrb[0].mxu0
        %v1096 = vadd.f32 0.0, %v1095
        %v1097 = vpop.f32.mrb[0].mxu0
        %v1098 = vpop.f32.mrb[0].mxu0
        %v1099 = vadd.f32 0.0, %v1098
        %v1100 = vpop.f32.mrb[0].mxu0
        %1101 = vmatprep.mubr.bf16.mxu0 0
        %1102 = vmatmul.mubr.bf16.gmra.mrb[0].mxu0 %v958
        %v1103 = vpop.f32.mrb[0].mxu0
        %v1104 = vadd.f32 0.0, %v1103
        %v1105 = vpop.f32.mrb[0].mxu0
        %v1106 = vpop.f32.mrb[0].mxu0
        %v1107 = vadd.f32 0.0, %v1106
        %v1108 = vpop.f32.mrb[0].mxu0
        %1109 = vmatprep.mubr.bf16.mxu0 0
        %1110 = vmatmul.mubr.bf16.gmra.mrb[0].mxu0 %v961
        %v1111 = vpop.f32.mrb[0].mxu0
        %v1112 = vadd.f32 0.0, %v1111
        %v1113 = vpop.f32.mrb[0].mxu0
        %v1114 = vpop.f32.mrb[0].mxu0
        %v1115 = vadd.f32 0.0, %v1114
        %v1116 = vpop.f32.mrb[0].mxu0
        %1117 = vmatprep.mubr.bf16.mxu0 0
        %1118 = vmatmul.mubr.bf16.gmra.mrb[0].mxu0 %v964
        %v1119 = vpop.f32.mrb[0].mxu0
        %v1120 = vadd.f32 0.0, %v1119
        %v1121 = vpop.f32.mrb[0].mxu0
        %v1122 = vpop.f32.mrb[0].mxu0
        %v1123 = vadd.f32 0.0, %v1122
        %v1124 = vpop.f32.mrb[0].mxu0
        %1125 = vmatprep.mubr.bf16.mxu0 0
        %1126 = vmatmul.mubr.bf16.gmra.mrb[0].mxu0 %v967
        %v1127 = vpop.f32.mrb[0].mxu0
        %v1128 = vadd.f32 0.0, %v1127
        %v1129 = vpop.f32.mrb[0].mxu0
        %v1130 = vpop.f32.mrb[0].mxu0
        %v1131 = vadd.f32 0.0, %v1130
        %v1132 = vpop.f32.mrb[0].mxu0
        %1133 = vdwg.mxu0
        %v1134 = vunpack.c.l.b16 %v497
        %v1135 = vunpack.c.l.b16 %v506
        %v1136 = vunpack.c.l.b16 %v519
        %v1137 = vunpack.c.l.b16 %v528
        %v1138 = vunpack.c.l.b16 %v541
        %v1139 = vunpack.c.l.b16 %v550
        %v1140 = vunpack.c.l.b16 %v563
        %v1141 = vunpack.c.l.b16 %v572
        %v1142 = vunpack.c.l.b16 %v585
        %v1143 = vunpack.c.l.b16 %v594
        %v1144 = vunpack.c.l.b16 %v607
        %v1145 = vunpack.c.l.b16 %v616
        %v1146 = vunpack.c.l.b16 %v629
        %v1147 = vunpack.c.l.b16 %v638
        %v1148 = vunpack.c.l.b16 %v651
        %v1149 = vunpack.c.l.b16 %v660
        %v1150 = vunpack.c.l.b16 %v673
        %v1151 = vunpack.c.l.b16 %v682
        %v1152 = vunpack.c.l.b16 %v695
        %v1153 = vunpack.c.l.b16 %v704
        %v1154 = vunpack.c.l.b16 %v717
        %v1155 = vunpack.c.l.b16 %v726
        %v1156 = vunpack.c.l.b16 %v739
        %v1157 = vunpack.c.l.b16 %v748
        %v1158 = vunpack.c.l.b16 %v761
        %v1159 = vunpack.c.l.b16 %v770
        %v1160 = vunpack.c.l.b16 %v783
        %v1161 = vunpack.c.l.b16 %v792
        %v1162 = vunpack.c.l.b16 %v805
        %v1163 = vunpack.c.l.b16 %v814
        %v1164 = vunpack.c.l.b16 %v827
        %v1165 = vunpack.c.l.b16 %v836
        %v1166 = vpack.c.b16 %v1135, %v1134
        %v1167 = vpack.c.b16 %v1137, %v1136
        %v1168 = vpack.c.b16 %v1139, %v1138
        %v1169 = vpack.c.b16 %v1141, %v1140
        %v1170 = vpack.c.b16 %v1143, %v1142
        %v1171 = vpack.c.b16 %v1145, %v1144
        %v1172 = vpack.c.b16 %v1147, %v1146
        %v1173 = vpack.c.b16 %v1149, %v1148
        %v1174 = vpack.c.b16 %v1151, %v1150
        %v1175 = vpack.c.b16 %v1153, %v1152
        %v1176 = vpack.c.b16 %v1155, %v1154
        %v1177 = vpack.c.b16 %v1157, %v1156
        %v1178 = vpack.c.b16 %v1159, %v1158
        %v1179 = vpack.c.b16 %v1161, %v1160
        %v1180 = vpack.c.b16 %v1163, %v1162
        %v1181 = vpack.c.b16 %v1165, %v1164
        %v1183 = vsel %vm920, %v1166, 0
        %v1186 = vsel %vm920, %v1167, 0
        %v1189 = vsel %vm920, %v1168, 0
        %v1192 = vsel %vm920, %v1169, 0
        %v1195 = vsel %vm920, %v1170, 0
        %v1198 = vsel %vm920, %v1171, 0
        %v1201 = vsel %vm920, %v1172, 0
        %v1204 = vsel %vm920, %v1173, 0
        %v1207 = vsel %vm920, %v1174, 0
        %v1210 = vsel %vm920, %v1175, 0
        %v1213 = vsel %vm920, %v1176, 0
        %v1216 = vsel %vm920, %v1177, 0
        %v1219 = vsel %vm920, %v1178, 0
        %v1222 = vsel %vm920, %v1179, 0
        %v1225 = vsel %vm920, %v1180, 0
        %v1228 = vsel %vm920, %v1181, 0
        %v1231 = vsel %vm969, %v837, 0
        %1233 = vmatprep.subr.bf16.mxu0 0
        %1234 = vmatpush1.bf16.msra.mxu0 %v1231
        %1235 = vmatprep.subr.bf16.mxu0 0
        %1236 = vmatpush1.bf16.msra.mxu0 0
        %1237 = vmatprep.subr.bf16.mxu0 0
        %1238 = vmatpush1.bf16.msra.mxu0 0
        %1239 = vmatprep.subr.bf16.mxu0 0
        %1240 = vmatpush1.bf16.msra.mxu0 0
        %1241 = vmatprep.subr.bf16.mxu0 0
        %1242 = vmatpush1.bf16.msra.mxu0 0
        %1243 = vmatprep.subr.bf16.mxu0 0
        %1244 = vmatpush1.bf16.msra.mxu0 0
        %1245 = vmatprep.subr.bf16.mxu0 0
        %1246 = vmatpush1.bf16.msra.mxu0 0
        %1247 = vmatprep.subr.bf16.mxu0 0
        %1248 = vmatpush1.bf16.msra.mxu0 0
        %1249 = vmatprep.subr.bf16.mxu0 0
        %1250 = vmatpush1.bf16.msra.mxu0 0
        %1251 = vmatprep.subr.bf16.mxu0 0
        %1252 = vmatpush1.bf16.msra.mxu0 0
        %1253 = vmatprep.subr.bf16.mxu0 0
        %1254 = vmatpush1.bf16.msra.mxu0 0
        %1255 = vmatprep.subr.bf16.mxu0 0
        %1256 = vmatpush1.bf16.msra.mxu0 0
        %1257 = vmatprep.subr.bf16.mxu0 0
        %1258 = vmatpush1.bf16.msra.mxu0 0
        %1259 = vmatprep.subr.bf16.mxu0 0
        %1260 = vmatpush1.bf16.msra.mxu0 0
        %1261 = vmatprep.subr.bf16.mxu0 0
        %1262 = vmatpush1.bf16.msra.mxu0 0
        %1263 = vmatprep.subr.bf16.mxu0 0
        %1264 = vmatpush1.bf16.msra.mxu0 0
        %1265 = vmatprep.mubr.bf16.mxu0 0
        %1266 = vmatmul.mubr.bf16.gmra.mrb[0].mxu0 %v1183
        %v1267 = vpop.f32.mrb[0].mxu0
        %v1268 = vadd.f32 %v1008, %v1267
        %v1269 = vpop.f32.mrb[0].mxu0
        %v1270 = vpop.f32.mrb[0].mxu0
        %v1271 = vadd.f32 %v1011, %v1270
        %v1272 = vpop.f32.mrb[0].mxu0
        %1273 = vmatprep.mubr.bf16.mxu0 0
        %1274 = vmatmul.mubr.bf16.gmra.mrb[0].mxu0 %v1186
        %v1275 = vpop.f32.mrb[0].mxu0
        %v1276 = vadd.f32 %v1016, %v1275
        %v1277 = vpop.f32.mrb[0].mxu0
        %v1278 = vpop.f32.mrb[0].mxu0
        %v1279 = vadd.f32 %v1019, %v1278
        %v1280 = vpop.f32.mrb[0].mxu0
        %1281 = vmatprep.mubr.bf16.mxu0 0
        %1282 = vmatmul.mubr.bf16.gmra.mrb[0].mxu0 %v1189
        %v1283 = vpop.f32.mrb[0].mxu0
        %v1284 = vadd.f32 %v1024, %v1283
        %v1285 = vpop.f32.mrb[0].mxu0
        %v1286 = vpop.f32.mrb[0].mxu0
        %v1287 = vadd.f32 %v1027, %v1286
        %v1288 = vpop.f32.mrb[0].mxu0
        %1289 = vmatprep.mubr.bf16.mxu0 0
        %1290 = vmatmul.mubr.bf16.gmra.mrb[0].mxu0 %v1192
        %v1291 = vpop.f32.mrb[0].mxu0
        %v1292 = vadd.f32 %v1032, %v1291
        %v1293 = vpop.f32.mrb[0].mxu0
        %v1294 = vpop.f32.mrb[0].mxu0
        %v1295 = vadd.f32 %v1035, %v1294
        %v1296 = vpop.f32.mrb[0].mxu0
        %1297 = vmatprep.mubr.bf16.mxu0 0
        %1298 = vmatmul.mubr.bf16.gmra.mrb[0].mxu0 %v1195
        %v1299 = vpop.f32.mrb[0].mxu0
        %v1300 = vadd.f32 %v1040, %v1299
        %v1301 = vpop.f32.mrb[0].mxu0
        %v1302 = vpop.f32.mrb[0].mxu0
        %v1303 = vadd.f32 %v1043, %v1302
        %v1304 = vpop.f32.mrb[0].mxu0
        %1305 = vmatprep.mubr.bf16.mxu0 0
        %1306 = vmatmul.mubr.bf16.gmra.mrb[0].mxu0 %v1198
        %v1307 = vpop.f32.mrb[0].mxu0
        %v1308 = vadd.f32 %v1048, %v1307
        %v1309 = vpop.f32.mrb[0].mxu0
        %v1310 = vpop.f32.mrb[0].mxu0
        %v1311 = vadd.f32 %v1051, %v1310
        %v1312 = vpop.f32.mrb[0].mxu0
        %1313 = vmatprep.mubr.bf16.mxu0 0
        %1314 = vmatmul.mubr.bf16.gmra.mrb[0].mxu0 %v1201
        %v1315 = vpop.f32.mrb[0].mxu0
        %v1316 = vadd.f32 %v1056, %v1315
        %v1317 = vpop.f32.mrb[0].mxu0
        %v1318 = vpop.f32.mrb[0].mxu0
        %v1319 = vadd.f32 %v1059, %v1318
        %v1320 = vpop.f32.mrb[0].mxu0
        %1321 = vmatprep.mubr.bf16.mxu0 0
        %1322 = vmatmul.mubr.bf16.gmra.mrb[0].mxu0 %v1204
        %v1323 = vpop.f32.mrb[0].mxu0
        %v1324 = vadd.f32 %v1064, %v1323
        %v1325 = vpop.f32.mrb[0].mxu0
        %v1326 = vpop.f32.mrb[0].mxu0
        %v1327 = vadd.f32 %v1067, %v1326
        %v1328 = vpop.f32.mrb[0].mxu0
        %1329 = vmatprep.mubr.bf16.mxu0 0
        %1330 = vmatmul.mubr.bf16.gmra.mrb[0].mxu0 %v1207
        %v1331 = vpop.f32.mrb[0].mxu0
        %v1332 = vadd.f32 %v1072, %v1331
        %v1333 = vpop.f32.mrb[0].mxu0
        %v1334 = vpop.f32.mrb[0].mxu0
        %v1335 = vadd.f32 %v1075, %v1334
        %v1336 = vpop.f32.mrb[0].mxu0
        %1337 = vmatprep.mubr.bf16.mxu0 0
        %1338 = vmatmul.mubr.bf16.gmra.mrb[0].mxu0 %v1210
        %v1339 = vpop.f32.mrb[0].mxu0
        %v1340 = vadd.f32 %v1080, %v1339
        %v1341 = vpop.f32.mrb[0].mxu0
        %v1342 = vpop.f32.mrb[0].mxu0
        %v1343 = vadd.f32 %v1083, %v1342
        %v1344 = vpop.f32.mrb[0].mxu0
        %1345 = vmatprep.mubr.bf16.mxu0 0
        %1346 = vmatmul.mubr.bf16.gmra.mrb[0].mxu0 %v1213
        %v1347 = vpop.f32.mrb[0].mxu0
        %v1348 = vadd.f32 %v1088, %v1347
        %v1349 = vpop.f32.mrb[0].mxu0
        %v1350 = vpop.f32.mrb[0].mxu0
        %v1351 = vadd.f32 %v1091, %v1350
        %v1352 = vpop.f32.mrb[0].mxu0
        %1353 = vmatprep.mubr.bf16.mxu0 0
        %1354 = vmatmul.mubr.bf16.gmra.mrb[0].mxu0 %v1216
        %v1355 = vpop.f32.mrb[0].mxu0
        %v1356 = vadd.f32 %v1096, %v1355
        %v1357 = vpop.f32.mrb[0].mxu0
        %v1358 = vpop.f32.mrb[0].mxu0
        %v1359 = vadd.f32 %v1099, %v1358
        %v1360 = vpop.f32.mrb[0].mxu0
        %1361 = vmatprep.mubr.bf16.mxu0 0
        %1362 = vmatmul.mubr.bf16.gmra.mrb[0].mxu0 %v1219
        %v1363 = vpop.f32.mrb[0].mxu0
        %v1364 = vadd.f32 %v1104, %v1363
        %v1365 = vpop.f32.mrb[0].mxu0
        %v1366 = vpop.f32.mrb[0].mxu0
        %v1367 = vadd.f32 %v1107, %v1366
        %v1368 = vpop.f32.mrb[0].mxu0
        %1369 = vmatprep.mubr.bf16.mxu0 0
        %1370 = vmatmul.mubr.bf16.gmra.mrb[0].mxu0 %v1222
        %v1371 = vpop.f32.mrb[0].mxu0
        %v1372 = vadd.f32 %v1112, %v1371
        %v1373 = vpop.f32.mrb[0].mxu0
        %v1374 = vpop.f32.mrb[0].mxu0
        %v1375 = vadd.f32 %v1115, %v1374
        %v1376 = vpop.f32.mrb[0].mxu0
        %1377 = vmatprep.mubr.bf16.mxu0 0
        %1378 = vmatmul.mubr.bf16.gmra.mrb[0].mxu0 %v1225
        %v1379 = vpop.f32.mrb[0].mxu0
        %v1380 = vadd.f32 %v1120, %v1379
        %v1381 = vpop.f32.mrb[0].mxu0
        %v1382 = vpop.f32.mrb[0].mxu0
        %v1383 = vadd.f32 %v1123, %v1382
        %v1384 = vpop.f32.mrb[0].mxu0
        %1385 = vmatprep.mubr.bf16.mxu0 0
        %1386 = vmatmul.mubr.bf16.gmra.mrb[0].mxu0 %v1228
        %v1387 = vpop.f32.mrb[0].mxu0
        %v1388 = vadd.f32 %v1128, %v1387
        %v1389 = vpop.f32.mrb[0].mxu0
        %v1390 = vpop.f32.mrb[0].mxu0
        %v1391 = vadd.f32 %v1131, %v1390
        %v1392 = vpop.f32.mrb[0].mxu0
        %1393 = vdwg.mxu0
        %v1394 = vld [vmem:[#allocation2 + $0x8] sm:$0xf]
        %v1395 = vld [vmem:[#allocation2 + $0xc] sm:$0xf]
        %v1396 = vld [vmem:[#allocation2 + $0x10] sm:$0x1]
        %v1397 = vld [vmem:[#allocation2 + $0x1c] sm:$0xf]
        %v1398 = vld [vmem:[#allocation2 + $0x20] sm:$0xf]
        %v1399 = vld [vmem:[#allocation2 + $0x24] sm:$0x1]
        %v1400 = vld [vmem:[#allocation2 + $0x30] sm:$0xf]
        %v1401 = vld [vmem:[#allocation2 + $0x34] sm:$0xf]
        %v1402 = vld [vmem:[#allocation2 + $0x38] sm:$0x1]
        %v1403 = vld [vmem:[#allocation2 + $0x44] sm:$0xf]
        %v1404 = vld [vmem:[#allocation2 + $0x48] sm:$0xf]
        %v1405 = vld [vmem:[#allocation2 + $0x4c] sm:$0x1]
        %v1406 = vld [vmem:[#allocation2 + $0x58] sm:$0xf]
        %v1407 = vld [vmem:[#allocation2 + $0x5c] sm:$0xf]
        %v1408 = vld [vmem:[#allocation2 + $0x60] sm:$0x1]
        %v1409 = vld [vmem:[#allocation2 + $0x6c] sm:$0xf]
        %v1410 = vld [vmem:[#allocation2 + $0x70] sm:$0xf]
        %v1411 = vld [vmem:[#allocation2 + $0x74] sm:$0x1]
        %v1412 = vld [vmem:[#allocation2 + $0x80] sm:$0xf]
        %v1413 = vld [vmem:[#allocation2 + $0x84] sm:$0xf]
        %v1414 = vld [vmem:[#allocation2 + $0x88] sm:$0x1]
        %v1415 = vld [vmem:[#allocation2 + $0x94] sm:$0xf]
        %v1416 = vld [vmem:[#allocation2 + $0x98] sm:$0xf]
        %v1417 = vld [vmem:[#allocation2 + $0x9c] sm:$0x1]
        %v1418 = vld [vmem:[#allocation2 + $0xa8] sm:$0xf]
        %v1419 = vld [vmem:[#allocation2 + $0xac] sm:$0xf]
        %v1420 = vld [vmem:[#allocation2 + $0xb0] sm:$0x1]
        %v1421 = vld [vmem:[#allocation2 + $0xbc] sm:$0xf]
        %v1422 = vld [vmem:[#allocation2 + $0xc0] sm:$0xf]
        %v1423 = vld [vmem:[#allocation2 + $0xc4] sm:$0x1]
        %v1424 = vld [vmem:[#allocation2 + $0xd0] sm:$0xf]
        %v1425 = vld [vmem:[#allocation2 + $0xd4] sm:$0xf]
        %v1426 = vld [vmem:[#allocation2 + $0xd8] sm:$0x1]
        %v1427 = vld [vmem:[#allocation2 + $0xe4] sm:$0xf]
        %v1428 = vld [vmem:[#allocation2 + $0xe8] sm:$0xf]
        %v1429 = vld [vmem:[#allocation2 + $0xec] sm:$0x1]
        %v1430 = vld [vmem:[#allocation2 + $0xf8] sm:$0xf]
        %v1431 = vld [vmem:[#allocation2 + $0xfc] sm:$0xf]
        %v1432 = vld [vmem:[#allocation2 + $0x100] sm:$0x1]
        %v1433 = vld [vmem:[#allocation2 + $0x10c] sm:$0xf]
        %v1434 = vld [vmem:[#allocation2 + $0x110] sm:$0xf]
        %v1435 = vld [vmem:[#allocation2 + $0x114] sm:$0x1]
        %v1436 = vld [vmem:[#allocation2 + $0x120] sm:$0xf]
        %v1437 = vld [vmem:[#allocation2 + $0x124] sm:$0xf]
        %v1438 = vld [vmem:[#allocation2 + $0x128] sm:$0x1]
        %v1439 = vld [vmem:[#allocation2 + $0x134] sm:$0xf]
        %v1440 = vld [vmem:[#allocation2 + $0x138] sm:$0xf]
        %v1441 = vld [vmem:[#allocation2 + $0x13c] sm:$0x1]
        %vm1442 = vsmask.f32 3328
        %vm1443 = vsmask.f32 7440
        %vm1444 = vmor %vm1442, %vm1443
        %v1446 = vshrl.u32 %v1394, 16
        %v1448 = vrot.slane %v1446, 4
        %v1449 = vshll.u32 %v1394, 16
        %v1451 = vrot.slane %v1449, 5
        %v1452 = vor.u32 %v1448, %v1451
        %v1453 = vrot.slane %v1452, 4
        %v1455 = vshll.u32 %v1395, 16
        %v1457 = vrot.slane %v1455, 5
        %v1458 = vsel %vm1444, %v1453, %v1457
        %v1459 = vshrl.u32 %v1395, 16
        %v1461 = vrot.slane %v1459, 4
        %v1462 = vor.u32 %v1461, %v1457
        %v1463 = vrot.slane %v1462, 4
        %v1465 = vshll.u32 %v1396, 16
        %v1467 = vrot.slane %v1465, 5
        %v1468 = vsel %vm1444, %v1463, %v1467
        %v1470 = vshrl.u32 %v1397, 16
        %v1472 = vrot.slane %v1470, 4
        %v1473 = vshll.u32 %v1397, 16
        %v1475 = vrot.slane %v1473, 5
        %v1476 = vor.u32 %v1472, %v1475
        %v1477 = vrot.slane %v1476, 4
        %v1479 = vshll.u32 %v1398, 16
        %v1481 = vrot.slane %v1479, 5
        %v1482 = vsel %vm1444, %v1477, %v1481
        %v1483 = vshrl.u32 %v1398, 16
        %v1485 = vrot.slane %v1483, 4
        %v1486 = vor.u32 %v1485, %v1481
        %v1487 = vrot.slane %v1486, 4
        %v1489 = vshll.u32 %v1399, 16
        %v1491 = vrot.slane %v1489, 5
        %v1492 = vsel %vm1444, %v1487, %v1491
        %v1494 = vshrl.u32 %v1400, 16
        %v1496 = vrot.slane %v1494, 4
        %v1497 = vshll.u32 %v1400, 16
        %v1499 = vrot.slane %v1497, 5
        %v1500 = vor.u32 %v1496, %v1499
        %v1501 = vrot.slane %v1500, 4
        %v1503 = vshll.u32 %v1401, 16
        %v1505 = vrot.slane %v1503, 5
        %v1506 = vsel %vm1444, %v1501, %v1505
        %v1507 = vshrl.u32 %v1401, 16
        %v1509 = vrot.slane %v1507, 4
        %v1510 = vor.u32 %v1509, %v1505
        %v1511 = vrot.slane %v1510, 4
        %v1513 = vshll.u32 %v1402, 16
        %v1515 = vrot.slane %v1513, 5
        %v1516 = vsel %vm1444, %v1511, %v1515
        %v1518 = vshrl.u32 %v1403, 16
        %v1520 = vrot.slane %v1518, 4
        %v1521 = vshll.u32 %v1403, 16
        %v1523 = vrot.slane %v1521, 5
        %v1524 = vor.u32 %v1520, %v1523
        %v1525 = vrot.slane %v1524, 4
        %v1527 = vshll.u32 %v1404, 16
        %v1529 = vrot.slane %v1527, 5
        %v1530 = vsel %vm1444, %v1525, %v1529
        %v1531 = vshrl.u32 %v1404, 16
        %v1533 = vrot.slane %v1531, 4
        %v1534 = vor.u32 %v1533, %v1529
        %v1535 = vrot.slane %v1534, 4
        %v1537 = vshll.u32 %v1405, 16
        %v1539 = vrot.slane %v1537, 5
        %v1540 = vsel %vm1444, %v1535, %v1539
        %v1542 = vshrl.u32 %v1406, 16
        %v1544 = vrot.slane %v1542, 4
        %v1545 = vshll.u32 %v1406, 16
        %v1547 = vrot.slane %v1545, 5
        %v1548 = vor.u32 %v1544, %v1547
        %v1549 = vrot.slane %v1548, 4
        %v1551 = vshll.u32 %v1407, 16
        %v1553 = vrot.slane %v1551, 5
        %v1554 = vsel %vm1444, %v1549, %v1553
        %v1555 = vshrl.u32 %v1407, 16
        %v1557 = vrot.slane %v1555, 4
        %v1558 = vor.u32 %v1557, %v1553
        %v1559 = vrot.slane %v1558, 4
        %v1561 = vshll.u32 %v1408, 16
        %v1563 = vrot.slane %v1561, 5
        %v1564 = vsel %vm1444, %v1559, %v1563
        %v1566 = vshrl.u32 %v1409, 16
        %v1568 = vrot.slane %v1566, 4
        %v1569 = vshll.u32 %v1409, 16
        %v1571 = vrot.slane %v1569, 5
        %v1572 = vor.u32 %v1568, %v1571
        %v1573 = vrot.slane %v1572, 4
        %v1575 = vshll.u32 %v1410, 16
        %v1577 = vrot.slane %v1575, 5
        %v1578 = vsel %vm1444, %v1573, %v1577
        %v1579 = vshrl.u32 %v1410, 16
        %v1581 = vrot.slane %v1579, 4
        %v1582 = vor.u32 %v1581, %v1577
        %v1583 = vrot.slane %v1582, 4
        %v1585 = vshll.u32 %v1411, 16
        %v1587 = vrot.slane %v1585, 5
        %v1588 = vsel %vm1444, %v1583, %v1587
        %v1590 = vshrl.u32 %v1412, 16
        %v1592 = vrot.slane %v1590, 4
        %v1593 = vshll.u32 %v1412, 16
        %v1595 = vrot.slane %v1593, 5
        %v1596 = vor.u32 %v1592, %v1595
        %v1597 = vrot.slane %v1596, 4
        %v1599 = vshll.u32 %v1413, 16
        %v1601 = vrot.slane %v1599, 5
        %v1602 = vsel %vm1444, %v1597, %v1601
        %v1603 = vshrl.u32 %v1413, 16
        %v1605 = vrot.slane %v1603, 4
        %v1606 = vor.u32 %v1605, %v1601
        %v1607 = vrot.slane %v1606, 4
        %v1609 = vshll.u32 %v1414, 16
        %v1611 = vrot.slane %v1609, 5
        %v1612 = vsel %vm1444, %v1607, %v1611
        %v1614 = vshrl.u32 %v1415, 16
        %v1616 = vrot.slane %v1614, 4
        %v1617 = vshll.u32 %v1415, 16
        %v1619 = vrot.slane %v1617, 5
        %v1620 = vor.u32 %v1616, %v1619
        %v1621 = vrot.slane %v1620, 4
        %v1623 = vshll.u32 %v1416, 16
        %v1625 = vrot.slane %v1623, 5
        %v1626 = vsel %vm1444, %v1621, %v1625
        %v1627 = vshrl.u32 %v1416, 16
        %v1629 = vrot.slane %v1627, 4
        %v1630 = vor.u32 %v1629, %v1625
        %v1631 = vrot.slane %v1630, 4
        %v1633 = vshll.u32 %v1417, 16
        %v1635 = vrot.slane %v1633, 5
        %v1636 = vsel %vm1444, %v1631, %v1635
        %v1638 = vshrl.u32 %v1418, 16
        %v1640 = vrot.slane %v1638, 4
        %v1641 = vshll.u32 %v1418, 16
        %v1643 = vrot.slane %v1641, 5
        %v1644 = vor.u32 %v1640, %v1643
        %v1645 = vrot.slane %v1644, 4
        %v1647 = vshll.u32 %v1419, 16
        %v1649 = vrot.slane %v1647, 5
        %v1650 = vsel %vm1444, %v1645, %v1649
        %v1651 = vshrl.u32 %v1419, 16
        %v1653 = vrot.slane %v1651, 4
        %v1654 = vor.u32 %v1653, %v1649
        %v1655 = vrot.slane %v1654, 4
        %v1657 = vshll.u32 %v1420, 16
        %v1659 = vrot.slane %v1657, 5
        %v1660 = vsel %vm1444, %v1655, %v1659
        %v1662 = vshrl.u32 %v1421, 16
        %v1664 = vrot.slane %v1662, 4
        %v1665 = vshll.u32 %v1421, 16
        %v1667 = vrot.slane %v1665, 5
        %v1668 = vor.u32 %v1664, %v1667
        %v1669 = vrot.slane %v1668, 4
        %v1671 = vshll.u32 %v1422, 16
        %v1673 = vrot.slane %v1671, 5
        %v1674 = vsel %vm1444, %v1669, %v1673
        %v1675 = vshrl.u32 %v1422, 16
        %v1677 = vrot.slane %v1675, 4
        %v1678 = vor.u32 %v1677, %v1673
        %v1679 = vrot.slane %v1678, 4
        %v1681 = vshll.u32 %v1423, 16
        %v1683 = vrot.slane %v1681, 5
        %v1684 = vsel %vm1444, %v1679, %v1683
        %v1686 = vshrl.u32 %v1424, 16
        %v1688 = vrot.slane %v1686, 4
        %v1689 = vshll.u32 %v1424, 16
        %v1691 = vrot.slane %v1689, 5
        %v1692 = vor.u32 %v1688, %v1691
        %v1693 = vrot.slane %v1692, 4
        %v1695 = vshll.u32 %v1425, 16
        %v1697 = vrot.slane %v1695, 5
        %v1698 = vsel %vm1444, %v1693, %v1697
        %v1699 = vshrl.u32 %v1425, 16
        %v1701 = vrot.slane %v1699, 4
        %v1702 = vor.u32 %v1701, %v1697
        %v1703 = vrot.slane %v1702, 4
        %v1705 = vshll.u32 %v1426, 16
        %v1707 = vrot.slane %v1705, 5
        %v1708 = vsel %vm1444, %v1703, %v1707
        %v1710 = vshrl.u32 %v1427, 16
        %v1712 = vrot.slane %v1710, 4
        %v1713 = vshll.u32 %v1427, 16
        %v1715 = vrot.slane %v1713, 5
        %v1716 = vor.u32 %v1712, %v1715
        %v1717 = vrot.slane %v1716, 4
        %v1719 = vshll.u32 %v1428, 16
        %v1721 = vrot.slane %v1719, 5
        %v1722 = vsel %vm1444, %v1717, %v1721
        %v1723 = vshrl.u32 %v1428, 16
        %v1725 = vrot.slane %v1723, 4
        %v1726 = vor.u32 %v1725, %v1721
        %v1727 = vrot.slane %v1726, 4
        %v1729 = vshll.u32 %v1429, 16
        %v1731 = vrot.slane %v1729, 5
        %v1732 = vsel %vm1444, %v1727, %v1731
        %v1734 = vshrl.u32 %v1430, 16
        %v1736 = vrot.slane %v1734, 4
        %v1737 = vshll.u32 %v1430, 16
        %v1739 = vrot.slane %v1737, 5
        %v1740 = vor.u32 %v1736, %v1739
        %v1741 = vrot.slane %v1740, 4
        %v1743 = vshll.u32 %v1431, 16
        %v1745 = vrot.slane %v1743, 5
        %v1746 = vsel %vm1444, %v1741, %v1745
        %v1747 = vshrl.u32 %v1431, 16
        %v1749 = vrot.slane %v1747, 4
        %v1750 = vor.u32 %v1749, %v1745
        %v1751 = vrot.slane %v1750, 4
        %v1753 = vshll.u32 %v1432, 16
        %v1755 = vrot.slane %v1753, 5
        %v1756 = vsel %vm1444, %v1751, %v1755
        %v1758 = vshrl.u32 %v1433, 16
        %v1760 = vrot.slane %v1758, 4
        %v1761 = vshll.u32 %v1433, 16
        %v1763 = vrot.slane %v1761, 5
        %v1764 = vor.u32 %v1760, %v1763
        %v1765 = vrot.slane %v1764, 4
        %v1767 = vshll.u32 %v1434, 16
        %v1769 = vrot.slane %v1767, 5
        %v1770 = vsel %vm1444, %v1765, %v1769
        %v1771 = vshrl.u32 %v1434, 16
        %v1773 = vrot.slane %v1771, 4
        %v1774 = vor.u32 %v1773, %v1769
        %v1775 = vrot.slane %v1774, 4
        %v1777 = vshll.u32 %v1435, 16
        %v1779 = vrot.slane %v1777, 5
        %v1780 = vsel %vm1444, %v1775, %v1779
        %v1782 = vshrl.u32 %v1436, 16
        %v1784 = vrot.slane %v1782, 4
        %v1785 = vshll.u32 %v1436, 16
        %v1787 = vrot.slane %v1785, 5
        %v1788 = vor.u32 %v1784, %v1787
        %v1789 = vrot.slane %v1788, 4
        %v1791 = vshll.u32 %v1437, 16
        %v1793 = vrot.slane %v1791, 5
        %v1794 = vsel %vm1444, %v1789, %v1793
        %v1795 = vshrl.u32 %v1437, 16
        %v1797 = vrot.slane %v1795, 4
        %v1798 = vor.u32 %v1797, %v1793
        %v1799 = vrot.slane %v1798, 4
        %v1801 = vshll.u32 %v1438, 16
        %v1803 = vrot.slane %v1801, 5
        %v1804 = vsel %vm1444, %v1799, %v1803
        %v1806 = vshrl.u32 %v1439, 16
        %v1808 = vrot.slane %v1806, 4
        %v1809 = vshll.u32 %v1439, 16
        %v1811 = vrot.slane %v1809, 5
        %v1812 = vor.u32 %v1808, %v1811
        %v1813 = vrot.slane %v1812, 4
        %v1815 = vshll.u32 %v1440, 16
        %v1817 = vrot.slane %v1815, 5
        %v1818 = vsel %vm1444, %v1813, %v1817
        %v1819 = vshrl.u32 %v1440, 16
        %v1821 = vrot.slane %v1819, 4
        %v1822 = vor.u32 %v1821, %v1817
        %v1823 = vrot.slane %v1822, 4
        %v1825 = vshll.u32 %v1441, 16
        %v1827 = vrot.slane %v1825, 5
        %v1828 = vsel %vm1444, %v1823, %v1827
        %s1829 = scalar_lea.vmem %s1, 4
        %v1830 = vld [vmem:[%s1829] sm:$0x3]
        %v1831 = vunpack.c.l.b16 %v1458
        %v1832 = vunpack.c.l.b16 %v1468
        %v1833 = vunpack.c.l.b16 %v1482
        %v1834 = vunpack.c.l.b16 %v1492
        %v1835 = vunpack.c.l.b16 %v1506
        %v1836 = vunpack.c.l.b16 %v1516
        %v1837 = vunpack.c.l.b16 %v1530
        %v1838 = vunpack.c.l.b16 %v1540
        %v1839 = vunpack.c.l.b16 %v1554
        %v1840 = vunpack.c.l.b16 %v1564
        %v1841 = vunpack.c.l.b16 %v1578
        %v1842 = vunpack.c.l.b16 %v1588
        %v1843 = vunpack.c.l.b16 %v1602
        %v1844 = vunpack.c.l.b16 %v1612
        %v1845 = vunpack.c.l.b16 %v1626
        %v1846 = vunpack.c.l.b16 %v1636
        %v1847 = vunpack.c.l.b16 %v1650
        %v1848 = vunpack.c.l.b16 %v1660
        %v1849 = vunpack.c.l.b16 %v1674
        %v1850 = vunpack.c.l.b16 %v1684
        %v1851 = vunpack.c.l.b16 %v1698
        %v1852 = vunpack.c.l.b16 %v1708
        %v1853 = vunpack.c.l.b16 %v1722
        %v1854 = vunpack.c.l.b16 %v1732
        %v1855 = vunpack.c.l.b16 %v1746
        %v1856 = vunpack.c.l.b16 %v1756
        %v1857 = vunpack.c.l.b16 %v1770
        %v1858 = vunpack.c.l.b16 %v1780
        %v1859 = vunpack.c.l.b16 %v1794
        %v1860 = vunpack.c.l.b16 %v1804
        %v1861 = vunpack.c.l.b16 %v1818
        %v1862 = vunpack.c.l.b16 %v1828
        %v1863 = vpack.c.b16 %v1832, %v1831
        %v1864 = vpack.c.b16 %v1834, %v1833
        %v1865 = vpack.c.b16 %v1836, %v1835
        %v1866 = vpack.c.b16 %v1838, %v1837
        %v1867 = vpack.c.b16 %v1840, %v1839
        %v1868 = vpack.c.b16 %v1842, %v1841
        %v1869 = vpack.c.b16 %v1844, %v1843
        %v1870 = vpack.c.b16 %v1846, %v1845
        %v1871 = vpack.c.b16 %v1848, %v1847
        %v1872 = vpack.c.b16 %v1850, %v1849
        %v1873 = vpack.c.b16 %v1852, %v1851
        %v1874 = vpack.c.b16 %v1854, %v1853
        %v1875 = vpack.c.b16 %v1856, %v1855
        %v1876 = vpack.c.b16 %v1858, %v1857
        %v1877 = vpack.c.b16 %v1860, %v1859
        %v1878 = vpack.c.b16 %v1862, %v1861
        %v1880 = vsel %vm920, %v1863, 0
        %v1883 = vsel %vm920, %v1864, 0
        %v1886 = vsel %vm920, %v1865, 0
        %v1889 = vsel %vm920, %v1866, 0
        %v1892 = vsel %vm920, %v1867, 0
        %v1895 = vsel %vm920, %v1868, 0
        %v1898 = vsel %vm920, %v1869, 0
        %v1901 = vsel %vm920, %v1870, 0
        %v1904 = vsel %vm920, %v1871, 0
        %v1907 = vsel %vm920, %v1872, 0
        %v1910 = vsel %vm920, %v1873, 0
        %v1913 = vsel %vm920, %v1874, 0
        %v1916 = vsel %vm920, %v1875, 0
        %v1919 = vsel %vm920, %v1876, 0
        %v1922 = vsel %vm920, %v1877, 0
        %v1925 = vsel %vm920, %v1878, 0
        %v1928 = vsel %vm969, %v1830, 0
        %1930 = vmatprep.subr.bf16.mxu0 0
        %1931 = vmatpush1.bf16.msra.mxu0 %v1928
        %1932 = vmatprep.subr.bf16.mxu0 0
        %1933 = vmatpush1.bf16.msra.mxu0 0
        %1934 = vmatprep.subr.bf16.mxu0 0
        %1935 = vmatpush1.bf16.msra.mxu0 0
        %1936 = vmatprep.subr.bf16.mxu0 0
        %1937 = vmatpush1.bf16.msra.mxu0 0
        %1938 = vmatprep.subr.bf16.mxu0 0
        %1939 = vmatpush1.bf16.msra.mxu0 0
        %1940 = vmatprep.subr.bf16.mxu0 0
        %1941 = vmatpush1.bf16.msra.mxu0 0
        %1942 = vmatprep.subr.bf16.mxu0 0
        %1943 = vmatpush1.bf16.msra.mxu0 0
        %1944 = vmatprep.subr.bf16.mxu0 0
        %1945 = vmatpush1.bf16.msra.mxu0 0
        %1946 = vmatprep.subr.bf16.mxu0 0
        %1947 = vmatpush1.bf16.msra.mxu0 0
        %1948 = vmatprep.subr.bf16.mxu0 0
        %1949 = vmatpush1.bf16.msra.mxu0 0
        %1950 = vmatprep.subr.bf16.mxu0 0
        %1951 = vmatpush1.bf16.msra.mxu0 0
        %1952 = vmatprep.subr.bf16.mxu0 0
        %1953 = vmatpush1.bf16.msra.mxu0 0
        %1954 = vmatprep.subr.bf16.mxu0 0
        %1955 = vmatpush1.bf16.msra.mxu0 0
        %1956 = vmatprep.subr.bf16.mxu0 0
        %1957 = vmatpush1.bf16.msra.mxu0 0
        %1958 = vmatprep.subr.bf16.mxu0 0
        %1959 = vmatpush1.bf16.msra.mxu0 0
        %1960 = vmatprep.subr.bf16.mxu0 0
        %1961 = vmatpush1.bf16.msra.mxu0 0
        %1962 = vmatprep.mubr.bf16.mxu0 0
        %1963 = vmatmul.mubr.bf16.gmra.mrb[0].mxu0 %v1880
        %v1964 = vpop.f32.mrb[0].mxu0
        %v1965 = vadd.f32 0.0, %v1964
        %v1966 = vpop.f32.mrb[0].mxu0
        %v1967 = vpop.f32.mrb[0].mxu0
        %v1968 = vadd.f32 0.0, %v1967
        %v1969 = vpop.f32.mrb[0].mxu0
        %1970 = vmatprep.mubr.bf16.mxu0 0
        %1971 = vmatmul.mubr.bf16.gmra.mrb[0].mxu0 %v1883
        %v1972 = vpop.f32.mrb[0].mxu0
        %v1973 = vadd.f32 0.0, %v1972
        %v1974 = vpop.f32.mrb[0].mxu0
        %v1975 = vpop.f32.mrb[0].mxu0
        %v1976 = vadd.f32 0.0, %v1975
        %v1977 = vpop.f32.mrb[0].mxu0
        %1978 = vmatprep.mubr.bf16.mxu0 0
        %1979 = vmatmul.mubr.bf16.gmra.mrb[0].mxu0 %v1886
        %v1980 = vpop.f32.mrb[0].mxu0
        %v1981 = vadd.f32 0.0, %v1980
        %v1982 = vpop.f32.mrb[0].mxu0
        %v1983 = vpop.f32.mrb[0].mxu0
        %v1984 = vadd.f32 0.0, %v1983
        %v1985 = vpop.f32.mrb[0].mxu0
        %1986 = vmatprep.mubr.bf16.mxu0 0
        %1987 = vmatmul.mubr.bf16.gmra.mrb[0].mxu0 %v1889
        %v1988 = vpop.f32.mrb[0].mxu0
        %v1989 = vadd.f32 0.0, %v1988
        %v1990 = vpop.f32.mrb[0].mxu0
        %v1991 = vpop.f32.mrb[0].mxu0
        %v1992 = vadd.f32 0.0, %v1991
        %v1993 = vpop.f32.mrb[0].mxu0
        %1994 = vmatprep.mubr.bf16.mxu0 0
        %1995 = vmatmul.mubr.bf16.gmra.mrb[0].mxu0 %v1892
        %v1996 = vpop.f32.mrb[0].mxu0
        %v1997 = vadd.f32 0.0, %v1996
        %v1998 = vpop.f32.mrb[0].mxu0
        %v1999 = vpop.f32.mrb[0].mxu0
        %v2000 = vadd.f32 0.0, %v1999
        %v2001 = vpop.f32.mrb[0].mxu0
        %2002 = vmatprep.mubr.bf16.mxu0 0
        %2003 = vmatmul.mubr.bf16.gmra.mrb[0].mxu0 %v1895
        %v2004 = vpop.f32.mrb[0].mxu0
        %v2005 = vadd.f32 0.0, %v2004
        %v2006 = vpop.f32.mrb[0].mxu0
        %v2007 = vpop.f32.mrb[0].mxu0
        %v2008 = vadd.f32 0.0, %v2007
        %v2009 = vpop.f32.mrb[0].mxu0
        %2010 = vmatprep.mubr.bf16.mxu0 0
        %2011 = vmatmul.mubr.bf16.gmra.mrb[0].mxu0 %v1898
        %v2012 = vpop.f32.mrb[0].mxu0
        %v2013 = vadd.f32 0.0, %v2012
        %v2014 = vpop.f32.mrb[0].mxu0
        %v2015 = vpop.f32.mrb[0].mxu0
        %v2016 = vadd.f32 0.0, %v2015
        %v2017 = vpop.f32.mrb[0].mxu0
        %2018 = vmatprep.mubr.bf16.mxu0 0
        %2019 = vmatmul.mubr.bf16.gmra.mrb[0].mxu0 %v1901
        %v2020 = vpop.f32.mrb[0].mxu0
        %v2021 = vadd.f32 0.0, %v2020
        %v2022 = vpop.f32.mrb[0].mxu0
        %v2023 = vpop.f32.mrb[0].mxu0
        %v2024 = vadd.f32 0.0, %v2023
        %v2025 = vpop.f32.mrb[0].mxu0
        %2026 = vmatprep.mubr.bf16.mxu0 0
        %2027 = vmatmul.mubr.bf16.gmra.mrb[0].mxu0 %v1904
        %v2028 = vpop.f32.mrb[0].mxu0
        %v2029 = vadd.f32 0.0, %v2028
        %v2030 = vpop.f32.mrb[0].mxu0
        %v2031 = vpop.f32.mrb[0].mxu0
        %v2032 = vadd.f32 0.0, %v2031
        %v2033 = vpop.f32.mrb[0].mxu0
        %2034 = vmatprep.mubr.bf16.mxu0 0
        %2035 = vmatmul.mubr.bf16.gmra.mrb[0].mxu0 %v1907
        %v2036 = vpop.f32.mrb[0].mxu0
        %v2037 = vadd.f32 0.0, %v2036
        %v2038 = vpop.f32.mrb[0].mxu0
        %v2039 = vpop.f32.mrb[0].mxu0
        %v2040 = vadd.f32 0.0, %v2039
        %v2041 = vpop.f32.mrb[0].mxu0
        %2042 = vmatprep.mubr.bf16.mxu0 0
        %2043 = vmatmul.mubr.bf16.gmra.mrb[0].mxu0 %v1910
        %v2044 = vpop.f32.mrb[0].mxu0
        %v2045 = vadd.f32 0.0, %v2044
        %v2046 = vpop.f32.mrb[0].mxu0
        %v2047 = vpop.f32.mrb[0].mxu0
        %v2048 = vadd.f32 0.0, %v2047
        %v2049 = vpop.f32.mrb[0].mxu0
        %2050 = vmatprep.mubr.bf16.mxu0 0
        %2051 = vmatmul.mubr.bf16.gmra.mrb[0].mxu0 %v1913
        %v2052 = vpop.f32.mrb[0].mxu0
        %v2053 = vadd.f32 0.0, %v2052
        %v2054 = vpop.f32.mrb[0].mxu0
        %v2055 = vpop.f32.mrb[0].mxu0
        %v2056 = vadd.f32 0.0, %v2055
        %v2057 = vpop.f32.mrb[0].mxu0
        %2058 = vmatprep.mubr.bf16.mxu0 0
        %2059 = vmatmul.mubr.bf16.gmra.mrb[0].mxu0 %v1916
        %v2060 = vpop.f32.mrb[0].mxu0
        %v2061 = vadd.f32 0.0, %v2060
        %v2062 = vpop.f32.mrb[0].mxu0
        %v2063 = vpop.f32.mrb[0].mxu0
        %v2064 = vadd.f32 0.0, %v2063
        %v2065 = vpop.f32.mrb[0].mxu0
        %2066 = vmatprep.mubr.bf16.mxu0 0
        %2067 = vmatmul.mubr.bf16.gmra.mrb[0].mxu0 %v1919
        %v2068 = vpop.f32.mrb[0].mxu0
        %v2069 = vadd.f32 0.0, %v2068
        %v2070 = vpop.f32.mrb[0].mxu0
        %v2071 = vpop.f32.mrb[0].mxu0
        %v2072 = vadd.f32 0.0, %v2071
        %v2073 = vpop.f32.mrb[0].mxu0
        %2074 = vmatprep.mubr.bf16.mxu0 0
        %2075 = vmatmul.mubr.bf16.gmra.mrb[0].mxu0 %v1922
        %v2076 = vpop.f32.mrb[0].mxu0
        %v2077 = vadd.f32 0.0, %v2076
        %v2078 = vpop.f32.mrb[0].mxu0
        %v2079 = vpop.f32.mrb[0].mxu0
        %v2080 = vadd.f32 0.0, %v2079
        %v2081 = vpop.f32.mrb[0].mxu0
        %2082 = vmatprep.mubr.bf16.mxu0 0
        %2083 = vmatmul.mubr.bf16.gmra.mrb[0].mxu0 %v1925
        %v2084 = vpop.f32.mrb[0].mxu0
        %v2085 = vadd.f32 0.0, %v2084
        %v2086 = vpop.f32.mrb[0].mxu0
        %v2087 = vpop.f32.mrb[0].mxu0
        %v2088 = vadd.f32 0.0, %v2087
        %v2089 = vpop.f32.mrb[0].mxu0
        %2090 = vdwg.mxu0
        %v2091 = vadd.f32 %v1268, %v1965
        %v2092 = vadd.f32 %v1271, %v1968
        %v2093 = vadd.f32 %v1276, %v1973
        %v2094 = vadd.f32 %v1279, %v1976
        %v2095 = vadd.f32 %v1284, %v1981
        %v2096 = vadd.f32 %v1287, %v1984
        %v2097 = vadd.f32 %v1292, %v1989
        %v2098 = vadd.f32 %v1295, %v1992
        %v2099 = vadd.f32 %v1300, %v1997
        %v2100 = vadd.f32 %v1303, %v2000
        %v2101 = vadd.f32 %v1308, %v2005
        %v2102 = vadd.f32 %v1311, %v2008
        %v2103 = vadd.f32 %v1316, %v2013
        %v2104 = vadd.f32 %v1319, %v2016
        %v2105 = vadd.f32 %v1324, %v2021
        %v2106 = vadd.f32 %v1327, %v2024
        %v2107 = vadd.f32 %v1332, %v2029
        %v2108 = vadd.f32 %v1335, %v2032
        %v2109 = vadd.f32 %v1340, %v2037
        %v2110 = vadd.f32 %v1343, %v2040
        %v2111 = vadd.f32 %v1348, %v2045
        %v2112 = vadd.f32 %v1351, %v2048
        %v2113 = vadd.f32 %v1356, %v2053
        %v2114 = vadd.f32 %v1359, %v2056
        %v2115 = vadd.f32 %v1364, %v2061
        %v2116 = vadd.f32 %v1367, %v2064
        %v2117 = vadd.f32 %v1372, %v2069
        %v2118 = vadd.f32 %v1375, %v2072
        %v2119 = vadd.f32 %v1380, %v2077
        %v2120 = vadd.f32 %v1383, %v2080
        %v2121 = vadd.f32 %v1388, %v2085
        %v2122 = vadd.f32 %v1391, %v2088
        %v2123 = vld [vmem:[%s401 + $0x4] sm:$0x8]
        %v2124 = vld [vmem:[%s401 + $0x8] sm:$0xf]
        %v2125 = vld [vmem:[%s401 + $0xc] sm:$0xf]
        %v2126 = vld [vmem:[%s401 + $0x18] sm:$0x8]
        %v2127 = vld [vmem:[%s401 + $0x1c] sm:$0xf]
        %v2128 = vld [vmem:[%s401 + $0x20] sm:$0xf]
        %v2129 = vld [vmem:[%s401 + $0x2c] sm:$0x8]
        %v2130 = vld [vmem:[%s401 + $0x30] sm:$0xf]
        %v2131 = vld [vmem:[%s401 + $0x34] sm:$0xf]
        %v2132 = vld [vmem:[%s401 + $0x40] sm:$0x8]
        %v2133 = vld [vmem:[%s401 + $0x44] sm:$0xf]
        %v2134 = vld [vmem:[%s401 + $0x48] sm:$0xf]
        %v2135 = vld [vmem:[%s401 + $0x54] sm:$0x8]
        %v2136 = vld [vmem:[%s401 + $0x58] sm:$0xf]
        %v2137 = vld [vmem:[%s401 + $0x5c] sm:$0xf]
        %v2138 = vld [vmem:[%s401 + $0x68] sm:$0x8]
        %v2139 = vld [vmem:[%s401 + $0x6c] sm:$0xf]
        %v2140 = vld [vmem:[%s401 + $0x70] sm:$0xf]
        %v2141 = vld [vmem:[%s401 + $0x7c] sm:$0x8]
        %v2142 = vld [vmem:[%s401 + $0x80] sm:$0xf]
        %v2143 = vld [vmem:[%s401 + $0x84] sm:$0xf]
        %v2144 = vld [vmem:[%s401 + $0x90] sm:$0x8]
        %v2145 = vld [vmem:[%s401 + $0x94] sm:$0xf]
        %v2146 = vld [vmem:[%s401 + $0x98] sm:$0xf]
        %v2147 = vld [vmem:[%s401 + $0xa4] sm:$0x8]
        %v2148 = vld [vmem:[%s401 + $0xa8] sm:$0xf]
        %v2149 = vld [vmem:[%s401 + $0xac] sm:$0xf]
        %v2150 = vld [vmem:[%s401 + $0xb8] sm:$0x8]
        %v2151 = vld [vmem:[%s401 + $0xbc] sm:$0xf]
        %v2152 = vld [vmem:[%s401 + $0xc0] sm:$0xf]
        %v2153 = vld [vmem:[%s401 + $0xcc] sm:$0x8]
        %v2154 = vld [vmem:[%s401 + $0xd0] sm:$0xf]
        %v2155 = vld [vmem:[%s401 + $0xd4] sm:$0xf]
        %v2156 = vld [vmem:[%s401 + $0xe0] sm:$0x8]
        %v2157 = vld [vmem:[%s401 + $0xe4] sm:$0xf]
        %v2158 = vld [vmem:[%s401 + $0xe8] sm:$0xf]
        %v2159 = vld [vmem:[%s401 + $0xf4] sm:$0x8]
        %v2160 = vld [vmem:[%s401 + $0xf8] sm:$0xf]
        %v2161 = vld [vmem:[%s401 + $0xfc] sm:$0xf]
        %v2162 = vld [vmem:[%s401 + $0x108] sm:$0x8]
        %v2163 = vld [vmem:[%s401 + $0x10c] sm:$0xf]
        %v2164 = vld [vmem:[%s401 + $0x110] sm:$0xf]
        %v2165 = vld [vmem:[%s401 + $0x11c] sm:$0x8]
        %v2166 = vld [vmem:[%s401 + $0x120] sm:$0xf]
        %v2167 = vld [vmem:[%s401 + $0x124] sm:$0xf]
        %v2168 = vld [vmem:[%s401 + $0x130] sm:$0x8]
        %v2169 = vld [vmem:[%s401 + $0x134] sm:$0xf]
        %v2170 = vld [vmem:[%s401 + $0x138] sm:$0xf]
        %v2172 = vshrl.u32 %v2123, 16
        %v2174 = vrot.slane %v2172, 7
        %v2175 = vrot.slane %v2174, 4
        %v2177 = vshrl.u32 %v2124, 16
        %v2179 = vrot.slane %v2177, 7
        %v2180 = vshll.u32 %v2124, 16
        %v2182 = vor.u32 %v2179, %v2180
        %v2183 = vsel %vm484, %v2175, %v2182
        %v2184 = vrot.slane %v2179, 4
        %v2186 = vshrl.u32 %v2125, 16
        %v2188 = vrot.slane %v2186, 7
        %v2189 = vshll.u32 %v2125, 16
        %v2191 = vor.u32 %v2188, %v2189
        %v2192 = vsel %vm484, %v2184, %v2191
        %v2194 = vshrl.u32 %v2126, 16
        %v2196 = vrot.slane %v2194, 7
        %v2197 = vrot.slane %v2196, 4
        %v2199 = vshrl.u32 %v2127, 16
        %v2201 = vrot.slane %v2199, 7
        %v2202 = vshll.u32 %v2127, 16
        %v2204 = vor.u32 %v2201, %v2202
        %v2205 = vsel %vm484, %v2197, %v2204
        %v2206 = vrot.slane %v2201, 4
        %v2208 = vshrl.u32 %v2128, 16
        %v2210 = vrot.slane %v2208, 7
        %v2211 = vshll.u32 %v2128, 16
        %v2213 = vor.u32 %v2210, %v2211
        %v2214 = vsel %vm484, %v2206, %v2213
        %v2216 = vshrl.u32 %v2129, 16
        %v2218 = vrot.slane %v2216, 7
        %v2219 = vrot.slane %v2218, 4
        %v2221 = vshrl.u32 %v2130, 16
        %v2223 = vrot.slane %v2221, 7
        %v2224 = vshll.u32 %v2130, 16
        %v2226 = vor.u32 %v2223, %v2224
        %v2227 = vsel %vm484, %v2219, %v2226
        %v2228 = vrot.slane %v2223, 4
        %v2230 = vshrl.u32 %v2131, 16
        %v2232 = vrot.slane %v2230, 7
        %v2233 = vshll.u32 %v2131, 16
        %v2235 = vor.u32 %v2232, %v2233
        %v2236 = vsel %vm484, %v2228, %v2235
        %v2238 = vshrl.u32 %v2132, 16
        %v2240 = vrot.slane %v2238, 7
        %v2241 = vrot.slane %v2240, 4
        %v2243 = vshrl.u32 %v2133, 16
        %v2245 = vrot.slane %v2243, 7
        %v2246 = vshll.u32 %v2133, 16
        %v2248 = vor.u32 %v2245, %v2246
        %v2249 = vsel %vm484, %v2241, %v2248
        %v2250 = vrot.slane %v2245, 4
        %v2252 = vshrl.u32 %v2134, 16
        %v2254 = vrot.slane %v2252, 7
        %v2255 = vshll.u32 %v2134, 16
        %v2257 = vor.u32 %v2254, %v2255
        %v2258 = vsel %vm484, %v2250, %v2257
        %v2260 = vshrl.u32 %v2135, 16
        %v2262 = vrot.slane %v2260, 7
        %v2263 = vrot.slane %v2262, 4
        %v2265 = vshrl.u32 %v2136, 16
        %v2267 = vrot.slane %v2265, 7
        %v2268 = vshll.u32 %v2136, 16
        %v2270 = vor.u32 %v2267, %v2268
        %v2271 = vsel %vm484, %v2263, %v2270
        %v2272 = vrot.slane %v2267, 4
        %v2274 = vshrl.u32 %v2137, 16
        %v2276 = vrot.slane %v2274, 7
        %v2277 = vshll.u32 %v2137, 16
        %v2279 = vor.u32 %v2276, %v2277
        %v2280 = vsel %vm484, %v2272, %v2279
        %v2282 = vshrl.u32 %v2138, 16
        %v2284 = vrot.slane %v2282, 7
        %v2285 = vrot.slane %v2284, 4
        %v2287 = vshrl.u32 %v2139, 16
        %v2289 = vrot.slane %v2287, 7
        %v2290 = vshll.u32 %v2139, 16
        %v2292 = vor.u32 %v2289, %v2290
        %v2293 = vsel %vm484, %v2285, %v2292
        %v2294 = vrot.slane %v2289, 4
        %v2296 = vshrl.u32 %v2140, 16
        %v2298 = vrot.slane %v2296, 7
        %v2299 = vshll.u32 %v2140, 16
        %v2301 = vor.u32 %v2298, %v2299
        %v2302 = vsel %vm484, %v2294, %v2301
        %v2304 = vshrl.u32 %v2141, 16
        %v2306 = vrot.slane %v2304, 7
        %v2307 = vrot.slane %v2306, 4
        %v2309 = vshrl.u32 %v2142, 16
        %v2311 = vrot.slane %v2309, 7
        %v2312 = vshll.u32 %v2142, 16
        %v2314 = vor.u32 %v2311, %v2312
        %v2315 = vsel %vm484, %v2307, %v2314
        %v2316 = vrot.slane %v2311, 4
        %v2318 = vshrl.u32 %v2143, 16
        %v2320 = vrot.slane %v2318, 7
        %v2321 = vshll.u32 %v2143, 16
        %v2323 = vor.u32 %v2320, %v2321
        %v2324 = vsel %vm484, %v2316, %v2323
        %v2326 = vshrl.u32 %v2144, 16
        %v2328 = vrot.slane %v2326, 7
        %v2329 = vrot.slane %v2328, 4
        %v2331 = vshrl.u32 %v2145, 16
        %v2333 = vrot.slane %v2331, 7
        %v2334 = vshll.u32 %v2145, 16
        %v2336 = vor.u32 %v2333, %v2334
        %v2337 = vsel %vm484, %v2329, %v2336
        %v2338 = vrot.slane %v2333, 4
        %v2340 = vshrl.u32 %v2146, 16
        %v2342 = vrot.slane %v2340, 7
        %v2343 = vshll.u32 %v2146, 16
        %v2345 = vor.u32 %v2342, %v2343
        %v2346 = vsel %vm484, %v2338, %v2345
        %v2348 = vshrl.u32 %v2147, 16
        %v2350 = vrot.slane %v2348, 7
        %v2351 = vrot.slane %v2350, 4
        %v2353 = vshrl.u32 %v2148, 16
        %v2355 = vrot.slane %v2353, 7
        %v2356 = vshll.u32 %v2148, 16
        %v2358 = vor.u32 %v2355, %v2356
        %v2359 = vsel %vm484, %v2351, %v2358
        %v2360 = vrot.slane %v2355, 4
        %v2362 = vshrl.u32 %v2149, 16
        %v2364 = vrot.slane %v2362, 7
        %v2365 = vshll.u32 %v2149, 16
        %v2367 = vor.u32 %v2364, %v2365
        %v2368 = vsel %vm484, %v2360, %v2367
        %v2370 = vshrl.u32 %v2150, 16
        %v2372 = vrot.slane %v2370, 7
        %v2373 = vrot.slane %v2372, 4
        %v2375 = vshrl.u32 %v2151, 16
        %v2377 = vrot.slane %v2375, 7
        %v2378 = vshll.u32 %v2151, 16
        %v2380 = vor.u32 %v2377, %v2378
        %v2381 = vsel %vm484, %v2373, %v2380
        %v2382 = vrot.slane %v2377, 4
        %v2384 = vshrl.u32 %v2152, 16
        %v2386 = vrot.slane %v2384, 7
        %v2387 = vshll.u32 %v2152, 16
        %v2389 = vor.u32 %v2386, %v2387
        %v2390 = vsel %vm484, %v2382, %v2389
        %v2392 = vshrl.u32 %v2153, 16
        %v2394 = vrot.slane %v2392, 7
        %v2395 = vrot.slane %v2394, 4
        %v2397 = vshrl.u32 %v2154, 16
        %v2399 = vrot.slane %v2397, 7
        %v2400 = vshll.u32 %v2154, 16
        %v2402 = vor.u32 %v2399, %v2400
        %v2403 = vsel %vm484, %v2395, %v2402
        %v2404 = vrot.slane %v2399, 4
        %v2406 = vshrl.u32 %v2155, 16
        %v2408 = vrot.slane %v2406, 7
        %v2409 = vshll.u32 %v2155, 16
        %v2411 = vor.u32 %v2408, %v2409
        %v2412 = vsel %vm484, %v2404, %v2411
        %v2414 = vshrl.u32 %v2156, 16
        %v2416 = vrot.slane %v2414, 7
        %v2417 = vrot.slane %v2416, 4
        %v2419 = vshrl.u32 %v2157, 16
        %v2421 = vrot.slane %v2419, 7
        %v2422 = vshll.u32 %v2157, 16
        %v2424 = vor.u32 %v2421, %v2422
        %v2425 = vsel %vm484, %v2417, %v2424
        %v2426 = vrot.slane %v2421, 4
        %v2428 = vshrl.u32 %v2158, 16
        %v2430 = vrot.slane %v2428, 7
        %v2431 = vshll.u32 %v2158, 16
        %v2433 = vor.u32 %v2430, %v2431
        %v2434 = vsel %vm484, %v2426, %v2433
        %v2436 = vshrl.u32 %v2159, 16
        %v2438 = vrot.slane %v2436, 7
        %v2439 = vrot.slane %v2438, 4
        %v2441 = vshrl.u32 %v2160, 16
        %v2443 = vrot.slane %v2441, 7
        %v2444 = vshll.u32 %v2160, 16
        %v2446 = vor.u32 %v2443, %v2444
        %v2447 = vsel %vm484, %v2439, %v2446
        %v2448 = vrot.slane %v2443, 4
        %v2450 = vshrl.u32 %v2161, 16
        %v2452 = vrot.slane %v2450, 7
        %v2453 = vshll.u32 %v2161, 16
        %v2455 = vor.u32 %v2452, %v2453
        %v2456 = vsel %vm484, %v2448, %v2455
        %v2458 = vshrl.u32 %v2162, 16
        %v2460 = vrot.slane %v2458, 7
        %v2461 = vrot.slane %v2460, 4
        %v2463 = vshrl.u32 %v2163, 16
        %v2465 = vrot.slane %v2463, 7
        %v2466 = vshll.u32 %v2163, 16
        %v2468 = vor.u32 %v2465, %v2466
        %v2469 = vsel %vm484, %v2461, %v2468
        %v2470 = vrot.slane %v2465, 4
        %v2472 = vshrl.u32 %v2164, 16
        %v2474 = vrot.slane %v2472, 7
        %v2475 = vshll.u32 %v2164, 16
        %v2477 = vor.u32 %v2474, %v2475
        %v2478 = vsel %vm484, %v2470, %v2477
        %v2480 = vshrl.u32 %v2165, 16
        %v2482 = vrot.slane %v2480, 7
        %v2483 = vrot.slane %v2482, 4
        %v2485 = vshrl.u32 %v2166, 16
        %v2487 = vrot.slane %v2485, 7
        %v2488 = vshll.u32 %v2166, 16
        %v2490 = vor.u32 %v2487, %v2488
        %v2491 = vsel %vm484, %v2483, %v2490
        %v2492 = vrot.slane %v2487, 4
        %v2494 = vshrl.u32 %v2167, 16
        %v2496 = vrot.slane %v2494, 7
        %v2497 = vshll.u32 %v2167, 16
        %v2499 = vor.u32 %v2496, %v2497
        %v2500 = vsel %vm484, %v2492, %v2499
        %v2502 = vshrl.u32 %v2168, 16
        %v2504 = vrot.slane %v2502, 7
        %v2505 = vrot.slane %v2504, 4
        %v2507 = vshrl.u32 %v2169, 16
        %v2509 = vrot.slane %v2507, 7
        %v2510 = vshll.u32 %v2169, 16
        %v2512 = vor.u32 %v2509, %v2510
        %v2513 = vsel %vm484, %v2505, %v2512
        %v2514 = vrot.slane %v2509, 4
        %v2516 = vshrl.u32 %v2170, 16
        %v2518 = vrot.slane %v2516, 7
        %v2519 = vshll.u32 %v2170, 16
        %v2521 = vor.u32 %v2518, %v2519
        %v2522 = vsel %vm484, %v2514, %v2521
        %s2523 = scalar_lea.vmem %s1, 6
        %v2524 = vld [vmem:[%s2523] sm:$0x3]
        %v2525 = vunpack.c.l.b16 %v2183
        %v2526 = vunpack.c.l.b16 %v2192
        %v2527 = vunpack.c.l.b16 %v2205
        %v2528 = vunpack.c.l.b16 %v2214
        %v2529 = vunpack.c.l.b16 %v2227
        %v2530 = vunpack.c.l.b16 %v2236
        %v2531 = vunpack.c.l.b16 %v2249
        %v2532 = vunpack.c.l.b16 %v2258
        %v2533 = vunpack.c.l.b16 %v2271
        %v2534 = vunpack.c.l.b16 %v2280
        %v2535 = vunpack.c.l.b16 %v2293
        %v2536 = vunpack.c.l.b16 %v2302
        %v2537 = vunpack.c.l.b16 %v2315
        %v2538 = vunpack.c.l.b16 %v2324
        %v2539 = vunpack.c.l.b16 %v2337
        %v2540 = vunpack.c.l.b16 %v2346
        %v2541 = vunpack.c.l.b16 %v2359
        %v2542 = vunpack.c.l.b16 %v2368
        %v2543 = vunpack.c.l.b16 %v2381
        %v2544 = vunpack.c.l.b16 %v2390
        %v2545 = vunpack.c.l.b16 %v2403
        %v2546 = vunpack.c.l.b16 %v2412
        %v2547 = vunpack.c.l.b16 %v2425
        %v2548 = vunpack.c.l.b16 %v2434
        %v2549 = vunpack.c.l.b16 %v2447
        %v2550 = vunpack.c.l.b16 %v2456
        %v2551 = vunpack.c.l.b16 %v2469
        %v2552 = vunpack.c.l.b16 %v2478
        %v2553 = vunpack.c.l.b16 %v2491
        %v2554 = vunpack.c.l.b16 %v2500
        %v2555 = vunpack.c.l.b16 %v2513
        %v2556 = vunpack.c.l.b16 %v2522
        %v2557 = vpack.c.b16 %v2526, %v2525
        %v2558 = vpack.c.b16 %v2528, %v2527
        %v2559 = vpack.c.b16 %v2530, %v2529
        %v2560 = vpack.c.b16 %v2532, %v2531
        %v2561 = vpack.c.b16 %v2534, %v2533
        %v2562 = vpack.c.b16 %v2536, %v2535
        %v2563 = vpack.c.b16 %v2538, %v2537
        %v2564 = vpack.c.b16 %v2540, %v2539
        %v2565 = vpack.c.b16 %v2542, %v2541
        %v2566 = vpack.c.b16 %v2544, %v2543
        %v2567 = vpack.c.b16 %v2546, %v2545
        %v2568 = vpack.c.b16 %v2548, %v2547
        %v2569 = vpack.c.b16 %v2550, %v2549
        %v2570 = vpack.c.b16 %v2552, %v2551
        %v2571 = vpack.c.b16 %v2554, %v2553
        %v2572 = vpack.c.b16 %v2556, %v2555
        %v2574 = vsel %vm920, %v2557, 0
        %v2577 = vsel %vm920, %v2558, 0
        %v2580 = vsel %vm920, %v2559, 0
        %v2583 = vsel %vm920, %v2560, 0
        %v2586 = vsel %vm920, %v2561, 0
        %v2589 = vsel %vm920, %v2562, 0
        %v2592 = vsel %vm920, %v2563, 0
        %v2595 = vsel %vm920, %v2564, 0
        %v2598 = vsel %vm920, %v2565, 0
        %v2601 = vsel %vm920, %v2566, 0
        %v2604 = vsel %vm920, %v2567, 0
        %v2607 = vsel %vm920, %v2568, 0
        %v2610 = vsel %vm920, %v2569, 0
        %v2613 = vsel %vm920, %v2570, 0
        %v2616 = vsel %vm920, %v2571, 0
        %v2619 = vsel %vm920, %v2572, 0
        %v2622 = vsel %vm969, %v2524, 0
        %2624 = vmatprep.subr.bf16.mxu0 0
        %2625 = vmatpush1.bf16.msra.mxu0 %v2622
        %2626 = vmatprep.subr.bf16.mxu0 0
        %2627 = vmatpush1.bf16.msra.mxu0 0
        %2628 = vmatprep.subr.bf16.mxu0 0
        %2629 = vmatpush1.bf16.msra.mxu0 0
        %2630 = vmatprep.subr.bf16.mxu0 0
        %2631 = vmatpush1.bf16.msra.mxu0 0
        %2632 = vmatprep.subr.bf16.mxu0 0
        %2633 = vmatpush1.bf16.msra.mxu0 0
        %2634 = vmatprep.subr.bf16.mxu0 0
        %2635 = vmatpush1.bf16.msra.mxu0 0
        %2636 = vmatprep.subr.bf16.mxu0 0
        %2637 = vmatpush1.bf16.msra.mxu0 0
        %2638 = vmatprep.subr.bf16.mxu0 0
        %2639 = vmatpush1.bf16.msra.mxu0 0
        %2640 = vmatprep.subr.bf16.mxu0 0
        %2641 = vmatpush1.bf16.msra.mxu0 0
        %2642 = vmatprep.subr.bf16.mxu0 0
        %2643 = vmatpush1.bf16.msra.mxu0 0
        %2644 = vmatprep.subr.bf16.mxu0 0
        %2645 = vmatpush1.bf16.msra.mxu0 0
        %2646 = vmatprep.subr.bf16.mxu0 0
        %2647 = vmatpush1.bf16.msra.mxu0 0
        %2648 = vmatprep.subr.bf16.mxu0 0
        %2649 = vmatpush1.bf16.msra.mxu0 0
        %2650 = vmatprep.subr.bf16.mxu0 0
        %2651 = vmatpush1.bf16.msra.mxu0 0
        %2652 = vmatprep.subr.bf16.mxu0 0
        %2653 = vmatpush1.bf16.msra.mxu0 0
        %2654 = vmatprep.subr.bf16.mxu0 0
        %2655 = vmatpush1.bf16.msra.mxu0 0
        %2656 = vmatprep.mubr.bf16.mxu0 0
        %2657 = vmatmul.mubr.bf16.gmra.mrb[0].mxu0 %v2574
        %v2658 = vpop.f32.mrb[0].mxu0
        %v2659 = vadd.f32 0.0, %v2658
        %v2660 = vpop.f32.mrb[0].mxu0
        %v2661 = vpop.f32.mrb[0].mxu0
        %v2662 = vadd.f32 0.0, %v2661
        %v2663 = vpop.f32.mrb[0].mxu0
        %2664 = vmatprep.mubr.bf16.mxu0 0
        %2665 = vmatmul.mubr.bf16.gmra.mrb[0].mxu0 %v2577
        %v2666 = vpop.f32.mrb[0].mxu0
        %v2667 = vadd.f32 0.0, %v2666
        %v2668 = vpop.f32.mrb[0].mxu0
        %v2669 = vpop.f32.mrb[0].mxu0
        %v2670 = vadd.f32 0.0, %v2669
        %v2671 = vpop.f32.mrb[0].mxu0
        %2672 = vmatprep.mubr.bf16.mxu0 0
        %2673 = vmatmul.mubr.bf16.gmra.mrb[0].mxu0 %v2580
        %v2674 = vpop.f32.mrb[0].mxu0
        %v2675 = vadd.f32 0.0, %v2674
        %v2676 = vpop.f32.mrb[0].mxu0
        %v2677 = vpop.f32.mrb[0].mxu0
        %v2678 = vadd.f32 0.0, %v2677
        %v2679 = vpop.f32.mrb[0].mxu0
        %2680 = vmatprep.mubr.bf16.mxu0 0
        %2681 = vmatmul.mubr.bf16.gmra.mrb[0].mxu0 %v2583
        %v2682 = vpop.f32.mrb[0].mxu0
        %v2683 = vadd.f32 0.0, %v2682
        %v2684 = vpop.f32.mrb[0].mxu0
        %v2685 = vpop.f32.mrb[0].mxu0
        %v2686 = vadd.f32 0.0, %v2685
        %v2687 = vpop.f32.mrb[0].mxu0
        %2688 = vmatprep.mubr.bf16.mxu0 0
        %2689 = vmatmul.mubr.bf16.gmra.mrb[0].mxu0 %v2586
        %v2690 = vpop.f32.mrb[0].mxu0
        %v2691 = vadd.f32 0.0, %v2690
        %v2692 = vpop.f32.mrb[0].mxu0
        %v2693 = vpop.f32.mrb[0].mxu0
        %v2694 = vadd.f32 0.0, %v2693
        %v2695 = vpop.f32.mrb[0].mxu0
        %2696 = vmatprep.mubr.bf16.mxu0 0
        %2697 = vmatmul.mubr.bf16.gmra.mrb[0].mxu0 %v2589
        %v2698 = vpop.f32.mrb[0].mxu0
        %v2699 = vadd.f32 0.0, %v2698
        %v2700 = vpop.f32.mrb[0].mxu0
        %v2701 = vpop.f32.mrb[0].mxu0
        %v2702 = vadd.f32 0.0, %v2701
        %v2703 = vpop.f32.mrb[0].mxu0
        %2704 = vmatprep.mubr.bf16.mxu0 0
        %2705 = vmatmul.mubr.bf16.gmra.mrb[0].mxu0 %v2592
        %v2706 = vpop.f32.mrb[0].mxu0
        %v2707 = vadd.f32 0.0, %v2706
        %v2708 = vpop.f32.mrb[0].mxu0
        %v2709 = vpop.f32.mrb[0].mxu0
        %v2710 = vadd.f32 0.0, %v2709
        %v2711 = vpop.f32.mrb[0].mxu0
        %2712 = vmatprep.mubr.bf16.mxu0 0
        %2713 = vmatmul.mubr.bf16.gmra.mrb[0].mxu0 %v2595
        %v2714 = vpop.f32.mrb[0].mxu0
        %v2715 = vadd.f32 0.0, %v2714
        %v2716 = vpop.f32.mrb[0].mxu0
        %v2717 = vpop.f32.mrb[0].mxu0
        %v2718 = vadd.f32 0.0, %v2717
        %v2719 = vpop.f32.mrb[0].mxu0
        %2720 = vmatprep.mubr.bf16.mxu0 0
        %2721 = vmatmul.mubr.bf16.gmra.mrb[0].mxu0 %v2598
        %v2722 = vpop.f32.mrb[0].mxu0
        %v2723 = vadd.f32 0.0, %v2722
        %v2724 = vpop.f32.mrb[0].mxu0
        %v2725 = vpop.f32.mrb[0].mxu0
        %v2726 = vadd.f32 0.0, %v2725
        %v2727 = vpop.f32.mrb[0].mxu0
        %2728 = vmatprep.mubr.bf16.mxu0 0
        %2729 = vmatmul.mubr.bf16.gmra.mrb[0].mxu0 %v2601
        %v2730 = vpop.f32.mrb[0].mxu0
        %v2731 = vadd.f32 0.0, %v2730
        %v2732 = vpop.f32.mrb[0].mxu0
        %v2733 = vpop.f32.mrb[0].mxu0
        %v2734 = vadd.f32 0.0, %v2733
        %v2735 = vpop.f32.mrb[0].mxu0
        %2736 = vmatprep.mubr.bf16.mxu0 0
        %2737 = vmatmul.mubr.bf16.gmra.mrb[0].mxu0 %v2604
        %v2738 = vpop.f32.mrb[0].mxu0
        %v2739 = vadd.f32 0.0, %v2738
        %v2740 = vpop.f32.mrb[0].mxu0
        %v2741 = vpop.f32.mrb[0].mxu0
        %v2742 = vadd.f32 0.0, %v2741
        %v2743 = vpop.f32.mrb[0].mxu0
        %2744 = vmatprep.mubr.bf16.mxu0 0
        %2745 = vmatmul.mubr.bf16.gmra.mrb[0].mxu0 %v2607
        %v2746 = vpop.f32.mrb[0].mxu0
        %v2747 = vadd.f32 0.0, %v2746
        %v2748 = vpop.f32.mrb[0].mxu0
        %v2749 = vpop.f32.mrb[0].mxu0
        %v2750 = vadd.f32 0.0, %v2749
        %v2751 = vpop.f32.mrb[0].mxu0
        %2752 = vmatprep.mubr.bf16.mxu0 0
        %2753 = vmatmul.mubr.bf16.gmra.mrb[0].mxu0 %v2610
        %v2754 = vpop.f32.mrb[0].mxu0
        %v2755 = vadd.f32 0.0, %v2754
        %v2756 = vpop.f32.mrb[0].mxu0
        %v2757 = vpop.f32.mrb[0].mxu0
        %v2758 = vadd.f32 0.0, %v2757
        %v2759 = vpop.f32.mrb[0].mxu0
        %2760 = vmatprep.mubr.bf16.mxu0 0
        %2761 = vmatmul.mubr.bf16.gmra.mrb[0].mxu0 %v2613
        %v2762 = vpop.f32.mrb[0].mxu0
        %v2763 = vadd.f32 0.0, %v2762
        %v2764 = vpop.f32.mrb[0].mxu0
        %v2765 = vpop.f32.mrb[0].mxu0
        %v2766 = vadd.f32 0.0, %v2765
        %v2767 = vpop.f32.mrb[0].mxu0
        %2768 = vmatprep.mubr.bf16.mxu0 0
        %2769 = vmatmul.mubr.bf16.gmra.mrb[0].mxu0 %v2616
        %v2770 = vpop.f32.mrb[0].mxu0
        %v2771 = vadd.f32 0.0, %v2770
        %v2772 = vpop.f32.mrb[0].mxu0
        %v2773 = vpop.f32.mrb[0].mxu0
        %v2774 = vadd.f32 0.0, %v2773
        %v2775 = vpop.f32.mrb[0].mxu0
        %2776 = vmatprep.mubr.bf16.mxu0 0
        %2777 = vmatmul.mubr.bf16.gmra.mrb[0].mxu0 %v2619
        %v2778 = vpop.f32.mrb[0].mxu0
        %v2779 = vadd.f32 0.0, %v2778
        %v2780 = vpop.f32.mrb[0].mxu0
        %v2781 = vpop.f32.mrb[0].mxu0
        %v2782 = vadd.f32 0.0, %v2781
        %v2783 = vpop.f32.mrb[0].mxu0
        %2784 = vdwg.mxu0
        %v2785 = vadd.f32 %v2091, %v2659
        %v2786 = vadd.f32 %v2092, %v2662
        %v2787 = vadd.f32 %v2093, %v2667
        %v2788 = vadd.f32 %v2094, %v2670
        %v2789 = vadd.f32 %v2095, %v2675
        %v2790 = vadd.f32 %v2096, %v2678
        %v2791 = vadd.f32 %v2097, %v2683
        %v2792 = vadd.f32 %v2098, %v2686
        %v2793 = vadd.f32 %v2099, %v2691
        %v2794 = vadd.f32 %v2100, %v2694
        %v2795 = vadd.f32 %v2101, %v2699
        %v2796 = vadd.f32 %v2102, %v2702
        %v2797 = vadd.f32 %v2103, %v2707
        %v2798 = vadd.f32 %v2104, %v2710
        %v2799 = vadd.f32 %v2105, %v2715
        %v2800 = vadd.f32 %v2106, %v2718
        %v2801 = vadd.f32 %v2107, %v2723
        %v2802 = vadd.f32 %v2108, %v2726
        %v2803 = vadd.f32 %v2109, %v2731
        %v2804 = vadd.f32 %v2110, %v2734
        %v2805 = vadd.f32 %v2111, %v2739
        %v2806 = vadd.f32 %v2112, %v2742
        %v2807 = vadd.f32 %v2113, %v2747
        %v2808 = vadd.f32 %v2114, %v2750
        %v2809 = vadd.f32 %v2115, %v2755
        %v2810 = vadd.f32 %v2116, %v2758
        %v2811 = vadd.f32 %v2117, %v2763
        %v2812 = vadd.f32 %v2118, %v2766
        %v2813 = vadd.f32 %v2119, %v2771
        %v2814 = vadd.f32 %v2120, %v2774
        %v2815 = vadd.f32 %v2121, %v2779
        %v2816 = vadd.f32 %v2122, %v2782
        %s2817 = scalar_lea.vmem %s1, 8
        %v2818 = vld [vmem:[%s2817] sm:$0x3]
        %v2851 = vunpack.c.l.b16 %v2124
        %v2852 = vunpack.c.l.b16 %v2125
        %v2853 = vunpack.c.l.b16 %v2127
        %v2854 = vunpack.c.l.b16 %v2128
        %v2855 = vunpack.c.l.b16 %v2130
        %v2856 = vunpack.c.l.b16 %v2131
        %v2857 = vunpack.c.l.b16 %v2133
        %v2858 = vunpack.c.l.b16 %v2134
        %v2859 = vunpack.c.l.b16 %v2136
        %v2860 = vunpack.c.l.b16 %v2137
        %v2861 = vunpack.c.l.b16 %v2139
        %v2862 = vunpack.c.l.b16 %v2140
        %v2863 = vunpack.c.l.b16 %v2142
        %v2864 = vunpack.c.l.b16 %v2143
        %v2865 = vunpack.c.l.b16 %v2145
        %v2866 = vunpack.c.l.b16 %v2146
        %v2867 = vunpack.c.l.b16 %v2148
        %v2868 = vunpack.c.l.b16 %v2149
        %v2869 = vunpack.c.l.b16 %v2151
        %v2870 = vunpack.c.l.b16 %v2152
        %v2871 = vunpack.c.l.b16 %v2154
        %v2872 = vunpack.c.l.b16 %v2155
        %v2873 = vunpack.c.l.b16 %v2157
        %v2874 = vunpack.c.l.b16 %v2158
        %v2875 = vunpack.c.l.b16 %v2160
        %v2876 = vunpack.c.l.b16 %v2161
        %v2877 = vunpack.c.l.b16 %v2163
        %v2878 = vunpack.c.l.b16 %v2164
        %v2879 = vunpack.c.l.b16 %v2166
        %v2880 = vunpack.c.l.b16 %v2167
        %v2881 = vunpack.c.l.b16 %v2169
        %v2882 = vunpack.c.l.b16 %v2170
        %v2883 = vpack.c.b16 %v2852, %v2851
        %v2884 = vpack.c.b16 %v2854, %v2853
        %v2885 = vpack.c.b16 %v2856, %v2855
        %v2886 = vpack.c.b16 %v2858, %v2857
        %v2887 = vpack.c.b16 %v2860, %v2859
        %v2888 = vpack.c.b16 %v2862, %v2861
        %v2889 = vpack.c.b16 %v2864, %v2863
        %v2890 = vpack.c.b16 %v2866, %v2865
        %v2891 = vpack.c.b16 %v2868, %v2867
        %v2892 = vpack.c.b16 %v2870, %v2869
        %v2893 = vpack.c.b16 %v2872, %v2871
        %v2894 = vpack.c.b16 %v2874, %v2873
        %v2895 = vpack.c.b16 %v2876, %v2875
        %v2896 = vpack.c.b16 %v2878, %v2877
        %v2897 = vpack.c.b16 %v2880, %v2879
        %v2898 = vpack.c.b16 %v2882, %v2881
        %v2900 = vsel %vm920, %v2883, 0
        %v2903 = vsel %vm920, %v2884, 0
        %v2906 = vsel %vm920, %v2885, 0
        %v2909 = vsel %vm920, %v2886, 0
        %v2912 = vsel %vm920, %v2887, 0
        %v2915 = vsel %vm920, %v2888, 0
        %v2918 = vsel %vm920, %v2889, 0
        %v2921 = vsel %vm920, %v2890, 0
        %v2924 = vsel %vm920, %v2891, 0
        %v2927 = vsel %vm920, %v2892, 0
        %v2930 = vsel %vm920, %v2893, 0
        %v2933 = vsel %vm920, %v2894, 0
        %v2936 = vsel %vm920, %v2895, 0
        %v2939 = vsel %vm920, %v2896, 0
        %v2942 = vsel %vm920, %v2897, 0
        %v2945 = vsel %vm920, %v2898, 0
        %v2948 = vsel %vm969, %v2818, 0
        %2950 = vmatprep.subr.bf16.mxu0 0
        %2951 = vmatpush1.bf16.msra.mxu0 %v2948
        %2952 = vmatprep.subr.bf16.mxu0 0
        %2953 = vmatpush1.bf16.msra.mxu0 0
        %2954 = vmatprep.subr.bf16.mxu0 0
        %2955 = vmatpush1.bf16.msra.mxu0 0
        %2956 = vmatprep.subr.bf16.mxu0 0
        %2957 = vmatpush1.bf16.msra.mxu0 0
        %2958 = vmatprep.subr.bf16.mxu0 0
        %2959 = vmatpush1.bf16.msra.mxu0 0
        %2960 = vmatprep.subr.bf16.mxu0 0
        %2961 = vmatpush1.bf16.msra.mxu0 0
        %2962 = vmatprep.subr.bf16.mxu0 0
        %2963 = vmatpush1.bf16.msra.mxu0 0
        %2964 = vmatprep.subr.bf16.mxu0 0
        %2965 = vmatpush1.bf16.msra.mxu0 0
        %2966 = vmatprep.subr.bf16.mxu0 0
        %2967 = vmatpush1.bf16.msra.mxu0 0
        %2968 = vmatprep.subr.bf16.mxu0 0
        %2969 = vmatpush1.bf16.msra.mxu0 0
        %2970 = vmatprep.subr.bf16.mxu0 0
        %2971 = vmatpush1.bf16.msra.mxu0 0
        %2972 = vmatprep.subr.bf16.mxu0 0
        %2973 = vmatpush1.bf16.msra.mxu0 0
        %2974 = vmatprep.subr.bf16.mxu0 0
        %2975 = vmatpush1.bf16.msra.mxu0 0
        %2976 = vmatprep.subr.bf16.mxu0 0
        %2977 = vmatpush1.bf16.msra.mxu0 0
        %2978 = vmatprep.subr.bf16.mxu0 0
        %2979 = vmatpush1.bf16.msra.mxu0 0
        %2980 = vmatprep.subr.bf16.mxu0 0
        %2981 = vmatpush1.bf16.msra.mxu0 0
        %2982 = vmatprep.mubr.bf16.mxu0 0
        %2983 = vmatmul.mubr.bf16.gmra.mrb[0].mxu0 %v2900
        %v2984 = vpop.f32.mrb[0].mxu0
        %v2985 = vadd.f32 0.0, %v2984
        %v2986 = vpop.f32.mrb[0].mxu0
        %v2987 = vpop.f32.mrb[0].mxu0
        %v2988 = vadd.f32 0.0, %v2987
        %v2989 = vpop.f32.mrb[0].mxu0
        %2990 = vmatprep.mubr.bf16.mxu0 0
        %2991 = vmatmul.mubr.bf16.gmra.mrb[0].mxu0 %v2903
        %v2992 = vpop.f32.mrb[0].mxu0
        %v2993 = vadd.f32 0.0, %v2992
        %v2994 = vpop.f32.mrb[0].mxu0
        %v2995 = vpop.f32.mrb[0].mxu0
        %v2996 = vadd.f32 0.0, %v2995
        %v2997 = vpop.f32.mrb[0].mxu0
        %2998 = vmatprep.mubr.bf16.mxu0 0
        %2999 = vmatmul.mubr.bf16.gmra.mrb[0].mxu0 %v2906
        %v3000 = vpop.f32.mrb[0].mxu0
        %v3001 = vadd.f32 0.0, %v3000
        %v3002 = vpop.f32.mrb[0].mxu0
        %v3003 = vpop.f32.mrb[0].mxu0
        %v3004 = vadd.f32 0.0, %v3003
        %v3005 = vpop.f32.mrb[0].mxu0
        %3006 = vmatprep.mubr.bf16.mxu0 0
        %3007 = vmatmul.mubr.bf16.gmra.mrb[0].mxu0 %v2909
        %v3008 = vpop.f32.mrb[0].mxu0
        %v3009 = vadd.f32 0.0, %v3008
        %v3010 = vpop.f32.mrb[0].mxu0
        %v3011 = vpop.f32.mrb[0].mxu0
        %v3012 = vadd.f32 0.0, %v3011
        %v3013 = vpop.f32.mrb[0].mxu0
        %3014 = vmatprep.mubr.bf16.mxu0 0
        %3015 = vmatmul.mubr.bf16.gmra.mrb[0].mxu0 %v2912
        %v3016 = vpop.f32.mrb[0].mxu0
        %v3017 = vadd.f32 0.0, %v3016
        %v3018 = vpop.f32.mrb[0].mxu0
        %v3019 = vpop.f32.mrb[0].mxu0
        %v3020 = vadd.f32 0.0, %v3019
        %v3021 = vpop.f32.mrb[0].mxu0
        %3022 = vmatprep.mubr.bf16.mxu0 0
        %3023 = vmatmul.mubr.bf16.gmra.mrb[0].mxu0 %v2915
        %v3024 = vpop.f32.mrb[0].mxu0
        %v3025 = vadd.f32 0.0, %v3024
        %v3026 = vpop.f32.mrb[0].mxu0
        %v3027 = vpop.f32.mrb[0].mxu0
        %v3028 = vadd.f32 0.0, %v3027
        %v3029 = vpop.f32.mrb[0].mxu0
        %3030 = vmatprep.mubr.bf16.mxu0 0
        %3031 = vmatmul.mubr.bf16.gmra.mrb[0].mxu0 %v2918
        %v3032 = vpop.f32.mrb[0].mxu0
        %v3033 = vadd.f32 0.0, %v3032
        %v3034 = vpop.f32.mrb[0].mxu0
        %v3035 = vpop.f32.mrb[0].mxu0
        %v3036 = vadd.f32 0.0, %v3035
        %v3037 = vpop.f32.mrb[0].mxu0
        %3038 = vmatprep.mubr.bf16.mxu0 0
        %3039 = vmatmul.mubr.bf16.gmra.mrb[0].mxu0 %v2921
        %v3040 = vpop.f32.mrb[0].mxu0
        %v3041 = vadd.f32 0.0, %v3040
        %v3042 = vpop.f32.mrb[0].mxu0
        %v3043 = vpop.f32.mrb[0].mxu0
        %v3044 = vadd.f32 0.0, %v3043
        %v3045 = vpop.f32.mrb[0].mxu0
        %3046 = vmatprep.mubr.bf16.mxu0 0
        %3047 = vmatmul.mubr.bf16.gmra.mrb[0].mxu0 %v2924
        %v3048 = vpop.f32.mrb[0].mxu0
        %v3049 = vadd.f32 0.0, %v3048
        %v3050 = vpop.f32.mrb[0].mxu0
        %v3051 = vpop.f32.mrb[0].mxu0
        %v3052 = vadd.f32 0.0, %v3051
        %v3053 = vpop.f32.mrb[0].mxu0
        %3054 = vmatprep.mubr.bf16.mxu0 0
        %3055 = vmatmul.mubr.bf16.gmra.mrb[0].mxu0 %v2927
        %v3056 = vpop.f32.mrb[0].mxu0
        %v3057 = vadd.f32 0.0, %v3056
        %v3058 = vpop.f32.mrb[0].mxu0
        %v3059 = vpop.f32.mrb[0].mxu0
        %v3060 = vadd.f32 0.0, %v3059
        %v3061 = vpop.f32.mrb[0].mxu0
        %3062 = vmatprep.mubr.bf16.mxu0 0
        %3063 = vmatmul.mubr.bf16.gmra.mrb[0].mxu0 %v2930
        %v3064 = vpop.f32.mrb[0].mxu0
        %v3065 = vadd.f32 0.0, %v3064
        %v3066 = vpop.f32.mrb[0].mxu0
        %v3067 = vpop.f32.mrb[0].mxu0
        %v3068 = vadd.f32 0.0, %v3067
        %v3069 = vpop.f32.mrb[0].mxu0
        %3070 = vmatprep.mubr.bf16.mxu0 0
        %3071 = vmatmul.mubr.bf16.gmra.mrb[0].mxu0 %v2933
        %v3072 = vpop.f32.mrb[0].mxu0
        %v3073 = vadd.f32 0.0, %v3072
        %v3074 = vpop.f32.mrb[0].mxu0
        %v3075 = vpop.f32.mrb[0].mxu0
        %v3076 = vadd.f32 0.0, %v3075
        %v3077 = vpop.f32.mrb[0].mxu0
        %3078 = vmatprep.mubr.bf16.mxu0 0
        %3079 = vmatmul.mubr.bf16.gmra.mrb[0].mxu0 %v2936
        %v3080 = vpop.f32.mrb[0].mxu0
        %v3081 = vadd.f32 0.0, %v3080
        %v3082 = vpop.f32.mrb[0].mxu0
        %v3083 = vpop.f32.mrb[0].mxu0
        %v3084 = vadd.f32 0.0, %v3083
        %v3085 = vpop.f32.mrb[0].mxu0
        %3086 = vmatprep.mubr.bf16.mxu0 0
        %3087 = vmatmul.mubr.bf16.gmra.mrb[0].mxu0 %v2939
        %v3088 = vpop.f32.mrb[0].mxu0
        %v3089 = vadd.f32 0.0, %v3088
        %v3090 = vpop.f32.mrb[0].mxu0
        %v3091 = vpop.f32.mrb[0].mxu0
        %v3092 = vadd.f32 0.0, %v3091
        %v3093 = vpop.f32.mrb[0].mxu0
        %3094 = vmatprep.mubr.bf16.mxu0 0
        %3095 = vmatmul.mubr.bf16.gmra.mrb[0].mxu0 %v2942
        %v3096 = vpop.f32.mrb[0].mxu0
        %v3097 = vadd.f32 0.0, %v3096
        %v3098 = vpop.f32.mrb[0].mxu0
        %v3099 = vpop.f32.mrb[0].mxu0
        %v3100 = vadd.f32 0.0, %v3099
        %v3101 = vpop.f32.mrb[0].mxu0
        %3102 = vmatprep.mubr.bf16.mxu0 0
        %3103 = vmatmul.mubr.bf16.gmra.mrb[0].mxu0 %v2945
        %v3104 = vpop.f32.mrb[0].mxu0
        %v3105 = vadd.f32 0.0, %v3104
        %v3106 = vpop.f32.mrb[0].mxu0
        %v3107 = vpop.f32.mrb[0].mxu0
        %v3108 = vadd.f32 0.0, %v3107
        %v3109 = vpop.f32.mrb[0].mxu0
        %3110 = vdwg.mxu0
        %v3111 = vadd.f32 %v2785, %v2985
        %v3112 = vadd.f32 %v2786, %v2988
        %v3113 = vadd.f32 %v2787, %v2993
        %v3114 = vadd.f32 %v2788, %v2996
        %v3115 = vadd.f32 %v2789, %v3001
        %v3116 = vadd.f32 %v2790, %v3004
        %v3117 = vadd.f32 %v2791, %v3009
        %v3118 = vadd.f32 %v2792, %v3012
        %v3119 = vadd.f32 %v2793, %v3017
        %v3120 = vadd.f32 %v2794, %v3020
        %v3121 = vadd.f32 %v2795, %v3025
        %v3122 = vadd.f32 %v2796, %v3028
        %v3123 = vadd.f32 %v2797, %v3033
        %v3124 = vadd.f32 %v2798, %v3036
        %v3125 = vadd.f32 %v2799, %v3041
        %v3126 = vadd.f32 %v2800, %v3044
        %v3127 = vadd.f32 %v2801, %v3049
        %v3128 = vadd.f32 %v2802, %v3052
        %v3129 = vadd.f32 %v2803, %v3057
        %v3130 = vadd.f32 %v2804, %v3060
        %v3131 = vadd.f32 %v2805, %v3065
        %v3132 = vadd.f32 %v2806, %v3068
        %v3133 = vadd.f32 %v2807, %v3073
        %v3134 = vadd.f32 %v2808, %v3076
        %v3135 = vadd.f32 %v2809, %v3081
        %v3136 = vadd.f32 %v2810, %v3084
        %v3137 = vadd.f32 %v2811, %v3089
        %v3138 = vadd.f32 %v2812, %v3092
        %v3139 = vadd.f32 %v2813, %v3097
        %v3140 = vadd.f32 %v2814, %v3100
        %v3141 = vadd.f32 %v2815, %v3105
        %v3142 = vadd.f32 %v2816, %v3108
        %v3143 = vld [vmem:[%s401 + $0x8] sm:$0xf]
        %v3144 = vld [vmem:[%s401 + $0xc] sm:$0xf]
        %v3145 = vld [vmem:[%s401 + $0x10] sm:$0x1]
        %v3146 = vld [vmem:[%s401 + $0x1c] sm:$0xf]
        %v3147 = vld [vmem:[%s401 + $0x20] sm:$0xf]
        %v3148 = vld [vmem:[%s401 + $0x24] sm:$0x1]
        %v3149 = vld [vmem:[%s401 + $0x30] sm:$0xf]
        %v3150 = vld [vmem:[%s401 + $0x34] sm:$0xf]
        %v3151 = vld [vmem:[%s401 + $0x38] sm:$0x1]
        %v3152 = vld [vmem:[%s401 + $0x44] sm:$0xf]
        %v3153 = vld [vmem:[%s401 + $0x48] sm:$0xf]
        %v3154 = vld [vmem:[%s401 + $0x4c] sm:$0x1]
        %v3155 = vld [vmem:[%s401 + $0x58] sm:$0xf]
        %v3156 = vld [vmem:[%s401 + $0x5c] sm:$0xf]
        %v3157 = vld [vmem:[%s401 + $0x60] sm:$0x1]
        %v3158 = vld [vmem:[%s401 + $0x6c] sm:$0xf]
        %v3159 = vld [vmem:[%s401 + $0x70] sm:$0xf]
        %v3160 = vld [vmem:[%s401 + $0x74] sm:$0x1]
        %v3161 = vld [vmem:[%s401 + $0x80] sm:$0xf]
        %v3162 = vld [vmem:[%s401 + $0x84] sm:$0xf]
        %v3163 = vld [vmem:[%s401 + $0x88] sm:$0x1]
        %v3164 = vld [vmem:[%s401 + $0x94] sm:$0xf]
        %v3165 = vld [vmem:[%s401 + $0x98] sm:$0xf]
        %v3166 = vld [vmem:[%s401 + $0x9c] sm:$0x1]
        %v3167 = vld [vmem:[%s401 + $0xa8] sm:$0xf]
        %v3168 = vld [vmem:[%s401 + $0xac] sm:$0xf]
        %v3169 = vld [vmem:[%s401 + $0xb0] sm:$0x1]
        %v3170 = vld [vmem:[%s401 + $0xbc] sm:$0xf]
        %v3171 = vld [vmem:[%s401 + $0xc0] sm:$0xf]
        %v3172 = vld [vmem:[%s401 + $0xc4] sm:$0x1]
        %v3173 = vld [vmem:[%s401 + $0xd0] sm:$0xf]
        %v3174 = vld [vmem:[%s401 + $0xd4] sm:$0xf]
        %v3175 = vld [vmem:[%s401 + $0xd8] sm:$0x1]
        %v3176 = vld [vmem:[%s401 + $0xe4] sm:$0xf]
        %v3177 = vld [vmem:[%s401 + $0xe8] sm:$0xf]
        %v3178 = vld [vmem:[%s401 + $0xec] sm:$0x1]
        %v3179 = vld [vmem:[%s401 + $0xf8] sm:$0xf]
        %v3180 = vld [vmem:[%s401 + $0xfc] sm:$0xf]
        %v3181 = vld [vmem:[%s401 + $0x100] sm:$0x1]
        %v3182 = vld [vmem:[%s401 + $0x10c] sm:$0xf]
        %v3183 = vld [vmem:[%s401 + $0x110] sm:$0xf]
        %v3184 = vld [vmem:[%s401 + $0x114] sm:$0x1]
        %v3185 = vld [vmem:[%s401 + $0x120] sm:$0xf]
        %v3186 = vld [vmem:[%s401 + $0x124] sm:$0xf]
        %v3187 = vld [vmem:[%s401 + $0x128] sm:$0x1]
        %v3188 = vld [vmem:[%s401 + $0x134] sm:$0xf]
        %v3189 = vld [vmem:[%s401 + $0x138] sm:$0xf]
        %v3190 = vld [vmem:[%s401 + $0x13c] sm:$0x1]
        %v3192 = vshrl.u32 %v3143, 16
        %v3194 = vrot.slane %v3192, 4
        %v3195 = vshll.u32 %v3143, 16
        %v3197 = vrot.slane %v3195, 5
        %v3198 = vor.u32 %v3194, %v3197
        %v3199 = vrot.slane %v3198, 4
        %v3201 = vshll.u32 %v3144, 16
        %v3203 = vrot.slane %v3201, 5
        %v3204 = vsel %vm1444, %v3199, %v3203
        %v3205 = vshrl.u32 %v3144, 16
        %v3207 = vrot.slane %v3205, 4
        %v3208 = vor.u32 %v3207, %v3203
        %v3209 = vrot.slane %v3208, 4
        %v3211 = vshll.u32 %v3145, 16
        %v3213 = vrot.slane %v3211, 5
        %v3214 = vsel %vm1444, %v3209, %v3213
        %v3216 = vshrl.u32 %v3146, 16
        %v3218 = vrot.slane %v3216, 4
        %v3219 = vshll.u32 %v3146, 16
        %v3221 = vrot.slane %v3219, 5
        %v3222 = vor.u32 %v3218, %v3221
        %v3223 = vrot.slane %v3222, 4
        %v3225 = vshll.u32 %v3147, 16
        %v3227 = vrot.slane %v3225, 5
        %v3228 = vsel %vm1444, %v3223, %v3227
        %v3229 = vshrl.u32 %v3147, 16
        %v3231 = vrot.slane %v3229, 4
        %v3232 = vor.u32 %v3231, %v3227
        %v3233 = vrot.slane %v3232, 4
        %v3235 = vshll.u32 %v3148, 16
        %v3237 = vrot.slane %v3235, 5
        %v3238 = vsel %vm1444, %v3233, %v3237
        %v3240 = vshrl.u32 %v3149, 16
        %v3242 = vrot.slane %v3240, 4
        %v3243 = vshll.u32 %v3149, 16
        %v3245 = vrot.slane %v3243, 5
        %v3246 = vor.u32 %v3242, %v3245
        %v3247 = vrot.slane %v3246, 4
        %v3249 = vshll.u32 %v3150, 16
        %v3251 = vrot.slane %v3249, 5
        %v3252 = vsel %vm1444, %v3247, %v3251
        %v3253 = vshrl.u32 %v3150, 16
        %v3255 = vrot.slane %v3253, 4
        %v3256 = vor.u32 %v3255, %v3251
        %v3257 = vrot.slane %v3256, 4
        %v3259 = vshll.u32 %v3151, 16
        %v3261 = vrot.slane %v3259, 5
        %v3262 = vsel %vm1444, %v3257, %v3261
        %v3264 = vshrl.u32 %v3152, 16
        %v3266 = vrot.slane %v3264, 4
        %v3267 = vshll.u32 %v3152, 16
        %v3269 = vrot.slane %v3267, 5
        %v3270 = vor.u32 %v3266, %v3269
        %v3271 = vrot.slane %v3270, 4
        %v3273 = vshll.u32 %v3153, 16
        %v3275 = vrot.slane %v3273, 5
        %v3276 = vsel %vm1444, %v3271, %v3275
        %v3277 = vshrl.u32 %v3153, 16
        %v3279 = vrot.slane %v3277, 4
        %v3280 = vor.u32 %v3279, %v3275
        %v3281 = vrot.slane %v3280, 4
        %v3283 = vshll.u32 %v3154, 16
        %v3285 = vrot.slane %v3283, 5
        %v3286 = vsel %vm1444, %v3281, %v3285
        %v3288 = vshrl.u32 %v3155, 16
        %v3290 = vrot.slane %v3288, 4
        %v3291 = vshll.u32 %v3155, 16
        %v3293 = vrot.slane %v3291, 5
        %v3294 = vor.u32 %v3290, %v3293
        %v3295 = vrot.slane %v3294, 4
        %v3297 = vshll.u32 %v3156, 16
        %v3299 = vrot.slane %v3297, 5
        %v3300 = vsel %vm1444, %v3295, %v3299
        %v3301 = vshrl.u32 %v3156, 16
        %v3303 = vrot.slane %v3301, 4
        %v3304 = vor.u32 %v3303, %v3299
        %v3305 = vrot.slane %v3304, 4
        %v3307 = vshll.u32 %v3157, 16
        %v3309 = vrot.slane %v3307, 5
        %v3310 = vsel %vm1444, %v3305, %v3309
        %v3312 = vshrl.u32 %v3158, 16
        %v3314 = vrot.slane %v3312, 4
        %v3315 = vshll.u32 %v3158, 16
        %v3317 = vrot.slane %v3315, 5
        %v3318 = vor.u32 %v3314, %v3317
        %v3319 = vrot.slane %v3318, 4
        %v3321 = vshll.u32 %v3159, 16
        %v3323 = vrot.slane %v3321, 5
        %v3324 = vsel %vm1444, %v3319, %v3323
        %v3325 = vshrl.u32 %v3159, 16
        %v3327 = vrot.slane %v3325, 4
        %v3328 = vor.u32 %v3327, %v3323
        %v3329 = vrot.slane %v3328, 4
        %v3331 = vshll.u32 %v3160, 16
        %v3333 = vrot.slane %v3331, 5
        %v3334 = vsel %vm1444, %v3329, %v3333
        %v3336 = vshrl.u32 %v3161, 16
        %v3338 = vrot.slane %v3336, 4
        %v3339 = vshll.u32 %v3161, 16
        %v3341 = vrot.slane %v3339, 5
        %v3342 = vor.u32 %v3338, %v3341
        %v3343 = vrot.slane %v3342, 4
        %v3345 = vshll.u32 %v3162, 16
        %v3347 = vrot.slane %v3345, 5
        %v3348 = vsel %vm1444, %v3343, %v3347
        %v3349 = vshrl.u32 %v3162, 16
        %v3351 = vrot.slane %v3349, 4
        %v3352 = vor.u32 %v3351, %v3347
        %v3353 = vrot.slane %v3352, 4
        %v3355 = vshll.u32 %v3163, 16
        %v3357 = vrot.slane %v3355, 5
        %v3358 = vsel %vm1444, %v3353, %v3357
        %v3360 = vshrl.u32 %v3164, 16
        %v3362 = vrot.slane %v3360, 4
        %v3363 = vshll.u32 %v3164, 16
        %v3365 = vrot.slane %v3363, 5
        %v3366 = vor.u32 %v3362, %v3365
        %v3367 = vrot.slane %v3366, 4
        %v3369 = vshll.u32 %v3165, 16
        %v3371 = vrot.slane %v3369, 5
        %v3372 = vsel %vm1444, %v3367, %v3371
        %v3373 = vshrl.u32 %v3165, 16
        %v3375 = vrot.slane %v3373, 4
        %v3376 = vor.u32 %v3375, %v3371
        %v3377 = vrot.slane %v3376, 4
        %v3379 = vshll.u32 %v3166, 16
        %v3381 = vrot.slane %v3379, 5
        %v3382 = vsel %vm1444, %v3377, %v3381
        %v3384 = vshrl.u32 %v3167, 16
        %v3386 = vrot.slane %v3384, 4
        %v3387 = vshll.u32 %v3167, 16
        %v3389 = vrot.slane %v3387, 5
        %v3390 = vor.u32 %v3386, %v3389
        %v3391 = vrot.slane %v3390, 4
        %v3393 = vshll.u32 %v3168, 16
        %v3395 = vrot.slane %v3393, 5
        %v3396 = vsel %vm1444, %v3391, %v3395
        %v3397 = vshrl.u32 %v3168, 16
        %v3399 = vrot.slane %v3397, 4
        %v3400 = vor.u32 %v3399, %v3395
        %v3401 = vrot.slane %v3400, 4
        %v3403 = vshll.u32 %v3169, 16
        %v3405 = vrot.slane %v3403, 5
        %v3406 = vsel %vm1444, %v3401, %v3405
        %v3408 = vshrl.u32 %v3170, 16
        %v3410 = vrot.slane %v3408, 4
        %v3411 = vshll.u32 %v3170, 16
        %v3413 = vrot.slane %v3411, 5
        %v3414 = vor.u32 %v3410, %v3413
        %v3415 = vrot.slane %v3414, 4
        %v3417 = vshll.u32 %v3171, 16
        %v3419 = vrot.slane %v3417, 5
        %v3420 = vsel %vm1444, %v3415, %v3419
        %v3421 = vshrl.u32 %v3171, 16
        %v3423 = vrot.slane %v3421, 4
        %v3424 = vor.u32 %v3423, %v3419
        %v3425 = vrot.slane %v3424, 4
        %v3427 = vshll.u32 %v3172, 16
        %v3429 = vrot.slane %v3427, 5
        %v3430 = vsel %vm1444, %v3425, %v3429
        %v3432 = vshrl.u32 %v3173, 16
        %v3434 = vrot.slane %v3432, 4
        %v3435 = vshll.u32 %v3173, 16
        %v3437 = vrot.slane %v3435, 5
        %v3438 = vor.u32 %v3434, %v3437
        %v3439 = vrot.slane %v3438, 4
        %v3441 = vshll.u32 %v3174, 16
        %v3443 = vrot.slane %v3441, 5
        %v3444 = vsel %vm1444, %v3439, %v3443
        %v3445 = vshrl.u32 %v3174, 16
        %v3447 = vrot.slane %v3445, 4
        %v3448 = vor.u32 %v3447, %v3443
        %v3449 = vrot.slane %v3448, 4
        %v3451 = vshll.u32 %v3175, 16
        %v3453 = vrot.slane %v3451, 5
        %v3454 = vsel %vm1444, %v3449, %v3453
        %v3456 = vshrl.u32 %v3176, 16
        %v3458 = vrot.slane %v3456, 4
        %v3459 = vshll.u32 %v3176, 16
        %v3461 = vrot.slane %v3459, 5
        %v3462 = vor.u32 %v3458, %v3461
        %v3463 = vrot.slane %v3462, 4
        %v3465 = vshll.u32 %v3177, 16
        %v3467 = vrot.slane %v3465, 5
        %v3468 = vsel %vm1444, %v3463, %v3467
        %v3469 = vshrl.u32 %v3177, 16
        %v3471 = vrot.slane %v3469, 4
        %v3472 = vor.u32 %v3471, %v3467
        %v3473 = vrot.slane %v3472, 4
        %v3475 = vshll.u32 %v3178, 16
        %v3477 = vrot.slane %v3475, 5
        %v3478 = vsel %vm1444, %v3473, %v3477
        %v3480 = vshrl.u32 %v3179, 16
        %v3482 = vrot.slane %v3480, 4
        %v3483 = vshll.u32 %v3179, 16
        %v3485 = vrot.slane %v3483, 5
        %v3486 = vor.u32 %v3482, %v3485
        %v3487 = vrot.slane %v3486, 4
        %v3489 = vshll.u32 %v3180, 16
        %v3491 = vrot.slane %v3489, 5
        %v3492 = vsel %vm1444, %v3487, %v3491
        %v3493 = vshrl.u32 %v3180, 16
        %v3495 = vrot.slane %v3493, 4
        %v3496 = vor.u32 %v3495, %v3491
        %v3497 = vrot.slane %v3496, 4
        %v3499 = vshll.u32 %v3181, 16
        %v3501 = vrot.slane %v3499, 5
        %v3502 = vsel %vm1444, %v3497, %v3501
        %v3504 = vshrl.u32 %v3182, 16
        %v3506 = vrot.slane %v3504, 4
        %v3507 = vshll.u32 %v3182, 16
        %v3509 = vrot.slane %v3507, 5
        %v3510 = vor.u32 %v3506, %v3509
        %v3511 = vrot.slane %v3510, 4
        %v3513 = vshll.u32 %v3183, 16
        %v3515 = vrot.slane %v3513, 5
        %v3516 = vsel %vm1444, %v3511, %v3515
        %v3517 = vshrl.u32 %v3183, 16
        %v3519 = vrot.slane %v3517, 4
        %v3520 = vor.u32 %v3519, %v3515
        %v3521 = vrot.slane %v3520, 4
        %v3523 = vshll.u32 %v3184, 16
        %v3525 = vrot.slane %v3523, 5
        %v3526 = vsel %vm1444, %v3521, %v3525
        %v3528 = vshrl.u32 %v3185, 16
        %v3530 = vrot.slane %v3528, 4
        %v3531 = vshll.u32 %v3185, 16
        %v3533 = vrot.slane %v3531, 5
        %v3534 = vor.u32 %v3530, %v3533
        %v3535 = vrot.slane %v3534, 4
        %v3537 = vshll.u32 %v3186, 16
        %v3539 = vrot.slane %v3537, 5
        %v3540 = vsel %vm1444, %v3535, %v3539
        %v3541 = vshrl.u32 %v3186, 16
        %v3543 = vrot.slane %v3541, 4
        %v3544 = vor.u32 %v3543, %v3539
        %v3545 = vrot.slane %v3544, 4
        %v3547 = vshll.u32 %v3187, 16
        %v3549 = vrot.slane %v3547, 5
        %v3550 = vsel %vm1444, %v3545, %v3549
        %v3552 = vshrl.u32 %v3188, 16
        %v3554 = vrot.slane %v3552, 4
        %v3555 = vshll.u32 %v3188, 16
        %v3557 = vrot.slane %v3555, 5
        %v3558 = vor.u32 %v3554, %v3557
        %v3559 = vrot.slane %v3558, 4
        %v3561 = vshll.u32 %v3189, 16
        %v3563 = vrot.slane %v3561, 5
        %v3564 = vsel %vm1444, %v3559, %v3563
        %v3565 = vshrl.u32 %v3189, 16
        %v3567 = vrot.slane %v3565, 4
        %v3568 = vor.u32 %v3567, %v3563
        %v3569 = vrot.slane %v3568, 4
        %v3571 = vshll.u32 %v3190, 16
        %v3573 = vrot.slane %v3571, 5
        %v3574 = vsel %vm1444, %v3569, %v3573
        %s3575 = scalar_lea.vmem %s1, 10
        %v3576 = vld [vmem:[%s3575] sm:$0x3]
        %v3577 = vunpack.c.l.b16 %v3204
        %v3578 = vunpack.c.l.b16 %v3214
        %v3579 = vunpack.c.l.b16 %v3228
        %v3580 = vunpack.c.l.b16 %v3238
        %v3581 = vunpack.c.l.b16 %v3252
        %v3582 = vunpack.c.l.b16 %v3262
        %v3583 = vunpack.c.l.b16 %v3276
        %v3584 = vunpack.c.l.b16 %v3286
        %v3585 = vunpack.c.l.b16 %v3300
        %v3586 = vunpack.c.l.b16 %v3310
        %v3587 = vunpack.c.l.b16 %v3324
        %v3588 = vunpack.c.l.b16 %v3334
        %v3589 = vunpack.c.l.b16 %v3348
        %v3590 = vunpack.c.l.b16 %v3358
        %v3591 = vunpack.c.l.b16 %v3372
        %v3592 = vunpack.c.l.b16 %v3382
        %v3593 = vunpack.c.l.b16 %v3396
        %v3594 = vunpack.c.l.b16 %v3406
        %v3595 = vunpack.c.l.b16 %v3420
        %v3596 = vunpack.c.l.b16 %v3430
        %v3597 = vunpack.c.l.b16 %v3444
        %v3598 = vunpack.c.l.b16 %v3454
        %v3599 = vunpack.c.l.b16 %v3468
        %v3600 = vunpack.c.l.b16 %v3478
        %v3601 = vunpack.c.l.b16 %v3492
        %v3602 = vunpack.c.l.b16 %v3502
        %v3603 = vunpack.c.l.b16 %v3516
        %v3604 = vunpack.c.l.b16 %v3526
        %v3605 = vunpack.c.l.b16 %v3540
        %v3606 = vunpack.c.l.b16 %v3550
        %v3607 = vunpack.c.l.b16 %v3564
        %v3608 = vunpack.c.l.b16 %v3574
        %v3609 = vpack.c.b16 %v3578, %v3577
        %v3610 = vpack.c.b16 %v3580, %v3579
        %v3611 = vpack.c.b16 %v3582, %v3581
        %v3612 = vpack.c.b16 %v3584, %v3583
        %v3613 = vpack.c.b16 %v3586, %v3585
        %v3614 = vpack.c.b16 %v3588, %v3587
        %v3615 = vpack.c.b16 %v3590, %v3589
        %v3616 = vpack.c.b16 %v3592, %v3591
        %v3617 = vpack.c.b16 %v3594, %v3593
        %v3618 = vpack.c.b16 %v3596, %v3595
        %v3619 = vpack.c.b16 %v3598, %v3597
        %v3620 = vpack.c.b16 %v3600, %v3599
        %v3621 = vpack.c.b16 %v3602, %v3601
        %v3622 = vpack.c.b16 %v3604, %v3603
        %v3623 = vpack.c.b16 %v3606, %v3605
        %v3624 = vpack.c.b16 %v3608, %v3607
        %v3626 = vsel %vm920, %v3609, 0
        %v3629 = vsel %vm920, %v3610, 0
        %v3632 = vsel %vm920, %v3611, 0
        %v3635 = vsel %vm920, %v3612, 0
        %v3638 = vsel %vm920, %v3613, 0
        %v3641 = vsel %vm920, %v3614, 0
        %v3644 = vsel %vm920, %v3615, 0
        %v3647 = vsel %vm920, %v3616, 0
        %v3650 = vsel %vm920, %v3617, 0
        %v3653 = vsel %vm920, %v3618, 0
        %v3656 = vsel %vm920, %v3619, 0
        %v3659 = vsel %vm920, %v3620, 0
        %v3662 = vsel %vm920, %v3621, 0
        %v3665 = vsel %vm920, %v3622, 0
        %v3668 = vsel %vm920, %v3623, 0
        %v3671 = vsel %vm920, %v3624, 0
        %v3674 = vsel %vm969, %v3576, 0
        %3676 = vmatprep.subr.bf16.mxu0 0
        %3677 = vmatpush1.bf16.msra.mxu0 %v3674
        %3678 = vmatprep.subr.bf16.mxu0 0
        %3679 = vmatpush1.bf16.msra.mxu0 0
        %3680 = vmatprep.subr.bf16.mxu0 0
        %3681 = vmatpush1.bf16.msra.mxu0 0
        %3682 = vmatprep.subr.bf16.mxu0 0
        %3683 = vmatpush1.bf16.msra.mxu0 0
        %3684 = vmatprep.subr.bf16.mxu0 0
        %3685 = vmatpush1.bf16.msra.mxu0 0
        %3686 = vmatprep.subr.bf16.mxu0 0
        %3687 = vmatpush1.bf16.msra.mxu0 0
        %3688 = vmatprep.subr.bf16.mxu0 0
        %3689 = vmatpush1.bf16.msra.mxu0 0
        %3690 = vmatprep.subr.bf16.mxu0 0
        %3691 = vmatpush1.bf16.msra.mxu0 0
        %3692 = vmatprep.subr.bf16.mxu0 0
        %3693 = vmatpush1.bf16.msra.mxu0 0
        %3694 = vmatprep.subr.bf16.mxu0 0
        %3695 = vmatpush1.bf16.msra.mxu0 0
        %3696 = vmatprep.subr.bf16.mxu0 0
        %3697 = vmatpush1.bf16.msra.mxu0 0
        %3698 = vmatprep.subr.bf16.mxu0 0
        %3699 = vmatpush1.bf16.msra.mxu0 0
        %3700 = vmatprep.subr.bf16.mxu0 0
        %3701 = vmatpush1.bf16.msra.mxu0 0
        %3702 = vmatprep.subr.bf16.mxu0 0
        %3703 = vmatpush1.bf16.msra.mxu0 0
        %3704 = vmatprep.subr.bf16.mxu0 0
        %3705 = vmatpush1.bf16.msra.mxu0 0
        %3706 = vmatprep.subr.bf16.mxu0 0
        %3707 = vmatpush1.bf16.msra.mxu0 0
        %3708 = vmatprep.mubr.bf16.mxu0 0
        %3709 = vmatmul.mubr.bf16.gmra.mrb[0].mxu0 %v3626
        %v3710 = vpop.f32.mrb[0].mxu0
        %v3711 = vadd.f32 0.0, %v3710
        %v3712 = vpop.f32.mrb[0].mxu0
        %v3713 = vpop.f32.mrb[0].mxu0
        %v3714 = vadd.f32 0.0, %v3713
        %v3715 = vpop.f32.mrb[0].mxu0
        %3716 = vmatprep.mubr.bf16.mxu0 0
        %3717 = vmatmul.mubr.bf16.gmra.mrb[0].mxu0 %v3629
        %v3718 = vpop.f32.mrb[0].mxu0
        %v3719 = vadd.f32 0.0, %v3718
        %v3720 = vpop.f32.mrb[0].mxu0
        %v3721 = vpop.f32.mrb[0].mxu0
        %v3722 = vadd.f32 0.0, %v3721
        %v3723 = vpop.f32.mrb[0].mxu0
        %3724 = vmatprep.mubr.bf16.mxu0 0
        %3725 = vmatmul.mubr.bf16.gmra.mrb[0].mxu0 %v3632
        %v3726 = vpop.f32.mrb[0].mxu0
        %v3727 = vadd.f32 0.0, %v3726
        %v3728 = vpop.f32.mrb[0].mxu0
        %v3729 = vpop.f32.mrb[0].mxu0
        %v3730 = vadd.f32 0.0, %v3729
        %v3731 = vpop.f32.mrb[0].mxu0
        %3732 = vmatprep.mubr.bf16.mxu0 0
        %3733 = vmatmul.mubr.bf16.gmra.mrb[0].mxu0 %v3635
        %v3734 = vpop.f32.mrb[0].mxu0
        %v3735 = vadd.f32 0.0, %v3734
        %v3736 = vpop.f32.mrb[0].mxu0
        %v3737 = vpop.f32.mrb[0].mxu0
        %v3738 = vadd.f32 0.0, %v3737
        %v3739 = vpop.f32.mrb[0].mxu0
        %3740 = vmatprep.mubr.bf16.mxu0 0
        %3741 = vmatmul.mubr.bf16.gmra.mrb[0].mxu0 %v3638
        %v3742 = vpop.f32.mrb[0].mxu0
        %v3743 = vadd.f32 0.0, %v3742
        %v3744 = vpop.f32.mrb[0].mxu0
        %v3745 = vpop.f32.mrb[0].mxu0
        %v3746 = vadd.f32 0.0, %v3745
        %v3747 = vpop.f32.mrb[0].mxu0
        %3748 = vmatprep.mubr.bf16.mxu0 0
        %3749 = vmatmul.mubr.bf16.gmra.mrb[0].mxu0 %v3641
        %v3750 = vpop.f32.mrb[0].mxu0
        %v3751 = vadd.f32 0.0, %v3750
        %v3752 = vpop.f32.mrb[0].mxu0
        %v3753 = vpop.f32.mrb[0].mxu0
        %v3754 = vadd.f32 0.0, %v3753
        %v3755 = vpop.f32.mrb[0].mxu0
        %3756 = vmatprep.mubr.bf16.mxu0 0
        %3757 = vmatmul.mubr.bf16.gmra.mrb[0].mxu0 %v3644
        %v3758 = vpop.f32.mrb[0].mxu0
        %v3759 = vadd.f32 0.0, %v3758
        %v3760 = vpop.f32.mrb[0].mxu0
        %v3761 = vpop.f32.mrb[0].mxu0
        %v3762 = vadd.f32 0.0, %v3761
        %v3763 = vpop.f32.mrb[0].mxu0
        %3764 = vmatprep.mubr.bf16.mxu0 0
        %3765 = vmatmul.mubr.bf16.gmra.mrb[0].mxu0 %v3647
        %v3766 = vpop.f32.mrb[0].mxu0
        %v3767 = vadd.f32 0.0, %v3766
        %v3768 = vpop.f32.mrb[0].mxu0
        %v3769 = vpop.f32.mrb[0].mxu0
        %v3770 = vadd.f32 0.0, %v3769
        %v3771 = vpop.f32.mrb[0].mxu0
        %3772 = vmatprep.mubr.bf16.mxu0 0
        %3773 = vmatmul.mubr.bf16.gmra.mrb[0].mxu0 %v3650
        %v3774 = vpop.f32.mrb[0].mxu0
        %v3775 = vadd.f32 0.0, %v3774
        %v3776 = vpop.f32.mrb[0].mxu0
        %v3777 = vpop.f32.mrb[0].mxu0
        %v3778 = vadd.f32 0.0, %v3777
        %v3779 = vpop.f32.mrb[0].mxu0
        %3780 = vmatprep.mubr.bf16.mxu0 0
        %3781 = vmatmul.mubr.bf16.gmra.mrb[0].mxu0 %v3653
        %v3782 = vpop.f32.mrb[0].mxu0
        %v3783 = vadd.f32 0.0, %v3782
        %v3784 = vpop.f32.mrb[0].mxu0
        %v3785 = vpop.f32.mrb[0].mxu0
        %v3786 = vadd.f32 0.0, %v3785
        %v3787 = vpop.f32.mrb[0].mxu0
        %3788 = vmatprep.mubr.bf16.mxu0 0
        %3789 = vmatmul.mubr.bf16.gmra.mrb[0].mxu0 %v3656
        %v3790 = vpop.f32.mrb[0].mxu0
        %v3791 = vadd.f32 0.0, %v3790
        %v3792 = vpop.f32.mrb[0].mxu0
        %v3793 = vpop.f32.mrb[0].mxu0
        %v3794 = vadd.f32 0.0, %v3793
        %v3795 = vpop.f32.mrb[0].mxu0
        %3796 = vmatprep.mubr.bf16.mxu0 0
        %3797 = vmatmul.mubr.bf16.gmra.mrb[0].mxu0 %v3659
        %v3798 = vpop.f32.mrb[0].mxu0
        %v3799 = vadd.f32 0.0, %v3798
        %v3800 = vpop.f32.mrb[0].mxu0
        %v3801 = vpop.f32.mrb[0].mxu0
        %v3802 = vadd.f32 0.0, %v3801
        %v3803 = vpop.f32.mrb[0].mxu0
        %3804 = vmatprep.mubr.bf16.mxu0 0
        %3805 = vmatmul.mubr.bf16.gmra.mrb[0].mxu0 %v3662
        %v3806 = vpop.f32.mrb[0].mxu0
        %v3807 = vadd.f32 0.0, %v3806
        %v3808 = vpop.f32.mrb[0].mxu0
        %v3809 = vpop.f32.mrb[0].mxu0
        %v3810 = vadd.f32 0.0, %v3809
        %v3811 = vpop.f32.mrb[0].mxu0
        %3812 = vmatprep.mubr.bf16.mxu0 0
        %3813 = vmatmul.mubr.bf16.gmra.mrb[0].mxu0 %v3665
        %v3814 = vpop.f32.mrb[0].mxu0
        %v3815 = vadd.f32 0.0, %v3814
        %v3816 = vpop.f32.mrb[0].mxu0
        %v3817 = vpop.f32.mrb[0].mxu0
        %v3818 = vadd.f32 0.0, %v3817
        %v3819 = vpop.f32.mrb[0].mxu0
        %3820 = vmatprep.mubr.bf16.mxu0 0
        %3821 = vmatmul.mubr.bf16.gmra.mrb[0].mxu0 %v3668
        %v3822 = vpop.f32.mrb[0].mxu0
        %v3823 = vadd.f32 0.0, %v3822
        %v3824 = vpop.f32.mrb[0].mxu0
        %v3825 = vpop.f32.mrb[0].mxu0
        %v3826 = vadd.f32 0.0, %v3825
        %v3827 = vpop.f32.mrb[0].mxu0
        %3828 = vmatprep.mubr.bf16.mxu0 0
        %3829 = vmatmul.mubr.bf16.gmra.mrb[0].mxu0 %v3671
        %v3830 = vpop.f32.mrb[0].mxu0
        %v3831 = vadd.f32 0.0, %v3830
        %v3832 = vpop.f32.mrb[0].mxu0
        %v3833 = vpop.f32.mrb[0].mxu0
        %v3834 = vadd.f32 0.0, %v3833
        %v3835 = vpop.f32.mrb[0].mxu0
        %3836 = vdwg.mxu0
        %v3837 = vadd.f32 %v3111, %v3711
        %v3838 = vadd.f32 %v3112, %v3714
        %v3839 = vadd.f32 %v3113, %v3719
        %v3840 = vadd.f32 %v3114, %v3722
        %v3841 = vadd.f32 %v3115, %v3727
        %v3842 = vadd.f32 %v3116, %v3730
        %v3843 = vadd.f32 %v3117, %v3735
        %v3844 = vadd.f32 %v3118, %v3738
        %v3845 = vadd.f32 %v3119, %v3743
        %v3846 = vadd.f32 %v3120, %v3746
        %v3847 = vadd.f32 %v3121, %v3751
        %v3848 = vadd.f32 %v3122, %v3754
        %v3849 = vadd.f32 %v3123, %v3759
        %v3850 = vadd.f32 %v3124, %v3762
        %v3851 = vadd.f32 %v3125, %v3767
        %v3852 = vadd.f32 %v3126, %v3770
        %v3853 = vadd.f32 %v3127, %v3775
        %v3854 = vadd.f32 %v3128, %v3778
        %v3855 = vadd.f32 %v3129, %v3783
        %v3856 = vadd.f32 %v3130, %v3786
        %v3857 = vadd.f32 %v3131, %v3791
        %v3858 = vadd.f32 %v3132, %v3794
        %v3859 = vadd.f32 %v3133, %v3799
        %v3860 = vadd.f32 %v3134, %v3802
        %v3861 = vadd.f32 %v3135, %v3807
        %v3862 = vadd.f32 %v3136, %v3810
        %v3863 = vadd.f32 %v3137, %v3815
        %v3864 = vadd.f32 %v3138, %v3818
        %v3865 = vadd.f32 %v3139, %v3823
        %v3866 = vadd.f32 %v3140, %v3826
        %v3867 = vadd.f32 %v3141, %v3831
        %v3868 = vadd.f32 %v3142, %v3834
        %s3869 = scalar_lea.vmem [#allocation2], 40
        %v3870 = vld [vmem:[%s3869 + $0x4] sm:$0x8]
        %v3871 = vld [vmem:[%s3869 + $0x8] sm:$0xf]
        %v3872 = vld [vmem:[%s3869 + $0xc] sm:$0xf]
        %v3873 = vld [vmem:[%s3869 + $0x18] sm:$0x8]
        %v3874 = vld [vmem:[%s3869 + $0x1c] sm:$0xf]
        %v3875 = vld [vmem:[%s3869 + $0x20] sm:$0xf]
        %v3876 = vld [vmem:[%s3869 + $0x2c] sm:$0x8]
        %v3877 = vld [vmem:[%s3869 + $0x30] sm:$0xf]
        %v3878 = vld [vmem:[%s3869 + $0x34] sm:$0xf]
        %v3879 = vld [vmem:[%s3869 + $0x40] sm:$0x8]
        %v3880 = vld [vmem:[%s3869 + $0x44] sm:$0xf]
        %v3881 = vld [vmem:[%s3869 + $0x48] sm:$0xf]
        %v3882 = vld [vmem:[%s3869 + $0x54] sm:$0x8]
        %v3883 = vld [vmem:[%s3869 + $0x58] sm:$0xf]
        %v3884 = vld [vmem:[%s3869 + $0x5c] sm:$0xf]
        %v3885 = vld [vmem:[%s3869 + $0x68] sm:$0x8]
        %v3886 = vld [vmem:[%s3869 + $0x6c] sm:$0xf]
        %v3887 = vld [vmem:[%s3869 + $0x70] sm:$0xf]
        %v3888 = vld [vmem:[%s3869 + $0x7c] sm:$0x8]
        %v3889 = vld [vmem:[%s3869 + $0x80] sm:$0xf]
        %v3890 = vld [vmem:[%s3869 + $0x84] sm:$0xf]
        %v3891 = vld [vmem:[%s3869 + $0x90] sm:$0x8]
        %v3892 = vld [vmem:[%s3869 + $0x94] sm:$0xf]
        %v3893 = vld [vmem:[%s3869 + $0x98] sm:$0xf]
        %v3894 = vld [vmem:[%s3869 + $0xa4] sm:$0x8]
        %v3895 = vld [vmem:[%s3869 + $0xa8] sm:$0xf]
        %v3896 = vld [vmem:[%s3869 + $0xac] sm:$0xf]
        %v3897 = vld [vmem:[%s3869 + $0xb8] sm:$0x8]
        %v3898 = vld [vmem:[%s3869 + $0xbc] sm:$0xf]
        %v3899 = vld [vmem:[%s3869 + $0xc0] sm:$0xf]
        %v3900 = vld [vmem:[%s3869 + $0xcc] sm:$0x8]
        %v3901 = vld [vmem:[%s3869 + $0xd0] sm:$0xf]
        %v3902 = vld [vmem:[%s3869 + $0xd4] sm:$0xf]
        %v3903 = vld [vmem:[%s3869 + $0xe0] sm:$0x8]
        %v3904 = vld [vmem:[%s3869 + $0xe4] sm:$0xf]
        %v3905 = vld [vmem:[%s3869 + $0xe8] sm:$0xf]
        %v3906 = vld [vmem:[%s3869 + $0xf4] sm:$0x8]
        %v3907 = vld [vmem:[%s3869 + $0xf8] sm:$0xf]
        %v3908 = vld [vmem:[%s3869 + $0xfc] sm:$0xf]
        %v3909 = vld [vmem:[%s3869 + $0x108] sm:$0x8]
        %v3910 = vld [vmem:[%s3869 + $0x10c] sm:$0xf]
        %v3911 = vld [vmem:[%s3869 + $0x110] sm:$0xf]
        %v3912 = vld [vmem:[%s3869 + $0x11c] sm:$0x8]
        %v3913 = vld [vmem:[%s3869 + $0x120] sm:$0xf]
        %v3914 = vld [vmem:[%s3869 + $0x124] sm:$0xf]
        %v3915 = vld [vmem:[%s3869 + $0x130] sm:$0x8]
        %v3916 = vld [vmem:[%s3869 + $0x134] sm:$0xf]
        %v3917 = vld [vmem:[%s3869 + $0x138] sm:$0xf]
        %v3919 = vshrl.u32 %v3870, 16
        %v3921 = vrot.slane %v3919, 7
        %v3922 = vrot.slane %v3921, 4
        %v3924 = vshrl.u32 %v3871, 16
        %v3926 = vrot.slane %v3924, 7
        %v3927 = vshll.u32 %v3871, 16
        %v3929 = vor.u32 %v3926, %v3927
        %v3930 = vsel %vm484, %v3922, %v3929
        %v3931 = vrot.slane %v3926, 4
        %v3933 = vshrl.u32 %v3872, 16
        %v3935 = vrot.slane %v3933, 7
        %v3936 = vshll.u32 %v3872, 16
        %v3938 = vor.u32 %v3935, %v3936
        %v3939 = vsel %vm484, %v3931, %v3938
        %v3941 = vshrl.u32 %v3873, 16
        %v3943 = vrot.slane %v3941, 7
        %v3944 = vrot.slane %v3943, 4
        %v3946 = vshrl.u32 %v3874, 16
        %v3948 = vrot.slane %v3946, 7
        %v3949 = vshll.u32 %v3874, 16
        %v3951 = vor.u32 %v3948, %v3949
        %v3952 = vsel %vm484, %v3944, %v3951
        %v3953 = vrot.slane %v3948, 4
        %v3955 = vshrl.u32 %v3875, 16
        %v3957 = vrot.slane %v3955, 7
        %v3958 = vshll.u32 %v3875, 16
        %v3960 = vor.u32 %v3957, %v3958
        %v3961 = vsel %vm484, %v3953, %v3960
        %v3963 = vshrl.u32 %v3876, 16
        %v3965 = vrot.slane %v3963, 7
        %v3966 = vrot.slane %v3965, 4
        %v3968 = vshrl.u32 %v3877, 16
        %v3970 = vrot.slane %v3968, 7
        %v3971 = vshll.u32 %v3877, 16
        %v3973 = vor.u32 %v3970, %v3971
        %v3974 = vsel %vm484, %v3966, %v3973
        %v3975 = vrot.slane %v3970, 4
        %v3977 = vshrl.u32 %v3878, 16
        %v3979 = vrot.slane %v3977, 7
        %v3980 = vshll.u32 %v3878, 16
        %v3982 = vor.u32 %v3979, %v3980
        %v3983 = vsel %vm484, %v3975, %v3982
        %v3985 = vshrl.u32 %v3879, 16
        %v3987 = vrot.slane %v3985, 7
        %v3988 = vrot.slane %v3987, 4
        %v3990 = vshrl.u32 %v3880, 16
        %v3992 = vrot.slane %v3990, 7
        %v3993 = vshll.u32 %v3880, 16
        %v3995 = vor.u32 %v3992, %v3993
        %v3996 = vsel %vm484, %v3988, %v3995
        %v3997 = vrot.slane %v3992, 4
        %v3999 = vshrl.u32 %v3881, 16
        %v4001 = vrot.slane %v3999, 7
        %v4002 = vshll.u32 %v3881, 16
        %v4004 = vor.u32 %v4001, %v4002
        %v4005 = vsel %vm484, %v3997, %v4004
        %v4007 = vshrl.u32 %v3882, 16
        %v4009 = vrot.slane %v4007, 7
        %v4010 = vrot.slane %v4009, 4
        %v4012 = vshrl.u32 %v3883, 16
        %v4014 = vrot.slane %v4012, 7
        %v4015 = vshll.u32 %v3883, 16
        %v4017 = vor.u32 %v4014, %v4015
        %v4018 = vsel %vm484, %v4010, %v4017
        %v4019 = vrot.slane %v4014, 4
        %v4021 = vshrl.u32 %v3884, 16
        %v4023 = vrot.slane %v4021, 7
        %v4024 = vshll.u32 %v3884, 16
        %v4026 = vor.u32 %v4023, %v4024
        %v4027 = vsel %vm484, %v4019, %v4026
        %v4029 = vshrl.u32 %v3885, 16
        %v4031 = vrot.slane %v4029, 7
        %v4032 = vrot.slane %v4031, 4
        %v4034 = vshrl.u32 %v3886, 16
        %v4036 = vrot.slane %v4034, 7
        %v4037 = vshll.u32 %v3886, 16
        %v4039 = vor.u32 %v4036, %v4037
        %v4040 = vsel %vm484, %v4032, %v4039
        %v4041 = vrot.slane %v4036, 4
        %v4043 = vshrl.u32 %v3887, 16
        %v4045 = vrot.slane %v4043, 7
        %v4046 = vshll.u32 %v3887, 16
        %v4048 = vor.u32 %v4045, %v4046
        %v4049 = vsel %vm484, %v4041, %v4048
        %v4051 = vshrl.u32 %v3888, 16
        %v4053 = vrot.slane %v4051, 7
        %v4054 = vrot.slane %v4053, 4
        %v4056 = vshrl.u32 %v3889, 16
        %v4058 = vrot.slane %v4056, 7
        %v4059 = vshll.u32 %v3889, 16
        %v4061 = vor.u32 %v4058, %v4059
        %v4062 = vsel %vm484, %v4054, %v4061
        %v4063 = vrot.slane %v4058, 4
        %v4065 = vshrl.u32 %v3890, 16
        %v4067 = vrot.slane %v4065, 7
        %v4068 = vshll.u32 %v3890, 16
        %v4070 = vor.u32 %v4067, %v4068
        %v4071 = vsel %vm484, %v4063, %v4070
        %v4073 = vshrl.u32 %v3891, 16
        %v4075 = vrot.slane %v4073, 7
        %v4076 = vrot.slane %v4075, 4
        %v4078 = vshrl.u32 %v3892, 16
        %v4080 = vrot.slane %v4078, 7
        %v4081 = vshll.u32 %v3892, 16
        %v4083 = vor.u32 %v4080, %v4081
        %v4084 = vsel %vm484, %v4076, %v4083
        %v4085 = vrot.slane %v4080, 4
        %v4087 = vshrl.u32 %v3893, 16
        %v4089 = vrot.slane %v4087, 7
        %v4090 = vshll.u32 %v3893, 16
        %v4092 = vor.u32 %v4089, %v4090
        %v4093 = vsel %vm484, %v4085, %v4092
        %v4095 = vshrl.u32 %v3894, 16
        %v4097 = vrot.slane %v4095, 7
        %v4098 = vrot.slane %v4097, 4
        %v4100 = vshrl.u32 %v3895, 16
        %v4102 = vrot.slane %v4100, 7
        %v4103 = vshll.u32 %v3895, 16
        %v4105 = vor.u32 %v4102, %v4103
        %v4106 = vsel %vm484, %v4098, %v4105
        %v4107 = vrot.slane %v4102, 4
        %v4109 = vshrl.u32 %v3896, 16
        %v4111 = vrot.slane %v4109, 7
        %v4112 = vshll.u32 %v3896, 16
        %v4114 = vor.u32 %v4111, %v4112
        %v4115 = vsel %vm484, %v4107, %v4114
        %v4117 = vshrl.u32 %v3897, 16
        %v4119 = vrot.slane %v4117, 7
        %v4120 = vrot.slane %v4119, 4
        %v4122 = vshrl.u32 %v3898, 16
        %v4124 = vrot.slane %v4122, 7
        %v4125 = vshll.u32 %v3898, 16
        %v4127 = vor.u32 %v4124, %v4125
        %v4128 = vsel %vm484, %v4120, %v4127
        %v4129 = vrot.slane %v4124, 4
        %v4131 = vshrl.u32 %v3899, 16
        %v4133 = vrot.slane %v4131, 7
        %v4134 = vshll.u32 %v3899, 16
        %v4136 = vor.u32 %v4133, %v4134
        %v4137 = vsel %vm484, %v4129, %v4136
        %v4139 = vshrl.u32 %v3900, 16
        %v4141 = vrot.slane %v4139, 7
        %v4142 = vrot.slane %v4141, 4
        %v4144 = vshrl.u32 %v3901, 16
        %v4146 = vrot.slane %v4144, 7
        %v4147 = vshll.u32 %v3901, 16
        %v4149 = vor.u32 %v4146, %v4147
        %v4150 = vsel %vm484, %v4142, %v4149
        %v4151 = vrot.slane %v4146, 4
        %v4153 = vshrl.u32 %v3902, 16
        %v4155 = vrot.slane %v4153, 7
        %v4156 = vshll.u32 %v3902, 16
        %v4158 = vor.u32 %v4155, %v4156
        %v4159 = vsel %vm484, %v4151, %v4158
        %v4161 = vshrl.u32 %v3903, 16
        %v4163 = vrot.slane %v4161, 7
        %v4164 = vrot.slane %v4163, 4
        %v4166 = vshrl.u32 %v3904, 16
        %v4168 = vrot.slane %v4166, 7
        %v4169 = vshll.u32 %v3904, 16
        %v4171 = vor.u32 %v4168, %v4169
        %v4172 = vsel %vm484, %v4164, %v4171
        %v4173 = vrot.slane %v4168, 4
        %v4175 = vshrl.u32 %v3905, 16
        %v4177 = vrot.slane %v4175, 7
        %v4178 = vshll.u32 %v3905, 16
        %v4180 = vor.u32 %v4177, %v4178
        %v4181 = vsel %vm484, %v4173, %v4180
        %v4183 = vshrl.u32 %v3906, 16
        %v4185 = vrot.slane %v4183, 7
        %v4186 = vrot.slane %v4185, 4
        %v4188 = vshrl.u32 %v3907, 16
        %v4190 = vrot.slane %v4188, 7
        %v4191 = vshll.u32 %v3907, 16
        %v4193 = vor.u32 %v4190, %v4191
        %v4194 = vsel %vm484, %v4186, %v4193
        %v4195 = vrot.slane %v4190, 4
        %v4197 = vshrl.u32 %v3908, 16
        %v4199 = vrot.slane %v4197, 7
        %v4200 = vshll.u32 %v3908, 16
        %v4202 = vor.u32 %v4199, %v4200
        %v4203 = vsel %vm484, %v4195, %v4202
        %v4205 = vshrl.u32 %v3909, 16
        %v4207 = vrot.slane %v4205, 7
        %v4208 = vrot.slane %v4207, 4
        %v4210 = vshrl.u32 %v3910, 16
        %v4212 = vrot.slane %v4210, 7
        %v4213 = vshll.u32 %v3910, 16
        %v4215 = vor.u32 %v4212, %v4213
        %v4216 = vsel %vm484, %v4208, %v4215
        %v4217 = vrot.slane %v4212, 4
        %v4219 = vshrl.u32 %v3911, 16
        %v4221 = vrot.slane %v4219, 7
        %v4222 = vshll.u32 %v3911, 16
        %v4224 = vor.u32 %v4221, %v4222
        %v4225 = vsel %vm484, %v4217, %v4224
        %v4227 = vshrl.u32 %v3912, 16
        %v4229 = vrot.slane %v4227, 7
        %v4230 = vrot.slane %v4229, 4
        %v4232 = vshrl.u32 %v3913, 16
        %v4234 = vrot.slane %v4232, 7
        %v4235 = vshll.u32 %v3913, 16
        %v4237 = vor.u32 %v4234, %v4235
        %v4238 = vsel %vm484, %v4230, %v4237
        %v4239 = vrot.slane %v4234, 4
        %v4241 = vshrl.u32 %v3914, 16
        %v4243 = vrot.slane %v4241, 7
        %v4244 = vshll.u32 %v3914, 16
        %v4246 = vor.u32 %v4243, %v4244
        %v4247 = vsel %vm484, %v4239, %v4246
        %v4249 = vshrl.u32 %v3915, 16
        %v4251 = vrot.slane %v4249, 7
        %v4252 = vrot.slane %v4251, 4
        %v4254 = vshrl.u32 %v3916, 16
        %v4256 = vrot.slane %v4254, 7
        %v4257 = vshll.u32 %v3916, 16
        %v4259 = vor.u32 %v4256, %v4257
        %v4260 = vsel %vm484, %v4252, %v4259
        %v4261 = vrot.slane %v4256, 4
        %v4263 = vshrl.u32 %v3917, 16
        %v4265 = vrot.slane %v4263, 7
        %v4266 = vshll.u32 %v3917, 16
        %v4268 = vor.u32 %v4265, %v4266
        %v4269 = vsel %vm484, %v4261, %v4268
        %s4270 = scalar_lea.vmem %s1, 12
        %v4271 = vld [vmem:[%s4270] sm:$0x3]
        %v4272 = vunpack.c.l.b16 %v3930
        %v4273 = vunpack.c.l.b16 %v3939
        %v4274 = vunpack.c.l.b16 %v3952
        %v4275 = vunpack.c.l.b16 %v3961
        %v4276 = vunpack.c.l.b16 %v3974
        %v4277 = vunpack.c.l.b16 %v3983
        %v4278 = vunpack.c.l.b16 %v3996
        %v4279 = vunpack.c.l.b16 %v4005
        %v4280 = vunpack.c.l.b16 %v4018
        %v4281 = vunpack.c.l.b16 %v4027
        %v4282 = vunpack.c.l.b16 %v4040
        %v4283 = vunpack.c.l.b16 %v4049
        %v4284 = vunpack.c.l.b16 %v4062
        %v4285 = vunpack.c.l.b16 %v4071
        %v4286 = vunpack.c.l.b16 %v4084
        %v4287 = vunpack.c.l.b16 %v4093
        %v4288 = vunpack.c.l.b16 %v4106
        %v4289 = vunpack.c.l.b16 %v4115
        %v4290 = vunpack.c.l.b16 %v4128
        %v4291 = vunpack.c.l.b16 %v4137
        %v4292 = vunpack.c.l.b16 %v4150
        %v4293 = vunpack.c.l.b16 %v4159
        %v4294 = vunpack.c.l.b16 %v4172
        %v4295 = vunpack.c.l.b16 %v4181
        %v4296 = vunpack.c.l.b16 %v4194
        %v4297 = vunpack.c.l.b16 %v4203
        %v4298 = vunpack.c.l.b16 %v4216
        %v4299 = vunpack.c.l.b16 %v4225
        %v4300 = vunpack.c.l.b16 %v4238
        %v4301 = vunpack.c.l.b16 %v4247
        %v4302 = vunpack.c.l.b16 %v4260
        %v4303 = vunpack.c.l.b16 %v4269
        %v4304 = vpack.c.b16 %v4273, %v4272
        %v4305 = vpack.c.b16 %v4275, %v4274
        %v4306 = vpack.c.b16 %v4277, %v4276
        %v4307 = vpack.c.b16 %v4279, %v4278
        %v4308 = vpack.c.b16 %v4281, %v4280
        %v4309 = vpack.c.b16 %v4283, %v4282
        %v4310 = vpack.c.b16 %v4285, %v4284
        %v4311 = vpack.c.b16 %v4287, %v4286
        %v4312 = vpack.c.b16 %v4289, %v4288
        %v4313 = vpack.c.b16 %v4291, %v4290
        %v4314 = vpack.c.b16 %v4293, %v4292
        %v4315 = vpack.c.b16 %v4295, %v4294
        %v4316 = vpack.c.b16 %v4297, %v4296
        %v4317 = vpack.c.b16 %v4299, %v4298
        %v4318 = vpack.c.b16 %v4301, %v4300
        %v4319 = vpack.c.b16 %v4303, %v4302
        %v4321 = vsel %vm920, %v4304, 0
        %v4324 = vsel %vm920, %v4305, 0
        %v4327 = vsel %vm920, %v4306, 0
        %v4330 = vsel %vm920, %v4307, 0
        %v4333 = vsel %vm920, %v4308, 0
        %v4336 = vsel %vm920, %v4309, 0
        %v4339 = vsel %vm920, %v4310, 0
        %v4342 = vsel %vm920, %v4311, 0
        %v4345 = vsel %vm920, %v4312, 0
        %v4348 = vsel %vm920, %v4313, 0
        %v4351 = vsel %vm920, %v4314, 0
        %v4354 = vsel %vm920, %v4315, 0
        %v4357 = vsel %vm920, %v4316, 0
        %v4360 = vsel %vm920, %v4317, 0
        %v4363 = vsel %vm920, %v4318, 0
        %v4366 = vsel %vm920, %v4319, 0
        %v4369 = vsel %vm969, %v4271, 0
        %4371 = vmatprep.subr.bf16.mxu0 0
        %4372 = vmatpush1.bf16.msra.mxu0 %v4369
        %4373 = vmatprep.subr.bf16.mxu0 0
        %4374 = vmatpush1.bf16.msra.mxu0 0
        %4375 = vmatprep.subr.bf16.mxu0 0
        %4376 = vmatpush1.bf16.msra.mxu0 0
        %4377 = vmatprep.subr.bf16.mxu0 0
        %4378 = vmatpush1.bf16.msra.mxu0 0
        %4379 = vmatprep.subr.bf16.mxu0 0
        %4380 = vmatpush1.bf16.msra.mxu0 0
        %4381 = vmatprep.subr.bf16.mxu0 0
        %4382 = vmatpush1.bf16.msra.mxu0 0
        %4383 = vmatprep.subr.bf16.mxu0 0
        %4384 = vmatpush1.bf16.msra.mxu0 0
        %4385 = vmatprep.subr.bf16.mxu0 0
        %4386 = vmatpush1.bf16.msra.mxu0 0
        %4387 = vmatprep.subr.bf16.mxu0 0
        %4388 = vmatpush1.bf16.msra.mxu0 0
        %4389 = vmatprep.subr.bf16.mxu0 0
        %4390 = vmatpush1.bf16.msra.mxu0 0
        %4391 = vmatprep.subr.bf16.mxu0 0
        %4392 = vmatpush1.bf16.msra.mxu0 0
        %4393 = vmatprep.subr.bf16.mxu0 0
        %4394 = vmatpush1.bf16.msra.mxu0 0
        %4395 = vmatprep.subr.bf16.mxu0 0
        %4396 = vmatpush1.bf16.msra.mxu0 0
        %4397 = vmatprep.subr.bf16.mxu0 0
        %4398 = vmatpush1.bf16.msra.mxu0 0
        %4399 = vmatprep.subr.bf16.mxu0 0
        %4400 = vmatpush1.bf16.msra.mxu0 0
        %4401 = vmatprep.subr.bf16.mxu0 0
        %4402 = vmatpush1.bf16.msra.mxu0 0
        %4403 = vmatprep.mubr.bf16.mxu0 0
        %4404 = vmatmul.mubr.bf16.gmra.mrb[0].mxu0 %v4321
        %v4405 = vpop.f32.mrb[0].mxu0
        %v4406 = vadd.f32 0.0, %v4405
        %v4407 = vpop.f32.mrb[0].mxu0
        %v4408 = vpop.f32.mrb[0].mxu0
        %v4409 = vadd.f32 0.0, %v4408
        %v4410 = vpop.f32.mrb[0].mxu0
        %4411 = vmatprep.mubr.bf16.mxu0 0
        %4412 = vmatmul.mubr.bf16.gmra.mrb[0].mxu0 %v4324
        %v4413 = vpop.f32.mrb[0].mxu0
        %v4414 = vadd.f32 0.0, %v4413
        %v4415 = vpop.f32.mrb[0].mxu0
        %v4416 = vpop.f32.mrb[0].mxu0
        %v4417 = vadd.f32 0.0, %v4416
        %v4418 = vpop.f32.mrb[0].mxu0
        %4419 = vmatprep.mubr.bf16.mxu0 0
        %4420 = vmatmul.mubr.bf16.gmra.mrb[0].mxu0 %v4327
        %v4421 = vpop.f32.mrb[0].mxu0
        %v4422 = vadd.f32 0.0, %v4421
        %v4423 = vpop.f32.mrb[0].mxu0
        %v4424 = vpop.f32.mrb[0].mxu0
        %v4425 = vadd.f32 0.0, %v4424
        %v4426 = vpop.f32.mrb[0].mxu0
        %4427 = vmatprep.mubr.bf16.mxu0 0
        %4428 = vmatmul.mubr.bf16.gmra.mrb[0].mxu0 %v4330
        %v4429 = vpop.f32.mrb[0].mxu0
        %v4430 = vadd.f32 0.0, %v4429
        %v4431 = vpop.f32.mrb[0].mxu0
        %v4432 = vpop.f32.mrb[0].mxu0
        %v4433 = vadd.f32 0.0, %v4432
        %v4434 = vpop.f32.mrb[0].mxu0
        %4435 = vmatprep.mubr.bf16.mxu0 0
        %4436 = vmatmul.mubr.bf16.gmra.mrb[0].mxu0 %v4333
        %v4437 = vpop.f32.mrb[0].mxu0
        %v4438 = vadd.f32 0.0, %v4437
        %v4439 = vpop.f32.mrb[0].mxu0
        %v4440 = vpop.f32.mrb[0].mxu0
        %v4441 = vadd.f32 0.0, %v4440
        %v4442 = vpop.f32.mrb[0].mxu0
        %4443 = vmatprep.mubr.bf16.mxu0 0
        %4444 = vmatmul.mubr.bf16.gmra.mrb[0].mxu0 %v4336
        %v4445 = vpop.f32.mrb[0].mxu0
        %v4446 = vadd.f32 0.0, %v4445
        %v4447 = vpop.f32.mrb[0].mxu0
        %v4448 = vpop.f32.mrb[0].mxu0
        %v4449 = vadd.f32 0.0, %v4448
        %v4450 = vpop.f32.mrb[0].mxu0
        %4451 = vmatprep.mubr.bf16.mxu0 0
        %4452 = vmatmul.mubr.bf16.gmra.mrb[0].mxu0 %v4339
        %v4453 = vpop.f32.mrb[0].mxu0
        %v4454 = vadd.f32 0.0, %v4453
        %v4455 = vpop.f32.mrb[0].mxu0
        %v4456 = vpop.f32.mrb[0].mxu0
        %v4457 = vadd.f32 0.0, %v4456
        %v4458 = vpop.f32.mrb[0].mxu0
        %4459 = vmatprep.mubr.bf16.mxu0 0
        %4460 = vmatmul.mubr.bf16.gmra.mrb[0].mxu0 %v4342
        %v4461 = vpop.f32.mrb[0].mxu0
        %v4462 = vadd.f32 0.0, %v4461
        %v4463 = vpop.f32.mrb[0].mxu0
        %v4464 = vpop.f32.mrb[0].mxu0
        %v4465 = vadd.f32 0.0, %v4464
        %v4466 = vpop.f32.mrb[0].mxu0
        %4467 = vmatprep.mubr.bf16.mxu0 0
        %4468 = vmatmul.mubr.bf16.gmra.mrb[0].mxu0 %v4345
        %v4469 = vpop.f32.mrb[0].mxu0
        %v4470 = vadd.f32 0.0, %v4469
        %v4471 = vpop.f32.mrb[0].mxu0
        %v4472 = vpop.f32.mrb[0].mxu0
        %v4473 = vadd.f32 0.0, %v4472
        %v4474 = vpop.f32.mrb[0].mxu0
        %4475 = vmatprep.mubr.bf16.mxu0 0
        %4476 = vmatmul.mubr.bf16.gmra.mrb[0].mxu0 %v4348
        %v4477 = vpop.f32.mrb[0].mxu0
        %v4478 = vadd.f32 0.0, %v4477
        %v4479 = vpop.f32.mrb[0].mxu0
        %v4480 = vpop.f32.mrb[0].mxu0
        %v4481 = vadd.f32 0.0, %v4480
        %v4482 = vpop.f32.mrb[0].mxu0
        %4483 = vmatprep.mubr.bf16.mxu0 0
        %4484 = vmatmul.mubr.bf16.gmra.mrb[0].mxu0 %v4351
        %v4485 = vpop.f32.mrb[0].mxu0
        %v4486 = vadd.f32 0.0, %v4485
        %v4487 = vpop.f32.mrb[0].mxu0
        %v4488 = vpop.f32.mrb[0].mxu0
        %v4489 = vadd.f32 0.0, %v4488
        %v4490 = vpop.f32.mrb[0].mxu0
        %4491 = vmatprep.mubr.bf16.mxu0 0
        %4492 = vmatmul.mubr.bf16.gmra.mrb[0].mxu0 %v4354
        %v4493 = vpop.f32.mrb[0].mxu0
        %v4494 = vadd.f32 0.0, %v4493
        %v4495 = vpop.f32.mrb[0].mxu0
        %v4496 = vpop.f32.mrb[0].mxu0
        %v4497 = vadd.f32 0.0, %v4496
        %v4498 = vpop.f32.mrb[0].mxu0
        %4499 = vmatprep.mubr.bf16.mxu0 0
        %4500 = vmatmul.mubr.bf16.gmra.mrb[0].mxu0 %v4357
        %v4501 = vpop.f32.mrb[0].mxu0
        %v4502 = vadd.f32 0.0, %v4501
        %v4503 = vpop.f32.mrb[0].mxu0
        %v4504 = vpop.f32.mrb[0].mxu0
        %v4505 = vadd.f32 0.0, %v4504
        %v4506 = vpop.f32.mrb[0].mxu0
        %4507 = vmatprep.mubr.bf16.mxu0 0
        %4508 = vmatmul.mubr.bf16.gmra.mrb[0].mxu0 %v4360
        %v4509 = vpop.f32.mrb[0].mxu0
        %v4510 = vadd.f32 0.0, %v4509
        %v4511 = vpop.f32.mrb[0].mxu0
        %v4512 = vpop.f32.mrb[0].mxu0
        %v4513 = vadd.f32 0.0, %v4512
        %v4514 = vpop.f32.mrb[0].mxu0
        %4515 = vmatprep.mubr.bf16.mxu0 0
        %4516 = vmatmul.mubr.bf16.gmra.mrb[0].mxu0 %v4363
        %v4517 = vpop.f32.mrb[0].mxu0
        %v4518 = vadd.f32 0.0, %v4517
        %v4519 = vpop.f32.mrb[0].mxu0
        %v4520 = vpop.f32.mrb[0].mxu0
        %v4521 = vadd.f32 0.0, %v4520
        %v4522 = vpop.f32.mrb[0].mxu0
        %4523 = vmatprep.mubr.bf16.mxu0 0
        %4524 = vmatmul.mubr.bf16.gmra.mrb[0].mxu0 %v4366
        %v4525 = vpop.f32.mrb[0].mxu0
        %v4526 = vadd.f32 0.0, %v4525
        %v4527 = vpop.f32.mrb[0].mxu0
        %v4528 = vpop.f32.mrb[0].mxu0
        %v4529 = vadd.f32 0.0, %v4528
        %v4530 = vpop.f32.mrb[0].mxu0
        %4531 = vdwg.mxu0
        %v4532 = vadd.f32 %v3837, %v4406
        %v4533 = vadd.f32 %v3838, %v4409
        %v4534 = vadd.f32 %v3839, %v4414
        %v4535 = vadd.f32 %v3840, %v4417
        %v4536 = vadd.f32 %v3841, %v4422
        %v4537 = vadd.f32 %v3842, %v4425
        %v4538 = vadd.f32 %v3843, %v4430
        %v4539 = vadd.f32 %v3844, %v4433
        %v4540 = vadd.f32 %v3845, %v4438
        %v4541 = vadd.f32 %v3846, %v4441
        %v4542 = vadd.f32 %v3847, %v4446
        %v4543 = vadd.f32 %v3848, %v4449
        %v4544 = vadd.f32 %v3849, %v4454
        %v4545 = vadd.f32 %v3850, %v4457
        %v4546 = vadd.f32 %v3851, %v4462
        %v4547 = vadd.f32 %v3852, %v4465
        %v4548 = vadd.f32 %v3853, %v4470
        %v4549 = vadd.f32 %v3854, %v4473
        %v4550 = vadd.f32 %v3855, %v4478
        %v4551 = vadd.f32 %v3856, %v4481
        %v4552 = vadd.f32 %v3857, %v4486
        %v4553 = vadd.f32 %v3858, %v4489
        %v4554 = vadd.f32 %v3859, %v4494
        %v4555 = vadd.f32 %v3860, %v4497
        %v4556 = vadd.f32 %v3861, %v4502
        %v4557 = vadd.f32 %v3862, %v4505
        %v4558 = vadd.f32 %v3863, %v4510
        %v4559 = vadd.f32 %v3864, %v4513
        %v4560 = vadd.f32 %v3865, %v4518
        %v4561 = vadd.f32 %v3866, %v4521
        %v4562 = vadd.f32 %v3867, %v4526
        %v4563 = vadd.f32 %v3868, %v4529
        %s4564 = scalar_lea.vmem %s1, 14
        %v4565 = vld [vmem:[%s4564] sm:$0x3]
        %v4598 = vunpack.c.l.b16 %v3871
        %v4599 = vunpack.c.l.b16 %v3872
        %v4600 = vunpack.c.l.b16 %v3874
        %v4601 = vunpack.c.l.b16 %v3875
        %v4602 = vunpack.c.l.b16 %v3877
        %v4603 = vunpack.c.l.b16 %v3878
        %v4604 = vunpack.c.l.b16 %v3880
        %v4605 = vunpack.c.l.b16 %v3881
        %v4606 = vunpack.c.l.b16 %v3883
        %v4607 = vunpack.c.l.b16 %v3884
        %v4608 = vunpack.c.l.b16 %v3886
        %v4609 = vunpack.c.l.b16 %v3887
        %v4610 = vunpack.c.l.b16 %v3889
        %v4611 = vunpack.c.l.b16 %v3890
        %v4612 = vunpack.c.l.b16 %v3892
        %v4613 = vunpack.c.l.b16 %v3893
        %v4614 = vunpack.c.l.b16 %v3895
        %v4615 = vunpack.c.l.b16 %v3896
        %v4616 = vunpack.c.l.b16 %v3898
        %v4617 = vunpack.c.l.b16 %v3899
        %v4618 = vunpack.c.l.b16 %v3901
        %v4619 = vunpack.c.l.b16 %v3902
        %v4620 = vunpack.c.l.b16 %v3904
        %v4621 = vunpack.c.l.b16 %v3905
        %v4622 = vunpack.c.l.b16 %v3907
        %v4623 = vunpack.c.l.b16 %v3908
        %v4624 = vunpack.c.l.b16 %v3910
        %v4625 = vunpack.c.l.b16 %v3911
        %v4626 = vunpack.c.l.b16 %v3913
        %v4627 = vunpack.c.l.b16 %v3914
        %v4628 = vunpack.c.l.b16 %v3916
        %v4629 = vunpack.c.l.b16 %v3917
        %v4630 = vpack.c.b16 %v4599, %v4598
        %v4631 = vpack.c.b16 %v4601, %v4600
        %v4632 = vpack.c.b16 %v4603, %v4602
        %v4633 = vpack.c.b16 %v4605, %v4604
        %v4634 = vpack.c.b16 %v4607, %v4606
        %v4635 = vpack.c.b16 %v4609, %v4608
        %v4636 = vpack.c.b16 %v4611, %v4610
        %v4637 = vpack.c.b16 %v4613, %v4612
        %v4638 = vpack.c.b16 %v4615, %v4614
        %v4639 = vpack.c.b16 %v4617, %v4616
        %v4640 = vpack.c.b16 %v4619, %v4618
        %v4641 = vpack.c.b16 %v4621, %v4620
        %v4642 = vpack.c.b16 %v4623, %v4622
        %v4643 = vpack.c.b16 %v4625, %v4624
        %v4644 = vpack.c.b16 %v4627, %v4626
        %v4645 = vpack.c.b16 %v4629, %v4628
        %v4647 = vsel %vm920, %v4630, 0
        %v4650 = vsel %vm920, %v4631, 0
        %v4653 = vsel %vm920, %v4632, 0
        %v4656 = vsel %vm920, %v4633, 0
        %v4659 = vsel %vm920, %v4634, 0
        %v4662 = vsel %vm920, %v4635, 0
        %v4665 = vsel %vm920, %v4636, 0
        %v4668 = vsel %vm920, %v4637, 0
        %v4671 = vsel %vm920, %v4638, 0
        %v4674 = vsel %vm920, %v4639, 0
        %v4677 = vsel %vm920, %v4640, 0
        %v4680 = vsel %vm920, %v4641, 0
        %v4683 = vsel %vm920, %v4642, 0
        %v4686 = vsel %vm920, %v4643, 0
        %v4689 = vsel %vm920, %v4644, 0
        %v4692 = vsel %vm920, %v4645, 0
        %v4695 = vsel %vm969, %v4565, 0
        %4697 = vmatprep.subr.bf16.mxu0 0
        %4698 = vmatpush1.bf16.msra.mxu0 %v4695
        %4699 = vmatprep.subr.bf16.mxu0 0
        %4700 = vmatpush1.bf16.msra.mxu0 0
        %4701 = vmatprep.subr.bf16.mxu0 0
        %4702 = vmatpush1.bf16.msra.mxu0 0
        %4703 = vmatprep.subr.bf16.mxu0 0
        %4704 = vmatpush1.bf16.msra.mxu0 0
        %4705 = vmatprep.subr.bf16.mxu0 0
        %4706 = vmatpush1.bf16.msra.mxu0 0
        %4707 = vmatprep.subr.bf16.mxu0 0
        %4708 = vmatpush1.bf16.msra.mxu0 0
        %4709 = vmatprep.subr.bf16.mxu0 0
        %4710 = vmatpush1.bf16.msra.mxu0 0
        %4711 = vmatprep.subr.bf16.mxu0 0
        %4712 = vmatpush1.bf16.msra.mxu0 0
        %4713 = vmatprep.subr.bf16.mxu0 0
        %4714 = vmatpush1.bf16.msra.mxu0 0
        %4715 = vmatprep.subr.bf16.mxu0 0
        %4716 = vmatpush1.bf16.msra.mxu0 0
        %4717 = vmatprep.subr.bf16.mxu0 0
        %4718 = vmatpush1.bf16.msra.mxu0 0
        %4719 = vmatprep.subr.bf16.mxu0 0
        %4720 = vmatpush1.bf16.msra.mxu0 0
        %4721 = vmatprep.subr.bf16.mxu0 0
        %4722 = vmatpush1.bf16.msra.mxu0 0
        %4723 = vmatprep.subr.bf16.mxu0 0
        %4724 = vmatpush1.bf16.msra.mxu0 0
        %4725 = vmatprep.subr.bf16.mxu0 0
        %4726 = vmatpush1.bf16.msra.mxu0 0
        %4727 = vmatprep.subr.bf16.mxu0 0
        %4728 = vmatpush1.bf16.msra.mxu0 0
        %4729 = vmatprep.mubr.bf16.mxu0 0
        %4730 = vmatmul.mubr.bf16.gmra.mrb[0].mxu0 %v4647
        %v4731 = vpop.f32.mrb[0].mxu0
        %v4732 = vadd.f32 0.0, %v4731
        %v4733 = vpop.f32.mrb[0].mxu0
        %v4734 = vpop.f32.mrb[0].mxu0
        %v4735 = vadd.f32 0.0, %v4734
        %v4736 = vpop.f32.mrb[0].mxu0
        %4737 = vmatprep.mubr.bf16.mxu0 0
        %4738 = vmatmul.mubr.bf16.gmra.mrb[0].mxu0 %v4650
        %v4739 = vpop.f32.mrb[0].mxu0
        %v4740 = vadd.f32 0.0, %v4739
        %v4741 = vpop.f32.mrb[0].mxu0
        %v4742 = vpop.f32.mrb[0].mxu0
        %v4743 = vadd.f32 0.0, %v4742
        %v4744 = vpop.f32.mrb[0].mxu0
        %4745 = vmatprep.mubr.bf16.mxu0 0
        %4746 = vmatmul.mubr.bf16.gmra.mrb[0].mxu0 %v4653
        %v4747 = vpop.f32.mrb[0].mxu0
        %v4748 = vadd.f32 0.0, %v4747
        %v4749 = vpop.f32.mrb[0].mxu0
        %v4750 = vpop.f32.mrb[0].mxu0
        %v4751 = vadd.f32 0.0, %v4750
        %v4752 = vpop.f32.mrb[0].mxu0
        %4753 = vmatprep.mubr.bf16.mxu0 0
        %4754 = vmatmul.mubr.bf16.gmra.mrb[0].mxu0 %v4656
        %v4755 = vpop.f32.mrb[0].mxu0
        %v4756 = vadd.f32 0.0, %v4755
        %v4757 = vpop.f32.mrb[0].mxu0
        %v4758 = vpop.f32.mrb[0].mxu0
        %v4759 = vadd.f32 0.0, %v4758
        %v4760 = vpop.f32.mrb[0].mxu0
        %4761 = vmatprep.mubr.bf16.mxu0 0
        %4762 = vmatmul.mubr.bf16.gmra.mrb[0].mxu0 %v4659
        %v4763 = vpop.f32.mrb[0].mxu0
        %v4764 = vadd.f32 0.0, %v4763
        %v4765 = vpop.f32.mrb[0].mxu0
        %v4766 = vpop.f32.mrb[0].mxu0
        %v4767 = vadd.f32 0.0, %v4766
        %v4768 = vpop.f32.mrb[0].mxu0
        %4769 = vmatprep.mubr.bf16.mxu0 0
        %4770 = vmatmul.mubr.bf16.gmra.mrb[0].mxu0 %v4662
        %v4771 = vpop.f32.mrb[0].mxu0
        %v4772 = vadd.f32 0.0, %v4771
        %v4773 = vpop.f32.mrb[0].mxu0
        %v4774 = vpop.f32.mrb[0].mxu0
        %v4775 = vadd.f32 0.0, %v4774
        %v4776 = vpop.f32.mrb[0].mxu0
        %4777 = vmatprep.mubr.bf16.mxu0 0
        %4778 = vmatmul.mubr.bf16.gmra.mrb[0].mxu0 %v4665
        %v4779 = vpop.f32.mrb[0].mxu0
        %v4780 = vadd.f32 0.0, %v4779
        %v4781 = vpop.f32.mrb[0].mxu0
        %v4782 = vpop.f32.mrb[0].mxu0
        %v4783 = vadd.f32 0.0, %v4782
        %v4784 = vpop.f32.mrb[0].mxu0
        %4785 = vmatprep.mubr.bf16.mxu0 0
        %4786 = vmatmul.mubr.bf16.gmra.mrb[0].mxu0 %v4668
        %v4787 = vpop.f32.mrb[0].mxu0
        %v4788 = vadd.f32 0.0, %v4787
        %v4789 = vpop.f32.mrb[0].mxu0
        %v4790 = vpop.f32.mrb[0].mxu0
        %v4791 = vadd.f32 0.0, %v4790
        %v4792 = vpop.f32.mrb[0].mxu0
        %4793 = vmatprep.mubr.bf16.mxu0 0
        %4794 = vmatmul.mubr.bf16.gmra.mrb[0].mxu0 %v4671
        %v4795 = vpop.f32.mrb[0].mxu0
        %v4796 = vadd.f32 0.0, %v4795
        %v4797 = vpop.f32.mrb[0].mxu0
        %v4798 = vpop.f32.mrb[0].mxu0
        %v4799 = vadd.f32 0.0, %v4798
        %v4800 = vpop.f32.mrb[0].mxu0
        %4801 = vmatprep.mubr.bf16.mxu0 0
        %4802 = vmatmul.mubr.bf16.gmra.mrb[0].mxu0 %v4674
        %v4803 = vpop.f32.mrb[0].mxu0
        %v4804 = vadd.f32 0.0, %v4803
        %v4805 = vpop.f32.mrb[0].mxu0
        %v4806 = vpop.f32.mrb[0].mxu0
        %v4807 = vadd.f32 0.0, %v4806
        %v4808 = vpop.f32.mrb[0].mxu0
        %4809 = vmatprep.mubr.bf16.mxu0 0
        %4810 = vmatmul.mubr.bf16.gmra.mrb[0].mxu0 %v4677
        %v4811 = vpop.f32.mrb[0].mxu0
        %v4812 = vadd.f32 0.0, %v4811
        %v4813 = vpop.f32.mrb[0].mxu0
        %v4814 = vpop.f32.mrb[0].mxu0
        %v4815 = vadd.f32 0.0, %v4814
        %v4816 = vpop.f32.mrb[0].mxu0
        %4817 = vmatprep.mubr.bf16.mxu0 0
        %4818 = vmatmul.mubr.bf16.gmra.mrb[0].mxu0 %v4680
        %v4819 = vpop.f32.mrb[0].mxu0
        %v4820 = vadd.f32 0.0, %v4819
        %v4821 = vpop.f32.mrb[0].mxu0
        %v4822 = vpop.f32.mrb[0].mxu0
        %v4823 = vadd.f32 0.0, %v4822
        %v4824 = vpop.f32.mrb[0].mxu0
        %4825 = vmatprep.mubr.bf16.mxu0 0
        %4826 = vmatmul.mubr.bf16.gmra.mrb[0].mxu0 %v4683
        %v4827 = vpop.f32.mrb[0].mxu0
        %v4828 = vadd.f32 0.0, %v4827
        %v4829 = vpop.f32.mrb[0].mxu0
        %v4830 = vpop.f32.mrb[0].mxu0
        %v4831 = vadd.f32 0.0, %v4830
        %v4832 = vpop.f32.mrb[0].mxu0
        %4833 = vmatprep.mubr.bf16.mxu0 0
        %4834 = vmatmul.mubr.bf16.gmra.mrb[0].mxu0 %v4686
        %v4835 = vpop.f32.mrb[0].mxu0
        %v4836 = vadd.f32 0.0, %v4835
        %v4837 = vpop.f32.mrb[0].mxu0
        %v4838 = vpop.f32.mrb[0].mxu0
        %v4839 = vadd.f32 0.0, %v4838
        %v4840 = vpop.f32.mrb[0].mxu0
        %4841 = vmatprep.mubr.bf16.mxu0 0
        %4842 = vmatmul.mubr.bf16.gmra.mrb[0].mxu0 %v4689
        %v4843 = vpop.f32.mrb[0].mxu0
        %v4844 = vadd.f32 0.0, %v4843
        %v4845 = vpop.f32.mrb[0].mxu0
        %v4846 = vpop.f32.mrb[0].mxu0
        %v4847 = vadd.f32 0.0, %v4846
        %v4848 = vpop.f32.mrb[0].mxu0
        %4849 = vmatprep.mubr.bf16.mxu0 0
        %4850 = vmatmul.mubr.bf16.gmra.mrb[0].mxu0 %v4692
        %v4851 = vpop.f32.mrb[0].mxu0
        %v4852 = vadd.f32 0.0, %v4851
        %v4853 = vpop.f32.mrb[0].mxu0
        %v4854 = vpop.f32.mrb[0].mxu0
        %v4855 = vadd.f32 0.0, %v4854
        %v4856 = vpop.f32.mrb[0].mxu0
        %4857 = vdwg.mxu0
        %v4858 = vadd.f32 %v4532, %v4732
        %v4859 = vadd.f32 %v4533, %v4735
        %v4860 = vadd.f32 %v4534, %v4740
        %v4861 = vadd.f32 %v4535, %v4743
        %v4862 = vadd.f32 %v4536, %v4748
        %v4863 = vadd.f32 %v4537, %v4751
        %v4864 = vadd.f32 %v4538, %v4756
        %v4865 = vadd.f32 %v4539, %v4759
        %v4866 = vadd.f32 %v4540, %v4764
        %v4867 = vadd.f32 %v4541, %v4767
        %v4868 = vadd.f32 %v4542, %v4772
        %v4869 = vadd.f32 %v4543, %v4775
        %v4870 = vadd.f32 %v4544, %v4780
        %v4871 = vadd.f32 %v4545, %v4783
        %v4872 = vadd.f32 %v4546, %v4788
        %v4873 = vadd.f32 %v4547, %v4791
        %v4874 = vadd.f32 %v4548, %v4796
        %v4875 = vadd.f32 %v4549, %v4799
        %v4876 = vadd.f32 %v4550, %v4804
        %v4877 = vadd.f32 %v4551, %v4807
        %v4878 = vadd.f32 %v4552, %v4812
        %v4879 = vadd.f32 %v4553, %v4815
        %v4880 = vadd.f32 %v4554, %v4820
        %v4881 = vadd.f32 %v4555, %v4823
        %v4882 = vadd.f32 %v4556, %v4828
        %v4883 = vadd.f32 %v4557, %v4831
        %v4884 = vadd.f32 %v4558, %v4836
        %v4885 = vadd.f32 %v4559, %v4839
        %v4886 = vadd.f32 %v4560, %v4844
        %v4887 = vadd.f32 %v4561, %v4847
        %v4888 = vadd.f32 %v4562, %v4852
        %v4889 = vadd.f32 %v4563, %v4855
        %v4890 = vld [vmem:[%s3869 + $0x8] sm:$0xf]
        %v4891 = vld [vmem:[%s3869 + $0xc] sm:$0xf]
        %v4892 = vld [vmem:[%s3869 + $0x10] sm:$0x1]
        %v4893 = vld [vmem:[%s3869 + $0x1c] sm:$0xf]
        %v4894 = vld [vmem:[%s3869 + $0x20] sm:$0xf]
        %v4895 = vld [vmem:[%s3869 + $0x24] sm:$0x1]
        %v4896 = vld [vmem:[%s3869 + $0x30] sm:$0xf]
        %v4897 = vld [vmem:[%s3869 + $0x34] sm:$0xf]
        %v4898 = vld [vmem:[%s3869 + $0x38] sm:$0x1]
        %v4899 = vld [vmem:[%s3869 + $0x44] sm:$0xf]
        %v4900 = vld [vmem:[%s3869 + $0x48] sm:$0xf]
        %v4901 = vld [vmem:[%s3869 + $0x4c] sm:$0x1]
        %v4902 = vld [vmem:[%s3869 + $0x58] sm:$0xf]
        %v4903 = vld [vmem:[%s3869 + $0x5c] sm:$0xf]
        %v4904 = vld [vmem:[%s3869 + $0x60] sm:$0x1]
        %v4905 = vld [vmem:[%s3869 + $0x6c] sm:$0xf]
        %v4906 = vld [vmem:[%s3869 + $0x70] sm:$0xf]
        %v4907 = vld [vmem:[%s3869 + $0x74] sm:$0x1]
        %v4908 = vld [vmem:[%s3869 + $0x80] sm:$0xf]
        %v4909 = vld [vmem:[%s3869 + $0x84] sm:$0xf]
        %v4910 = vld [vmem:[%s3869 + $0x88] sm:$0x1]
        %v4911 = vld [vmem:[%s3869 + $0x94] sm:$0xf]
        %v4912 = vld [vmem:[%s3869 + $0x98] sm:$0xf]
        %v4913 = vld [vmem:[%s3869 + $0x9c] sm:$0x1]
        %v4914 = vld [vmem:[%s3869 + $0xa8] sm:$0xf]
        %v4915 = vld [vmem:[%s3869 + $0xac] sm:$0xf]
        %v4916 = vld [vmem:[%s3869 + $0xb0] sm:$0x1]
        %v4917 = vld [vmem:[%s3869 + $0xbc] sm:$0xf]
        %v4918 = vld [vmem:[%s3869 + $0xc0] sm:$0xf]
        %v4919 = vld [vmem:[%s3869 + $0xc4] sm:$0x1]
        %v4920 = vld [vmem:[%s3869 + $0xd0] sm:$0xf]
        %v4921 = vld [vmem:[%s3869 + $0xd4] sm:$0xf]
        %v4922 = vld [vmem:[%s3869 + $0xd8] sm:$0x1]
        %v4923 = vld [vmem:[%s3869 + $0xe4] sm:$0xf]
        %v4924 = vld [vmem:[%s3869 + $0xe8] sm:$0xf]
        %v4925 = vld [vmem:[%s3869 + $0xec] sm:$0x1]
        %v4926 = vld [vmem:[%s3869 + $0xf8] sm:$0xf]
        %v4927 = vld [vmem:[%s3869 + $0xfc] sm:$0xf]
        %v4928 = vld [vmem:[%s3869 + $0x100] sm:$0x1]
        %v4929 = vld [vmem:[%s3869 + $0x10c] sm:$0xf]
        %v4930 = vld [vmem:[%s3869 + $0x110] sm:$0xf]
        %v4931 = vld [vmem:[%s3869 + $0x114] sm:$0x1]
        %v4932 = vld [vmem:[%s3869 + $0x120] sm:$0xf]
        %v4933 = vld [vmem:[%s3869 + $0x124] sm:$0xf]
        %v4934 = vld [vmem:[%s3869 + $0x128] sm:$0x1]
        %v4935 = vld [vmem:[%s3869 + $0x134] sm:$0xf]
        %v4936 = vld [vmem:[%s3869 + $0x138] sm:$0xf]
        %v4937 = vld [vmem:[%s3869 + $0x13c] sm:$0x1]
        %v4939 = vshrl.u32 %v4890, 16
        %v4941 = vrot.slane %v4939, 4
        %v4942 = vshll.u32 %v4890, 16
        %v4944 = vrot.slane %v4942, 5
        %v4945 = vor.u32 %v4941, %v4944
        %v4946 = vrot.slane %v4945, 4
        %v4948 = vshll.u32 %v4891, 16
        %v4950 = vrot.slane %v4948, 5
        %v4951 = vsel %vm1444, %v4946, %v4950
        %v4952 = vshrl.u32 %v4891, 16
        %v4954 = vrot.slane %v4952, 4
        %v4955 = vor.u32 %v4954, %v4950
        %v4956 = vrot.slane %v4955, 4
        %v4958 = vshll.u32 %v4892, 16
        %v4960 = vrot.slane %v4958, 5
        %v4961 = vsel %vm1444, %v4956, %v4960
        %v4963 = vshrl.u32 %v4893, 16
        %v4965 = vrot.slane %v4963, 4
        %v4966 = vshll.u32 %v4893, 16
        %v4968 = vrot.slane %v4966, 5
        %v4969 = vor.u32 %v4965, %v4968
        %v4970 = vrot.slane %v4969, 4
        %v4972 = vshll.u32 %v4894, 16
        %v4974 = vrot.slane %v4972, 5
        %v4975 = vsel %vm1444, %v4970, %v4974
        %v4976 = vshrl.u32 %v4894, 16
        %v4978 = vrot.slane %v4976, 4
        %v4979 = vor.u32 %v4978, %v4974
        %v4980 = vrot.slane %v4979, 4
        %v4982 = vshll.u32 %v4895, 16
        %v4984 = vrot.slane %v4982, 5
        %v4985 = vsel %vm1444, %v4980, %v4984
        %v4987 = vshrl.u32 %v4896, 16
        %v4989 = vrot.slane %v4987, 4
        %v4990 = vshll.u32 %v4896, 16
        %v4992 = vrot.slane %v4990, 5
        %v4993 = vor.u32 %v4989, %v4992
        %v4994 = vrot.slane %v4993, 4
        %v4996 = vshll.u32 %v4897, 16
        %v4998 = vrot.slane %v4996, 5
        %v4999 = vsel %vm1444, %v4994, %v4998
        %v5000 = vshrl.u32 %v4897, 16
        %v5002 = vrot.slane %v5000, 4
        %v5003 = vor.u32 %v5002, %v4998
        %v5004 = vrot.slane %v5003, 4
        %v5006 = vshll.u32 %v4898, 16
        %v5008 = vrot.slane %v5006, 5
        %v5009 = vsel %vm1444, %v5004, %v5008
        %v5011 = vshrl.u32 %v4899, 16
        %v5013 = vrot.slane %v5011, 4
        %v5014 = vshll.u32 %v4899, 16
        %v5016 = vrot.slane %v5014, 5
        %v5017 = vor.u32 %v5013, %v5016
        %v5018 = vrot.slane %v5017, 4
        %v5020 = vshll.u32 %v4900, 16
        %v5022 = vrot.slane %v5020, 5
        %v5023 = vsel %vm1444, %v5018, %v5022
        %v5024 = vshrl.u32 %v4900, 16
        %v5026 = vrot.slane %v5024, 4
        %v5027 = vor.u32 %v5026, %v5022
        %v5028 = vrot.slane %v5027, 4
        %v5030 = vshll.u32 %v4901, 16
        %v5032 = vrot.slane %v5030, 5
        %v5033 = vsel %vm1444, %v5028, %v5032
        %v5035 = vshrl.u32 %v4902, 16
        %v5037 = vrot.slane %v5035, 4
        %v5038 = vshll.u32 %v4902, 16
        %v5040 = vrot.slane %v5038, 5
        %v5041 = vor.u32 %v5037, %v5040
        %v5042 = vrot.slane %v5041, 4
        %v5044 = vshll.u32 %v4903, 16
        %v5046 = vrot.slane %v5044, 5
        %v5047 = vsel %vm1444, %v5042, %v5046
        %v5048 = vshrl.u32 %v4903, 16
        %v5050 = vrot.slane %v5048, 4
        %v5051 = vor.u32 %v5050, %v5046
        %v5052 = vrot.slane %v5051, 4
        %v5054 = vshll.u32 %v4904, 16
        %v5056 = vrot.slane %v5054, 5
        %v5057 = vsel %vm1444, %v5052, %v5056
        %v5059 = vshrl.u32 %v4905, 16
        %v5061 = vrot.slane %v5059, 4
        %v5062 = vshll.u32 %v4905, 16
        %v5064 = vrot.slane %v5062, 5
        %v5065 = vor.u32 %v5061, %v5064
        %v5066 = vrot.slane %v5065, 4
        %v5068 = vshll.u32 %v4906, 16
        %v5070 = vrot.slane %v5068, 5
        %v5071 = vsel %vm1444, %v5066, %v5070
        %v5072 = vshrl.u32 %v4906, 16
        %v5074 = vrot.slane %v5072, 4
        %v5075 = vor.u32 %v5074, %v5070
        %v5076 = vrot.slane %v5075, 4
        %v5078 = vshll.u32 %v4907, 16
        %v5080 = vrot.slane %v5078, 5
        %v5081 = vsel %vm1444, %v5076, %v5080
        %v5083 = vshrl.u32 %v4908, 16
        %v5085 = vrot.slane %v5083, 4
        %v5086 = vshll.u32 %v4908, 16
        %v5088 = vrot.slane %v5086, 5
        %v5089 = vor.u32 %v5085, %v5088
        %v5090 = vrot.slane %v5089, 4
        %v5092 = vshll.u32 %v4909, 16
        %v5094 = vrot.slane %v5092, 5
        %v5095 = vsel %vm1444, %v5090, %v5094
        %v5096 = vshrl.u32 %v4909, 16
        %v5098 = vrot.slane %v5096, 4
        %v5099 = vor.u32 %v5098, %v5094
        %v5100 = vrot.slane %v5099, 4
        %v5102 = vshll.u32 %v4910, 16
        %v5104 = vrot.slane %v5102, 5
        %v5105 = vsel %vm1444, %v5100, %v5104
        %v5107 = vshrl.u32 %v4911, 16
        %v5109 = vrot.slane %v5107, 4
        %v5110 = vshll.u32 %v4911, 16
        %v5112 = vrot.slane %v5110, 5
        %v5113 = vor.u32 %v5109, %v5112
        %v5114 = vrot.slane %v5113, 4
        %v5116 = vshll.u32 %v4912, 16
        %v5118 = vrot.slane %v5116, 5
        %v5119 = vsel %vm1444, %v5114, %v5118
        %v5120 = vshrl.u32 %v4912, 16
        %v5122 = vrot.slane %v5120, 4
        %v5123 = vor.u32 %v5122, %v5118
        %v5124 = vrot.slane %v5123, 4
        %v5126 = vshll.u32 %v4913, 16
        %v5128 = vrot.slane %v5126, 5
        %v5129 = vsel %vm1444, %v5124, %v5128
        %v5131 = vshrl.u32 %v4914, 16
        %v5133 = vrot.slane %v5131, 4
        %v5134 = vshll.u32 %v4914, 16
        %v5136 = vrot.slane %v5134, 5
        %v5137 = vor.u32 %v5133, %v5136
        %v5138 = vrot.slane %v5137, 4
        %v5140 = vshll.u32 %v4915, 16
        %v5142 = vrot.slane %v5140, 5
        %v5143 = vsel %vm1444, %v5138, %v5142
        %v5144 = vshrl.u32 %v4915, 16
        %v5146 = vrot.slane %v5144, 4
        %v5147 = vor.u32 %v5146, %v5142
        %v5148 = vrot.slane %v5147, 4
        %v5150 = vshll.u32 %v4916, 16
        %v5152 = vrot.slane %v5150, 5
        %v5153 = vsel %vm1444, %v5148, %v5152
        %v5155 = vshrl.u32 %v4917, 16
        %v5157 = vrot.slane %v5155, 4
        %v5158 = vshll.u32 %v4917, 16
        %v5160 = vrot.slane %v5158, 5
        %v5161 = vor.u32 %v5157, %v5160
        %v5162 = vrot.slane %v5161, 4
        %v5164 = vshll.u32 %v4918, 16
        %v5166 = vrot.slane %v5164, 5
        %v5167 = vsel %vm1444, %v5162, %v5166
        %v5168 = vshrl.u32 %v4918, 16
        %v5170 = vrot.slane %v5168, 4
        %v5171 = vor.u32 %v5170, %v5166
        %v5172 = vrot.slane %v5171, 4
        %v5174 = vshll.u32 %v4919, 16
        %v5176 = vrot.slane %v5174, 5
        %v5177 = vsel %vm1444, %v5172, %v5176
        %v5179 = vshrl.u32 %v4920, 16
        %v5181 = vrot.slane %v5179, 4
        %v5182 = vshll.u32 %v4920, 16
        %v5184 = vrot.slane %v5182, 5
        %v5185 = vor.u32 %v5181, %v5184
        %v5186 = vrot.slane %v5185, 4
        %v5188 = vshll.u32 %v4921, 16
        %v5190 = vrot.slane %v5188, 5
        %v5191 = vsel %vm1444, %v5186, %v5190
        %v5192 = vshrl.u32 %v4921, 16
        %v5194 = vrot.slane %v5192, 4
        %v5195 = vor.u32 %v5194, %v5190
        %v5196 = vrot.slane %v5195, 4
        %v5198 = vshll.u32 %v4922, 16
        %v5200 = vrot.slane %v5198, 5
        %v5201 = vsel %vm1444, %v5196, %v5200
        %v5203 = vshrl.u32 %v4923, 16
        %v5205 = vrot.slane %v5203, 4
        %v5206 = vshll.u32 %v4923, 16
        %v5208 = vrot.slane %v5206, 5
        %v5209 = vor.u32 %v5205, %v5208
        %v5210 = vrot.slane %v5209, 4
        %v5212 = vshll.u32 %v4924, 16
        %v5214 = vrot.slane %v5212, 5
        %v5215 = vsel %vm1444, %v5210, %v5214
        %v5216 = vshrl.u32 %v4924, 16
        %v5218 = vrot.slane %v5216, 4
        %v5219 = vor.u32 %v5218, %v5214
        %v5220 = vrot.slane %v5219, 4
        %v5222 = vshll.u32 %v4925, 16
        %v5224 = vrot.slane %v5222, 5
        %v5225 = vsel %vm1444, %v5220, %v5224
        %v5227 = vshrl.u32 %v4926, 16
        %v5229 = vrot.slane %v5227, 4
        %v5230 = vshll.u32 %v4926, 16
        %v5232 = vrot.slane %v5230, 5
        %v5233 = vor.u32 %v5229, %v5232
        %v5234 = vrot.slane %v5233, 4
        %v5236 = vshll.u32 %v4927, 16
        %v5238 = vrot.slane %v5236, 5
        %v5239 = vsel %vm1444, %v5234, %v5238
        %v5240 = vshrl.u32 %v4927, 16
        %v5242 = vrot.slane %v5240, 4
        %v5243 = vor.u32 %v5242, %v5238
        %v5244 = vrot.slane %v5243, 4
        %v5246 = vshll.u32 %v4928, 16
        %v5248 = vrot.slane %v5246, 5
        %v5249 = vsel %vm1444, %v5244, %v5248
        %v5251 = vshrl.u32 %v4929, 16
        %v5253 = vrot.slane %v5251, 4
        %v5254 = vshll.u32 %v4929, 16
        %v5256 = vrot.slane %v5254, 5
        %v5257 = vor.u32 %v5253, %v5256
        %v5258 = vrot.slane %v5257, 4
        %v5260 = vshll.u32 %v4930, 16
        %v5262 = vrot.slane %v5260, 5
        %v5263 = vsel %vm1444, %v5258, %v5262
        %v5264 = vshrl.u32 %v4930, 16
        %v5266 = vrot.slane %v5264, 4
        %v5267 = vor.u32 %v5266, %v5262
        %v5268 = vrot.slane %v5267, 4
        %v5270 = vshll.u32 %v4931, 16
        %v5272 = vrot.slane %v5270, 5
        %v5273 = vsel %vm1444, %v5268, %v5272
        %v5275 = vshrl.u32 %v4932, 16
        %v5277 = vrot.slane %v5275, 4
        %v5278 = vshll.u32 %v4932, 16
        %v5280 = vrot.slane %v5278, 5
        %v5281 = vor.u32 %v5277, %v5280
        %v5282 = vrot.slane %v5281, 4
        %v5284 = vshll.u32 %v4933, 16
        %v5286 = vrot.slane %v5284, 5
        %v5287 = vsel %vm1444, %v5282, %v5286
        %v5288 = vshrl.u32 %v4933, 16
        %v5290 = vrot.slane %v5288, 4
        %v5291 = vor.u32 %v5290, %v5286
        %v5292 = vrot.slane %v5291, 4
        %v5294 = vshll.u32 %v4934, 16
        %v5296 = vrot.slane %v5294, 5
        %v5297 = vsel %vm1444, %v5292, %v5296
        %v5299 = vshrl.u32 %v4935, 16
        %v5301 = vrot.slane %v5299, 4
        %v5302 = vshll.u32 %v4935, 16
        %v5304 = vrot.slane %v5302, 5
        %v5305 = vor.u32 %v5301, %v5304
        %v5306 = vrot.slane %v5305, 4
        %v5308 = vshll.u32 %v4936, 16
        %v5310 = vrot.slane %v5308, 5
        %v5311 = vsel %vm1444, %v5306, %v5310
        %v5312 = vshrl.u32 %v4936, 16
        %v5314 = vrot.slane %v5312, 4
        %v5315 = vor.u32 %v5314, %v5310
        %v5316 = vrot.slane %v5315, 4
        %v5318 = vshll.u32 %v4937, 16
        %v5320 = vrot.slane %v5318, 5
        %v5321 = vsel %vm1444, %v5316, %v5320
        %s5322 = scalar_lea.vmem %s1, 16
        %v5323 = vld [vmem:[%s5322] sm:$0x3]
        %v5324 = vunpack.c.l.b16 %v4951
        %v5325 = vunpack.c.l.b16 %v4961
        %v5326 = vunpack.c.l.b16 %v4975
        %v5327 = vunpack.c.l.b16 %v4985
        %v5328 = vunpack.c.l.b16 %v4999
        %v5329 = vunpack.c.l.b16 %v5009
        %v5330 = vunpack.c.l.b16 %v5023
        %v5331 = vunpack.c.l.b16 %v5033
        %v5332 = vunpack.c.l.b16 %v5047
        %v5333 = vunpack.c.l.b16 %v5057
        %v5334 = vunpack.c.l.b16 %v5071
        %v5335 = vunpack.c.l.b16 %v5081
        %v5336 = vunpack.c.l.b16 %v5095
        %v5337 = vunpack.c.l.b16 %v5105
        %v5338 = vunpack.c.l.b16 %v5119
        %v5339 = vunpack.c.l.b16 %v5129
        %v5340 = vunpack.c.l.b16 %v5143
        %v5341 = vunpack.c.l.b16 %v5153
        %v5342 = vunpack.c.l.b16 %v5167
        %v5343 = vunpack.c.l.b16 %v5177
        %v5344 = vunpack.c.l.b16 %v5191
        %v5345 = vunpack.c.l.b16 %v5201
        %v5346 = vunpack.c.l.b16 %v5215
        %v5347 = vunpack.c.l.b16 %v5225
        %v5348 = vunpack.c.l.b16 %v5239
        %v5349 = vunpack.c.l.b16 %v5249
        %v5350 = vunpack.c.l.b16 %v5263
        %v5351 = vunpack.c.l.b16 %v5273
        %v5352 = vunpack.c.l.b16 %v5287
        %v5353 = vunpack.c.l.b16 %v5297
        %v5354 = vunpack.c.l.b16 %v5311
        %v5355 = vunpack.c.l.b16 %v5321
        %v5356 = vpack.c.b16 %v5325, %v5324
        %v5357 = vpack.c.b16 %v5327, %v5326
        %v5358 = vpack.c.b16 %v5329, %v5328
        %v5359 = vpack.c.b16 %v5331, %v5330
        %v5360 = vpack.c.b16 %v5333, %v5332
        %v5361 = vpack.c.b16 %v5335, %v5334
        %v5362 = vpack.c.b16 %v5337, %v5336
        %v5363 = vpack.c.b16 %v5339, %v5338
        %v5364 = vpack.c.b16 %v5341, %v5340
        %v5365 = vpack.c.b16 %v5343, %v5342
        %v5366 = vpack.c.b16 %v5345, %v5344
        %v5367 = vpack.c.b16 %v5347, %v5346
        %v5368 = vpack.c.b16 %v5349, %v5348
        %v5369 = vpack.c.b16 %v5351, %v5350
        %v5370 = vpack.c.b16 %v5353, %v5352
        %v5371 = vpack.c.b16 %v5355, %v5354
        %v5373 = vsel %vm920, %v5356, 0
        %v5376 = vsel %vm920, %v5357, 0
        %v5379 = vsel %vm920, %v5358, 0
        %v5382 = vsel %vm920, %v5359, 0
        %v5385 = vsel %vm920, %v5360, 0
        %v5388 = vsel %vm920, %v5361, 0
        %v5391 = vsel %vm920, %v5362, 0
        %v5394 = vsel %vm920, %v5363, 0
        %v5397 = vsel %vm920, %v5364, 0
        %v5400 = vsel %vm920, %v5365, 0
        %v5403 = vsel %vm920, %v5366, 0
        %v5406 = vsel %vm920, %v5367, 0
        %v5409 = vsel %vm920, %v5368, 0
        %v5412 = vsel %vm920, %v5369, 0
        %v5415 = vsel %vm920, %v5370, 0
        %v5418 = vsel %vm920, %v5371, 0
        %v5421 = vsel %vm969, %v5323, 0
        %5423 = vmatprep.subr.bf16.mxu0 0
        %5424 = vmatpush1.bf16.msra.mxu0 %v5421
        %5425 = vmatprep.subr.bf16.mxu0 0
        %5426 = vmatpush1.bf16.msra.mxu0 0
        %5427 = vmatprep.subr.bf16.mxu0 0
        %5428 = vmatpush1.bf16.msra.mxu0 0
        %5429 = vmatprep.subr.bf16.mxu0 0
        %5430 = vmatpush1.bf16.msra.mxu0 0
        %5431 = vmatprep.subr.bf16.mxu0 0
        %5432 = vmatpush1.bf16.msra.mxu0 0
        %5433 = vmatprep.subr.bf16.mxu0 0
        %5434 = vmatpush1.bf16.msra.mxu0 0
        %5435 = vmatprep.subr.bf16.mxu0 0
        %5436 = vmatpush1.bf16.msra.mxu0 0
        %5437 = vmatprep.subr.bf16.mxu0 0
        %5438 = vmatpush1.bf16.msra.mxu0 0
        %5439 = vmatprep.subr.bf16.mxu0 0
        %5440 = vmatpush1.bf16.msra.mxu0 0
        %5441 = vmatprep.subr.bf16.mxu0 0
        %5442 = vmatpush1.bf16.msra.mxu0 0
        %5443 = vmatprep.subr.bf16.mxu0 0
        %5444 = vmatpush1.bf16.msra.mxu0 0
        %5445 = vmatprep.subr.bf16.mxu0 0
        %5446 = vmatpush1.bf16.msra.mxu0 0
        %5447 = vmatprep.subr.bf16.mxu0 0
        %5448 = vmatpush1.bf16.msra.mxu0 0
        %5449 = vmatprep.subr.bf16.mxu0 0
        %5450 = vmatpush1.bf16.msra.mxu0 0
        %5451 = vmatprep.subr.bf16.mxu0 0
        %5452 = vmatpush1.bf16.msra.mxu0 0
        %5453 = vmatprep.subr.bf16.mxu0 0
        %5454 = vmatpush1.bf16.msra.mxu0 0
        %5455 = vmatprep.mubr.bf16.mxu0 0
        %5456 = vmatmul.mubr.bf16.gmra.mrb[0].mxu0 %v5373
        %v5457 = vpop.f32.mrb[0].mxu0
        %v5458 = vadd.f32 0.0, %v5457
        %v5459 = vpop.f32.mrb[0].mxu0
        %v5460 = vpop.f32.mrb[0].mxu0
        %v5461 = vadd.f32 0.0, %v5460
        %v5462 = vpop.f32.mrb[0].mxu0
        %5463 = vmatprep.mubr.bf16.mxu0 0
        %5464 = vmatmul.mubr.bf16.gmra.mrb[0].mxu0 %v5376
        %v5465 = vpop.f32.mrb[0].mxu0
        %v5466 = vadd.f32 0.0, %v5465
        %v5467 = vpop.f32.mrb[0].mxu0
        %v5468 = vpop.f32.mrb[0].mxu0
        %v5469 = vadd.f32 0.0, %v5468
        %v5470 = vpop.f32.mrb[0].mxu0
        %5471 = vmatprep.mubr.bf16.mxu0 0
        %5472 = vmatmul.mubr.bf16.gmra.mrb[0].mxu0 %v5379
        %v5473 = vpop.f32.mrb[0].mxu0
        %v5474 = vadd.f32 0.0, %v5473
        %v5475 = vpop.f32.mrb[0].mxu0
        %v5476 = vpop.f32.mrb[0].mxu0
        %v5477 = vadd.f32 0.0, %v5476
        %v5478 = vpop.f32.mrb[0].mxu0
        %5479 = vmatprep.mubr.bf16.mxu0 0
        %5480 = vmatmul.mubr.bf16.gmra.mrb[0].mxu0 %v5382
        %v5481 = vpop.f32.mrb[0].mxu0
        %v5482 = vadd.f32 0.0, %v5481
        %v5483 = vpop.f32.mrb[0].mxu0
        %v5484 = vpop.f32.mrb[0].mxu0
        %v5485 = vadd.f32 0.0, %v5484
        %v5486 = vpop.f32.mrb[0].mxu0
        %5487 = vmatprep.mubr.bf16.mxu0 0
        %5488 = vmatmul.mubr.bf16.gmra.mrb[0].mxu0 %v5385
        %v5489 = vpop.f32.mrb[0].mxu0
        %v5490 = vadd.f32 0.0, %v5489
        %v5491 = vpop.f32.mrb[0].mxu0
        %v5492 = vpop.f32.mrb[0].mxu0
        %v5493 = vadd.f32 0.0, %v5492
        %v5494 = vpop.f32.mrb[0].mxu0
        %5495 = vmatprep.mubr.bf16.mxu0 0
        %5496 = vmatmul.mubr.bf16.gmra.mrb[0].mxu0 %v5388
        %v5497 = vpop.f32.mrb[0].mxu0
        %v5498 = vadd.f32 0.0, %v5497
        %v5499 = vpop.f32.mrb[0].mxu0
        %v5500 = vpop.f32.mrb[0].mxu0
        %v5501 = vadd.f32 0.0, %v5500
        %v5502 = vpop.f32.mrb[0].mxu0
        %5503 = vmatprep.mubr.bf16.mxu0 0
        %5504 = vmatmul.mubr.bf16.gmra.mrb[0].mxu0 %v5391
        %v5505 = vpop.f32.mrb[0].mxu0
        %v5506 = vadd.f32 0.0, %v5505
        %v5507 = vpop.f32.mrb[0].mxu0
        %v5508 = vpop.f32.mrb[0].mxu0
        %v5509 = vadd.f32 0.0, %v5508
        %v5510 = vpop.f32.mrb[0].mxu0
        %5511 = vmatprep.mubr.bf16.mxu0 0
        %5512 = vmatmul.mubr.bf16.gmra.mrb[0].mxu0 %v5394
        %v5513 = vpop.f32.mrb[0].mxu0
        %v5514 = vadd.f32 0.0, %v5513
        %v5515 = vpop.f32.mrb[0].mxu0
        %v5516 = vpop.f32.mrb[0].mxu0
        %v5517 = vadd.f32 0.0, %v5516
        %v5518 = vpop.f32.mrb[0].mxu0
        %5519 = vmatprep.mubr.bf16.mxu0 0
        %5520 = vmatmul.mubr.bf16.gmra.mrb[0].mxu0 %v5397
        %v5521 = vpop.f32.mrb[0].mxu0
        %v5522 = vadd.f32 0.0, %v5521
        %v5523 = vpop.f32.mrb[0].mxu0
        %v5524 = vpop.f32.mrb[0].mxu0
        %v5525 = vadd.f32 0.0, %v5524
        %v5526 = vpop.f32.mrb[0].mxu0
        %5527 = vmatprep.mubr.bf16.mxu0 0
        %5528 = vmatmul.mubr.bf16.gmra.mrb[0].mxu0 %v5400
        %v5529 = vpop.f32.mrb[0].mxu0
        %v5530 = vadd.f32 0.0, %v5529
        %v5531 = vpop.f32.mrb[0].mxu0
        %v5532 = vpop.f32.mrb[0].mxu0
        %v5533 = vadd.f32 0.0, %v5532
        %v5534 = vpop.f32.mrb[0].mxu0
        %5535 = vmatprep.mubr.bf16.mxu0 0
        %5536 = vmatmul.mubr.bf16.gmra.mrb[0].mxu0 %v5403
        %v5537 = vpop.f32.mrb[0].mxu0
        %v5538 = vadd.f32 0.0, %v5537
        %v5539 = vpop.f32.mrb[0].mxu0
        %v5540 = vpop.f32.mrb[0].mxu0
        %v5541 = vadd.f32 0.0, %v5540
        %v5542 = vpop.f32.mrb[0].mxu0
        %5543 = vmatprep.mubr.bf16.mxu0 0
        %5544 = vmatmul.mubr.bf16.gmra.mrb[0].mxu0 %v5406
        %v5545 = vpop.f32.mrb[0].mxu0
        %v5546 = vadd.f32 0.0, %v5545
        %v5547 = vpop.f32.mrb[0].mxu0
        %v5548 = vpop.f32.mrb[0].mxu0
        %v5549 = vadd.f32 0.0, %v5548
        %v5550 = vpop.f32.mrb[0].mxu0
        %5551 = vmatprep.mubr.bf16.mxu0 0
        %5552 = vmatmul.mubr.bf16.gmra.mrb[0].mxu0 %v5409
        %v5553 = vpop.f32.mrb[0].mxu0
        %v5554 = vadd.f32 0.0, %v5553
        %v5555 = vpop.f32.mrb[0].mxu0
        %v5556 = vpop.f32.mrb[0].mxu0
        %v5557 = vadd.f32 0.0, %v5556
        %v5558 = vpop.f32.mrb[0].mxu0
        %5559 = vmatprep.mubr.bf16.mxu0 0
        %5560 = vmatmul.mubr.bf16.gmra.mrb[0].mxu0 %v5412
        %v5561 = vpop.f32.mrb[0].mxu0
        %v5562 = vadd.f32 0.0, %v5561
        %v5563 = vpop.f32.mrb[0].mxu0
        %v5564 = vpop.f32.mrb[0].mxu0
        %v5565 = vadd.f32 0.0, %v5564
        %v5566 = vpop.f32.mrb[0].mxu0
        %5567 = vmatprep.mubr.bf16.mxu0 0
        %5568 = vmatmul.mubr.bf16.gmra.mrb[0].mxu0 %v5415
        %v5569 = vpop.f32.mrb[0].mxu0
        %v5570 = vadd.f32 0.0, %v5569
        %v5571 = vpop.f32.mrb[0].mxu0
        %v5572 = vpop.f32.mrb[0].mxu0
        %v5573 = vadd.f32 0.0, %v5572
        %v5574 = vpop.f32.mrb[0].mxu0
        %5575 = vmatprep.mubr.bf16.mxu0 0
        %5576 = vmatmul.mubr.bf16.gmra.mrb[0].mxu0 %v5418
        %v5577 = vpop.f32.mrb[0].mxu0
        %v5578 = vadd.f32 0.0, %v5577
        %v5579 = vpop.f32.mrb[0].mxu0
        %v5580 = vpop.f32.mrb[0].mxu0
        %v5581 = vadd.f32 0.0, %v5580
        %v5582 = vpop.f32.mrb[0].mxu0
        %5583 = vdwg.mxu0
        %v5584 = vadd.f32 %v4858, %v5458
        %v5585 = vadd.f32 %v4859, %v5461
        %v5586 = vadd.f32 %v4860, %v5466
        %v5587 = vadd.f32 %v4861, %v5469
        %v5588 = vadd.f32 %v4862, %v5474
        %v5589 = vadd.f32 %v4863, %v5477
        %v5590 = vadd.f32 %v4864, %v5482
        %v5591 = vadd.f32 %v4865, %v5485
        %v5592 = vadd.f32 %v4866, %v5490
        %v5593 = vadd.f32 %v4867, %v5493
        %v5594 = vadd.f32 %v4868, %v5498
        %v5595 = vadd.f32 %v4869, %v5501
        %v5596 = vadd.f32 %v4870, %v5506
        %v5597 = vadd.f32 %v4871, %v5509
        %v5598 = vadd.f32 %v4872, %v5514
        %v5599 = vadd.f32 %v4873, %v5517
        %v5600 = vadd.f32 %v4874, %v5522
        %v5601 = vadd.f32 %v4875, %v5525
        %v5602 = vadd.f32 %v4876, %v5530
        %v5603 = vadd.f32 %v4877, %v5533
        %v5604 = vadd.f32 %v4878, %v5538
        %v5605 = vadd.f32 %v4879, %v5541
        %v5606 = vadd.f32 %v4880, %v5546
        %v5607 = vadd.f32 %v4881, %v5549
        %v5608 = vadd.f32 %v4882, %v5554
        %v5609 = vadd.f32 %v4883, %v5557
        %v5610 = vadd.f32 %v4884, %v5562
        %v5611 = vadd.f32 %v4885, %v5565
        %v5612 = vadd.f32 %v4886, %v5570
        %v5613 = vadd.f32 %v4887, %v5573
        %v5614 = vadd.f32 %v4888, %v5578
        %v5615 = vadd.f32 %v4889, %v5581
        %v5616 = vlaneseq
        %v5617 = vshrl.u32 %v5616, 7
        %v5618 = vsub.s32 0, %v5617
        %v5619 = vrot.slane %v434, %v5618
        %v5620 = vmul.f32 %v5584, %v5619
        %v5621 = vmul.f32 %v5585, %v5619
        %v5622 = vmul.f32 %v5586, %v5619
        %v5623 = vmul.f32 %v5587, %v5619
        %v5624 = vmul.f32 %v5588, %v5619
        %v5625 = vmul.f32 %v5589, %v5619
        %v5626 = vmul.f32 %v5590, %v5619
        %v5627 = vmul.f32 %v5591, %v5619
        %v5628 = vmul.f32 %v5592, %v5619
        %v5629 = vmul.f32 %v5593, %v5619
        %v5630 = vmul.f32 %v5594, %v5619
        %v5631 = vmul.f32 %v5595, %v5619
        %v5632 = vmul.f32 %v5596, %v5619
        %v5633 = vmul.f32 %v5597, %v5619
        %v5634 = vmul.f32 %v5598, %v5619
        %v5635 = vmul.f32 %v5599, %v5619
        %v5636 = vmul.f32 %v5600, %v5619
        %v5637 = vmul.f32 %v5601, %v5619
        %v5638 = vmul.f32 %v5602, %v5619
        %v5639 = vmul.f32 %v5603, %v5619
        %v5640 = vmul.f32 %v5604, %v5619
        %v5641 = vmul.f32 %v5605, %v5619
        %v5642 = vmul.f32 %v5606, %v5619
        %v5643 = vmul.f32 %v5607, %v5619
        %v5644 = vmul.f32 %v5608, %v5619
        %v5645 = vmul.f32 %v5609, %v5619
        %v5646 = vmul.f32 %v5610, %v5619
        %v5647 = vmul.f32 %v5611, %v5619
        %v5648 = vmul.f32 %v5612, %v5619
        %v5649 = vmul.f32 %v5613, %v5619
        %v5650 = vmul.f32 %v5614, %v5619
        %v5651 = vmul.f32 %v5615, %v5619
        %v5652 = vlaneseq
        %v5653 = vshrl.u32 %v5652, 7
        %v5654 = vsub.s32 1, %v5653
        %v5655 = vrot.slane %v434, %v5654
        %v5656 = vadd.f32 %v5620, %v5655
        %v5657 = vadd.f32 %v5621, %v5655
        %v5658 = vadd.f32 %v5622, %v5655
        %v5659 = vadd.f32 %v5623, %v5655
        %v5660 = vadd.f32 %v5624, %v5655
        %v5661 = vadd.f32 %v5625, %v5655
        %v5662 = vadd.f32 %v5626, %v5655
        %v5663 = vadd.f32 %v5627, %v5655
        %v5664 = vadd.f32 %v5628, %v5655
        %v5665 = vadd.f32 %v5629, %v5655
        %v5666 = vadd.f32 %v5630, %v5655
        %v5667 = vadd.f32 %v5631, %v5655
        %v5668 = vadd.f32 %v5632, %v5655
        %v5669 = vadd.f32 %v5633, %v5655
        %v5670 = vadd.f32 %v5634, %v5655
        %v5671 = vadd.f32 %v5635, %v5655
        %v5672 = vadd.f32 %v5636, %v5655
        %v5673 = vadd.f32 %v5637, %v5655
        %v5674 = vadd.f32 %v5638, %v5655
        %v5675 = vadd.f32 %v5639, %v5655
        %v5676 = vadd.f32 %v5640, %v5655
        %v5677 = vadd.f32 %v5641, %v5655
        %v5678 = vadd.f32 %v5642, %v5655
        %v5679 = vadd.f32 %v5643, %v5655
        %v5680 = vadd.f32 %v5644, %v5655
        %v5681 = vadd.f32 %v5645, %v5655
        %v5682 = vadd.f32 %v5646, %v5655
        %v5683 = vadd.f32 %v5647, %v5655
        %v5684 = vadd.f32 %v5648, %v5655
        %v5685 = vadd.f32 %v5649, %v5655
        %v5686 = vadd.f32 %v5650, %v5655
        %v5687 = vadd.f32 %v5651, %v5655
        %v5688 = vmax.f32 %v5656, 0.0
        %v5689 = vmax.f32 %v5657, 0.0
        %v5690 = vmax.f32 %v5658, 0.0
        %v5691 = vmax.f32 %v5659, 0.0
        %v5692 = vmax.f32 %v5660, 0.0
        %v5693 = vmax.f32 %v5661, 0.0
        %v5694 = vmax.f32 %v5662, 0.0
        %v5695 = vmax.f32 %v5663, 0.0
        %v5696 = vmax.f32 %v5664, 0.0
        %v5697 = vmax.f32 %v5665, 0.0
        %v5698 = vmax.f32 %v5666, 0.0
        %v5699 = vmax.f32 %v5667, 0.0
        %v5700 = vmax.f32 %v5668, 0.0
        %v5701 = vmax.f32 %v5669, 0.0
        %v5702 = vmax.f32 %v5670, 0.0
        %v5703 = vmax.f32 %v5671, 0.0
        %v5704 = vmax.f32 %v5672, 0.0
        %v5705 = vmax.f32 %v5673, 0.0
        %v5706 = vmax.f32 %v5674, 0.0
        %v5707 = vmax.f32 %v5675, 0.0
        %v5708 = vmax.f32 %v5676, 0.0
        %v5709 = vmax.f32 %v5677, 0.0
        %v5710 = vmax.f32 %v5678, 0.0
        %v5711 = vmax.f32 %v5679, 0.0
        %v5712 = vmax.f32 %v5680, 0.0
        %v5713 = vmax.f32 %v5681, 0.0
        %v5714 = vmax.f32 %v5682, 0.0
        %v5715 = vmax.f32 %v5683, 0.0
        %v5716 = vmax.f32 %v5684, 0.0
        %v5717 = vmax.f32 %v5685, 0.0
        %v5718 = vmax.f32 %v5686, 0.0
        %v5719 = vmax.f32 %v5687, 0.0
        %v5720 = vld [vmem:[%s3] sm:$0x3]
        %v5722 = vsel %vm969, %v5720, 0
        %5724 = vmatprep.subr.bf16.mxu0 0
        %5725 = vmatpush1.bf16.msra.mxu0 %v5722
        %5726 = vmatprep.subr.bf16.mxu0 0
        %5727 = vmatpush1.bf16.msra.mxu0 0
        %5728 = vmatprep.subr.bf16.mxu0 0
        %5729 = vmatpush1.bf16.msra.mxu0 0
        %5730 = vmatprep.subr.bf16.mxu0 0
        %5731 = vmatpush1.bf16.msra.mxu0 0
        %5732 = vmatprep.subr.bf16.mxu0 0
        %5733 = vmatpush1.bf16.msra.mxu0 0
        %5734 = vmatprep.subr.bf16.mxu0 0
        %5735 = vmatpush1.bf16.msra.mxu0 0
        %5736 = vmatprep.subr.bf16.mxu0 0
        %5737 = vmatpush1.bf16.msra.mxu0 0
        %5738 = vmatprep.subr.bf16.mxu0 0
        %5739 = vmatpush1.bf16.msra.mxu0 0
        %5740 = vmatprep.subr.bf16.mxu0 0
        %5741 = vmatpush1.bf16.msra.mxu0 0
        %5742 = vmatprep.subr.bf16.mxu0 0
        %5743 = vmatpush1.bf16.msra.mxu0 0
        %5744 = vmatprep.subr.bf16.mxu0 0
        %5745 = vmatpush1.bf16.msra.mxu0 0
        %5746 = vmatprep.subr.bf16.mxu0 0
        %5747 = vmatpush1.bf16.msra.mxu0 0
        %5748 = vmatprep.subr.bf16.mxu0 0
        %5749 = vmatpush1.bf16.msra.mxu0 0
        %5750 = vmatprep.subr.bf16.mxu0 0
        %5751 = vmatpush1.bf16.msra.mxu0 0
        %5752 = vmatprep.subr.bf16.mxu0 0
        %5753 = vmatpush1.bf16.msra.mxu0 0
        %5754 = vmatprep.subr.bf16.mxu0 0
        %5755 = vmatpush1.bf16.msra.mxu0 0
        %5756 = vmatprep.mubr.bf16.mxu0 0
        %5757 = vmatmul.mubr.bf16.gmra.mrb[0].mxu0 %v2900
        %v5758 = vpop.f32.mrb[0].mxu0
        %v5759 = vadd.f32 0.0, %v5758
        %v5760 = vpop.f32.mrb[0].mxu0
        %v5761 = vpop.f32.mrb[0].mxu0
        %v5762 = vadd.f32 0.0, %v5761
        %v5763 = vpop.f32.mrb[0].mxu0
        %5764 = vmatprep.mubr.bf16.mxu0 0
        %5765 = vmatmul.mubr.bf16.gmra.mrb[0].mxu0 %v2903
        %v5766 = vpop.f32.mrb[0].mxu0
        %v5767 = vadd.f32 0.0, %v5766
        %v5768 = vpop.f32.mrb[0].mxu0
        %v5769 = vpop.f32.mrb[0].mxu0
        %v5770 = vadd.f32 0.0, %v5769
        %v5771 = vpop.f32.mrb[0].mxu0
        %5772 = vmatprep.mubr.bf16.mxu0 0
        %5773 = vmatmul.mubr.bf16.gmra.mrb[0].mxu0 %v2906
        %v5774 = vpop.f32.mrb[0].mxu0
        %v5775 = vadd.f32 0.0, %v5774
        %v5776 = vpop.f32.mrb[0].mxu0
        %v5777 = vpop.f32.mrb[0].mxu0
        %v5778 = vadd.f32 0.0, %v5777
        %v5779 = vpop.f32.mrb[0].mxu0
        %5780 = vmatprep.mubr.bf16.mxu0 0
        %5781 = vmatmul.mubr.bf16.gmra.mrb[0].mxu0 %v2909
        %v5782 = vpop.f32.mrb[0].mxu0
        %v5783 = vadd.f32 0.0, %v5782
        %v5784 = vpop.f32.mrb[0].mxu0
        %v5785 = vpop.f32.mrb[0].mxu0
        %v5786 = vadd.f32 0.0, %v5785
        %v5787 = vpop.f32.mrb[0].mxu0
        %5788 = vmatprep.mubr.bf16.mxu0 0
        %5789 = vmatmul.mubr.bf16.gmra.mrb[0].mxu0 %v2912
        %v5790 = vpop.f32.mrb[0].mxu0
        %v5791 = vadd.f32 0.0, %v5790
        %v5792 = vpop.f32.mrb[0].mxu0
        %v5793 = vpop.f32.mrb[0].mxu0
        %v5794 = vadd.f32 0.0, %v5793
        %v5795 = vpop.f32.mrb[0].mxu0
        %5796 = vmatprep.mubr.bf16.mxu0 0
        %5797 = vmatmul.mubr.bf16.gmra.mrb[0].mxu0 %v2915
        %v5798 = vpop.f32.mrb[0].mxu0
        %v5799 = vadd.f32 0.0, %v5798
        %v5800 = vpop.f32.mrb[0].mxu0
        %v5801 = vpop.f32.mrb[0].mxu0
        %v5802 = vadd.f32 0.0, %v5801
        %v5803 = vpop.f32.mrb[0].mxu0
        %5804 = vmatprep.mubr.bf16.mxu0 0
        %5805 = vmatmul.mubr.bf16.gmra.mrb[0].mxu0 %v2918
        %v5806 = vpop.f32.mrb[0].mxu0
        %v5807 = vadd.f32 0.0, %v5806
        %v5808 = vpop.f32.mrb[0].mxu0
        %v5809 = vpop.f32.mrb[0].mxu0
        %v5810 = vadd.f32 0.0, %v5809
        %v5811 = vpop.f32.mrb[0].mxu0
        %5812 = vmatprep.mubr.bf16.mxu0 0
        %5813 = vmatmul.mubr.bf16.gmra.mrb[0].mxu0 %v2921
        %v5814 = vpop.f32.mrb[0].mxu0
        %v5815 = vadd.f32 0.0, %v5814
        %v5816 = vpop.f32.mrb[0].mxu0
        %v5817 = vpop.f32.mrb[0].mxu0
        %v5818 = vadd.f32 0.0, %v5817
        %v5819 = vpop.f32.mrb[0].mxu0
        %5820 = vmatprep.mubr.bf16.mxu0 0
        %5821 = vmatmul.mubr.bf16.gmra.mrb[0].mxu0 %v2924
        %v5822 = vpop.f32.mrb[0].mxu0
        %v5823 = vadd.f32 0.0, %v5822
        %v5824 = vpop.f32.mrb[0].mxu0
        %v5825 = vpop.f32.mrb[0].mxu0
        %v5826 = vadd.f32 0.0, %v5825
        %v5827 = vpop.f32.mrb[0].mxu0
        %5828 = vmatprep.mubr.bf16.mxu0 0
        %5829 = vmatmul.mubr.bf16.gmra.mrb[0].mxu0 %v2927
        %v5830 = vpop.f32.mrb[0].mxu0
        %v5831 = vadd.f32 0.0, %v5830
        %v5832 = vpop.f32.mrb[0].mxu0
        %v5833 = vpop.f32.mrb[0].mxu0
        %v5834 = vadd.f32 0.0, %v5833
        %v5835 = vpop.f32.mrb[0].mxu0
        %5836 = vmatprep.mubr.bf16.mxu0 0
        %5837 = vmatmul.mubr.bf16.gmra.mrb[0].mxu0 %v2930
        %v5838 = vpop.f32.mrb[0].mxu0
        %v5839 = vadd.f32 0.0, %v5838
        %v5840 = vpop.f32.mrb[0].mxu0
        %v5841 = vpop.f32.mrb[0].mxu0
        %v5842 = vadd.f32 0.0, %v5841
        %v5843 = vpop.f32.mrb[0].mxu0
        %5844 = vmatprep.mubr.bf16.mxu0 0
        %5845 = vmatmul.mubr.bf16.gmra.mrb[0].mxu0 %v2933
        %v5846 = vpop.f32.mrb[0].mxu0
        %v5847 = vadd.f32 0.0, %v5846
        %v5848 = vpop.f32.mrb[0].mxu0
        %v5849 = vpop.f32.mrb[0].mxu0
        %v5850 = vadd.f32 0.0, %v5849
        %v5851 = vpop.f32.mrb[0].mxu0
        %5852 = vmatprep.mubr.bf16.mxu0 0
        %5853 = vmatmul.mubr.bf16.gmra.mrb[0].mxu0 %v2936
        %v5854 = vpop.f32.mrb[0].mxu0
        %v5855 = vadd.f32 0.0, %v5854
        %v5856 = vpop.f32.mrb[0].mxu0
        %v5857 = vpop.f32.mrb[0].mxu0
        %v5858 = vadd.f32 0.0, %v5857
        %v5859 = vpop.f32.mrb[0].mxu0
        %5860 = vmatprep.mubr.bf16.mxu0 0
        %5861 = vmatmul.mubr.bf16.gmra.mrb[0].mxu0 %v2939
        %v5862 = vpop.f32.mrb[0].mxu0
        %v5863 = vadd.f32 0.0, %v5862
        %v5864 = vpop.f32.mrb[0].mxu0
        %v5865 = vpop.f32.mrb[0].mxu0
        %v5866 = vadd.f32 0.0, %v5865
        %v5867 = vpop.f32.mrb[0].mxu0
        %5868 = vmatprep.mubr.bf16.mxu0 0
        %5869 = vmatmul.mubr.bf16.gmra.mrb[0].mxu0 %v2942
        %v5870 = vpop.f32.mrb[0].mxu0
        %v5871 = vadd.f32 0.0, %v5870
        %v5872 = vpop.f32.mrb[0].mxu0
        %v5873 = vpop.f32.mrb[0].mxu0
        %v5874 = vadd.f32 0.0, %v5873
        %v5875 = vpop.f32.mrb[0].mxu0
        %5876 = vmatprep.mubr.bf16.mxu0 0
        %5877 = vmatmul.mubr.bf16.gmra.mrb[0].mxu0 %v2945
        %v5878 = vpop.f32.mrb[0].mxu0
        %v5879 = vadd.f32 0.0, %v5878
        %v5880 = vpop.f32.mrb[0].mxu0
        %v5881 = vpop.f32.mrb[0].mxu0
        %v5882 = vadd.f32 0.0, %v5881
        %v5883 = vpop.f32.mrb[0].mxu0
        %5884 = vdwg.mxu0
        %v5885 = vlaneseq
        %v5886 = vshrl.u32 %v5885, 7
        %v5887 = vsub.s32 4, %v5886
        %v5888 = vrot.slane %v434, %v5887
        %v5889 = vmul.f32 %v5759, %v5888
        %v5890 = vmul.f32 %v5762, %v5888
        %v5891 = vmul.f32 %v5767, %v5888
        %v5892 = vmul.f32 %v5770, %v5888
        %v5893 = vmul.f32 %v5775, %v5888
        %v5894 = vmul.f32 %v5778, %v5888
        %v5895 = vmul.f32 %v5783, %v5888
        %v5896 = vmul.f32 %v5786, %v5888
        %v5897 = vmul.f32 %v5791, %v5888
        %v5898 = vmul.f32 %v5794, %v5888
        %v5899 = vmul.f32 %v5799, %v5888
        %v5900 = vmul.f32 %v5802, %v5888
        %v5901 = vmul.f32 %v5807, %v5888
        %v5902 = vmul.f32 %v5810, %v5888
        %v5903 = vmul.f32 %v5815, %v5888
        %v5904 = vmul.f32 %v5818, %v5888
        %v5905 = vmul.f32 %v5823, %v5888
        %v5906 = vmul.f32 %v5826, %v5888
        %v5907 = vmul.f32 %v5831, %v5888
        %v5908 = vmul.f32 %v5834, %v5888
        %v5909 = vmul.f32 %v5839, %v5888
        %v5910 = vmul.f32 %v5842, %v5888
        %v5911 = vmul.f32 %v5847, %v5888
        %v5912 = vmul.f32 %v5850, %v5888
        %v5913 = vmul.f32 %v5855, %v5888
        %v5914 = vmul.f32 %v5858, %v5888
        %v5915 = vmul.f32 %v5863, %v5888
        %v5916 = vmul.f32 %v5866, %v5888
        %v5917 = vmul.f32 %v5871, %v5888
        %v5918 = vmul.f32 %v5874, %v5888
        %v5919 = vmul.f32 %v5879, %v5888
        %v5920 = vmul.f32 %v5882, %v5888
        %v5921 = vlaneseq
        %v5922 = vshrl.u32 %v5921, 7
        %v5923 = vsub.s32 5, %v5922
        %v5924 = vrot.slane %v434, %v5923
        %v5925 = vadd.f32 %v5889, %v5924
        %v5926 = vadd.f32 %v5890, %v5924
        %v5927 = vadd.f32 %v5891, %v5924
        %v5928 = vadd.f32 %v5892, %v5924
        %v5929 = vadd.f32 %v5893, %v5924
        %v5930 = vadd.f32 %v5894, %v5924
        %v5931 = vadd.f32 %v5895, %v5924
        %v5932 = vadd.f32 %v5896, %v5924
        %v5933 = vadd.f32 %v5897, %v5924
        %v5934 = vadd.f32 %v5898, %v5924
        %v5935 = vadd.f32 %v5899, %v5924
        %v5936 = vadd.f32 %v5900, %v5924
        %v5937 = vadd.f32 %v5901, %v5924
        %v5938 = vadd.f32 %v5902, %v5924
        %v5939 = vadd.f32 %v5903, %v5924
        %v5940 = vadd.f32 %v5904, %v5924
        %v5941 = vadd.f32 %v5905, %v5924
        %v5942 = vadd.f32 %v5906, %v5924
        %v5943 = vadd.f32 %v5907, %v5924
        %v5944 = vadd.f32 %v5908, %v5924
        %v5945 = vadd.f32 %v5909, %v5924
        %v5946 = vadd.f32 %v5910, %v5924
        %v5947 = vadd.f32 %v5911, %v5924
        %v5948 = vadd.f32 %v5912, %v5924
        %v5949 = vadd.f32 %v5913, %v5924
        %v5950 = vadd.f32 %v5914, %v5924
        %v5951 = vadd.f32 %v5915, %v5924
        %v5952 = vadd.f32 %v5916, %v5924
        %v5953 = vadd.f32 %v5917, %v5924
        %v5954 = vadd.f32 %v5918, %v5924
        %v5955 = vadd.f32 %v5919, %v5924
        %v5956 = vadd.f32 %v5920, %v5924
        %v5957 = vpack.c.bf16 %v5689, %v5688
        %v5958 = vpack.c.bf16 %v5691, %v5690
        %v5959 = vpack.c.bf16 %v5693, %v5692
        %v5960 = vpack.c.bf16 %v5695, %v5694
        %v5961 = vpack.c.bf16 %v5697, %v5696
        %v5962 = vpack.c.bf16 %v5699, %v5698
        %v5963 = vpack.c.bf16 %v5701, %v5700
        %v5964 = vpack.c.bf16 %v5703, %v5702
        %v5965 = vpack.c.bf16 %v5705, %v5704
        %v5966 = vpack.c.bf16 %v5707, %v5706
        %v5967 = vpack.c.bf16 %v5709, %v5708
        %v5968 = vpack.c.bf16 %v5711, %v5710
        %v5969 = vpack.c.bf16 %v5713, %v5712
        %v5970 = vpack.c.bf16 %v5715, %v5714
        %v5971 = vpack.c.bf16 %v5717, %v5716
        %v5972 = vpack.c.bf16 %v5719, %v5718
        %5973 = vst [vmem:[#allocation3] sm:$0xf] 0
        %5974 = vst [vmem:[#allocation3 + $0x4] sm:$0xf] 0
        %5975 = vst [vmem:[#allocation3 + $0x8] sm:$0xf] 0
        %5976 = vst [vmem:[#allocation3 + $0xc] sm:$0xf] 0
        %vm5977 = vcmask 1040384
        %vm5978 = vmand %vm5977, %vm277
        %v5979 = vld [vmem:[#allocation3 + $0x10] sm:$0x1]
        %v5980 = vsel %vm5978, 0, %v5979
        %5981 = vst [vmem:[#allocation3 + $0x10] sm:$0x1] %v5980
        %s5982 = scalar_lea.vmem [#allocation3], 340
        %5983 = vst [vmem:[%s5982] sm:$0xf] 0
        %5984 = vst [vmem:[%s5982 + $0x4] sm:$0xf] 0
        %5985 = vst [vmem:[%s5982 + $0x8] sm:$0xf] 0
        %5986 = vst [vmem:[%s5982 + $0xc] sm:$0xf] 0
        %v5987 = vld [vmem:[%s5982 + $0x10] sm:$0x1]
        %v5988 = vsel %vm5978, 0, %v5987
        %5989 = vst [vmem:[%s5982 + $0x10] sm:$0x1] %v5988
        %vm5990 = vcmask 1043459
        %vm5991 = vmand %vm5990, %vm291
        %v5992 = vld [vmem:[#allocation3 + $0x4] sm:$0x8]
        %v5993 = vsel %vm5991, 0, %v5992
        %5994 = vst [vmem:[#allocation3 + $0x4] sm:$0x8] %v5993
        %v5995 = vld [vmem:[#allocation3 + $0x18] sm:$0x8]
        %v5996 = vsel %vm5991, 0, %v5995
        %5997 = vst [vmem:[#allocation3 + $0x18] sm:$0x8] %v5996
        %v5998 = vld [vmem:[#allocation3 + $0x2c] sm:$0x8]
        %v5999 = vsel %vm5991, 0, %v5998
        %6000 = vst [vmem:[#allocation3 + $0x2c] sm:$0x8] %v5999
        %v6001 = vld [vmem:[#allocation3 + $0x40] sm:$0x8]
        %v6002 = vsel %vm5991, 0, %v6001
        %6003 = vst [vmem:[#allocation3 + $0x40] sm:$0x8] %v6002
        %v6004 = vld [vmem:[#allocation3 + $0x54] sm:$0x8]
        %v6005 = vsel %vm5991, 0, %v6004
        %6006 = vst [vmem:[#allocation3 + $0x54] sm:$0x8] %v6005
        %v6007 = vld [vmem:[#allocation3 + $0x68] sm:$0x8]
        %v6008 = vsel %vm5991, 0, %v6007
        %6009 = vst [vmem:[#allocation3 + $0x68] sm:$0x8] %v6008
        %v6010 = vld [vmem:[#allocation3 + $0x7c] sm:$0x8]
        %v6011 = vsel %vm5991, 0, %v6010
        %6012 = vst [vmem:[#allocation3 + $0x7c] sm:$0x8] %v6011
        %v6013 = vld [vmem:[#allocation3 + $0x90] sm:$0x8]
        %v6014 = vsel %vm5991, 0, %v6013
        %6015 = vst [vmem:[#allocation3 + $0x90] sm:$0x8] %v6014
        %v6016 = vld [vmem:[#allocation3 + $0xa4] sm:$0x8]
        %v6017 = vsel %vm5991, 0, %v6016
        %6018 = vst [vmem:[#allocation3 + $0xa4] sm:$0x8] %v6017
        %v6019 = vld [vmem:[#allocation3 + $0xb8] sm:$0x8]
        %v6020 = vsel %vm5991, 0, %v6019
        %6021 = vst [vmem:[#allocation3 + $0xb8] sm:$0x8] %v6020
        %v6022 = vld [vmem:[#allocation3 + $0xcc] sm:$0x8]
        %v6023 = vsel %vm5991, 0, %v6022
        %6024 = vst [vmem:[#allocation3 + $0xcc] sm:$0x8] %v6023
        %v6025 = vld [vmem:[#allocation3 + $0xe0] sm:$0x8]
        %v6026 = vsel %vm5991, 0, %v6025
        %6027 = vst [vmem:[#allocation3 + $0xe0] sm:$0x8] %v6026
        %v6028 = vld [vmem:[#allocation3 + $0xf4] sm:$0x8]
        %v6029 = vsel %vm5991, 0, %v6028
        %6030 = vst [vmem:[#allocation3 + $0xf4] sm:$0x8] %v6029
        %v6031 = vld [vmem:[#allocation3 + $0x108] sm:$0x8]
        %v6032 = vsel %vm5991, 0, %v6031
        %6033 = vst [vmem:[#allocation3 + $0x108] sm:$0x8] %v6032
        %v6034 = vld [vmem:[#allocation3 + $0x11c] sm:$0x8]
        %v6035 = vsel %vm5991, 0, %v6034
        %6036 = vst [vmem:[#allocation3 + $0x11c] sm:$0x8] %v6035
        %v6037 = vld [vmem:[#allocation3 + $0x130] sm:$0x8]
        %v6038 = vsel %vm5991, 0, %v6037
        %6039 = vst [vmem:[#allocation3 + $0x130] sm:$0x8] %v6038
        %v6040 = vld [vmem:[#allocation3 + $0x144] sm:$0x8]
        %v6041 = vsel %vm5991, 0, %v6040
        %6042 = vst [vmem:[#allocation3 + $0x144] sm:$0x8] %v6041
        %v6043 = vld [vmem:[#allocation3 + $0x158] sm:$0x8]
        %v6044 = vsel %vm5991, 0, %v6043
        %6045 = vst [vmem:[#allocation3 + $0x158] sm:$0x8] %v6044
        %v6046 = vld [vmem:[#allocation3 + $0x10] sm:$0x1]
        %v6047 = vsel %vm5978, 0, %v6046
        %6048 = vst [vmem:[#allocation3 + $0x10] sm:$0x1] %v6047
        %v6049 = vld [vmem:[#allocation3 + $0x24] sm:$0x1]
        %v6050 = vsel %vm5978, 0, %v6049
        %6051 = vst [vmem:[#allocation3 + $0x24] sm:$0x1] %v6050
        %v6052 = vld [vmem:[#allocation3 + $0x38] sm:$0x1]
        %v6053 = vsel %vm5978, 0, %v6052
        %6054 = vst [vmem:[#allocation3 + $0x38] sm:$0x1] %v6053
        %v6055 = vld [vmem:[#allocation3 + $0x4c] sm:$0x1]
        %v6056 = vsel %vm5978, 0, %v6055
        %6057 = vst [vmem:[#allocation3 + $0x4c] sm:$0x1] %v6056
        %v6058 = vld [vmem:[#allocation3 + $0x60] sm:$0x1]
        %v6059 = vsel %vm5978, 0, %v6058
        %6060 = vst [vmem:[#allocation3 + $0x60] sm:$0x1] %v6059
        %v6061 = vld [vmem:[#allocation3 + $0x74] sm:$0x1]
        %v6062 = vsel %vm5978, 0, %v6061
        %6063 = vst [vmem:[#allocation3 + $0x74] sm:$0x1] %v6062
        %v6064 = vld [vmem:[#allocation3 + $0x88] sm:$0x1]
        %v6065 = vsel %vm5978, 0, %v6064
        %6066 = vst [vmem:[#allocation3 + $0x88] sm:$0x1] %v6065
        %v6067 = vld [vmem:[#allocation3 + $0x9c] sm:$0x1]
        %v6068 = vsel %vm5978, 0, %v6067
        %6069 = vst [vmem:[#allocation3 + $0x9c] sm:$0x1] %v6068
        %v6070 = vld [vmem:[#allocation3 + $0xb0] sm:$0x1]
        %v6071 = vsel %vm5978, 0, %v6070
        %6072 = vst [vmem:[#allocation3 + $0xb0] sm:$0x1] %v6071
        %v6073 = vld [vmem:[#allocation3 + $0xc4] sm:$0x1]
        %v6074 = vsel %vm5978, 0, %v6073
        %6075 = vst [vmem:[#allocation3 + $0xc4] sm:$0x1] %v6074
        %v6076 = vld [vmem:[#allocation3 + $0xd8] sm:$0x1]
        %v6077 = vsel %vm5978, 0, %v6076
        %6078 = vst [vmem:[#allocation3 + $0xd8] sm:$0x1] %v6077
        %v6079 = vld [vmem:[#allocation3 + $0xec] sm:$0x1]
        %v6080 = vsel %vm5978, 0, %v6079
        %6081 = vst [vmem:[#allocation3 + $0xec] sm:$0x1] %v6080
        %v6082 = vld [vmem:[#allocation3 + $0x100] sm:$0x1]
        %v6083 = vsel %vm5978, 0, %v6082
        %6084 = vst [vmem:[#allocation3 + $0x100] sm:$0x1] %v6083
        %v6085 = vld [vmem:[#allocation3 + $0x114] sm:$0x1]
        %v6086 = vsel %vm5978, 0, %v6085
        %6087 = vst [vmem:[#allocation3 + $0x114] sm:$0x1] %v6086
        %v6088 = vld [vmem:[#allocation3 + $0x128] sm:$0x1]
        %v6089 = vsel %vm5978, 0, %v6088
        %6090 = vst [vmem:[#allocation3 + $0x128] sm:$0x1] %v6089
        %v6091 = vld [vmem:[#allocation3 + $0x13c] sm:$0x1]
        %v6092 = vsel %vm5978, 0, %v6091
        %6093 = vst [vmem:[#allocation3 + $0x13c] sm:$0x1] %v6092
        %v6094 = vld [vmem:[#allocation3 + $0x150] sm:$0x1]
        %v6095 = vsel %vm5978, 0, %v6094
        %6096 = vst [vmem:[#allocation3 + $0x150] sm:$0x1] %v6095
        %v6097 = vld [vmem:[#allocation3 + $0x164] sm:$0x1]
        %v6098 = vsel %vm5978, 0, %v6097
        %6099 = vst [vmem:[#allocation3 + $0x164] sm:$0x1] %v6098
        %v6116 = vunpack.c.l.b16 %v5957
        %v6117 = vunpack.c.h.b16 %v5957
        %v6118 = vunpack.c.l.b16 %v5958
        %v6119 = vunpack.c.h.b16 %v5958
        %v6120 = vunpack.c.l.b16 %v5959
        %v6121 = vunpack.c.h.b16 %v5959
        %v6122 = vunpack.c.l.b16 %v5960
        %v6123 = vunpack.c.h.b16 %v5960
        %v6124 = vunpack.c.l.b16 %v5961
        %v6125 = vunpack.c.h.b16 %v5961
        %v6126 = vunpack.c.l.b16 %v5962
        %v6127 = vunpack.c.h.b16 %v5962
        %v6128 = vunpack.c.l.b16 %v5963
        %v6129 = vunpack.c.h.b16 %v5963
        %v6130 = vunpack.c.l.b16 %v5964
        %v6131 = vunpack.c.h.b16 %v5964
        %v6132 = vunpack.c.l.b16 %v5965
        %v6133 = vunpack.c.h.b16 %v5965
        %v6134 = vunpack.c.l.b16 %v5966
        %v6135 = vunpack.c.h.b16 %v5966
        %v6136 = vunpack.c.l.b16 %v5967
        %v6137 = vunpack.c.h.b16 %v5967
        %v6138 = vunpack.c.l.b16 %v5968
        %v6139 = vunpack.c.h.b16 %v5968
        %v6140 = vunpack.c.l.b16 %v5969
        %v6141 = vunpack.c.h.b16 %v5969
        %v6142 = vunpack.c.l.b16 %v5970
        %v6143 = vunpack.c.h.b16 %v5970
        %v6144 = vunpack.c.l.b16 %v5971
        %v6145 = vunpack.c.h.b16 %v5971
        %v6146 = vunpack.c.l.b16 %v5972
        %v6147 = vunpack.c.h.b16 %v5972
        %v6148 = vpack.c.b16 %v6116, %v6116
        %v6149 = vpack.c.b16 %v6117, %v6117
        %v6150 = vpack.c.b16 %v6118, %v6118
        %v6151 = vpack.c.b16 %v6119, %v6119
        %v6152 = vpack.c.b16 %v6120, %v6120
        %v6153 = vpack.c.b16 %v6121, %v6121
        %v6154 = vpack.c.b16 %v6122, %v6122
        %v6155 = vpack.c.b16 %v6123, %v6123
        %v6156 = vpack.c.b16 %v6124, %v6124
        %v6157 = vpack.c.b16 %v6125, %v6125
        %v6158 = vpack.c.b16 %v6126, %v6126
        %v6159 = vpack.c.b16 %v6127, %v6127
        %v6160 = vpack.c.b16 %v6128, %v6128
        %v6161 = vpack.c.b16 %v6129, %v6129
        %v6162 = vpack.c.b16 %v6130, %v6130
        %v6163 = vpack.c.b16 %v6131, %v6131
        %v6164 = vpack.c.b16 %v6132, %v6132
        %v6165 = vpack.c.b16 %v6133, %v6133
        %v6166 = vpack.c.b16 %v6134, %v6134
        %v6167 = vpack.c.b16 %v6135, %v6135
        %v6168 = vpack.c.b16 %v6136, %v6136
        %v6169 = vpack.c.b16 %v6137, %v6137
        %v6170 = vpack.c.b16 %v6138, %v6138
        %v6171 = vpack.c.b16 %v6139, %v6139
        %v6172 = vpack.c.b16 %v6140, %v6140
        %v6173 = vpack.c.b16 %v6141, %v6141
        %v6174 = vpack.c.b16 %v6142, %v6142
        %v6175 = vpack.c.b16 %v6143, %v6143
        %v6176 = vpack.c.b16 %v6144, %v6144
        %v6177 = vpack.c.b16 %v6145, %v6145
        %v6178 = vpack.c.b16 %v6146, %v6146
        %v6179 = vpack.c.b16 %v6147, %v6147
        %s6212 = scalar_lea.vmem [#allocation3], 20
        %6213 = vst [vmem:[%s6212 + $0x8] sm:$0xf] %v6148
        %6214 = vst [vmem:[%s6212 + $0xc] sm:$0xf] %v6149
        %6215 = vst [vmem:[%s6212 + $0x1c] sm:$0xf] %v6150
        %6216 = vst [vmem:[%s6212 + $0x20] sm:$0xf] %v6151
        %6217 = vst [vmem:[%s6212 + $0x30] sm:$0xf] %v6152
        %6218 = vst [vmem:[%s6212 + $0x34] sm:$0xf] %v6153
        %6219 = vst [vmem:[%s6212 + $0x44] sm:$0xf] %v6154
        %6220 = vst [vmem:[%s6212 + $0x48] sm:$0xf] %v6155
        %6221 = vst [vmem:[%s6212 + $0x58] sm:$0xf] %v6156
        %6222 = vst [vmem:[%s6212 + $0x5c] sm:$0xf] %v6157
        %6223 = vst [vmem:[%s6212 + $0x6c] sm:$0xf] %v6158
        %6224 = vst [vmem:[%s6212 + $0x70] sm:$0xf] %v6159
        %6225 = vst [vmem:[%s6212 + $0x80] sm:$0xf] %v6160
        %6226 = vst [vmem:[%s6212 + $0x84] sm:$0xf] %v6161
        %6227 = vst [vmem:[%s6212 + $0x94] sm:$0xf] %v6162
        %6228 = vst [vmem:[%s6212 + $0x98] sm:$0xf] %v6163
        %6229 = vst [vmem:[%s6212 + $0xa8] sm:$0xf] %v6164
        %6230 = vst [vmem:[%s6212 + $0xac] sm:$0xf] %v6165
        %6231 = vst [vmem:[%s6212 + $0xbc] sm:$0xf] %v6166
        %6232 = vst [vmem:[%s6212 + $0xc0] sm:$0xf] %v6167
        %6233 = vst [vmem:[%s6212 + $0xd0] sm:$0xf] %v6168
        %6234 = vst [vmem:[%s6212 + $0xd4] sm:$0xf] %v6169
        %6235 = vst [vmem:[%s6212 + $0xe4] sm:$0xf] %v6170
        %6236 = vst [vmem:[%s6212 + $0xe8] sm:$0xf] %v6171
        %6237 = vst [vmem:[%s6212 + $0xf8] sm:$0xf] %v6172
        %6238 = vst [vmem:[%s6212 + $0xfc] sm:$0xf] %v6173
        %6239 = vst [vmem:[%s6212 + $0x10c] sm:$0xf] %v6174
        %6240 = vst [vmem:[%s6212 + $0x110] sm:$0xf] %v6175
        %6241 = vst [vmem:[%s6212 + $0x120] sm:$0xf] %v6176
        %6242 = vst [vmem:[%s6212 + $0x124] sm:$0xf] %v6177
        %6243 = vst [vmem:[%s6212 + $0x134] sm:$0xf] %v6178
        %6244 = vst [vmem:[%s6212 + $0x138] sm:$0xf] %v6179
        %v6245 = vld [vmem:[#allocation3 + $0x4] sm:$0x8]
        %v6246 = vld [vmem:[#allocation3 + $0x8] sm:$0xf]
        %v6247 = vld [vmem:[#allocation3 + $0xc] sm:$0xf]
        %v6248 = vld [vmem:[#allocation3 + $0x18] sm:$0x8]
        %v6249 = vld [vmem:[#allocation3 + $0x1c] sm:$0xf]
        %v6250 = vld [vmem:[#allocation3 + $0x20] sm:$0xf]
        %v6251 = vld [vmem:[#allocation3 + $0x2c] sm:$0x8]
        %v6252 = vld [vmem:[#allocation3 + $0x30] sm:$0xf]
        %v6253 = vld [vmem:[#allocation3 + $0x34] sm:$0xf]
        %v6254 = vld [vmem:[#allocation3 + $0x40] sm:$0x8]
        %v6255 = vld [vmem:[#allocation3 + $0x44] sm:$0xf]
        %v6256 = vld [vmem:[#allocation3 + $0x48] sm:$0xf]
        %v6257 = vld [vmem:[#allocation3 + $0x54] sm:$0x8]
        %v6258 = vld [vmem:[#allocation3 + $0x58] sm:$0xf]
        %v6259 = vld [vmem:[#allocation3 + $0x5c] sm:$0xf]
        %v6260 = vld [vmem:[#allocation3 + $0x68] sm:$0x8]
        %v6261 = vld [vmem:[#allocation3 + $0x6c] sm:$0xf]
        %v6262 = vld [vmem:[#allocation3 + $0x70] sm:$0xf]
        %v6263 = vld [vmem:[#allocation3 + $0x7c] sm:$0x8]
        %v6264 = vld [vmem:[#allocation3 + $0x80] sm:$0xf]
        %v6265 = vld [vmem:[#allocation3 + $0x84] sm:$0xf]
        %v6266 = vld [vmem:[#allocation3 + $0x90] sm:$0x8]
        %v6267 = vld [vmem:[#allocation3 + $0x94] sm:$0xf]
        %v6268 = vld [vmem:[#allocation3 + $0x98] sm:$0xf]
        %v6269 = vld [vmem:[#allocation3 + $0xa4] sm:$0x8]
        %v6270 = vld [vmem:[#allocation3 + $0xa8] sm:$0xf]
        %v6271 = vld [vmem:[#allocation3 + $0xac] sm:$0xf]
        %v6272 = vld [vmem:[#allocation3 + $0xb8] sm:$0x8]
        %v6273 = vld [vmem:[#allocation3 + $0xbc] sm:$0xf]
        %v6274 = vld [vmem:[#allocation3 + $0xc0] sm:$0xf]
        %v6275 = vld [vmem:[#allocation3 + $0xcc] sm:$0x8]
        %v6276 = vld [vmem:[#allocation3 + $0xd0] sm:$0xf]
        %v6277 = vld [vmem:[#allocation3 + $0xd4] sm:$0xf]
        %v6278 = vld [vmem:[#allocation3 + $0xe0] sm:$0x8]
        %v6279 = vld [vmem:[#allocation3 + $0xe4] sm:$0xf]
        %v6280 = vld [vmem:[#allocation3 + $0xe8] sm:$0xf]
        %v6281 = vld [vmem:[#allocation3 + $0xf4] sm:$0x8]
        %v6282 = vld [vmem:[#allocation3 + $0xf8] sm:$0xf]
        %v6283 = vld [vmem:[#allocation3 + $0xfc] sm:$0xf]
        %v6284 = vld [vmem:[#allocation3 + $0x108] sm:$0x8]
        %v6285 = vld [vmem:[#allocation3 + $0x10c] sm:$0xf]
        %v6286 = vld [vmem:[#allocation3 + $0x110] sm:$0xf]
        %v6287 = vld [vmem:[#allocation3 + $0x11c] sm:$0x8]
        %v6288 = vld [vmem:[#allocation3 + $0x120] sm:$0xf]
        %v6289 = vld [vmem:[#allocation3 + $0x124] sm:$0xf]
        %v6290 = vld [vmem:[#allocation3 + $0x130] sm:$0x8]
        %v6291 = vld [vmem:[#allocation3 + $0x134] sm:$0xf]
        %v6292 = vld [vmem:[#allocation3 + $0x138] sm:$0xf]
        %v6294 = vshrl.u32 %v6245, 16
        %v6296 = vrot.slane %v6294, 7
        %v6297 = vrot.slane %v6296, 4
        %v6299 = vshrl.u32 %v6246, 16
        %v6301 = vrot.slane %v6299, 7
        %v6302 = vshll.u32 %v6246, 16
        %v6304 = vor.u32 %v6301, %v6302
        %v6305 = vsel %vm484, %v6297, %v6304
        %v6306 = vrot.slane %v6301, 4
        %v6308 = vshrl.u32 %v6247, 16
        %v6310 = vrot.slane %v6308, 7
        %v6311 = vshll.u32 %v6247, 16
        %v6313 = vor.u32 %v6310, %v6311
        %v6314 = vsel %vm484, %v6306, %v6313
        %v6316 = vshrl.u32 %v6248, 16
        %v6318 = vrot.slane %v6316, 7
        %v6319 = vrot.slane %v6318, 4
        %v6321 = vshrl.u32 %v6249, 16
        %v6323 = vrot.slane %v6321, 7
        %v6324 = vshll.u32 %v6249, 16
        %v6326 = vor.u32 %v6323, %v6324
        %v6327 = vsel %vm484, %v6319, %v6326
        %v6328 = vrot.slane %v6323, 4
        %v6330 = vshrl.u32 %v6250, 16
        %v6332 = vrot.slane %v6330, 7
        %v6333 = vshll.u32 %v6250, 16
        %v6335 = vor.u32 %v6332, %v6333
        %v6336 = vsel %vm484, %v6328, %v6335
        %v6338 = vshrl.u32 %v6251, 16
        %v6340 = vrot.slane %v6338, 7
        %v6341 = vrot.slane %v6340, 4
        %v6343 = vshrl.u32 %v6252, 16
        %v6345 = vrot.slane %v6343, 7
        %v6346 = vshll.u32 %v6252, 16
        %v6348 = vor.u32 %v6345, %v6346
        %v6349 = vsel %vm484, %v6341, %v6348
        %v6350 = vrot.slane %v6345, 4
        %v6352 = vshrl.u32 %v6253, 16
        %v6354 = vrot.slane %v6352, 7
        %v6355 = vshll.u32 %v6253, 16
        %v6357 = vor.u32 %v6354, %v6355
        %v6358 = vsel %vm484, %v6350, %v6357
        %v6360 = vshrl.u32 %v6254, 16
        %v6362 = vrot.slane %v6360, 7
        %v6363 = vrot.slane %v6362, 4
        %v6365 = vshrl.u32 %v6255, 16
        %v6367 = vrot.slane %v6365, 7
        %v6368 = vshll.u32 %v6255, 16
        %v6370 = vor.u32 %v6367, %v6368
        %v6371 = vsel %vm484, %v6363, %v6370
        %v6372 = vrot.slane %v6367, 4
        %v6374 = vshrl.u32 %v6256, 16
        %v6376 = vrot.slane %v6374, 7
        %v6377 = vshll.u32 %v6256, 16
        %v6379 = vor.u32 %v6376, %v6377
        %v6380 = vsel %vm484, %v6372, %v6379
        %v6382 = vshrl.u32 %v6257, 16
        %v6384 = vrot.slane %v6382, 7
        %v6385 = vrot.slane %v6384, 4
        %v6387 = vshrl.u32 %v6258, 16
        %v6389 = vrot.slane %v6387, 7
        %v6390 = vshll.u32 %v6258, 16
        %v6392 = vor.u32 %v6389, %v6390
        %v6393 = vsel %vm484, %v6385, %v6392
        %v6394 = vrot.slane %v6389, 4
        %v6396 = vshrl.u32 %v6259, 16
        %v6398 = vrot.slane %v6396, 7
        %v6399 = vshll.u32 %v6259, 16
        %v6401 = vor.u32 %v6398, %v6399
        %v6402 = vsel %vm484, %v6394, %v6401
        %v6404 = vshrl.u32 %v6260, 16
        %v6406 = vrot.slane %v6404, 7
        %v6407 = vrot.slane %v6406, 4
        %v6409 = vshrl.u32 %v6261, 16
        %v6411 = vrot.slane %v6409, 7
        %v6412 = vshll.u32 %v6261, 16
        %v6414 = vor.u32 %v6411, %v6412
        %v6415 = vsel %vm484, %v6407, %v6414
        %v6416 = vrot.slane %v6411, 4
        %v6418 = vshrl.u32 %v6262, 16
        %v6420 = vrot.slane %v6418, 7
        %v6421 = vshll.u32 %v6262, 16
        %v6423 = vor.u32 %v6420, %v6421
        %v6424 = vsel %vm484, %v6416, %v6423
        %v6426 = vshrl.u32 %v6263, 16
        %v6428 = vrot.slane %v6426, 7
        %v6429 = vrot.slane %v6428, 4
        %v6431 = vshrl.u32 %v6264, 16
        %v6433 = vrot.slane %v6431, 7
        %v6434 = vshll.u32 %v6264, 16
        %v6436 = vor.u32 %v6433, %v6434
        %v6437 = vsel %vm484, %v6429, %v6436
        %v6438 = vrot.slane %v6433, 4
        %v6440 = vshrl.u32 %v6265, 16
        %v6442 = vrot.slane %v6440, 7
        %v6443 = vshll.u32 %v6265, 16
        %v6445 = vor.u32 %v6442, %v6443
        %v6446 = vsel %vm484, %v6438, %v6445
        %v6448 = vshrl.u32 %v6266, 16
        %v6450 = vrot.slane %v6448, 7
        %v6451 = vrot.slane %v6450, 4
        %v6453 = vshrl.u32 %v6267, 16
        %v6455 = vrot.slane %v6453, 7
        %v6456 = vshll.u32 %v6267, 16
        %v6458 = vor.u32 %v6455, %v6456
        %v6459 = vsel %vm484, %v6451, %v6458
        %v6460 = vrot.slane %v6455, 4
        %v6462 = vshrl.u32 %v6268, 16
        %v6464 = vrot.slane %v6462, 7
        %v6465 = vshll.u32 %v6268, 16
        %v6467 = vor.u32 %v6464, %v6465
        %v6468 = vsel %vm484, %v6460, %v6467
        %v6470 = vshrl.u32 %v6269, 16
        %v6472 = vrot.slane %v6470, 7
        %v6473 = vrot.slane %v6472, 4
        %v6475 = vshrl.u32 %v6270, 16
        %v6477 = vrot.slane %v6475, 7
        %v6478 = vshll.u32 %v6270, 16
        %v6480 = vor.u32 %v6477, %v6478
        %v6481 = vsel %vm484, %v6473, %v6480
        %v6482 = vrot.slane %v6477, 4
        %v6484 = vshrl.u32 %v6271, 16
        %v6486 = vrot.slane %v6484, 7
        %v6487 = vshll.u32 %v6271, 16
        %v6489 = vor.u32 %v6486, %v6487
        %v6490 = vsel %vm484, %v6482, %v6489
        %v6492 = vshrl.u32 %v6272, 16
        %v6494 = vrot.slane %v6492, 7
        %v6495 = vrot.slane %v6494, 4
        %v6497 = vshrl.u32 %v6273, 16
        %v6499 = vrot.slane %v6497, 7
        %v6500 = vshll.u32 %v6273, 16
        %v6502 = vor.u32 %v6499, %v6500
        %v6503 = vsel %vm484, %v6495, %v6502
        %v6504 = vrot.slane %v6499, 4
        %v6506 = vshrl.u32 %v6274, 16
        %v6508 = vrot.slane %v6506, 7
        %v6509 = vshll.u32 %v6274, 16
        %v6511 = vor.u32 %v6508, %v6509
        %v6512 = vsel %vm484, %v6504, %v6511
        %v6514 = vshrl.u32 %v6275, 16
        %v6516 = vrot.slane %v6514, 7
        %v6517 = vrot.slane %v6516, 4
        %v6519 = vshrl.u32 %v6276, 16
        %v6521 = vrot.slane %v6519, 7
        %v6522 = vshll.u32 %v6276, 16
        %v6524 = vor.u32 %v6521, %v6522
        %v6525 = vsel %vm484, %v6517, %v6524
        %v6526 = vrot.slane %v6521, 4
        %v6528 = vshrl.u32 %v6277, 16
        %v6530 = vrot.slane %v6528, 7
        %v6531 = vshll.u32 %v6277, 16
        %v6533 = vor.u32 %v6530, %v6531
        %v6534 = vsel %vm484, %v6526, %v6533
        %v6536 = vshrl.u32 %v6278, 16
        %v6538 = vrot.slane %v6536, 7
        %v6539 = vrot.slane %v6538, 4
        %v6541 = vshrl.u32 %v6279, 16
        %v6543 = vrot.slane %v6541, 7
        %v6544 = vshll.u32 %v6279, 16
        %v6546 = vor.u32 %v6543, %v6544
        %v6547 = vsel %vm484, %v6539, %v6546
        %v6548 = vrot.slane %v6543, 4
        %v6550 = vshrl.u32 %v6280, 16
        %v6552 = vrot.slane %v6550, 7
        %v6553 = vshll.u32 %v6280, 16
        %v6555 = vor.u32 %v6552, %v6553
        %v6556 = vsel %vm484, %v6548, %v6555
        %v6558 = vshrl.u32 %v6281, 16
        %v6560 = vrot.slane %v6558, 7
        %v6561 = vrot.slane %v6560, 4
        %v6563 = vshrl.u32 %v6282, 16
        %v6565 = vrot.slane %v6563, 7
        %v6566 = vshll.u32 %v6282, 16
        %v6568 = vor.u32 %v6565, %v6566
        %v6569 = vsel %vm484, %v6561, %v6568
        %v6570 = vrot.slane %v6565, 4
        %v6572 = vshrl.u32 %v6283, 16
        %v6574 = vrot.slane %v6572, 7
        %v6575 = vshll.u32 %v6283, 16
        %v6577 = vor.u32 %v6574, %v6575
        %v6578 = vsel %vm484, %v6570, %v6577
        %v6580 = vshrl.u32 %v6284, 16
        %v6582 = vrot.slane %v6580, 7
        %v6583 = vrot.slane %v6582, 4
        %v6585 = vshrl.u32 %v6285, 16
        %v6587 = vrot.slane %v6585, 7
        %v6588 = vshll.u32 %v6285, 16
        %v6590 = vor.u32 %v6587, %v6588
        %v6591 = vsel %vm484, %v6583, %v6590
        %v6592 = vrot.slane %v6587, 4
        %v6594 = vshrl.u32 %v6286, 16
        %v6596 = vrot.slane %v6594, 7
        %v6597 = vshll.u32 %v6286, 16
        %v6599 = vor.u32 %v6596, %v6597
        %v6600 = vsel %vm484, %v6592, %v6599
        %v6602 = vshrl.u32 %v6287, 16
        %v6604 = vrot.slane %v6602, 7
        %v6605 = vrot.slane %v6604, 4
        %v6607 = vshrl.u32 %v6288, 16
        %v6609 = vrot.slane %v6607, 7
        %v6610 = vshll.u32 %v6288, 16
        %v6612 = vor.u32 %v6609, %v6610
        %v6613 = vsel %vm484, %v6605, %v6612
        %v6614 = vrot.slane %v6609, 4
        %v6616 = vshrl.u32 %v6289, 16
        %v6618 = vrot.slane %v6616, 7
        %v6619 = vshll.u32 %v6289, 16
        %v6621 = vor.u32 %v6618, %v6619
        %v6622 = vsel %vm484, %v6614, %v6621
        %v6624 = vshrl.u32 %v6290, 16
        %v6626 = vrot.slane %v6624, 7
        %v6627 = vrot.slane %v6626, 4
        %v6629 = vshrl.u32 %v6291, 16
        %v6631 = vrot.slane %v6629, 7
        %v6632 = vshll.u32 %v6291, 16
        %v6634 = vor.u32 %v6631, %v6632
        %v6635 = vsel %vm484, %v6627, %v6634
        %v6636 = vrot.slane %v6631, 4
        %v6638 = vshrl.u32 %v6292, 16
        %v6640 = vrot.slane %v6638, 7
        %v6641 = vshll.u32 %v6292, 16
        %v6643 = vor.u32 %v6640, %v6641
        %v6644 = vsel %vm484, %v6636, %v6643
        %v6645 = vld [vmem:[#allocation4] sm:$0xf]
        %v6646 = vld [vmem:[#allocation4 + $0x4] sm:$0xf]
        %v6647 = vld [vmem:[#allocation4 + $0x8] sm:$0xf]
        %v6648 = vld [vmem:[#allocation4 + $0xc] sm:$0xf]
        %v6649 = vld [vmem:[#allocation4 + $0x10] sm:$0xf]
        %v6650 = vld [vmem:[#allocation4 + $0x14] sm:$0xf]
        %v6651 = vld [vmem:[#allocation4 + $0x18] sm:$0xf]
        %v6652 = vld [vmem:[#allocation4 + $0x1c] sm:$0xf]
        %v6653 = vld [vmem:[#allocation4 + $0x20] sm:$0xf]
        %v6654 = vld [vmem:[#allocation4 + $0x24] sm:$0xf]
        %v6655 = vld [vmem:[#allocation4 + $0x28] sm:$0xf]
        %v6656 = vld [vmem:[#allocation4 + $0x2c] sm:$0xf]
        %v6657 = vld [vmem:[#allocation4 + $0x30] sm:$0xf]
        %v6658 = vld [vmem:[#allocation4 + $0x34] sm:$0xf]
        %v6659 = vld [vmem:[#allocation4 + $0x38] sm:$0xf]
        %v6660 = vld [vmem:[#allocation4 + $0x3c] sm:$0xf]
        %s6661 = scalar_lea.vmem [#allocation4], 64
        %v6662 = vld [vmem:[%s6661] sm:$0xf]
        %v6663 = vld [vmem:[%s6661 + $0x4] sm:$0xf]
        %v6664 = vld [vmem:[%s6661 + $0x8] sm:$0xf]
        %v6665 = vld [vmem:[%s6661 + $0xc] sm:$0xf]
        %v6666 = vld [vmem:[%s6661 + $0x10] sm:$0xf]
        %v6667 = vld [vmem:[%s6661 + $0x14] sm:$0xf]
        %v6668 = vld [vmem:[%s6661 + $0x18] sm:$0xf]
        %v6669 = vld [vmem:[%s6661 + $0x1c] sm:$0xf]
        %v6670 = vld [vmem:[%s6661 + $0x20] sm:$0xf]
        %v6671 = vld [vmem:[%s6661 + $0x24] sm:$0xf]
        %v6672 = vld [vmem:[%s6661 + $0x28] sm:$0xf]
        %v6673 = vld [vmem:[%s6661 + $0x2c] sm:$0xf]
        %v6674 = vld [vmem:[%s6661 + $0x30] sm:$0xf]
        %v6675 = vld [vmem:[%s6661 + $0x34] sm:$0xf]
        %v6676 = vld [vmem:[%s6661 + $0x38] sm:$0xf]
        %v6677 = vld [vmem:[%s6661 + $0x3c] sm:$0xf]
        %v6710 = vunpack.c.l.b16 %v6246
        %v6711 = vunpack.c.l.b16 %v6247
        %v6712 = vunpack.c.l.b16 %v6249
        %v6713 = vunpack.c.l.b16 %v6250
        %v6714 = vunpack.c.l.b16 %v6252
        %v6715 = vunpack.c.l.b16 %v6253
        %v6716 = vunpack.c.l.b16 %v6255
        %v6717 = vunpack.c.l.b16 %v6256
        %v6718 = vunpack.c.l.b16 %v6258
        %v6719 = vunpack.c.l.b16 %v6259
        %v6720 = vunpack.c.l.b16 %v6261
        %v6721 = vunpack.c.l.b16 %v6262
        %v6722 = vunpack.c.l.b16 %v6264
        %v6723 = vunpack.c.l.b16 %v6265
        %v6724 = vunpack.c.l.b16 %v6267
        %v6725 = vunpack.c.l.b16 %v6268
        %v6726 = vunpack.c.l.b16 %v6270
        %v6727 = vunpack.c.l.b16 %v6271
        %v6728 = vunpack.c.l.b16 %v6273
        %v6729 = vunpack.c.l.b16 %v6274
        %v6730 = vunpack.c.l.b16 %v6276
        %v6731 = vunpack.c.l.b16 %v6277
        %v6732 = vunpack.c.l.b16 %v6279
        %v6733 = vunpack.c.l.b16 %v6280
        %v6734 = vunpack.c.l.b16 %v6282
        %v6735 = vunpack.c.l.b16 %v6283
        %v6736 = vunpack.c.l.b16 %v6285
        %v6737 = vunpack.c.l.b16 %v6286
        %v6738 = vunpack.c.l.b16 %v6288
        %v6739 = vunpack.c.l.b16 %v6289
        %v6740 = vunpack.c.l.b16 %v6291
        %v6741 = vunpack.c.l.b16 %v6292
        %v6742 = vpack.c.b16 %v6711, %v6710
        %v6743 = vpack.c.b16 %v6713, %v6712
        %v6744 = vpack.c.b16 %v6715, %v6714
        %v6745 = vpack.c.b16 %v6717, %v6716
        %v6746 = vpack.c.b16 %v6719, %v6718
        %v6747 = vpack.c.b16 %v6721, %v6720
        %v6748 = vpack.c.b16 %v6723, %v6722
        %v6749 = vpack.c.b16 %v6725, %v6724
        %v6750 = vpack.c.b16 %v6727, %v6726
        %v6751 = vpack.c.b16 %v6729, %v6728
        %v6752 = vpack.c.b16 %v6731, %v6730
        %v6753 = vpack.c.b16 %v6733, %v6732
        %v6754 = vpack.c.b16 %v6735, %v6734
        %v6755 = vpack.c.b16 %v6737, %v6736
        %v6756 = vpack.c.b16 %v6739, %v6738
        %v6757 = vpack.c.b16 %v6741, %v6740
        %v6790 = vunpack.c.l.b16 %v6662
        %v6791 = vunpack.c.l.b16 %v6663
        %v6792 = vunpack.c.l.b16 %v6664
        %v6793 = vunpack.c.l.b16 %v6665
        %v6794 = vunpack.c.l.b16 %v6666
        %v6795 = vunpack.c.l.b16 %v6667
        %v6796 = vunpack.c.l.b16 %v6668
        %v6797 = vunpack.c.l.b16 %v6669
        %v6798 = vunpack.c.l.b16 %v6670
        %v6799 = vunpack.c.l.b16 %v6671
        %v6800 = vunpack.c.l.b16 %v6672
        %v6801 = vunpack.c.l.b16 %v6673
        %v6802 = vunpack.c.l.b16 %v6674
        %v6803 = vunpack.c.l.b16 %v6675
        %v6804 = vunpack.c.l.b16 %v6676
        %v6805 = vunpack.c.l.b16 %v6677
        %v6806 = vpack.c.b16 %v6791, %v6790
        %v6807 = vpack.c.b16 %v6793, %v6792
        %v6808 = vpack.c.b16 %v6795, %v6794
        %v6809 = vpack.c.b16 %v6797, %v6796
        %v6810 = vpack.c.b16 %v6799, %v6798
        %v6811 = vpack.c.b16 %v6801, %v6800
        %v6812 = vpack.c.b16 %v6803, %v6802
        %v6813 = vpack.c.b16 %v6805, %v6804
        %6822 = vmatprep.subr.bf16.mxu0 0
        %6823 = vmatpush1.bf16.msra.mxu0 %v6806
        %6824 = vmatprep.subr.bf16.mxu0 0
        %6825 = vmatpush1.bf16.msra.mxu0 %v6807
        %6826 = vmatprep.subr.bf16.mxu0 0
        %6827 = vmatpush1.bf16.msra.mxu0 %v6808
        %6828 = vmatprep.subr.bf16.mxu0 0
        %6829 = vmatpush1.bf16.msra.mxu0 %v6809
        %6830 = vmatprep.subr.bf16.mxu0 0
        %6831 = vmatpush1.bf16.msra.mxu0 %v6810
        %6832 = vmatprep.subr.bf16.mxu0 0
        %6833 = vmatpush1.bf16.msra.mxu0 %v6811
        %6834 = vmatprep.subr.bf16.mxu0 0
        %6835 = vmatpush1.bf16.msra.mxu0 %v6812
        %6836 = vmatprep.subr.bf16.mxu0 0
        %6837 = vmatpush1.bf16.msra.mxu0 %v6813
        %6838 = vmatprep.subr.bf16.mxu0 0
        %6839 = vmatpush1.bf16.msra.mxu0 0
        %6840 = vmatprep.subr.bf16.mxu0 0
        %6841 = vmatpush1.bf16.msra.mxu0 0
        %6842 = vmatprep.subr.bf16.mxu0 0
        %6843 = vmatpush1.bf16.msra.mxu0 0
        %6844 = vmatprep.subr.bf16.mxu0 0
        %6845 = vmatpush1.bf16.msra.mxu0 0
        %6846 = vmatprep.subr.bf16.mxu0 0
        %6847 = vmatpush1.bf16.msra.mxu0 0
        %6848 = vmatprep.subr.bf16.mxu0 0
        %6849 = vmatpush1.bf16.msra.mxu0 0
        %6850 = vmatprep.subr.bf16.mxu0 0
        %6851 = vmatpush1.bf16.msra.mxu0 0
        %6852 = vmatprep.subr.bf16.mxu0 0
        %6853 = vmatpush1.bf16.msra.mxu0 0
        %6854 = vmatprep.mubr.bf16.mxu0 0
        %6855 = vmatmul.mubr.bf16.gmra.mrb[0].mxu0 %v6742
        %v6856 = vpop.f32.mrb[0].mxu0
        %v6857 = vadd.f32 0.0, %v6856
        %v6858 = vpop.f32.mrb[0].mxu0
        %v6859 = vpop.f32.mrb[0].mxu0
        %v6860 = vadd.f32 0.0, %v6859
        %v6861 = vpop.f32.mrb[0].mxu0
        %6862 = vmatprep.mubr.bf16.mxu0 0
        %6863 = vmatmul.mubr.bf16.gmra.mrb[0].mxu0 %v6743
        %v6864 = vpop.f32.mrb[0].mxu0
        %v6865 = vadd.f32 0.0, %v6864
        %v6866 = vpop.f32.mrb[0].mxu0
        %v6867 = vpop.f32.mrb[0].mxu0
        %v6868 = vadd.f32 0.0, %v6867
        %v6869 = vpop.f32.mrb[0].mxu0
        %6870 = vmatprep.mubr.bf16.mxu0 0
        %6871 = vmatmul.mubr.bf16.gmra.mrb[0].mxu0 %v6744
        %v6872 = vpop.f32.mrb[0].mxu0
        %v6873 = vadd.f32 0.0, %v6872
        %v6874 = vpop.f32.mrb[0].mxu0
        %v6875 = vpop.f32.mrb[0].mxu0
        %v6876 = vadd.f32 0.0, %v6875
        %v6877 = vpop.f32.mrb[0].mxu0
        %6878 = vmatprep.mubr.bf16.mxu0 0
        %6879 = vmatmul.mubr.bf16.gmra.mrb[0].mxu0 %v6745
        %v6880 = vpop.f32.mrb[0].mxu0
        %v6881 = vadd.f32 0.0, %v6880
        %v6882 = vpop.f32.mrb[0].mxu0
        %v6883 = vpop.f32.mrb[0].mxu0
        %v6884 = vadd.f32 0.0, %v6883
        %v6885 = vpop.f32.mrb[0].mxu0
        %6886 = vmatprep.mubr.bf16.mxu0 0
        %6887 = vmatmul.mubr.bf16.gmra.mrb[0].mxu0 %v6746
        %v6888 = vpop.f32.mrb[0].mxu0
        %v6889 = vadd.f32 0.0, %v6888
        %v6890 = vpop.f32.mrb[0].mxu0
        %v6891 = vpop.f32.mrb[0].mxu0
        %v6892 = vadd.f32 0.0, %v6891
        %v6893 = vpop.f32.mrb[0].mxu0
        %6894 = vmatprep.mubr.bf16.mxu0 0
        %6895 = vmatmul.mubr.bf16.gmra.mrb[0].mxu0 %v6747
        %v6896 = vpop.f32.mrb[0].mxu0
        %v6897 = vadd.f32 0.0, %v6896
        %v6898 = vpop.f32.mrb[0].mxu0
        %v6899 = vpop.f32.mrb[0].mxu0
        %v6900 = vadd.f32 0.0, %v6899
        %v6901 = vpop.f32.mrb[0].mxu0
        %6902 = vmatprep.mubr.bf16.mxu0 0
        %6903 = vmatmul.mubr.bf16.gmra.mrb[0].mxu0 %v6748
        %v6904 = vpop.f32.mrb[0].mxu0
        %v6905 = vadd.f32 0.0, %v6904
        %v6906 = vpop.f32.mrb[0].mxu0
        %v6907 = vpop.f32.mrb[0].mxu0
        %v6908 = vadd.f32 0.0, %v6907
        %v6909 = vpop.f32.mrb[0].mxu0
        %6910 = vmatprep.mubr.bf16.mxu0 0
        %6911 = vmatmul.mubr.bf16.gmra.mrb[0].mxu0 %v6749
        %v6912 = vpop.f32.mrb[0].mxu0
        %v6913 = vadd.f32 0.0, %v6912
        %v6914 = vpop.f32.mrb[0].mxu0
        %v6915 = vpop.f32.mrb[0].mxu0
        %v6916 = vadd.f32 0.0, %v6915
        %v6917 = vpop.f32.mrb[0].mxu0
        %6918 = vmatprep.mubr.bf16.mxu0 0
        %6919 = vmatmul.mubr.bf16.gmra.mrb[0].mxu0 %v6750
        %v6920 = vpop.f32.mrb[0].mxu0
        %v6921 = vadd.f32 0.0, %v6920
        %v6922 = vpop.f32.mrb[0].mxu0
        %v6923 = vpop.f32.mrb[0].mxu0
        %v6924 = vadd.f32 0.0, %v6923
        %v6925 = vpop.f32.mrb[0].mxu0
        %6926 = vmatprep.mubr.bf16.mxu0 0
        %6927 = vmatmul.mubr.bf16.gmra.mrb[0].mxu0 %v6751
        %v6928 = vpop.f32.mrb[0].mxu0
        %v6929 = vadd.f32 0.0, %v6928
        %v6930 = vpop.f32.mrb[0].mxu0
        %v6931 = vpop.f32.mrb[0].mxu0
        %v6932 = vadd.f32 0.0, %v6931
        %v6933 = vpop.f32.mrb[0].mxu0
        %6934 = vmatprep.mubr.bf16.mxu0 0
        %6935 = vmatmul.mubr.bf16.gmra.mrb[0].mxu0 %v6752
        %v6936 = vpop.f32.mrb[0].mxu0
        %v6937 = vadd.f32 0.0, %v6936
        %v6938 = vpop.f32.mrb[0].mxu0
        %v6939 = vpop.f32.mrb[0].mxu0
        %v6940 = vadd.f32 0.0, %v6939
        %v6941 = vpop.f32.mrb[0].mxu0
        %6942 = vmatprep.mubr.bf16.mxu0 0
        %6943 = vmatmul.mubr.bf16.gmra.mrb[0].mxu0 %v6753
        %v6944 = vpop.f32.mrb[0].mxu0
        %v6945 = vadd.f32 0.0, %v6944
        %v6946 = vpop.f32.mrb[0].mxu0
        %v6947 = vpop.f32.mrb[0].mxu0
        %v6948 = vadd.f32 0.0, %v6947
        %v6949 = vpop.f32.mrb[0].mxu0
        %6950 = vmatprep.mubr.bf16.mxu0 0
        %6951 = vmatmul.mubr.bf16.gmra.mrb[0].mxu0 %v6754
        %v6952 = vpop.f32.mrb[0].mxu0
        %v6953 = vadd.f32 0.0, %v6952
        %v6954 = vpop.f32.mrb[0].mxu0
        %v6955 = vpop.f32.mrb[0].mxu0
        %v6956 = vadd.f32 0.0, %v6955
        %v6957 = vpop.f32.mrb[0].mxu0
        %6958 = vmatprep.mubr.bf16.mxu0 0
        %6959 = vmatmul.mubr.bf16.gmra.mrb[0].mxu0 %v6755
        %v6960 = vpop.f32.mrb[0].mxu0
        %v6961 = vadd.f32 0.0, %v6960
        %v6962 = vpop.f32.mrb[0].mxu0
        %v6963 = vpop.f32.mrb[0].mxu0
        %v6964 = vadd.f32 0.0, %v6963
        %v6965 = vpop.f32.mrb[0].mxu0
        %6966 = vmatprep.mubr.bf16.mxu0 0
        %6967 = vmatmul.mubr.bf16.gmra.mrb[0].mxu0 %v6756
        %v6968 = vpop.f32.mrb[0].mxu0
        %v6969 = vadd.f32 0.0, %v6968
        %v6970 = vpop.f32.mrb[0].mxu0
        %v6971 = vpop.f32.mrb[0].mxu0
        %v6972 = vadd.f32 0.0, %v6971
        %v6973 = vpop.f32.mrb[0].mxu0
        %6974 = vmatprep.mubr.bf16.mxu0 0
        %6975 = vmatmul.mubr.bf16.gmra.mrb[0].mxu0 %v6757
        %v6976 = vpop.f32.mrb[0].mxu0
        %v6977 = vadd.f32 0.0, %v6976
        %v6978 = vpop.f32.mrb[0].mxu0
        %v6979 = vpop.f32.mrb[0].mxu0
        %v6980 = vadd.f32 0.0, %v6979
        %v6981 = vpop.f32.mrb[0].mxu0
        %6982 = vdwg.mxu0
        %v6983 = vunpack.c.l.b16 %v6305
        %v6984 = vunpack.c.l.b16 %v6314
        %v6985 = vunpack.c.l.b16 %v6327
        %v6986 = vunpack.c.l.b16 %v6336
        %v6987 = vunpack.c.l.b16 %v6349
        %v6988 = vunpack.c.l.b16 %v6358
        %v6989 = vunpack.c.l.b16 %v6371
        %v6990 = vunpack.c.l.b16 %v6380
        %v6991 = vunpack.c.l.b16 %v6393
        %v6992 = vunpack.c.l.b16 %v6402
        %v6993 = vunpack.c.l.b16 %v6415
        %v6994 = vunpack.c.l.b16 %v6424
        %v6995 = vunpack.c.l.b16 %v6437
        %v6996 = vunpack.c.l.b16 %v6446
        %v6997 = vunpack.c.l.b16 %v6459
        %v6998 = vunpack.c.l.b16 %v6468
        %v6999 = vunpack.c.l.b16 %v6481
        %v7000 = vunpack.c.l.b16 %v6490
        %v7001 = vunpack.c.l.b16 %v6503
        %v7002 = vunpack.c.l.b16 %v6512
        %v7003 = vunpack.c.l.b16 %v6525
        %v7004 = vunpack.c.l.b16 %v6534
        %v7005 = vunpack.c.l.b16 %v6547
        %v7006 = vunpack.c.l.b16 %v6556
        %v7007 = vunpack.c.l.b16 %v6569
        %v7008 = vunpack.c.l.b16 %v6578
        %v7009 = vunpack.c.l.b16 %v6591
        %v7010 = vunpack.c.l.b16 %v6600
        %v7011 = vunpack.c.l.b16 %v6613
        %v7012 = vunpack.c.l.b16 %v6622
        %v7013 = vunpack.c.l.b16 %v6635
        %v7014 = vunpack.c.l.b16 %v6644
        %v7015 = vpack.c.b16 %v6984, %v6983
        %v7016 = vpack.c.b16 %v6986, %v6985
        %v7017 = vpack.c.b16 %v6988, %v6987
        %v7018 = vpack.c.b16 %v6990, %v6989
        %v7019 = vpack.c.b16 %v6992, %v6991
        %v7020 = vpack.c.b16 %v6994, %v6993
        %v7021 = vpack.c.b16 %v6996, %v6995
        %v7022 = vpack.c.b16 %v6998, %v6997
        %v7023 = vpack.c.b16 %v7000, %v6999
        %v7024 = vpack.c.b16 %v7002, %v7001
        %v7025 = vpack.c.b16 %v7004, %v7003
        %v7026 = vpack.c.b16 %v7006, %v7005
        %v7027 = vpack.c.b16 %v7008, %v7007
        %v7028 = vpack.c.b16 %v7010, %v7009
        %v7029 = vpack.c.b16 %v7012, %v7011
        %v7030 = vpack.c.b16 %v7014, %v7013
        %v7063 = vunpack.c.l.b16 %v6645
        %v7064 = vunpack.c.l.b16 %v6646
        %v7065 = vunpack.c.l.b16 %v6647
        %v7066 = vunpack.c.l.b16 %v6648
        %v7067 = vunpack.c.l.b16 %v6649
        %v7068 = vunpack.c.l.b16 %v6650
        %v7069 = vunpack.c.l.b16 %v6651
        %v7070 = vunpack.c.l.b16 %v6652
        %v7071 = vunpack.c.l.b16 %v6653
        %v7072 = vunpack.c.l.b16 %v6654
        %v7073 = vunpack.c.l.b16 %v6655
        %v7074 = vunpack.c.l.b16 %v6656
        %v7075 = vunpack.c.l.b16 %v6657
        %v7076 = vunpack.c.l.b16 %v6658
        %v7077 = vunpack.c.l.b16 %v6659
        %v7078 = vunpack.c.l.b16 %v6660
        %v7079 = vpack.c.b16 %v7064, %v7063
        %v7080 = vpack.c.b16 %v7066, %v7065
        %v7081 = vpack.c.b16 %v7068, %v7067
        %v7082 = vpack.c.b16 %v7070, %v7069
        %v7083 = vpack.c.b16 %v7072, %v7071
        %v7084 = vpack.c.b16 %v7074, %v7073
        %v7085 = vpack.c.b16 %v7076, %v7075
        %v7086 = vpack.c.b16 %v7078, %v7077
        %7095 = vmatprep.subr.bf16.mxu0 0
        %7096 = vmatpush1.bf16.msra.mxu0 %v7079
        %7097 = vmatprep.subr.bf16.mxu0 0
        %7098 = vmatpush1.bf16.msra.mxu0 %v7080
        %7099 = vmatprep.subr.bf16.mxu0 0
        %7100 = vmatpush1.bf16.msra.mxu0 %v7081
        %7101 = vmatprep.subr.bf16.mxu0 0
        %7102 = vmatpush1.bf16.msra.mxu0 %v7082
        %7103 = vmatprep.subr.bf16.mxu0 0
        %7104 = vmatpush1.bf16.msra.mxu0 %v7083
        %7105 = vmatprep.subr.bf16.mxu0 0
        %7106 = vmatpush1.bf16.msra.mxu0 %v7084
        %7107 = vmatprep.subr.bf16.mxu0 0
        %7108 = vmatpush1.bf16.msra.mxu0 %v7085
        %7109 = vmatprep.subr.bf16.mxu0 0
        %7110 = vmatpush1.bf16.msra.mxu0 %v7086
        %7111 = vmatprep.subr.bf16.mxu0 0
        %7112 = vmatpush1.bf16.msra.mxu0 0
        %7113 = vmatprep.subr.bf16.mxu0 0
        %7114 = vmatpush1.bf16.msra.mxu0 0
        %7115 = vmatprep.subr.bf16.mxu0 0
        %7116 = vmatpush1.bf16.msra.mxu0 0
        %7117 = vmatprep.subr.bf16.mxu0 0
        %7118 = vmatpush1.bf16.msra.mxu0 0
        %7119 = vmatprep.subr.bf16.mxu0 0
        %7120 = vmatpush1.bf16.msra.mxu0 0
        %7121 = vmatprep.subr.bf16.mxu0 0
        %7122 = vmatpush1.bf16.msra.mxu0 0
        %7123 = vmatprep.subr.bf16.mxu0 0
        %7124 = vmatpush1.bf16.msra.mxu0 0
        %7125 = vmatprep.subr.bf16.mxu0 0
        %7126 = vmatpush1.bf16.msra.mxu0 0
        %7127 = vmatprep.mubr.bf16.mxu0 0
        %7128 = vmatmul.mubr.bf16.gmra.mrb[0].mxu0 %v7015
        %v7129 = vpop.f32.mrb[0].mxu0
        %v7130 = vadd.f32 %v6857, %v7129
        %v7131 = vpop.f32.mrb[0].mxu0
        %v7132 = vpop.f32.mrb[0].mxu0
        %v7133 = vadd.f32 %v6860, %v7132
        %v7134 = vpop.f32.mrb[0].mxu0
        %7135 = vmatprep.mubr.bf16.mxu0 0
        %7136 = vmatmul.mubr.bf16.gmra.mrb[0].mxu0 %v7016
        %v7137 = vpop.f32.mrb[0].mxu0
        %v7138 = vadd.f32 %v6865, %v7137
        %v7139 = vpop.f32.mrb[0].mxu0
        %v7140 = vpop.f32.mrb[0].mxu0
        %v7141 = vadd.f32 %v6868, %v7140
        %v7142 = vpop.f32.mrb[0].mxu0
        %7143 = vmatprep.mubr.bf16.mxu0 0
        %7144 = vmatmul.mubr.bf16.gmra.mrb[0].mxu0 %v7017
        %v7145 = vpop.f32.mrb[0].mxu0
        %v7146 = vadd.f32 %v6873, %v7145
        %v7147 = vpop.f32.mrb[0].mxu0
        %v7148 = vpop.f32.mrb[0].mxu0
        %v7149 = vadd.f32 %v6876, %v7148
        %v7150 = vpop.f32.mrb[0].mxu0
        %7151 = vmatprep.mubr.bf16.mxu0 0
        %7152 = vmatmul.mubr.bf16.gmra.mrb[0].mxu0 %v7018
        %v7153 = vpop.f32.mrb[0].mxu0
        %v7154 = vadd.f32 %v6881, %v7153
        %v7155 = vpop.f32.mrb[0].mxu0
        %v7156 = vpop.f32.mrb[0].mxu0
        %v7157 = vadd.f32 %v6884, %v7156
        %v7158 = vpop.f32.mrb[0].mxu0
        %7159 = vmatprep.mubr.bf16.mxu0 0
        %7160 = vmatmul.mubr.bf16.gmra.mrb[0].mxu0 %v7019
        %v7161 = vpop.f32.mrb[0].mxu0
        %v7162 = vadd.f32 %v6889, %v7161
        %v7163 = vpop.f32.mrb[0].mxu0
        %v7164 = vpop.f32.mrb[0].mxu0
        %v7165 = vadd.f32 %v6892, %v7164
        %v7166 = vpop.f32.mrb[0].mxu0
        %7167 = vmatprep.mubr.bf16.mxu0 0
        %7168 = vmatmul.mubr.bf16.gmra.mrb[0].mxu0 %v7020
        %v7169 = vpop.f32.mrb[0].mxu0
        %v7170 = vadd.f32 %v6897, %v7169
        %v7171 = vpop.f32.mrb[0].mxu0
        %v7172 = vpop.f32.mrb[0].mxu0
        %v7173 = vadd.f32 %v6900, %v7172
        %v7174 = vpop.f32.mrb[0].mxu0
        %7175 = vmatprep.mubr.bf16.mxu0 0
        %7176 = vmatmul.mubr.bf16.gmra.mrb[0].mxu0 %v7021
        %v7177 = vpop.f32.mrb[0].mxu0
        %v7178 = vadd.f32 %v6905, %v7177
        %v7179 = vpop.f32.mrb[0].mxu0
        %v7180 = vpop.f32.mrb[0].mxu0
        %v7181 = vadd.f32 %v6908, %v7180
        %v7182 = vpop.f32.mrb[0].mxu0
        %7183 = vmatprep.mubr.bf16.mxu0 0
        %7184 = vmatmul.mubr.bf16.gmra.mrb[0].mxu0 %v7022
        %v7185 = vpop.f32.mrb[0].mxu0
        %v7186 = vadd.f32 %v6913, %v7185
        %v7187 = vpop.f32.mrb[0].mxu0
        %v7188 = vpop.f32.mrb[0].mxu0
        %v7189 = vadd.f32 %v6916, %v7188
        %v7190 = vpop.f32.mrb[0].mxu0
        %7191 = vmatprep.mubr.bf16.mxu0 0
        %7192 = vmatmul.mubr.bf16.gmra.mrb[0].mxu0 %v7023
        %v7193 = vpop.f32.mrb[0].mxu0
        %v7194 = vadd.f32 %v6921, %v7193
        %v7195 = vpop.f32.mrb[0].mxu0
        %v7196 = vpop.f32.mrb[0].mxu0
        %v7197 = vadd.f32 %v6924, %v7196
        %v7198 = vpop.f32.mrb[0].mxu0
        %7199 = vmatprep.mubr.bf16.mxu0 0
        %7200 = vmatmul.mubr.bf16.gmra.mrb[0].mxu0 %v7024
        %v7201 = vpop.f32.mrb[0].mxu0
        %v7202 = vadd.f32 %v6929, %v7201
        %v7203 = vpop.f32.mrb[0].mxu0
        %v7204 = vpop.f32.mrb[0].mxu0
        %v7205 = vadd.f32 %v6932, %v7204
        %v7206 = vpop.f32.mrb[0].mxu0
        %7207 = vmatprep.mubr.bf16.mxu0 0
        %7208 = vmatmul.mubr.bf16.gmra.mrb[0].mxu0 %v7025
        %v7209 = vpop.f32.mrb[0].mxu0
        %v7210 = vadd.f32 %v6937, %v7209
        %v7211 = vpop.f32.mrb[0].mxu0
        %v7212 = vpop.f32.mrb[0].mxu0
        %v7213 = vadd.f32 %v6940, %v7212
        %v7214 = vpop.f32.mrb[0].mxu0
        %7215 = vmatprep.mubr.bf16.mxu0 0
        %7216 = vmatmul.mubr.bf16.gmra.mrb[0].mxu0 %v7026
        %v7217 = vpop.f32.mrb[0].mxu0
        %v7218 = vadd.f32 %v6945, %v7217
        %v7219 = vpop.f32.mrb[0].mxu0
        %v7220 = vpop.f32.mrb[0].mxu0
        %v7221 = vadd.f32 %v6948, %v7220
        %v7222 = vpop.f32.mrb[0].mxu0
        %7223 = vmatprep.mubr.bf16.mxu0 0
        %7224 = vmatmul.mubr.bf16.gmra.mrb[0].mxu0 %v7027
        %v7225 = vpop.f32.mrb[0].mxu0
        %v7226 = vadd.f32 %v6953, %v7225
        %v7227 = vpop.f32.mrb[0].mxu0
        %v7228 = vpop.f32.mrb[0].mxu0
        %v7229 = vadd.f32 %v6956, %v7228
        %v7230 = vpop.f32.mrb[0].mxu0
        %7231 = vmatprep.mubr.bf16.mxu0 0
        %7232 = vmatmul.mubr.bf16.gmra.mrb[0].mxu0 %v7028
        %v7233 = vpop.f32.mrb[0].mxu0
        %v7234 = vadd.f32 %v6961, %v7233
        %v7235 = vpop.f32.mrb[0].mxu0
        %v7236 = vpop.f32.mrb[0].mxu0
        %v7237 = vadd.f32 %v6964, %v7236
        %v7238 = vpop.f32.mrb[0].mxu0
        %7239 = vmatprep.mubr.bf16.mxu0 0
        %7240 = vmatmul.mubr.bf16.gmra.mrb[0].mxu0 %v7029
        %v7241 = vpop.f32.mrb[0].mxu0
        %v7242 = vadd.f32 %v6969, %v7241
        %v7243 = vpop.f32.mrb[0].mxu0
        %v7244 = vpop.f32.mrb[0].mxu0
        %v7245 = vadd.f32 %v6972, %v7244
        %v7246 = vpop.f32.mrb[0].mxu0
        %7247 = vmatprep.mubr.bf16.mxu0 0
        %7248 = vmatmul.mubr.bf16.gmra.mrb[0].mxu0 %v7030
        %v7249 = vpop.f32.mrb[0].mxu0
        %v7250 = vadd.f32 %v6977, %v7249
        %v7251 = vpop.f32.mrb[0].mxu0
        %v7252 = vpop.f32.mrb[0].mxu0
        %v7253 = vadd.f32 %v6980, %v7252
        %v7254 = vpop.f32.mrb[0].mxu0
        %7255 = vdwg.mxu0
        %v7256 = vld [vmem:[#allocation3 + $0x8] sm:$0xf]
        %v7257 = vld [vmem:[#allocation3 + $0xc] sm:$0xf]
        %v7258 = vld [vmem:[#allocation3 + $0x10] sm:$0x1]
        %v7259 = vld [vmem:[#allocation3 + $0x1c] sm:$0xf]
        %v7260 = vld [vmem:[#allocation3 + $0x20] sm:$0xf]
        %v7261 = vld [vmem:[#allocation3 + $0x24] sm:$0x1]
        %v7262 = vld [vmem:[#allocation3 + $0x30] sm:$0xf]
        %v7263 = vld [vmem:[#allocation3 + $0x34] sm:$0xf]
        %v7264 = vld [vmem:[#allocation3 + $0x38] sm:$0x1]
        %v7265 = vld [vmem:[#allocation3 + $0x44] sm:$0xf]
        %v7266 = vld [vmem:[#allocation3 + $0x48] sm:$0xf]
        %v7267 = vld [vmem:[#allocation3 + $0x4c] sm:$0x1]
        %v7268 = vld [vmem:[#allocation3 + $0x58] sm:$0xf]
        %v7269 = vld [vmem:[#allocation3 + $0x5c] sm:$0xf]
        %v7270 = vld [vmem:[#allocation3 + $0x60] sm:$0x1]
        %v7271 = vld [vmem:[#allocation3 + $0x6c] sm:$0xf]
        %v7272 = vld [vmem:[#allocation3 + $0x70] sm:$0xf]
        %v7273 = vld [vmem:[#allocation3 + $0x74] sm:$0x1]
        %v7274 = vld [vmem:[#allocation3 + $0x80] sm:$0xf]
        %v7275 = vld [vmem:[#allocation3 + $0x84] sm:$0xf]
        %v7276 = vld [vmem:[#allocation3 + $0x88] sm:$0x1]
        %v7277 = vld [vmem:[#allocation3 + $0x94] sm:$0xf]
        %v7278 = vld [vmem:[#allocation3 + $0x98] sm:$0xf]
        %v7279 = vld [vmem:[#allocation3 + $0x9c] sm:$0x1]
        %v7280 = vld [vmem:[#allocation3 + $0xa8] sm:$0xf]
        %v7281 = vld [vmem:[#allocation3 + $0xac] sm:$0xf]
        %v7282 = vld [vmem:[#allocation3 + $0xb0] sm:$0x1]
        %v7283 = vld [vmem:[#allocation3 + $0xbc] sm:$0xf]
        %v7284 = vld [vmem:[#allocation3 + $0xc0] sm:$0xf]
        %v7285 = vld [vmem:[#allocation3 + $0xc4] sm:$0x1]
        %v7286 = vld [vmem:[#allocation3 + $0xd0] sm:$0xf]
        %v7287 = vld [vmem:[#allocation3 + $0xd4] sm:$0xf]
        %v7288 = vld [vmem:[#allocation3 + $0xd8] sm:$0x1]
        %v7289 = vld [vmem:[#allocation3 + $0xe4] sm:$0xf]
        %v7290 = vld [vmem:[#allocation3 + $0xe8] sm:$0xf]
        %v7291 = vld [vmem:[#allocation3 + $0xec] sm:$0x1]
        %v7292 = vld [vmem:[#allocation3 + $0xf8] sm:$0xf]
        %v7293 = vld [vmem:[#allocation3 + $0xfc] sm:$0xf]
        %v7294 = vld [vmem:[#allocation3 + $0x100] sm:$0x1]
        %v7295 = vld [vmem:[#allocation3 + $0x10c] sm:$0xf]
        %v7296 = vld [vmem:[#allocation3 + $0x110] sm:$0xf]
        %v7297 = vld [vmem:[#allocation3 + $0x114] sm:$0x1]
        %v7298 = vld [vmem:[#allocation3 + $0x120] sm:$0xf]
        %v7299 = vld [vmem:[#allocation3 + $0x124] sm:$0xf]
        %v7300 = vld [vmem:[#allocation3 + $0x128] sm:$0x1]
        %v7301 = vld [vmem:[#allocation3 + $0x134] sm:$0xf]
        %v7302 = vld [vmem:[#allocation3 + $0x138] sm:$0xf]
        %v7303 = vld [vmem:[#allocation3 + $0x13c] sm:$0x1]
        %v7305 = vshrl.u32 %v7256, 16
        %v7307 = vrot.slane %v7305, 4
        %v7308 = vshll.u32 %v7256, 16
        %v7310 = vrot.slane %v7308, 5
        %v7311 = vor.u32 %v7307, %v7310
        %v7312 = vrot.slane %v7311, 4
        %v7314 = vshll.u32 %v7257, 16
        %v7316 = vrot.slane %v7314, 5
        %v7317 = vsel %vm1444, %v7312, %v7316
        %v7318 = vshrl.u32 %v7257, 16
        %v7320 = vrot.slane %v7318, 4
        %v7321 = vor.u32 %v7320, %v7316
        %v7322 = vrot.slane %v7321, 4
        %v7324 = vshll.u32 %v7258, 16
        %v7326 = vrot.slane %v7324, 5
        %v7327 = vsel %vm1444, %v7322, %v7326
        %v7329 = vshrl.u32 %v7259, 16
        %v7331 = vrot.slane %v7329, 4
        %v7332 = vshll.u32 %v7259, 16
        %v7334 = vrot.slane %v7332, 5
        %v7335 = vor.u32 %v7331, %v7334
        %v7336 = vrot.slane %v7335, 4
        %v7338 = vshll.u32 %v7260, 16
        %v7340 = vrot.slane %v7338, 5
        %v7341 = vsel %vm1444, %v7336, %v7340
        %v7342 = vshrl.u32 %v7260, 16
        %v7344 = vrot.slane %v7342, 4
        %v7345 = vor.u32 %v7344, %v7340
        %v7346 = vrot.slane %v7345, 4
        %v7348 = vshll.u32 %v7261, 16
        %v7350 = vrot.slane %v7348, 5
        %v7351 = vsel %vm1444, %v7346, %v7350
        %v7353 = vshrl.u32 %v7262, 16
        %v7355 = vrot.slane %v7353, 4
        %v7356 = vshll.u32 %v7262, 16
        %v7358 = vrot.slane %v7356, 5
        %v7359 = vor.u32 %v7355, %v7358
        %v7360 = vrot.slane %v7359, 4
        %v7362 = vshll.u32 %v7263, 16
        %v7364 = vrot.slane %v7362, 5
        %v7365 = vsel %vm1444, %v7360, %v7364
        %v7366 = vshrl.u32 %v7263, 16
        %v7368 = vrot.slane %v7366, 4
        %v7369 = vor.u32 %v7368, %v7364
        %v7370 = vrot.slane %v7369, 4
        %v7372 = vshll.u32 %v7264, 16
        %v7374 = vrot.slane %v7372, 5
        %v7375 = vsel %vm1444, %v7370, %v7374
        %v7377 = vshrl.u32 %v7265, 16
        %v7379 = vrot.slane %v7377, 4
        %v7380 = vshll.u32 %v7265, 16
        %v7382 = vrot.slane %v7380, 5
        %v7383 = vor.u32 %v7379, %v7382
        %v7384 = vrot.slane %v7383, 4
        %v7386 = vshll.u32 %v7266, 16
        %v7388 = vrot.slane %v7386, 5
        %v7389 = vsel %vm1444, %v7384, %v7388
        %v7390 = vshrl.u32 %v7266, 16
        %v7392 = vrot.slane %v7390, 4
        %v7393 = vor.u32 %v7392, %v7388
        %v7394 = vrot.slane %v7393, 4
        %v7396 = vshll.u32 %v7267, 16
        %v7398 = vrot.slane %v7396, 5
        %v7399 = vsel %vm1444, %v7394, %v7398
        %v7401 = vshrl.u32 %v7268, 16
        %v7403 = vrot.slane %v7401, 4
        %v7404 = vshll.u32 %v7268, 16
        %v7406 = vrot.slane %v7404, 5
        %v7407 = vor.u32 %v7403, %v7406
        %v7408 = vrot.slane %v7407, 4
        %v7410 = vshll.u32 %v7269, 16
        %v7412 = vrot.slane %v7410, 5
        %v7413 = vsel %vm1444, %v7408, %v7412
        %v7414 = vshrl.u32 %v7269, 16
        %v7416 = vrot.slane %v7414, 4
        %v7417 = vor.u32 %v7416, %v7412
        %v7418 = vrot.slane %v7417, 4
        %v7420 = vshll.u32 %v7270, 16
        %v7422 = vrot.slane %v7420, 5
        %v7423 = vsel %vm1444, %v7418, %v7422
        %v7425 = vshrl.u32 %v7271, 16
        %v7427 = vrot.slane %v7425, 4
        %v7428 = vshll.u32 %v7271, 16
        %v7430 = vrot.slane %v7428, 5
        %v7431 = vor.u32 %v7427, %v7430
        %v7432 = vrot.slane %v7431, 4
        %v7434 = vshll.u32 %v7272, 16
        %v7436 = vrot.slane %v7434, 5
        %v7437 = vsel %vm1444, %v7432, %v7436
        %v7438 = vshrl.u32 %v7272, 16
        %v7440 = vrot.slane %v7438, 4
        %v7441 = vor.u32 %v7440, %v7436
        %v7442 = vrot.slane %v7441, 4
        %v7444 = vshll.u32 %v7273, 16
        %v7446 = vrot.slane %v7444, 5
        %v7447 = vsel %vm1444, %v7442, %v7446
        %v7449 = vshrl.u32 %v7274, 16
        %v7451 = vrot.slane %v7449, 4
        %v7452 = vshll.u32 %v7274, 16
        %v7454 = vrot.slane %v7452, 5
        %v7455 = vor.u32 %v7451, %v7454
        %v7456 = vrot.slane %v7455, 4
        %v7458 = vshll.u32 %v7275, 16
        %v7460 = vrot.slane %v7458, 5
        %v7461 = vsel %vm1444, %v7456, %v7460
        %v7462 = vshrl.u32 %v7275, 16
        %v7464 = vrot.slane %v7462, 4
        %v7465 = vor.u32 %v7464, %v7460
        %v7466 = vrot.slane %v7465, 4
        %v7468 = vshll.u32 %v7276, 16
        %v7470 = vrot.slane %v7468, 5
        %v7471 = vsel %vm1444, %v7466, %v7470
        %v7473 = vshrl.u32 %v7277, 16
        %v7475 = vrot.slane %v7473, 4
        %v7476 = vshll.u32 %v7277, 16
        %v7478 = vrot.slane %v7476, 5
        %v7479 = vor.u32 %v7475, %v7478
        %v7480 = vrot.slane %v7479, 4
        %v7482 = vshll.u32 %v7278, 16
        %v7484 = vrot.slane %v7482, 5
        %v7485 = vsel %vm1444, %v7480, %v7484
        %v7486 = vshrl.u32 %v7278, 16
        %v7488 = vrot.slane %v7486, 4
        %v7489 = vor.u32 %v7488, %v7484
        %v7490 = vrot.slane %v7489, 4
        %v7492 = vshll.u32 %v7279, 16
        %v7494 = vrot.slane %v7492, 5
        %v7495 = vsel %vm1444, %v7490, %v7494
        %v7497 = vshrl.u32 %v7280, 16
        %v7499 = vrot.slane %v7497, 4
        %v7500 = vshll.u32 %v7280, 16
        %v7502 = vrot.slane %v7500, 5
        %v7503 = vor.u32 %v7499, %v7502
        %v7504 = vrot.slane %v7503, 4
        %v7506 = vshll.u32 %v7281, 16
        %v7508 = vrot.slane %v7506, 5
        %v7509 = vsel %vm1444, %v7504, %v7508
        %v7510 = vshrl.u32 %v7281, 16
        %v7512 = vrot.slane %v7510, 4
        %v7513 = vor.u32 %v7512, %v7508
        %v7514 = vrot.slane %v7513, 4
        %v7516 = vshll.u32 %v7282, 16
        %v7518 = vrot.slane %v7516, 5
        %v7519 = vsel %vm1444, %v7514, %v7518
        %v7521 = vshrl.u32 %v7283, 16
        %v7523 = vrot.slane %v7521, 4
        %v7524 = vshll.u32 %v7283, 16
        %v7526 = vrot.slane %v7524, 5
        %v7527 = vor.u32 %v7523, %v7526
        %v7528 = vrot.slane %v7527, 4
        %v7530 = vshll.u32 %v7284, 16
        %v7532 = vrot.slane %v7530, 5
        %v7533 = vsel %vm1444, %v7528, %v7532
        %v7534 = vshrl.u32 %v7284, 16
        %v7536 = vrot.slane %v7534, 4
        %v7537 = vor.u32 %v7536, %v7532
        %v7538 = vrot.slane %v7537, 4
        %v7540 = vshll.u32 %v7285, 16
        %v7542 = vrot.slane %v7540, 5
        %v7543 = vsel %vm1444, %v7538, %v7542
        %v7545 = vshrl.u32 %v7286, 16
        %v7547 = vrot.slane %v7545, 4
        %v7548 = vshll.u32 %v7286, 16
        %v7550 = vrot.slane %v7548, 5
        %v7551 = vor.u32 %v7547, %v7550
        %v7552 = vrot.slane %v7551, 4
        %v7554 = vshll.u32 %v7287, 16
        %v7556 = vrot.slane %v7554, 5
        %v7557 = vsel %vm1444, %v7552, %v7556
        %v7558 = vshrl.u32 %v7287, 16
        %v7560 = vrot.slane %v7558, 4
        %v7561 = vor.u32 %v7560, %v7556
        %v7562 = vrot.slane %v7561, 4
        %v7564 = vshll.u32 %v7288, 16
        %v7566 = vrot.slane %v7564, 5
        %v7567 = vsel %vm1444, %v7562, %v7566
        %v7569 = vshrl.u32 %v7289, 16
        %v7571 = vrot.slane %v7569, 4
        %v7572 = vshll.u32 %v7289, 16
        %v7574 = vrot.slane %v7572, 5
        %v7575 = vor.u32 %v7571, %v7574
        %v7576 = vrot.slane %v7575, 4
        %v7578 = vshll.u32 %v7290, 16
        %v7580 = vrot.slane %v7578, 5
        %v7581 = vsel %vm1444, %v7576, %v7580
        %v7582 = vshrl.u32 %v7290, 16
        %v7584 = vrot.slane %v7582, 4
        %v7585 = vor.u32 %v7584, %v7580
        %v7586 = vrot.slane %v7585, 4
        %v7588 = vshll.u32 %v7291, 16
        %v7590 = vrot.slane %v7588, 5
        %v7591 = vsel %vm1444, %v7586, %v7590
        %v7593 = vshrl.u32 %v7292, 16
        %v7595 = vrot.slane %v7593, 4
        %v7596 = vshll.u32 %v7292, 16
        %v7598 = vrot.slane %v7596, 5
        %v7599 = vor.u32 %v7595, %v7598
        %v7600 = vrot.slane %v7599, 4
        %v7602 = vshll.u32 %v7293, 16
        %v7604 = vrot.slane %v7602, 5
        %v7605 = vsel %vm1444, %v7600, %v7604
        %v7606 = vshrl.u32 %v7293, 16
        %v7608 = vrot.slane %v7606, 4
        %v7609 = vor.u32 %v7608, %v7604
        %v7610 = vrot.slane %v7609, 4
        %v7612 = vshll.u32 %v7294, 16
        %v7614 = vrot.slane %v7612, 5
        %v7615 = vsel %vm1444, %v7610, %v7614
        %v7617 = vshrl.u32 %v7295, 16
        %v7619 = vrot.slane %v7617, 4
        %v7620 = vshll.u32 %v7295, 16
        %v7622 = vrot.slane %v7620, 5
        %v7623 = vor.u32 %v7619, %v7622
        %v7624 = vrot.slane %v7623, 4
        %v7626 = vshll.u32 %v7296, 16
        %v7628 = vrot.slane %v7626, 5
        %v7629 = vsel %vm1444, %v7624, %v7628
        %v7630 = vshrl.u32 %v7296, 16
        %v7632 = vrot.slane %v7630, 4
        %v7633 = vor.u32 %v7632, %v7628
        %v7634 = vrot.slane %v7633, 4
        %v7636 = vshll.u32 %v7297, 16
        %v7638 = vrot.slane %v7636, 5
        %v7639 = vsel %vm1444, %v7634, %v7638
        %v7641 = vshrl.u32 %v7298, 16
        %v7643 = vrot.slane %v7641, 4
        %v7644 = vshll.u32 %v7298, 16
        %v7646 = vrot.slane %v7644, 5
        %v7647 = vor.u32 %v7643, %v7646
        %v7648 = vrot.slane %v7647, 4
        %v7650 = vshll.u32 %v7299, 16
        %v7652 = vrot.slane %v7650, 5
        %v7653 = vsel %vm1444, %v7648, %v7652
        %v7654 = vshrl.u32 %v7299, 16
        %v7656 = vrot.slane %v7654, 4
        %v7657 = vor.u32 %v7656, %v7652
        %v7658 = vrot.slane %v7657, 4
        %v7660 = vshll.u32 %v7300, 16
        %v7662 = vrot.slane %v7660, 5
        %v7663 = vsel %vm1444, %v7658, %v7662
        %v7665 = vshrl.u32 %v7301, 16
        %v7667 = vrot.slane %v7665, 4
        %v7668 = vshll.u32 %v7301, 16
        %v7670 = vrot.slane %v7668, 5
        %v7671 = vor.u32 %v7667, %v7670
        %v7672 = vrot.slane %v7671, 4
        %v7674 = vshll.u32 %v7302, 16
        %v7676 = vrot.slane %v7674, 5
        %v7677 = vsel %vm1444, %v7672, %v7676
        %v7678 = vshrl.u32 %v7302, 16
        %v7680 = vrot.slane %v7678, 4
        %v7681 = vor.u32 %v7680, %v7676
        %v7682 = vrot.slane %v7681, 4
        %v7684 = vshll.u32 %v7303, 16
        %v7686 = vrot.slane %v7684, 5
        %v7687 = vsel %vm1444, %v7682, %v7686
        %s7688 = scalar_lea.vmem [#allocation4], 128
        %v7689 = vld [vmem:[%s7688] sm:$0xf]
        %v7690 = vld [vmem:[%s7688 + $0x4] sm:$0xf]
        %v7691 = vld [vmem:[%s7688 + $0x8] sm:$0xf]
        %v7692 = vld [vmem:[%s7688 + $0xc] sm:$0xf]
        %v7693 = vld [vmem:[%s7688 + $0x10] sm:$0xf]
        %v7694 = vld [vmem:[%s7688 + $0x14] sm:$0xf]
        %v7695 = vld [vmem:[%s7688 + $0x18] sm:$0xf]
        %v7696 = vld [vmem:[%s7688 + $0x1c] sm:$0xf]
        %v7697 = vld [vmem:[%s7688 + $0x20] sm:$0xf]
        %v7698 = vld [vmem:[%s7688 + $0x24] sm:$0xf]
        %v7699 = vld [vmem:[%s7688 + $0x28] sm:$0xf]
        %v7700 = vld [vmem:[%s7688 + $0x2c] sm:$0xf]
        %v7701 = vld [vmem:[%s7688 + $0x30] sm:$0xf]
        %v7702 = vld [vmem:[%s7688 + $0x34] sm:$0xf]
        %v7703 = vld [vmem:[%s7688 + $0x38] sm:$0xf]
        %v7704 = vld [vmem:[%s7688 + $0x3c] sm:$0xf]
        %v7705 = vunpack.c.l.b16 %v7317
        %v7706 = vunpack.c.l.b16 %v7327
        %v7707 = vunpack.c.l.b16 %v7341
        %v7708 = vunpack.c.l.b16 %v7351
        %v7709 = vunpack.c.l.b16 %v7365
        %v7710 = vunpack.c.l.b16 %v7375
        %v7711 = vunpack.c.l.b16 %v7389
        %v7712 = vunpack.c.l.b16 %v7399
        %v7713 = vunpack.c.l.b16 %v7413
        %v7714 = vunpack.c.l.b16 %v7423
        %v7715 = vunpack.c.l.b16 %v7437
        %v7716 = vunpack.c.l.b16 %v7447
        %v7717 = vunpack.c.l.b16 %v7461
        %v7718 = vunpack.c.l.b16 %v7471
        %v7719 = vunpack.c.l.b16 %v7485
        %v7720 = vunpack.c.l.b16 %v7495
        %v7721 = vunpack.c.l.b16 %v7509
        %v7722 = vunpack.c.l.b16 %v7519
        %v7723 = vunpack.c.l.b16 %v7533
        %v7724 = vunpack.c.l.b16 %v7543
        %v7725 = vunpack.c.l.b16 %v7557
        %v7726 = vunpack.c.l.b16 %v7567
        %v7727 = vunpack.c.l.b16 %v7581
        %v7728 = vunpack.c.l.b16 %v7591
        %v7729 = vunpack.c.l.b16 %v7605
        %v7730 = vunpack.c.l.b16 %v7615
        %v7731 = vunpack.c.l.b16 %v7629
        %v7732 = vunpack.c.l.b16 %v7639
        %v7733 = vunpack.c.l.b16 %v7653
        %v7734 = vunpack.c.l.b16 %v7663
        %v7735 = vunpack.c.l.b16 %v7677
        %v7736 = vunpack.c.l.b16 %v7687
        %v7737 = vpack.c.b16 %v7706, %v7705
        %v7738 = vpack.c.b16 %v7708, %v7707
        %v7739 = vpack.c.b16 %v7710, %v7709
        %v7740 = vpack.c.b16 %v7712, %v7711
        %v7741 = vpack.c.b16 %v7714, %v7713
        %v7742 = vpack.c.b16 %v7716, %v7715
        %v7743 = vpack.c.b16 %v7718, %v7717
        %v7744 = vpack.c.b16 %v7720, %v7719
        %v7745 = vpack.c.b16 %v7722, %v7721
        %v7746 = vpack.c.b16 %v7724, %v7723
        %v7747 = vpack.c.b16 %v7726, %v7725
        %v7748 = vpack.c.b16 %v7728, %v7727
        %v7749 = vpack.c.b16 %v7730, %v7729
        %v7750 = vpack.c.b16 %v7732, %v7731
        %v7751 = vpack.c.b16 %v7734, %v7733
        %v7752 = vpack.c.b16 %v7736, %v7735
        %v7785 = vunpack.c.l.b16 %v7689
        %v7786 = vunpack.c.l.b16 %v7690
        %v7787 = vunpack.c.l.b16 %v7691
        %v7788 = vunpack.c.l.b16 %v7692
        %v7789 = vunpack.c.l.b16 %v7693
        %v7790 = vunpack.c.l.b16 %v7694
        %v7791 = vunpack.c.l.b16 %v7695
        %v7792 = vunpack.c.l.b16 %v7696
        %v7793 = vunpack.c.l.b16 %v7697
        %v7794 = vunpack.c.l.b16 %v7698
        %v7795 = vunpack.c.l.b16 %v7699
        %v7796 = vunpack.c.l.b16 %v7700
        %v7797 = vunpack.c.l.b16 %v7701
        %v7798 = vunpack.c.l.b16 %v7702
        %v7799 = vunpack.c.l.b16 %v7703
        %v7800 = vunpack.c.l.b16 %v7704
        %v7801 = vpack.c.b16 %v7786, %v7785
        %v7802 = vpack.c.b16 %v7788, %v7787
        %v7803 = vpack.c.b16 %v7790, %v7789
        %v7804 = vpack.c.b16 %v7792, %v7791
        %v7805 = vpack.c.b16 %v7794, %v7793
        %v7806 = vpack.c.b16 %v7796, %v7795
        %v7807 = vpack.c.b16 %v7798, %v7797
        %v7808 = vpack.c.b16 %v7800, %v7799
        %7817 = vmatprep.subr.bf16.mxu0 0
        %7818 = vmatpush1.bf16.msra.mxu0 %v7801
        %7819 = vmatprep.subr.bf16.mxu0 0
        %7820 = vmatpush1.bf16.msra.mxu0 %v7802
        %7821 = vmatprep.subr.bf16.mxu0 0
        %7822 = vmatpush1.bf16.msra.mxu0 %v7803
        %7823 = vmatprep.subr.bf16.mxu0 0
        %7824 = vmatpush1.bf16.msra.mxu0 %v7804
        %7825 = vmatprep.subr.bf16.mxu0 0
        %7826 = vmatpush1.bf16.msra.mxu0 %v7805
        %7827 = vmatprep.subr.bf16.mxu0 0
        %7828 = vmatpush1.bf16.msra.mxu0 %v7806
        %7829 = vmatprep.subr.bf16.mxu0 0
        %7830 = vmatpush1.bf16.msra.mxu0 %v7807
        %7831 = vmatprep.subr.bf16.mxu0 0
        %7832 = vmatpush1.bf16.msra.mxu0 %v7808
        %7833 = vmatprep.subr.bf16.mxu0 0
        %7834 = vmatpush1.bf16.msra.mxu0 0
        %7835 = vmatprep.subr.bf16.mxu0 0
        %7836 = vmatpush1.bf16.msra.mxu0 0
        %7837 = vmatprep.subr.bf16.mxu0 0
        %7838 = vmatpush1.bf16.msra.mxu0 0
        %7839 = vmatprep.subr.bf16.mxu0 0
        %7840 = vmatpush1.bf16.msra.mxu0 0
        %7841 = vmatprep.subr.bf16.mxu0 0
        %7842 = vmatpush1.bf16.msra.mxu0 0
        %7843 = vmatprep.subr.bf16.mxu0 0
        %7844 = vmatpush1.bf16.msra.mxu0 0
        %7845 = vmatprep.subr.bf16.mxu0 0
        %7846 = vmatpush1.bf16.msra.mxu0 0
        %7847 = vmatprep.subr.bf16.mxu0 0
        %7848 = vmatpush1.bf16.msra.mxu0 0
        %7849 = vmatprep.mubr.bf16.mxu0 0
        %7850 = vmatmul.mubr.bf16.gmra.mrb[0].mxu0 %v7737
        %v7851 = vpop.f32.mrb[0].mxu0
        %v7852 = vadd.f32 0.0, %v7851
        %v7853 = vpop.f32.mrb[0].mxu0
        %v7854 = vpop.f32.mrb[0].mxu0
        %v7855 = vadd.f32 0.0, %v7854
        %v7856 = vpop.f32.mrb[0].mxu0
        %7857 = vmatprep.mubr.bf16.mxu0 0
        %7858 = vmatmul.mubr.bf16.gmra.mrb[0].mxu0 %v7738
        %v7859 = vpop.f32.mrb[0].mxu0
        %v7860 = vadd.f32 0.0, %v7859
        %v7861 = vpop.f32.mrb[0].mxu0
        %v7862 = vpop.f32.mrb[0].mxu0
        %v7863 = vadd.f32 0.0, %v7862
        %v7864 = vpop.f32.mrb[0].mxu0
        %7865 = vmatprep.mubr.bf16.mxu0 0
        %7866 = vmatmul.mubr.bf16.gmra.mrb[0].mxu0 %v7739
        %v7867 = vpop.f32.mrb[0].mxu0
        %v7868 = vadd.f32 0.0, %v7867
        %v7869 = vpop.f32.mrb[0].mxu0
        %v7870 = vpop.f32.mrb[0].mxu0
        %v7871 = vadd.f32 0.0, %v7870
        %v7872 = vpop.f32.mrb[0].mxu0
        %7873 = vmatprep.mubr.bf16.mxu0 0
        %7874 = vmatmul.mubr.bf16.gmra.mrb[0].mxu0 %v7740
        %v7875 = vpop.f32.mrb[0].mxu0
        %v7876 = vadd.f32 0.0, %v7875
        %v7877 = vpop.f32.mrb[0].mxu0
        %v7878 = vpop.f32.mrb[0].mxu0
        %v7879 = vadd.f32 0.0, %v7878
        %v7880 = vpop.f32.mrb[0].mxu0
        %7881 = vmatprep.mubr.bf16.mxu0 0
        %7882 = vmatmul.mubr.bf16.gmra.mrb[0].mxu0 %v7741
        %v7883 = vpop.f32.mrb[0].mxu0
        %v7884 = vadd.f32 0.0, %v7883
        %v7885 = vpop.f32.mrb[0].mxu0
        %v7886 = vpop.f32.mrb[0].mxu0
        %v7887 = vadd.f32 0.0, %v7886
        %v7888 = vpop.f32.mrb[0].mxu0
        %7889 = vmatprep.mubr.bf16.mxu0 0
        %7890 = vmatmul.mubr.bf16.gmra.mrb[0].mxu0 %v7742
        %v7891 = vpop.f32.mrb[0].mxu0
        %v7892 = vadd.f32 0.0, %v7891
        %v7893 = vpop.f32.mrb[0].mxu0
        %v7894 = vpop.f32.mrb[0].mxu0
        %v7895 = vadd.f32 0.0, %v7894
        %v7896 = vpop.f32.mrb[0].mxu0
        %7897 = vmatprep.mubr.bf16.mxu0 0
        %7898 = vmatmul.mubr.bf16.gmra.mrb[0].mxu0 %v7743
        %v7899 = vpop.f32.mrb[0].mxu0
        %v7900 = vadd.f32 0.0, %v7899
        %v7901 = vpop.f32.mrb[0].mxu0
        %v7902 = vpop.f32.mrb[0].mxu0
        %v7903 = vadd.f32 0.0, %v7902
        %v7904 = vpop.f32.mrb[0].mxu0
        %7905 = vmatprep.mubr.bf16.mxu0 0
        %7906 = vmatmul.mubr.bf16.gmra.mrb[0].mxu0 %v7744
        %v7907 = vpop.f32.mrb[0].mxu0
        %v7908 = vadd.f32 0.0, %v7907
        %v7909 = vpop.f32.mrb[0].mxu0
        %v7910 = vpop.f32.mrb[0].mxu0
        %v7911 = vadd.f32 0.0, %v7910
        %v7912 = vpop.f32.mrb[0].mxu0
        %7913 = vmatprep.mubr.bf16.mxu0 0
        %7914 = vmatmul.mubr.bf16.gmra.mrb[0].mxu0 %v7745
        %v7915 = vpop.f32.mrb[0].mxu0
        %v7916 = vadd.f32 0.0, %v7915
        %v7917 = vpop.f32.mrb[0].mxu0
        %v7918 = vpop.f32.mrb[0].mxu0
        %v7919 = vadd.f32 0.0, %v7918
        %v7920 = vpop.f32.mrb[0].mxu0
        %7921 = vmatprep.mubr.bf16.mxu0 0
        %7922 = vmatmul.mubr.bf16.gmra.mrb[0].mxu0 %v7746
        %v7923 = vpop.f32.mrb[0].mxu0
        %v7924 = vadd.f32 0.0, %v7923
        %v7925 = vpop.f32.mrb[0].mxu0
        %v7926 = vpop.f32.mrb[0].mxu0
        %v7927 = vadd.f32 0.0, %v7926
        %v7928 = vpop.f32.mrb[0].mxu0
        %7929 = vmatprep.mubr.bf16.mxu0 0
        %7930 = vmatmul.mubr.bf16.gmra.mrb[0].mxu0 %v7747
        %v7931 = vpop.f32.mrb[0].mxu0
        %v7932 = vadd.f32 0.0, %v7931
        %v7933 = vpop.f32.mrb[0].mxu0
        %v7934 = vpop.f32.mrb[0].mxu0
        %v7935 = vadd.f32 0.0, %v7934
        %v7936 = vpop.f32.mrb[0].mxu0
        %7937 = vmatprep.mubr.bf16.mxu0 0
        %7938 = vmatmul.mubr.bf16.gmra.mrb[0].mxu0 %v7748
        %v7939 = vpop.f32.mrb[0].mxu0
        %v7940 = vadd.f32 0.0, %v7939
        %v7941 = vpop.f32.mrb[0].mxu0
        %v7942 = vpop.f32.mrb[0].mxu0
        %v7943 = vadd.f32 0.0, %v7942
        %v7944 = vpop.f32.mrb[0].mxu0
        %7945 = vmatprep.mubr.bf16.mxu0 0
        %7946 = vmatmul.mubr.bf16.gmra.mrb[0].mxu0 %v7749
        %v7947 = vpop.f32.mrb[0].mxu0
        %v7948 = vadd.f32 0.0, %v7947
        %v7949 = vpop.f32.mrb[0].mxu0
        %v7950 = vpop.f32.mrb[0].mxu0
        %v7951 = vadd.f32 0.0, %v7950
        %v7952 = vpop.f32.mrb[0].mxu0
        %7953 = vmatprep.mubr.bf16.mxu0 0
        %7954 = vmatmul.mubr.bf16.gmra.mrb[0].mxu0 %v7750
        %v7955 = vpop.f32.mrb[0].mxu0
        %v7956 = vadd.f32 0.0, %v7955
        %v7957 = vpop.f32.mrb[0].mxu0
        %v7958 = vpop.f32.mrb[0].mxu0
        %v7959 = vadd.f32 0.0, %v7958
        %v7960 = vpop.f32.mrb[0].mxu0
        %7961 = vmatprep.mubr.bf16.mxu0 0
        %7962 = vmatmul.mubr.bf16.gmra.mrb[0].mxu0 %v7751
        %v7963 = vpop.f32.mrb[0].mxu0
        %v7964 = vadd.f32 0.0, %v7963
        %v7965 = vpop.f32.mrb[0].mxu0
        %v7966 = vpop.f32.mrb[0].mxu0
        %v7967 = vadd.f32 0.0, %v7966
        %v7968 = vpop.f32.mrb[0].mxu0
        %7969 = vmatprep.mubr.bf16.mxu0 0
        %7970 = vmatmul.mubr.bf16.gmra.mrb[0].mxu0 %v7752
        %v7971 = vpop.f32.mrb[0].mxu0
        %v7972 = vadd.f32 0.0, %v7971
        %v7973 = vpop.f32.mrb[0].mxu0
        %v7974 = vpop.f32.mrb[0].mxu0
        %v7975 = vadd.f32 0.0, %v7974
        %v7976 = vpop.f32.mrb[0].mxu0
        %7977 = vdwg.mxu0
        %v7978 = vadd.f32 %v7130, %v7852
        %v7979 = vadd.f32 %v7133, %v7855
        %v7980 = vadd.f32 %v7138, %v7860
        %v7981 = vadd.f32 %v7141, %v7863
        %v7982 = vadd.f32 %v7146, %v7868
        %v7983 = vadd.f32 %v7149, %v7871
        %v7984 = vadd.f32 %v7154, %v7876
        %v7985 = vadd.f32 %v7157, %v7879
        %v7986 = vadd.f32 %v7162, %v7884
        %v7987 = vadd.f32 %v7165, %v7887
        %v7988 = vadd.f32 %v7170, %v7892
        %v7989 = vadd.f32 %v7173, %v7895
        %v7990 = vadd.f32 %v7178, %v7900
        %v7991 = vadd.f32 %v7181, %v7903
        %v7992 = vadd.f32 %v7186, %v7908
        %v7993 = vadd.f32 %v7189, %v7911
        %v7994 = vadd.f32 %v7194, %v7916
        %v7995 = vadd.f32 %v7197, %v7919
        %v7996 = vadd.f32 %v7202, %v7924
        %v7997 = vadd.f32 %v7205, %v7927
        %v7998 = vadd.f32 %v7210, %v7932
        %v7999 = vadd.f32 %v7213, %v7935
        %v8000 = vadd.f32 %v7218, %v7940
        %v8001 = vadd.f32 %v7221, %v7943
        %v8002 = vadd.f32 %v7226, %v7948
        %v8003 = vadd.f32 %v7229, %v7951
        %v8004 = vadd.f32 %v7234, %v7956
        %v8005 = vadd.f32 %v7237, %v7959
        %v8006 = vadd.f32 %v7242, %v7964
        %v8007 = vadd.f32 %v7245, %v7967
        %v8008 = vadd.f32 %v7250, %v7972
        %v8009 = vadd.f32 %v7253, %v7975
        %v8010 = vld [vmem:[%s6212 + $0x4] sm:$0x8]
        %v8011 = vld [vmem:[%s6212 + $0x8] sm:$0xf]
        %v8012 = vld [vmem:[%s6212 + $0xc] sm:$0xf]
        %v8013 = vld [vmem:[%s6212 + $0x18] sm:$0x8]
        %v8014 = vld [vmem:[%s6212 + $0x1c] sm:$0xf]
        %v8015 = vld [vmem:[%s6212 + $0x20] sm:$0xf]
        %v8016 = vld [vmem:[%s6212 + $0x2c] sm:$0x8]
        %v8017 = vld [vmem:[%s6212 + $0x30] sm:$0xf]
        %v8018 = vld [vmem:[%s6212 + $0x34] sm:$0xf]
        %v8019 = vld [vmem:[%s6212 + $0x40] sm:$0x8]
        %v8020 = vld [vmem:[%s6212 + $0x44] sm:$0xf]
        %v8021 = vld [vmem:[%s6212 + $0x48] sm:$0xf]
        %v8022 = vld [vmem:[%s6212 + $0x54] sm:$0x8]
        %v8023 = vld [vmem:[%s6212 + $0x58] sm:$0xf]
        %v8024 = vld [vmem:[%s6212 + $0x5c] sm:$0xf]
        %v8025 = vld [vmem:[%s6212 + $0x68] sm:$0x8]
        %v8026 = vld [vmem:[%s6212 + $0x6c] sm:$0xf]
        %v8027 = vld [vmem:[%s6212 + $0x70] sm:$0xf]
        %v8028 = vld [vmem:[%s6212 + $0x7c] sm:$0x8]
        %v8029 = vld [vmem:[%s6212 + $0x80] sm:$0xf]
        %v8030 = vld [vmem:[%s6212 + $0x84] sm:$0xf]
        %v8031 = vld [vmem:[%s6212 + $0x90] sm:$0x8]
        %v8032 = vld [vmem:[%s6212 + $0x94] sm:$0xf]
        %v8033 = vld [vmem:[%s6212 + $0x98] sm:$0xf]
        %v8034 = vld [vmem:[%s6212 + $0xa4] sm:$0x8]
        %v8035 = vld [vmem:[%s6212 + $0xa8] sm:$0xf]
        %v8036 = vld [vmem:[%s6212 + $0xac] sm:$0xf]
        %v8037 = vld [vmem:[%s6212 + $0xb8] sm:$0x8]
        %v8038 = vld [vmem:[%s6212 + $0xbc] sm:$0xf]
        %v8039 = vld [vmem:[%s6212 + $0xc0] sm:$0xf]
        %v8040 = vld [vmem:[%s6212 + $0xcc] sm:$0x8]
        %v8041 = vld [vmem:[%s6212 + $0xd0] sm:$0xf]
        %v8042 = vld [vmem:[%s6212 + $0xd4] sm:$0xf]
        %v8043 = vld [vmem:[%s6212 + $0xe0] sm:$0x8]
        %v8044 = vld [vmem:[%s6212 + $0xe4] sm:$0xf]
        %v8045 = vld [vmem:[%s6212 + $0xe8] sm:$0xf]
        %v8046 = vld [vmem:[%s6212 + $0xf4] sm:$0x8]
        %v8047 = vld [vmem:[%s6212 + $0xf8] sm:$0xf]
        %v8048 = vld [vmem:[%s6212 + $0xfc] sm:$0xf]
        %v8049 = vld [vmem:[%s6212 + $0x108] sm:$0x8]
        %v8050 = vld [vmem:[%s6212 + $0x10c] sm:$0xf]
        %v8051 = vld [vmem:[%s6212 + $0x110] sm:$0xf]
        %v8052 = vld [vmem:[%s6212 + $0x11c] sm:$0x8]
        %v8053 = vld [vmem:[%s6212 + $0x120] sm:$0xf]
        %v8054 = vld [vmem:[%s6212 + $0x124] sm:$0xf]
        %v8055 = vld [vmem:[%s6212 + $0x130] sm:$0x8]
        %v8056 = vld [vmem:[%s6212 + $0x134] sm:$0xf]
        %v8057 = vld [vmem:[%s6212 + $0x138] sm:$0xf]
        %v8059 = vshrl.u32 %v8010, 16
        %v8061 = vrot.slane %v8059, 7
        %v8062 = vrot.slane %v8061, 4
        %v8064 = vshrl.u32 %v8011, 16
        %v8066 = vrot.slane %v8064, 7
        %v8067 = vshll.u32 %v8011, 16
        %v8069 = vor.u32 %v8066, %v8067
        %v8070 = vsel %vm484, %v8062, %v8069
        %v8071 = vrot.slane %v8066, 4
        %v8073 = vshrl.u32 %v8012, 16
        %v8075 = vrot.slane %v8073, 7
        %v8076 = vshll.u32 %v8012, 16
        %v8078 = vor.u32 %v8075, %v8076
        %v8079 = vsel %vm484, %v8071, %v8078
        %v8081 = vshrl.u32 %v8013, 16
        %v8083 = vrot.slane %v8081, 7
        %v8084 = vrot.slane %v8083, 4
        %v8086 = vshrl.u32 %v8014, 16
        %v8088 = vrot.slane %v8086, 7
        %v8089 = vshll.u32 %v8014, 16
        %v8091 = vor.u32 %v8088, %v8089
        %v8092 = vsel %vm484, %v8084, %v8091
        %v8093 = vrot.slane %v8088, 4
        %v8095 = vshrl.u32 %v8015, 16
        %v8097 = vrot.slane %v8095, 7
        %v8098 = vshll.u32 %v8015, 16
        %v8100 = vor.u32 %v8097, %v8098
        %v8101 = vsel %vm484, %v8093, %v8100
        %v8103 = vshrl.u32 %v8016, 16
        %v8105 = vrot.slane %v8103, 7
        %v8106 = vrot.slane %v8105, 4
        %v8108 = vshrl.u32 %v8017, 16
        %v8110 = vrot.slane %v8108, 7
        %v8111 = vshll.u32 %v8017, 16
        %v8113 = vor.u32 %v8110, %v8111
        %v8114 = vsel %vm484, %v8106, %v8113
        %v8115 = vrot.slane %v8110, 4
        %v8117 = vshrl.u32 %v8018, 16
        %v8119 = vrot.slane %v8117, 7
        %v8120 = vshll.u32 %v8018, 16
        %v8122 = vor.u32 %v8119, %v8120
        %v8123 = vsel %vm484, %v8115, %v8122
        %v8125 = vshrl.u32 %v8019, 16
        %v8127 = vrot.slane %v8125, 7
        %v8128 = vrot.slane %v8127, 4
        %v8130 = vshrl.u32 %v8020, 16
        %v8132 = vrot.slane %v8130, 7
        %v8133 = vshll.u32 %v8020, 16
        %v8135 = vor.u32 %v8132, %v8133
        %v8136 = vsel %vm484, %v8128, %v8135
        %v8137 = vrot.slane %v8132, 4
        %v8139 = vshrl.u32 %v8021, 16
        %v8141 = vrot.slane %v8139, 7
        %v8142 = vshll.u32 %v8021, 16
        %v8144 = vor.u32 %v8141, %v8142
        %v8145 = vsel %vm484, %v8137, %v8144
        %v8147 = vshrl.u32 %v8022, 16
        %v8149 = vrot.slane %v8147, 7
        %v8150 = vrot.slane %v8149, 4
        %v8152 = vshrl.u32 %v8023, 16
        %v8154 = vrot.slane %v8152, 7
        %v8155 = vshll.u32 %v8023, 16
        %v8157 = vor.u32 %v8154, %v8155
        %v8158 = vsel %vm484, %v8150, %v8157
        %v8159 = vrot.slane %v8154, 4
        %v8161 = vshrl.u32 %v8024, 16
        %v8163 = vrot.slane %v8161, 7
        %v8164 = vshll.u32 %v8024, 16
        %v8166 = vor.u32 %v8163, %v8164
        %v8167 = vsel %vm484, %v8159, %v8166
        %v8169 = vshrl.u32 %v8025, 16
        %v8171 = vrot.slane %v8169, 7
        %v8172 = vrot.slane %v8171, 4
        %v8174 = vshrl.u32 %v8026, 16
        %v8176 = vrot.slane %v8174, 7
        %v8177 = vshll.u32 %v8026, 16
        %v8179 = vor.u32 %v8176, %v8177
        %v8180 = vsel %vm484, %v8172, %v8179
        %v8181 = vrot.slane %v8176, 4
        %v8183 = vshrl.u32 %v8027, 16
        %v8185 = vrot.slane %v8183, 7
        %v8186 = vshll.u32 %v8027, 16
        %v8188 = vor.u32 %v8185, %v8186
        %v8189 = vsel %vm484, %v8181, %v8188
        %v8191 = vshrl.u32 %v8028, 16
        %v8193 = vrot.slane %v8191, 7
        %v8194 = vrot.slane %v8193, 4
        %v8196 = vshrl.u32 %v8029, 16
        %v8198 = vrot.slane %v8196, 7
        %v8199 = vshll.u32 %v8029, 16
        %v8201 = vor.u32 %v8198, %v8199
        %v8202 = vsel %vm484, %v8194, %v8201
        %v8203 = vrot.slane %v8198, 4
        %v8205 = vshrl.u32 %v8030, 16
        %v8207 = vrot.slane %v8205, 7
        %v8208 = vshll.u32 %v8030, 16
        %v8210 = vor.u32 %v8207, %v8208
        %v8211 = vsel %vm484, %v8203, %v8210
        %v8213 = vshrl.u32 %v8031, 16
        %v8215 = vrot.slane %v8213, 7
        %v8216 = vrot.slane %v8215, 4
        %v8218 = vshrl.u32 %v8032, 16
        %v8220 = vrot.slane %v8218, 7
        %v8221 = vshll.u32 %v8032, 16
        %v8223 = vor.u32 %v8220, %v8221
        %v8224 = vsel %vm484, %v8216, %v8223
        %v8225 = vrot.slane %v8220, 4
        %v8227 = vshrl.u32 %v8033, 16
        %v8229 = vrot.slane %v8227, 7
        %v8230 = vshll.u32 %v8033, 16
        %v8232 = vor.u32 %v8229, %v8230
        %v8233 = vsel %vm484, %v8225, %v8232
        %v8235 = vshrl.u32 %v8034, 16
        %v8237 = vrot.slane %v8235, 7
        %v8238 = vrot.slane %v8237, 4
        %v8240 = vshrl.u32 %v8035, 16
        %v8242 = vrot.slane %v8240, 7
        %v8243 = vshll.u32 %v8035, 16
        %v8245 = vor.u32 %v8242, %v8243
        %v8246 = vsel %vm484, %v8238, %v8245
        %v8247 = vrot.slane %v8242, 4
        %v8249 = vshrl.u32 %v8036, 16
        %v8251 = vrot.slane %v8249, 7
        %v8252 = vshll.u32 %v8036, 16
        %v8254 = vor.u32 %v8251, %v8252
        %v8255 = vsel %vm484, %v8247, %v8254
        %v8257 = vshrl.u32 %v8037, 16
        %v8259 = vrot.slane %v8257, 7
        %v8260 = vrot.slane %v8259, 4
        %v8262 = vshrl.u32 %v8038, 16
        %v8264 = vrot.slane %v8262, 7
        %v8265 = vshll.u32 %v8038, 16
        %v8267 = vor.u32 %v8264, %v8265
        %v8268 = vsel %vm484, %v8260, %v8267
        %v8269 = vrot.slane %v8264, 4
        %v8271 = vshrl.u32 %v8039, 16
        %v8273 = vrot.slane %v8271, 7
        %v8274 = vshll.u32 %v8039, 16
        %v8276 = vor.u32 %v8273, %v8274
        %v8277 = vsel %vm484, %v8269, %v8276
        %v8279 = vshrl.u32 %v8040, 16
        %v8281 = vrot.slane %v8279, 7
        %v8282 = vrot.slane %v8281, 4
        %v8284 = vshrl.u32 %v8041, 16
        %v8286 = vrot.slane %v8284, 7
        %v8287 = vshll.u32 %v8041, 16
        %v8289 = vor.u32 %v8286, %v8287
        %v8290 = vsel %vm484, %v8282, %v8289
        %v8291 = vrot.slane %v8286, 4
        %v8293 = vshrl.u32 %v8042, 16
        %v8295 = vrot.slane %v8293, 7
        %v8296 = vshll.u32 %v8042, 16
        %v8298 = vor.u32 %v8295, %v8296
        %v8299 = vsel %vm484, %v8291, %v8298
        %v8301 = vshrl.u32 %v8043, 16
        %v8303 = vrot.slane %v8301, 7
        %v8304 = vrot.slane %v8303, 4
        %v8306 = vshrl.u32 %v8044, 16
        %v8308 = vrot.slane %v8306, 7
        %v8309 = vshll.u32 %v8044, 16
        %v8311 = vor.u32 %v8308, %v8309
        %v8312 = vsel %vm484, %v8304, %v8311
        %v8313 = vrot.slane %v8308, 4
        %v8315 = vshrl.u32 %v8045, 16
        %v8317 = vrot.slane %v8315, 7
        %v8318 = vshll.u32 %v8045, 16
        %v8320 = vor.u32 %v8317, %v8318
        %v8321 = vsel %vm484, %v8313, %v8320
        %v8323 = vshrl.u32 %v8046, 16
        %v8325 = vrot.slane %v8323, 7
        %v8326 = vrot.slane %v8325, 4
        %v8328 = vshrl.u32 %v8047, 16
        %v8330 = vrot.slane %v8328, 7
        %v8331 = vshll.u32 %v8047, 16
        %v8333 = vor.u32 %v8330, %v8331
        %v8334 = vsel %vm484, %v8326, %v8333
        %v8335 = vrot.slane %v8330, 4
        %v8337 = vshrl.u32 %v8048, 16
        %v8339 = vrot.slane %v8337, 7
        %v8340 = vshll.u32 %v8048, 16
        %v8342 = vor.u32 %v8339, %v8340
        %v8343 = vsel %vm484, %v8335, %v8342
        %v8345 = vshrl.u32 %v8049, 16
        %v8347 = vrot.slane %v8345, 7
        %v8348 = vrot.slane %v8347, 4
        %v8350 = vshrl.u32 %v8050, 16
        %v8352 = vrot.slane %v8350, 7
        %v8353 = vshll.u32 %v8050, 16
        %v8355 = vor.u32 %v8352, %v8353
        %v8356 = vsel %vm484, %v8348, %v8355
        %v8357 = vrot.slane %v8352, 4
        %v8359 = vshrl.u32 %v8051, 16
        %v8361 = vrot.slane %v8359, 7
        %v8362 = vshll.u32 %v8051, 16
        %v8364 = vor.u32 %v8361, %v8362
        %v8365 = vsel %vm484, %v8357, %v8364
        %v8367 = vshrl.u32 %v8052, 16
        %v8369 = vrot.slane %v8367, 7
        %v8370 = vrot.slane %v8369, 4
        %v8372 = vshrl.u32 %v8053, 16
        %v8374 = vrot.slane %v8372, 7
        %v8375 = vshll.u32 %v8053, 16
        %v8377 = vor.u32 %v8374, %v8375
        %v8378 = vsel %vm484, %v8370, %v8377
        %v8379 = vrot.slane %v8374, 4
        %v8381 = vshrl.u32 %v8054, 16
        %v8383 = vrot.slane %v8381, 7
        %v8384 = vshll.u32 %v8054, 16
        %v8386 = vor.u32 %v8383, %v8384
        %v8387 = vsel %vm484, %v8379, %v8386
        %v8389 = vshrl.u32 %v8055, 16
        %v8391 = vrot.slane %v8389, 7
        %v8392 = vrot.slane %v8391, 4
        %v8394 = vshrl.u32 %v8056, 16
        %v8396 = vrot.slane %v8394, 7
        %v8397 = vshll.u32 %v8056, 16
        %v8399 = vor.u32 %v8396, %v8397
        %v8400 = vsel %vm484, %v8392, %v8399
        %v8401 = vrot.slane %v8396, 4
        %v8403 = vshrl.u32 %v8057, 16
        %v8405 = vrot.slane %v8403, 7
        %v8406 = vshll.u32 %v8057, 16
        %v8408 = vor.u32 %v8405, %v8406
        %v8409 = vsel %vm484, %v8401, %v8408
        %s8410 = scalar_lea.vmem [#allocation4], 192
        %v8411 = vld [vmem:[%s8410] sm:$0xf]
        %v8412 = vld [vmem:[%s8410 + $0x4] sm:$0xf]
        %v8413 = vld [vmem:[%s8410 + $0x8] sm:$0xf]
        %v8414 = vld [vmem:[%s8410 + $0xc] sm:$0xf]
        %v8415 = vld [vmem:[%s8410 + $0x10] sm:$0xf]
        %v8416 = vld [vmem:[%s8410 + $0x14] sm:$0xf]
        %v8417 = vld [vmem:[%s8410 + $0x18] sm:$0xf]
        %v8418 = vld [vmem:[%s8410 + $0x1c] sm:$0xf]
        %v8419 = vld [vmem:[%s8410 + $0x20] sm:$0xf]
        %v8420 = vld [vmem:[%s8410 + $0x24] sm:$0xf]
        %v8421 = vld [vmem:[%s8410 + $0x28] sm:$0xf]
        %v8422 = vld [vmem:[%s8410 + $0x2c] sm:$0xf]
        %v8423 = vld [vmem:[%s8410 + $0x30] sm:$0xf]
        %v8424 = vld [vmem:[%s8410 + $0x34] sm:$0xf]
        %v8425 = vld [vmem:[%s8410 + $0x38] sm:$0xf]
        %v8426 = vld [vmem:[%s8410 + $0x3c] sm:$0xf]
        %v8427 = vunpack.c.l.b16 %v8070
        %v8428 = vunpack.c.l.b16 %v8079
        %v8429 = vunpack.c.l.b16 %v8092
        %v8430 = vunpack.c.l.b16 %v8101
        %v8431 = vunpack.c.l.b16 %v8114
        %v8432 = vunpack.c.l.b16 %v8123
        %v8433 = vunpack.c.l.b16 %v8136
        %v8434 = vunpack.c.l.b16 %v8145
        %v8435 = vunpack.c.l.b16 %v8158
        %v8436 = vunpack.c.l.b16 %v8167
        %v8437 = vunpack.c.l.b16 %v8180
        %v8438 = vunpack.c.l.b16 %v8189
        %v8439 = vunpack.c.l.b16 %v8202
        %v8440 = vunpack.c.l.b16 %v8211
        %v8441 = vunpack.c.l.b16 %v8224
        %v8442 = vunpack.c.l.b16 %v8233
        %v8443 = vunpack.c.l.b16 %v8246
        %v8444 = vunpack.c.l.b16 %v8255
        %v8445 = vunpack.c.l.b16 %v8268
        %v8446 = vunpack.c.l.b16 %v8277
        %v8447 = vunpack.c.l.b16 %v8290
        %v8448 = vunpack.c.l.b16 %v8299
        %v8449 = vunpack.c.l.b16 %v8312
        %v8450 = vunpack.c.l.b16 %v8321
        %v8451 = vunpack.c.l.b16 %v8334
        %v8452 = vunpack.c.l.b16 %v8343
        %v8453 = vunpack.c.l.b16 %v8356
        %v8454 = vunpack.c.l.b16 %v8365
        %v8455 = vunpack.c.l.b16 %v8378
        %v8456 = vunpack.c.l.b16 %v8387
        %v8457 = vunpack.c.l.b16 %v8400
        %v8458 = vunpack.c.l.b16 %v8409
        %v8459 = vpack.c.b16 %v8428, %v8427
        %v8460 = vpack.c.b16 %v8430, %v8429
        %v8461 = vpack.c.b16 %v8432, %v8431
        %v8462 = vpack.c.b16 %v8434, %v8433
        %v8463 = vpack.c.b16 %v8436, %v8435
        %v8464 = vpack.c.b16 %v8438, %v8437
        %v8465 = vpack.c.b16 %v8440, %v8439
        %v8466 = vpack.c.b16 %v8442, %v8441
        %v8467 = vpack.c.b16 %v8444, %v8443
        %v8468 = vpack.c.b16 %v8446, %v8445
        %v8469 = vpack.c.b16 %v8448, %v8447
        %v8470 = vpack.c.b16 %v8450, %v8449
        %v8471 = vpack.c.b16 %v8452, %v8451
        %v8472 = vpack.c.b16 %v8454, %v8453
        %v8473 = vpack.c.b16 %v8456, %v8455
        %v8474 = vpack.c.b16 %v8458, %v8457
        %v8507 = vunpack.c.l.b16 %v8411
        %v8508 = vunpack.c.l.b16 %v8412
        %v8509 = vunpack.c.l.b16 %v8413
        %v8510 = vunpack.c.l.b16 %v8414
        %v8511 = vunpack.c.l.b16 %v8415
        %v8512 = vunpack.c.l.b16 %v8416
        %v8513 = vunpack.c.l.b16 %v8417
        %v8514 = vunpack.c.l.b16 %v8418
        %v8515 = vunpack.c.l.b16 %v8419
        %v8516 = vunpack.c.l.b16 %v8420
        %v8517 = vunpack.c.l.b16 %v8421
        %v8518 = vunpack.c.l.b16 %v8422
        %v8519 = vunpack.c.l.b16 %v8423
        %v8520 = vunpack.c.l.b16 %v8424
        %v8521 = vunpack.c.l.b16 %v8425
        %v8522 = vunpack.c.l.b16 %v8426
        %v8523 = vpack.c.b16 %v8508, %v8507
        %v8524 = vpack.c.b16 %v8510, %v8509
        %v8525 = vpack.c.b16 %v8512, %v8511
        %v8526 = vpack.c.b16 %v8514, %v8513
        %v8527 = vpack.c.b16 %v8516, %v8515
        %v8528 = vpack.c.b16 %v8518, %v8517
        %v8529 = vpack.c.b16 %v8520, %v8519
        %v8530 = vpack.c.b16 %v8522, %v8521
        %8539 = vmatprep.subr.bf16.mxu0 0
        %8540 = vmatpush1.bf16.msra.mxu0 %v8523
        %8541 = vmatprep.subr.bf16.mxu0 0
        %8542 = vmatpush1.bf16.msra.mxu0 %v8524
        %8543 = vmatprep.subr.bf16.mxu0 0
        %8544 = vmatpush1.bf16.msra.mxu0 %v8525
        %8545 = vmatprep.subr.bf16.mxu0 0
        %8546 = vmatpush1.bf16.msra.mxu0 %v8526
        %8547 = vmatprep.subr.bf16.mxu0 0
        %8548 = vmatpush1.bf16.msra.mxu0 %v8527
        %8549 = vmatprep.subr.bf16.mxu0 0
        %8550 = vmatpush1.bf16.msra.mxu0 %v8528
        %8551 = vmatprep.subr.bf16.mxu0 0
        %8552 = vmatpush1.bf16.msra.mxu0 %v8529
        %8553 = vmatprep.subr.bf16.mxu0 0
        %8554 = vmatpush1.bf16.msra.mxu0 %v8530
        %8555 = vmatprep.subr.bf16.mxu0 0
        %8556 = vmatpush1.bf16.msra.mxu0 0
        %8557 = vmatprep.subr.bf16.mxu0 0
        %8558 = vmatpush1.bf16.msra.mxu0 0
        %8559 = vmatprep.subr.bf16.mxu0 0
        %8560 = vmatpush1.bf16.msra.mxu0 0
        %8561 = vmatprep.subr.bf16.mxu0 0
        %8562 = vmatpush1.bf16.msra.mxu0 0
        %8563 = vmatprep.subr.bf16.mxu0 0
        %8564 = vmatpush1.bf16.msra.mxu0 0
        %8565 = vmatprep.subr.bf16.mxu0 0
        %8566 = vmatpush1.bf16.msra.mxu0 0
        %8567 = vmatprep.subr.bf16.mxu0 0
        %8568 = vmatpush1.bf16.msra.mxu0 0
        %8569 = vmatprep.subr.bf16.mxu0 0
        %8570 = vmatpush1.bf16.msra.mxu0 0
        %8571 = vmatprep.mubr.bf16.mxu0 0
        %8572 = vmatmul.mubr.bf16.gmra.mrb[0].mxu0 %v8459
        %v8573 = vpop.f32.mrb[0].mxu0
        %v8574 = vadd.f32 0.0, %v8573
        %v8575 = vpop.f32.mrb[0].mxu0
        %v8576 = vpop.f32.mrb[0].mxu0
        %v8577 = vadd.f32 0.0, %v8576
        %v8578 = vpop.f32.mrb[0].mxu0
        %8579 = vmatprep.mubr.bf16.mxu0 0
        %8580 = vmatmul.mubr.bf16.gmra.mrb[0].mxu0 %v8460
        %v8581 = vpop.f32.mrb[0].mxu0
        %v8582 = vadd.f32 0.0, %v8581
        %v8583 = vpop.f32.mrb[0].mxu0
        %v8584 = vpop.f32.mrb[0].mxu0
        %v8585 = vadd.f32 0.0, %v8584
        %v8586 = vpop.f32.mrb[0].mxu0
        %8587 = vmatprep.mubr.bf16.mxu0 0
        %8588 = vmatmul.mubr.bf16.gmra.mrb[0].mxu0 %v8461
        %v8589 = vpop.f32.mrb[0].mxu0
        %v8590 = vadd.f32 0.0, %v8589
        %v8591 = vpop.f32.mrb[0].mxu0
        %v8592 = vpop.f32.mrb[0].mxu0
        %v8593 = vadd.f32 0.0, %v8592
        %v8594 = vpop.f32.mrb[0].mxu0
        %8595 = vmatprep.mubr.bf16.mxu0 0
        %8596 = vmatmul.mubr.bf16.gmra.mrb[0].mxu0 %v8462
        %v8597 = vpop.f32.mrb[0].mxu0
        %v8598 = vadd.f32 0.0, %v8597
        %v8599 = vpop.f32.mrb[0].mxu0
        %v8600 = vpop.f32.mrb[0].mxu0
        %v8601 = vadd.f32 0.0, %v8600
        %v8602 = vpop.f32.mrb[0].mxu0
        %8603 = vmatprep.mubr.bf16.mxu0 0
        %8604 = vmatmul.mubr.bf16.gmra.mrb[0].mxu0 %v8463
        %v8605 = vpop.f32.mrb[0].mxu0
        %v8606 = vadd.f32 0.0, %v8605
        %v8607 = vpop.f32.mrb[0].mxu0
        %v8608 = vpop.f32.mrb[0].mxu0
        %v8609 = vadd.f32 0.0, %v8608
        %v8610 = vpop.f32.mrb[0].mxu0
        %8611 = vmatprep.mubr.bf16.mxu0 0
        %8612 = vmatmul.mubr.bf16.gmra.mrb[0].mxu0 %v8464
        %v8613 = vpop.f32.mrb[0].mxu0
        %v8614 = vadd.f32 0.0, %v8613
        %v8615 = vpop.f32.mrb[0].mxu0
        %v8616 = vpop.f32.mrb[0].mxu0
        %v8617 = vadd.f32 0.0, %v8616
        %v8618 = vpop.f32.mrb[0].mxu0
        %8619 = vmatprep.mubr.bf16.mxu0 0
        %8620 = vmatmul.mubr.bf16.gmra.mrb[0].mxu0 %v8465
        %v8621 = vpop.f32.mrb[0].mxu0
        %v8622 = vadd.f32 0.0, %v8621
        %v8623 = vpop.f32.mrb[0].mxu0
        %v8624 = vpop.f32.mrb[0].mxu0
        %v8625 = vadd.f32 0.0, %v8624
        %v8626 = vpop.f32.mrb[0].mxu0
        %8627 = vmatprep.mubr.bf16.mxu0 0
        %8628 = vmatmul.mubr.bf16.gmra.mrb[0].mxu0 %v8466
        %v8629 = vpop.f32.mrb[0].mxu0
        %v8630 = vadd.f32 0.0, %v8629
        %v8631 = vpop.f32.mrb[0].mxu0
        %v8632 = vpop.f32.mrb[0].mxu0
        %v8633 = vadd.f32 0.0, %v8632
        %v8634 = vpop.f32.mrb[0].mxu0
        %8635 = vmatprep.mubr.bf16.mxu0 0
        %8636 = vmatmul.mubr.bf16.gmra.mrb[0].mxu0 %v8467
        %v8637 = vpop.f32.mrb[0].mxu0
        %v8638 = vadd.f32 0.0, %v8637
        %v8639 = vpop.f32.mrb[0].mxu0
        %v8640 = vpop.f32.mrb[0].mxu0
        %v8641 = vadd.f32 0.0, %v8640
        %v8642 = vpop.f32.mrb[0].mxu0
        %8643 = vmatprep.mubr.bf16.mxu0 0
        %8644 = vmatmul.mubr.bf16.gmra.mrb[0].mxu0 %v8468
        %v8645 = vpop.f32.mrb[0].mxu0
        %v8646 = vadd.f32 0.0, %v8645
        %v8647 = vpop.f32.mrb[0].mxu0
        %v8648 = vpop.f32.mrb[0].mxu0
        %v8649 = vadd.f32 0.0, %v8648
        %v8650 = vpop.f32.mrb[0].mxu0
        %8651 = vmatprep.mubr.bf16.mxu0 0
        %8652 = vmatmul.mubr.bf16.gmra.mrb[0].mxu0 %v8469
        %v8653 = vpop.f32.mrb[0].mxu0
        %v8654 = vadd.f32 0.0, %v8653
        %v8655 = vpop.f32.mrb[0].mxu0
        %v8656 = vpop.f32.mrb[0].mxu0
        %v8657 = vadd.f32 0.0, %v8656
        %v8658 = vpop.f32.mrb[0].mxu0
        %8659 = vmatprep.mubr.bf16.mxu0 0
        %8660 = vmatmul.mubr.bf16.gmra.mrb[0].mxu0 %v8470
        %v8661 = vpop.f32.mrb[0].mxu0
        %v8662 = vadd.f32 0.0, %v8661
        %v8663 = vpop.f32.mrb[0].mxu0
        %v8664 = vpop.f32.mrb[0].mxu0
        %v8665 = vadd.f32 0.0, %v8664
        %v8666 = vpop.f32.mrb[0].mxu0
        %8667 = vmatprep.mubr.bf16.mxu0 0
        %8668 = vmatmul.mubr.bf16.gmra.mrb[0].mxu0 %v8471
        %v8669 = vpop.f32.mrb[0].mxu0
        %v8670 = vadd.f32 0.0, %v8669
        %v8671 = vpop.f32.mrb[0].mxu0
        %v8672 = vpop.f32.mrb[0].mxu0
        %v8673 = vadd.f32 0.0, %v8672
        %v8674 = vpop.f32.mrb[0].mxu0
        %8675 = vmatprep.mubr.bf16.mxu0 0
        %8676 = vmatmul.mubr.bf16.gmra.mrb[0].mxu0 %v8472
        %v8677 = vpop.f32.mrb[0].mxu0
        %v8678 = vadd.f32 0.0, %v8677
        %v8679 = vpop.f32.mrb[0].mxu0
        %v8680 = vpop.f32.mrb[0].mxu0
        %v8681 = vadd.f32 0.0, %v8680
        %v8682 = vpop.f32.mrb[0].mxu0
        %8683 = vmatprep.mubr.bf16.mxu0 0
        %8684 = vmatmul.mubr.bf16.gmra.mrb[0].mxu0 %v8473
        %v8685 = vpop.f32.mrb[0].mxu0
        %v8686 = vadd.f32 0.0, %v8685
        %v8687 = vpop.f32.mrb[0].mxu0
        %v8688 = vpop.f32.mrb[0].mxu0
        %v8689 = vadd.f32 0.0, %v8688
        %v8690 = vpop.f32.mrb[0].mxu0
        %8691 = vmatprep.mubr.bf16.mxu0 0
        %8692 = vmatmul.mubr.bf16.gmra.mrb[0].mxu0 %v8474
        %v8693 = vpop.f32.mrb[0].mxu0
        %v8694 = vadd.f32 0.0, %v8693
        %v8695 = vpop.f32.mrb[0].mxu0
        %v8696 = vpop.f32.mrb[0].mxu0
        %v8697 = vadd.f32 0.0, %v8696
        %v8698 = vpop.f32.mrb[0].mxu0
        %8699 = vdwg.mxu0
        %v8700 = vadd.f32 %v7978, %v8574
        %v8701 = vadd.f32 %v7979, %v8577
        %v8702 = vadd.f32 %v7980, %v8582
        %v8703 = vadd.f32 %v7981, %v8585
        %v8704 = vadd.f32 %v7982, %v8590
        %v8705 = vadd.f32 %v7983, %v8593
        %v8706 = vadd.f32 %v7984, %v8598
        %v8707 = vadd.f32 %v7985, %v8601
        %v8708 = vadd.f32 %v7986, %v8606
        %v8709 = vadd.f32 %v7987, %v8609
        %v8710 = vadd.f32 %v7988, %v8614
        %v8711 = vadd.f32 %v7989, %v8617
        %v8712 = vadd.f32 %v7990, %v8622
        %v8713 = vadd.f32 %v7991, %v8625
        %v8714 = vadd.f32 %v7992, %v8630
        %v8715 = vadd.f32 %v7993, %v8633
        %v8716 = vadd.f32 %v7994, %v8638
        %v8717 = vadd.f32 %v7995, %v8641
        %v8718 = vadd.f32 %v7996, %v8646
        %v8719 = vadd.f32 %v7997, %v8649
        %v8720 = vadd.f32 %v7998, %v8654
        %v8721 = vadd.f32 %v7999, %v8657
        %v8722 = vadd.f32 %v8000, %v8662
        %v8723 = vadd.f32 %v8001, %v8665
        %v8724 = vadd.f32 %v8002, %v8670
        %v8725 = vadd.f32 %v8003, %v8673
        %v8726 = vadd.f32 %v8004, %v8678
        %v8727 = vadd.f32 %v8005, %v8681
        %v8728 = vadd.f32 %v8006, %v8686
        %v8729 = vadd.f32 %v8007, %v8689
        %v8730 = vadd.f32 %v8008, %v8694
        %v8731 = vadd.f32 %v8009, %v8697
        %s8732 = scalar_lea.vmem [#allocation4], 256
        %v8733 = vld [vmem:[%s8732] sm:$0xf]
        %v8734 = vld [vmem:[%s8732 + $0x4] sm:$0xf]
        %v8735 = vld [vmem:[%s8732 + $0x8] sm:$0xf]
        %v8736 = vld [vmem:[%s8732 + $0xc] sm:$0xf]
        %v8737 = vld [vmem:[%s8732 + $0x10] sm:$0xf]
        %v8738 = vld [vmem:[%s8732 + $0x14] sm:$0xf]
        %v8739 = vld [vmem:[%s8732 + $0x18] sm:$0xf]
        %v8740 = vld [vmem:[%s8732 + $0x1c] sm:$0xf]
        %v8741 = vld [vmem:[%s8732 + $0x20] sm:$0xf]
        %v8742 = vld [vmem:[%s8732 + $0x24] sm:$0xf]
        %v8743 = vld [vmem:[%s8732 + $0x28] sm:$0xf]
        %v8744 = vld [vmem:[%s8732 + $0x2c] sm:$0xf]
        %v8745 = vld [vmem:[%s8732 + $0x30] sm:$0xf]
        %v8746 = vld [vmem:[%s8732 + $0x34] sm:$0xf]
        %v8747 = vld [vmem:[%s8732 + $0x38] sm:$0xf]
        %v8748 = vld [vmem:[%s8732 + $0x3c] sm:$0xf]
        %v8781 = vunpack.c.l.b16 %v8011
        %v8782 = vunpack.c.l.b16 %v8012
        %v8783 = vunpack.c.l.b16 %v8014
        %v8784 = vunpack.c.l.b16 %v8015
        %v8785 = vunpack.c.l.b16 %v8017
        %v8786 = vunpack.c.l.b16 %v8018
        %v8787 = vunpack.c.l.b16 %v8020
        %v8788 = vunpack.c.l.b16 %v8021
        %v8789 = vunpack.c.l.b16 %v8023
        %v8790 = vunpack.c.l.b16 %v8024
        %v8791 = vunpack.c.l.b16 %v8026
        %v8792 = vunpack.c.l.b16 %v8027
        %v8793 = vunpack.c.l.b16 %v8029
        %v8794 = vunpack.c.l.b16 %v8030
        %v8795 = vunpack.c.l.b16 %v8032
        %v8796 = vunpack.c.l.b16 %v8033
        %v8797 = vunpack.c.l.b16 %v8035
        %v8798 = vunpack.c.l.b16 %v8036
        %v8799 = vunpack.c.l.b16 %v8038
        %v8800 = vunpack.c.l.b16 %v8039
        %v8801 = vunpack.c.l.b16 %v8041
        %v8802 = vunpack.c.l.b16 %v8042
        %v8803 = vunpack.c.l.b16 %v8044
        %v8804 = vunpack.c.l.b16 %v8045
        %v8805 = vunpack.c.l.b16 %v8047
        %v8806 = vunpack.c.l.b16 %v8048
        %v8807 = vunpack.c.l.b16 %v8050
        %v8808 = vunpack.c.l.b16 %v8051
        %v8809 = vunpack.c.l.b16 %v8053
        %v8810 = vunpack.c.l.b16 %v8054
        %v8811 = vunpack.c.l.b16 %v8056
        %v8812 = vunpack.c.l.b16 %v8057
        %v8813 = vpack.c.b16 %v8782, %v8781
        %v8814 = vpack.c.b16 %v8784, %v8783
        %v8815 = vpack.c.b16 %v8786, %v8785
        %v8816 = vpack.c.b16 %v8788, %v8787
        %v8817 = vpack.c.b16 %v8790, %v8789
        %v8818 = vpack.c.b16 %v8792, %v8791
        %v8819 = vpack.c.b16 %v8794, %v8793
        %v8820 = vpack.c.b16 %v8796, %v8795
        %v8821 = vpack.c.b16 %v8798, %v8797
        %v8822 = vpack.c.b16 %v8800, %v8799
        %v8823 = vpack.c.b16 %v8802, %v8801
        %v8824 = vpack.c.b16 %v8804, %v8803
        %v8825 = vpack.c.b16 %v8806, %v8805
        %v8826 = vpack.c.b16 %v8808, %v8807
        %v8827 = vpack.c.b16 %v8810, %v8809
        %v8828 = vpack.c.b16 %v8812, %v8811
        %v8861 = vunpack.c.l.b16 %v8733
        %v8862 = vunpack.c.l.b16 %v8734
        %v8863 = vunpack.c.l.b16 %v8735
        %v8864 = vunpack.c.l.b16 %v8736
        %v8865 = vunpack.c.l.b16 %v8737
        %v8866 = vunpack.c.l.b16 %v8738
        %v8867 = vunpack.c.l.b16 %v8739
        %v8868 = vunpack.c.l.b16 %v8740
        %v8869 = vunpack.c.l.b16 %v8741
        %v8870 = vunpack.c.l.b16 %v8742
        %v8871 = vunpack.c.l.b16 %v8743
        %v8872 = vunpack.c.l.b16 %v8744
        %v8873 = vunpack.c.l.b16 %v8745
        %v8874 = vunpack.c.l.b16 %v8746
        %v8875 = vunpack.c.l.b16 %v8747
        %v8876 = vunpack.c.l.b16 %v8748
        %v8877 = vpack.c.b16 %v8862, %v8861
        %v8878 = vpack.c.b16 %v8864, %v8863
        %v8879 = vpack.c.b16 %v8866, %v8865
        %v8880 = vpack.c.b16 %v8868, %v8867
        %v8881 = vpack.c.b16 %v8870, %v8869
        %v8882 = vpack.c.b16 %v8872, %v8871
        %v8883 = vpack.c.b16 %v8874, %v8873
        %v8884 = vpack.c.b16 %v8876, %v8875
        %8893 = vmatprep.subr.bf16.mxu0 0
        %8894 = vmatpush1.bf16.msra.mxu0 %v8877
        %8895 = vmatprep.subr.bf16.mxu0 0
        %8896 = vmatpush1.bf16.msra.mxu0 %v8878
        %8897 = vmatprep.subr.bf16.mxu0 0
        %8898 = vmatpush1.bf16.msra.mxu0 %v8879
        %8899 = vmatprep.subr.bf16.mxu0 0
        %8900 = vmatpush1.bf16.msra.mxu0 %v8880
        %8901 = vmatprep.subr.bf16.mxu0 0
        %8902 = vmatpush1.bf16.msra.mxu0 %v8881
        %8903 = vmatprep.subr.bf16.mxu0 0
        %8904 = vmatpush1.bf16.msra.mxu0 %v8882
        %8905 = vmatprep.subr.bf16.mxu0 0
        %8906 = vmatpush1.bf16.msra.mxu0 %v8883
        %8907 = vmatprep.subr.bf16.mxu0 0
        %8908 = vmatpush1.bf16.msra.mxu0 %v8884
        %8909 = vmatprep.subr.bf16.mxu0 0
        %8910 = vmatpush1.bf16.msra.mxu0 0
        %8911 = vmatprep.subr.bf16.mxu0 0
        %8912 = vmatpush1.bf16.msra.mxu0 0
        %8913 = vmatprep.subr.bf16.mxu0 0
        %8914 = vmatpush1.bf16.msra.mxu0 0
        %8915 = vmatprep.subr.bf16.mxu0 0
        %8916 = vmatpush1.bf16.msra.mxu0 0
        %8917 = vmatprep.subr.bf16.mxu0 0
        %8918 = vmatpush1.bf16.msra.mxu0 0
        %8919 = vmatprep.subr.bf16.mxu0 0
        %8920 = vmatpush1.bf16.msra.mxu0 0
        %8921 = vmatprep.subr.bf16.mxu0 0
        %8922 = vmatpush1.bf16.msra.mxu0 0
        %8923 = vmatprep.subr.bf16.mxu0 0
        %8924 = vmatpush1.bf16.msra.mxu0 0
        %8925 = vmatprep.mubr.bf16.mxu0 0
        %8926 = vmatmul.mubr.bf16.gmra.mrb[0].mxu0 %v8813
        %v8927 = vpop.f32.mrb[0].mxu0
        %v8928 = vadd.f32 0.0, %v8927
        %v8929 = vpop.f32.mrb[0].mxu0
        %v8930 = vpop.f32.mrb[0].mxu0
        %v8931 = vadd.f32 0.0, %v8930
        %v8932 = vpop.f32.mrb[0].mxu0
        %8933 = vmatprep.mubr.bf16.mxu0 0
        %8934 = vmatmul.mubr.bf16.gmra.mrb[0].mxu0 %v8814
        %v8935 = vpop.f32.mrb[0].mxu0
        %v8936 = vadd.f32 0.0, %v8935
        %v8937 = vpop.f32.mrb[0].mxu0
        %v8938 = vpop.f32.mrb[0].mxu0
        %v8939 = vadd.f32 0.0, %v8938
        %v8940 = vpop.f32.mrb[0].mxu0
        %8941 = vmatprep.mubr.bf16.mxu0 0
        %8942 = vmatmul.mubr.bf16.gmra.mrb[0].mxu0 %v8815
        %v8943 = vpop.f32.mrb[0].mxu0
        %v8944 = vadd.f32 0.0, %v8943
        %v8945 = vpop.f32.mrb[0].mxu0
        %v8946 = vpop.f32.mrb[0].mxu0
        %v8947 = vadd.f32 0.0, %v8946
        %v8948 = vpop.f32.mrb[0].mxu0
        %8949 = vmatprep.mubr.bf16.mxu0 0
        %8950 = vmatmul.mubr.bf16.gmra.mrb[0].mxu0 %v8816
        %v8951 = vpop.f32.mrb[0].mxu0
        %v8952 = vadd.f32 0.0, %v8951
        %v8953 = vpop.f32.mrb[0].mxu0
        %v8954 = vpop.f32.mrb[0].mxu0
        %v8955 = vadd.f32 0.0, %v8954
        %v8956 = vpop.f32.mrb[0].mxu0
        %8957 = vmatprep.mubr.bf16.mxu0 0
        %8958 = vmatmul.mubr.bf16.gmra.mrb[0].mxu0 %v8817
        %v8959 = vpop.f32.mrb[0].mxu0
        %v8960 = vadd.f32 0.0, %v8959
        %v8961 = vpop.f32.mrb[0].mxu0
        %v8962 = vpop.f32.mrb[0].mxu0
        %v8963 = vadd.f32 0.0, %v8962
        %v8964 = vpop.f32.mrb[0].mxu0
        %8965 = vmatprep.mubr.bf16.mxu0 0
        %8966 = vmatmul.mubr.bf16.gmra.mrb[0].mxu0 %v8818
        %v8967 = vpop.f32.mrb[0].mxu0
        %v8968 = vadd.f32 0.0, %v8967
        %v8969 = vpop.f32.mrb[0].mxu0
        %v8970 = vpop.f32.mrb[0].mxu0
        %v8971 = vadd.f32 0.0, %v8970
        %v8972 = vpop.f32.mrb[0].mxu0
        %8973 = vmatprep.mubr.bf16.mxu0 0
        %8974 = vmatmul.mubr.bf16.gmra.mrb[0].mxu0 %v8819
        %v8975 = vpop.f32.mrb[0].mxu0
        %v8976 = vadd.f32 0.0, %v8975
        %v8977 = vpop.f32.mrb[0].mxu0
        %v8978 = vpop.f32.mrb[0].mxu0
        %v8979 = vadd.f32 0.0, %v8978
        %v8980 = vpop.f32.mrb[0].mxu0
        %8981 = vmatprep.mubr.bf16.mxu0 0
        %8982 = vmatmul.mubr.bf16.gmra.mrb[0].mxu0 %v8820
        %v8983 = vpop.f32.mrb[0].mxu0
        %v8984 = vadd.f32 0.0, %v8983
        %v8985 = vpop.f32.mrb[0].mxu0
        %v8986 = vpop.f32.mrb[0].mxu0
        %v8987 = vadd.f32 0.0, %v8986
        %v8988 = vpop.f32.mrb[0].mxu0
        %8989 = vmatprep.mubr.bf16.mxu0 0
        %8990 = vmatmul.mubr.bf16.gmra.mrb[0].mxu0 %v8821
        %v8991 = vpop.f32.mrb[0].mxu0
        %v8992 = vadd.f32 0.0, %v8991
        %v8993 = vpop.f32.mrb[0].mxu0
        %v8994 = vpop.f32.mrb[0].mxu0
        %v8995 = vadd.f32 0.0, %v8994
        %v8996 = vpop.f32.mrb[0].mxu0
        %8997 = vmatprep.mubr.bf16.mxu0 0
        %8998 = vmatmul.mubr.bf16.gmra.mrb[0].mxu0 %v8822
        %v8999 = vpop.f32.mrb[0].mxu0
        %v9000 = vadd.f32 0.0, %v8999
        %v9001 = vpop.f32.mrb[0].mxu0
        %v9002 = vpop.f32.mrb[0].mxu0
        %v9003 = vadd.f32 0.0, %v9002
        %v9004 = vpop.f32.mrb[0].mxu0
        %9005 = vmatprep.mubr.bf16.mxu0 0
        %9006 = vmatmul.mubr.bf16.gmra.mrb[0].mxu0 %v8823
        %v9007 = vpop.f32.mrb[0].mxu0
        %v9008 = vadd.f32 0.0, %v9007
        %v9009 = vpop.f32.mrb[0].mxu0
        %v9010 = vpop.f32.mrb[0].mxu0
        %v9011 = vadd.f32 0.0, %v9010
        %v9012 = vpop.f32.mrb[0].mxu0
        %9013 = vmatprep.mubr.bf16.mxu0 0
        %9014 = vmatmul.mubr.bf16.gmra.mrb[0].mxu0 %v8824
        %v9015 = vpop.f32.mrb[0].mxu0
        %v9016 = vadd.f32 0.0, %v9015
        %v9017 = vpop.f32.mrb[0].mxu0
        %v9018 = vpop.f32.mrb[0].mxu0
        %v9019 = vadd.f32 0.0, %v9018
        %v9020 = vpop.f32.mrb[0].mxu0
        %9021 = vmatprep.mubr.bf16.mxu0 0
        %9022 = vmatmul.mubr.bf16.gmra.mrb[0].mxu0 %v8825
        %v9023 = vpop.f32.mrb[0].mxu0
        %v9024 = vadd.f32 0.0, %v9023
        %v9025 = vpop.f32.mrb[0].mxu0
        %v9026 = vpop.f32.mrb[0].mxu0
        %v9027 = vadd.f32 0.0, %v9026
        %v9028 = vpop.f32.mrb[0].mxu0
        %9029 = vmatprep.mubr.bf16.mxu0 0
        %9030 = vmatmul.mubr.bf16.gmra.mrb[0].mxu0 %v8826
        %v9031 = vpop.f32.mrb[0].mxu0
        %v9032 = vadd.f32 0.0, %v9031
        %v9033 = vpop.f32.mrb[0].mxu0
        %v9034 = vpop.f32.mrb[0].mxu0
        %v9035 = vadd.f32 0.0, %v9034
        %v9036 = vpop.f32.mrb[0].mxu0
        %9037 = vmatprep.mubr.bf16.mxu0 0
        %9038 = vmatmul.mubr.bf16.gmra.mrb[0].mxu0 %v8827
        %v9039 = vpop.f32.mrb[0].mxu0
        %v9040 = vadd.f32 0.0, %v9039
        %v9041 = vpop.f32.mrb[0].mxu0
        %v9042 = vpop.f32.mrb[0].mxu0
        %v9043 = vadd.f32 0.0, %v9042
        %v9044 = vpop.f32.mrb[0].mxu0
        %9045 = vmatprep.mubr.bf16.mxu0 0
        %9046 = vmatmul.mubr.bf16.gmra.mrb[0].mxu0 %v8828
        %v9047 = vpop.f32.mrb[0].mxu0
        %v9048 = vadd.f32 0.0, %v9047
        %v9049 = vpop.f32.mrb[0].mxu0
        %v9050 = vpop.f32.mrb[0].mxu0
        %v9051 = vadd.f32 0.0, %v9050
        %v9052 = vpop.f32.mrb[0].mxu0
        %9053 = vdwg.mxu0
        %v9054 = vadd.f32 %v8700, %v8928
        %v9055 = vadd.f32 %v8701, %v8931
        %v9056 = vadd.f32 %v8702, %v8936
        %v9057 = vadd.f32 %v8703, %v8939
        %v9058 = vadd.f32 %v8704, %v8944
        %v9059 = vadd.f32 %v8705, %v8947
        %v9060 = vadd.f32 %v8706, %v8952
        %v9061 = vadd.f32 %v8707, %v8955
        %v9062 = vadd.f32 %v8708, %v8960
        %v9063 = vadd.f32 %v8709, %v8963
        %v9064 = vadd.f32 %v8710, %v8968
        %v9065 = vadd.f32 %v8711, %v8971
        %v9066 = vadd.f32 %v8712, %v8976
        %v9067 = vadd.f32 %v8713, %v8979
        %v9068 = vadd.f32 %v8714, %v8984
        %v9069 = vadd.f32 %v8715, %v8987
        %v9070 = vadd.f32 %v8716, %v8992
        %v9071 = vadd.f32 %v8717, %v8995
        %v9072 = vadd.f32 %v8718, %v9000
        %v9073 = vadd.f32 %v8719, %v9003
        %v9074 = vadd.f32 %v8720, %v9008
        %v9075 = vadd.f32 %v8721, %v9011
        %v9076 = vadd.f32 %v8722, %v9016
        %v9077 = vadd.f32 %v8723, %v9019
        %v9078 = vadd.f32 %v8724, %v9024
        %v9079 = vadd.f32 %v8725, %v9027
        %v9080 = vadd.f32 %v8726, %v9032
        %v9081 = vadd.f32 %v8727, %v9035
        %v9082 = vadd.f32 %v8728, %v9040
        %v9083 = vadd.f32 %v8729, %v9043
        %v9084 = vadd.f32 %v8730, %v9048
        %v9085 = vadd.f32 %v8731, %v9051
        %v9086 = vld [vmem:[%s6212 + $0x8] sm:$0xf]
        %v9087 = vld [vmem:[%s6212 + $0xc] sm:$0xf]
        %v9088 = vld [vmem:[%s6212 + $0x10] sm:$0x1]
        %v9089 = vld [vmem:[%s6212 + $0x1c] sm:$0xf]
        %v9090 = vld [vmem:[%s6212 + $0x20] sm:$0xf]
        %v9091 = vld [vmem:[%s6212 + $0x24] sm:$0x1]
        %v9092 = vld [vmem:[%s6212 + $0x30] sm:$0xf]
        %v9093 = vld [vmem:[%s6212 + $0x34] sm:$0xf]
        %v9094 = vld [vmem:[%s6212 + $0x38] sm:$0x1]
        %v9095 = vld [vmem:[%s6212 + $0x44] sm:$0xf]
        %v9096 = vld [vmem:[%s6212 + $0x48] sm:$0xf]
        %v9097 = vld [vmem:[%s6212 + $0x4c] sm:$0x1]
        %v9098 = vld [vmem:[%s6212 + $0x58] sm:$0xf]
        %v9099 = vld [vmem:[%s6212 + $0x5c] sm:$0xf]
        %v9100 = vld [vmem:[%s6212 + $0x60] sm:$0x1]
        %v9101 = vld [vmem:[%s6212 + $0x6c] sm:$0xf]
        %v9102 = vld [vmem:[%s6212 + $0x70] sm:$0xf]
        %v9103 = vld [vmem:[%s6212 + $0x74] sm:$0x1]
        %v9104 = vld [vmem:[%s6212 + $0x80] sm:$0xf]
        %v9105 = vld [vmem:[%s6212 + $0x84] sm:$0xf]
        %v9106 = vld [vmem:[%s6212 + $0x88] sm:$0x1]
        %v9107 = vld [vmem:[%s6212 + $0x94] sm:$0xf]
        %v9108 = vld [vmem:[%s6212 + $0x98] sm:$0xf]
        %v9109 = vld [vmem:[%s6212 + $0x9c] sm:$0x1]
        %v9110 = vld [vmem:[%s6212 + $0xa8] sm:$0xf]
        %v9111 = vld [vmem:[%s6212 + $0xac] sm:$0xf]
        %v9112 = vld [vmem:[%s6212 + $0xb0] sm:$0x1]
        %v9113 = vld [vmem:[%s6212 + $0xbc] sm:$0xf]
        %v9114 = vld [vmem:[%s6212 + $0xc0] sm:$0xf]
        %v9115 = vld [vmem:[%s6212 + $0xc4] sm:$0x1]
        %v9116 = vld [vmem:[%s6212 + $0xd0] sm:$0xf]
        %v9117 = vld [vmem:[%s6212 + $0xd4] sm:$0xf]
        %v9118 = vld [vmem:[%s6212 + $0xd8] sm:$0x1]
        %v9119 = vld [vmem:[%s6212 + $0xe4] sm:$0xf]
        %v9120 = vld [vmem:[%s6212 + $0xe8] sm:$0xf]
        %v9121 = vld [vmem:[%s6212 + $0xec] sm:$0x1]
        %v9122 = vld [vmem:[%s6212 + $0xf8] sm:$0xf]
        %v9123 = vld [vmem:[%s6212 + $0xfc] sm:$0xf]
        %v9124 = vld [vmem:[%s6212 + $0x100] sm:$0x1]
        %v9125 = vld [vmem:[%s6212 + $0x10c] sm:$0xf]
        %v9126 = vld [vmem:[%s6212 + $0x110] sm:$0xf]
        %v9127 = vld [vmem:[%s6212 + $0x114] sm:$0x1]
        %v9128 = vld [vmem:[%s6212 + $0x120] sm:$0xf]
        %v9129 = vld [vmem:[%s6212 + $0x124] sm:$0xf]
        %v9130 = vld [vmem:[%s6212 + $0x128] sm:$0x1]
        %v9131 = vld [vmem:[%s6212 + $0x134] sm:$0xf]
        %v9132 = vld [vmem:[%s6212 + $0x138] sm:$0xf]
        %v9133 = vld [vmem:[%s6212 + $0x13c] sm:$0x1]
        %v9135 = vshrl.u32 %v9086, 16
        %v9137 = vrot.slane %v9135, 4
        %v9138 = vshll.u32 %v9086, 16
        %v9140 = vrot.slane %v9138, 5
        %v9141 = vor.u32 %v9137, %v9140
        %v9142 = vrot.slane %v9141, 4
        %v9144 = vshll.u32 %v9087, 16
        %v9146 = vrot.slane %v9144, 5
        %v9147 = vsel %vm1444, %v9142, %v9146
        %v9148 = vshrl.u32 %v9087, 16
        %v9150 = vrot.slane %v9148, 4
        %v9151 = vor.u32 %v9150, %v9146
        %v9152 = vrot.slane %v9151, 4
        %v9154 = vshll.u32 %v9088, 16
        %v9156 = vrot.slane %v9154, 5
        %v9157 = vsel %vm1444, %v9152, %v9156
        %v9159 = vshrl.u32 %v9089, 16
        %v9161 = vrot.slane %v9159, 4
        %v9162 = vshll.u32 %v9089, 16
        %v9164 = vrot.slane %v9162, 5
        %v9165 = vor.u32 %v9161, %v9164
        %v9166 = vrot.slane %v9165, 4
        %v9168 = vshll.u32 %v9090, 16
        %v9170 = vrot.slane %v9168, 5
        %v9171 = vsel %vm1444, %v9166, %v9170
        %v9172 = vshrl.u32 %v9090, 16
        %v9174 = vrot.slane %v9172, 4
        %v9175 = vor.u32 %v9174, %v9170
        %v9176 = vrot.slane %v9175, 4
        %v9178 = vshll.u32 %v9091, 16
        %v9180 = vrot.slane %v9178, 5
        %v9181 = vsel %vm1444, %v9176, %v9180
        %v9183 = vshrl.u32 %v9092, 16
        %v9185 = vrot.slane %v9183, 4
        %v9186 = vshll.u32 %v9092, 16
        %v9188 = vrot.slane %v9186, 5
        %v9189 = vor.u32 %v9185, %v9188
        %v9190 = vrot.slane %v9189, 4
        %v9192 = vshll.u32 %v9093, 16
        %v9194 = vrot.slane %v9192, 5
        %v9195 = vsel %vm1444, %v9190, %v9194
        %v9196 = vshrl.u32 %v9093, 16
        %v9198 = vrot.slane %v9196, 4
        %v9199 = vor.u32 %v9198, %v9194
        %v9200 = vrot.slane %v9199, 4
        %v9202 = vshll.u32 %v9094, 16
        %v9204 = vrot.slane %v9202, 5
        %v9205 = vsel %vm1444, %v9200, %v9204
        %v9207 = vshrl.u32 %v9095, 16
        %v9209 = vrot.slane %v9207, 4
        %v9210 = vshll.u32 %v9095, 16
        %v9212 = vrot.slane %v9210, 5
        %v9213 = vor.u32 %v9209, %v9212
        %v9214 = vrot.slane %v9213, 4
        %v9216 = vshll.u32 %v9096, 16
        %v9218 = vrot.slane %v9216, 5
        %v9219 = vsel %vm1444, %v9214, %v9218
        %v9220 = vshrl.u32 %v9096, 16
        %v9222 = vrot.slane %v9220, 4
        %v9223 = vor.u32 %v9222, %v9218
        %v9224 = vrot.slane %v9223, 4
        %v9226 = vshll.u32 %v9097, 16
        %v9228 = vrot.slane %v9226, 5
        %v9229 = vsel %vm1444, %v9224, %v9228
        %v9231 = vshrl.u32 %v9098, 16
        %v9233 = vrot.slane %v9231, 4
        %v9234 = vshll.u32 %v9098, 16
        %v9236 = vrot.slane %v9234, 5
        %v9237 = vor.u32 %v9233, %v9236
        %v9238 = vrot.slane %v9237, 4
        %v9240 = vshll.u32 %v9099, 16
        %v9242 = vrot.slane %v9240, 5
        %v9243 = vsel %vm1444, %v9238, %v9242
        %v9244 = vshrl.u32 %v9099, 16
        %v9246 = vrot.slane %v9244, 4
        %v9247 = vor.u32 %v9246, %v9242
        %v9248 = vrot.slane %v9247, 4
        %v9250 = vshll.u32 %v9100, 16
        %v9252 = vrot.slane %v9250, 5
        %v9253 = vsel %vm1444, %v9248, %v9252
        %v9255 = vshrl.u32 %v9101, 16
        %v9257 = vrot.slane %v9255, 4
        %v9258 = vshll.u32 %v9101, 16
        %v9260 = vrot.slane %v9258, 5
        %v9261 = vor.u32 %v9257, %v9260
        %v9262 = vrot.slane %v9261, 4
        %v9264 = vshll.u32 %v9102, 16
        %v9266 = vrot.slane %v9264, 5
        %v9267 = vsel %vm1444, %v9262, %v9266
        %v9268 = vshrl.u32 %v9102, 16
        %v9270 = vrot.slane %v9268, 4
        %v9271 = vor.u32 %v9270, %v9266
        %v9272 = vrot.slane %v9271, 4
        %v9274 = vshll.u32 %v9103, 16
        %v9276 = vrot.slane %v9274, 5
        %v9277 = vsel %vm1444, %v9272, %v9276
        %v9279 = vshrl.u32 %v9104, 16
        %v9281 = vrot.slane %v9279, 4
        %v9282 = vshll.u32 %v9104, 16
        %v9284 = vrot.slane %v9282, 5
        %v9285 = vor.u32 %v9281, %v9284
        %v9286 = vrot.slane %v9285, 4
        %v9288 = vshll.u32 %v9105, 16
        %v9290 = vrot.slane %v9288, 5
        %v9291 = vsel %vm1444, %v9286, %v9290
        %v9292 = vshrl.u32 %v9105, 16
        %v9294 = vrot.slane %v9292, 4
        %v9295 = vor.u32 %v9294, %v9290
        %v9296 = vrot.slane %v9295, 4
        %v9298 = vshll.u32 %v9106, 16
        %v9300 = vrot.slane %v9298, 5
        %v9301 = vsel %vm1444, %v9296, %v9300
        %v9303 = vshrl.u32 %v9107, 16
        %v9305 = vrot.slane %v9303, 4
        %v9306 = vshll.u32 %v9107, 16
        %v9308 = vrot.slane %v9306, 5
        %v9309 = vor.u32 %v9305, %v9308
        %v9310 = vrot.slane %v9309, 4
        %v9312 = vshll.u32 %v9108, 16
        %v9314 = vrot.slane %v9312, 5
        %v9315 = vsel %vm1444, %v9310, %v9314
        %v9316 = vshrl.u32 %v9108, 16
        %v9318 = vrot.slane %v9316, 4
        %v9319 = vor.u32 %v9318, %v9314
        %v9320 = vrot.slane %v9319, 4
        %v9322 = vshll.u32 %v9109, 16
        %v9324 = vrot.slane %v9322, 5
        %v9325 = vsel %vm1444, %v9320, %v9324
        %v9327 = vshrl.u32 %v9110, 16
        %v9329 = vrot.slane %v9327, 4
        %v9330 = vshll.u32 %v9110, 16
        %v9332 = vrot.slane %v9330, 5
        %v9333 = vor.u32 %v9329, %v9332
        %v9334 = vrot.slane %v9333, 4
        %v9336 = vshll.u32 %v9111, 16
        %v9338 = vrot.slane %v9336, 5
        %v9339 = vsel %vm1444, %v9334, %v9338
        %v9340 = vshrl.u32 %v9111, 16
        %v9342 = vrot.slane %v9340, 4
        %v9343 = vor.u32 %v9342, %v9338
        %v9344 = vrot.slane %v9343, 4
        %v9346 = vshll.u32 %v9112, 16
        %v9348 = vrot.slane %v9346, 5
        %v9349 = vsel %vm1444, %v9344, %v9348
        %v9351 = vshrl.u32 %v9113, 16
        %v9353 = vrot.slane %v9351, 4
        %v9354 = vshll.u32 %v9113, 16
        %v9356 = vrot.slane %v9354, 5
        %v9357 = vor.u32 %v9353, %v9356
        %v9358 = vrot.slane %v9357, 4
        %v9360 = vshll.u32 %v9114, 16
        %v9362 = vrot.slane %v9360, 5
        %v9363 = vsel %vm1444, %v9358, %v9362
        %v9364 = vshrl.u32 %v9114, 16
        %v9366 = vrot.slane %v9364, 4
        %v9367 = vor.u32 %v9366, %v9362
        %v9368 = vrot.slane %v9367, 4
        %v9370 = vshll.u32 %v9115, 16
        %v9372 = vrot.slane %v9370, 5
        %v9373 = vsel %vm1444, %v9368, %v9372
        %v9375 = vshrl.u32 %v9116, 16
        %v9377 = vrot.slane %v9375, 4
        %v9378 = vshll.u32 %v9116, 16
        %v9380 = vrot.slane %v9378, 5
        %v9381 = vor.u32 %v9377, %v9380
        %v9382 = vrot.slane %v9381, 4
        %v9384 = vshll.u32 %v9117, 16
        %v9386 = vrot.slane %v9384, 5
        %v9387 = vsel %vm1444, %v9382, %v9386
        %v9388 = vshrl.u32 %v9117, 16
        %v9390 = vrot.slane %v9388, 4
        %v9391 = vor.u32 %v9390, %v9386
        %v9392 = vrot.slane %v9391, 4
        %v9394 = vshll.u32 %v9118, 16
        %v9396 = vrot.slane %v9394, 5
        %v9397 = vsel %vm1444, %v9392, %v9396
        %v9399 = vshrl.u32 %v9119, 16
        %v9401 = vrot.slane %v9399, 4
        %v9402 = vshll.u32 %v9119, 16
        %v9404 = vrot.slane %v9402, 5
        %v9405 = vor.u32 %v9401, %v9404
        %v9406 = vrot.slane %v9405, 4
        %v9408 = vshll.u32 %v9120, 16
        %v9410 = vrot.slane %v9408, 5
        %v9411 = vsel %vm1444, %v9406, %v9410
        %v9412 = vshrl.u32 %v9120, 16
        %v9414 = vrot.slane %v9412, 4
        %v9415 = vor.u32 %v9414, %v9410
        %v9416 = vrot.slane %v9415, 4
        %v9418 = vshll.u32 %v9121, 16
        %v9420 = vrot.slane %v9418, 5
        %v9421 = vsel %vm1444, %v9416, %v9420
        %v9423 = vshrl.u32 %v9122, 16
        %v9425 = vrot.slane %v9423, 4
        %v9426 = vshll.u32 %v9122, 16
        %v9428 = vrot.slane %v9426, 5
        %v9429 = vor.u32 %v9425, %v9428
        %v9430 = vrot.slane %v9429, 4
        %v9432 = vshll.u32 %v9123, 16
        %v9434 = vrot.slane %v9432, 5
        %v9435 = vsel %vm1444, %v9430, %v9434
        %v9436 = vshrl.u32 %v9123, 16
        %v9438 = vrot.slane %v9436, 4
        %v9439 = vor.u32 %v9438, %v9434
        %v9440 = vrot.slane %v9439, 4
        %v9442 = vshll.u32 %v9124, 16
        %v9444 = vrot.slane %v9442, 5
        %v9445 = vsel %vm1444, %v9440, %v9444
        %v9447 = vshrl.u32 %v9125, 16
        %v9449 = vrot.slane %v9447, 4
        %v9450 = vshll.u32 %v9125, 16
        %v9452 = vrot.slane %v9450, 5
        %v9453 = vor.u32 %v9449, %v9452
        %v9454 = vrot.slane %v9453, 4
        %v9456 = vshll.u32 %v9126, 16
        %v9458 = vrot.slane %v9456, 5
        %v9459 = vsel %vm1444, %v9454, %v9458
        %v9460 = vshrl.u32 %v9126, 16
        %v9462 = vrot.slane %v9460, 4
        %v9463 = vor.u32 %v9462, %v9458
        %v9464 = vrot.slane %v9463, 4
        %v9466 = vshll.u32 %v9127, 16
        %v9468 = vrot.slane %v9466, 5
        %v9469 = vsel %vm1444, %v9464, %v9468
        %v9471 = vshrl.u32 %v9128, 16
        %v9473 = vrot.slane %v9471, 4
        %v9474 = vshll.u32 %v9128, 16
        %v9476 = vrot.slane %v9474, 5
        %v9477 = vor.u32 %v9473, %v9476
        %v9478 = vrot.slane %v9477, 4
        %v9480 = vshll.u32 %v9129, 16
        %v9482 = vrot.slane %v9480, 5
        %v9483 = vsel %vm1444, %v9478, %v9482
        %v9484 = vshrl.u32 %v9129, 16
        %v9486 = vrot.slane %v9484, 4
        %v9487 = vor.u32 %v9486, %v9482
        %v9488 = vrot.slane %v9487, 4
        %v9490 = vshll.u32 %v9130, 16
        %v9492 = vrot.slane %v9490, 5
        %v9493 = vsel %vm1444, %v9488, %v9492
        %v9495 = vshrl.u32 %v9131, 16
        %v9497 = vrot.slane %v9495, 4
        %v9498 = vshll.u32 %v9131, 16
        %v9500 = vrot.slane %v9498, 5
        %v9501 = vor.u32 %v9497, %v9500
        %v9502 = vrot.slane %v9501, 4
        %v9504 = vshll.u32 %v9132, 16
        %v9506 = vrot.slane %v9504, 5
        %v9507 = vsel %vm1444, %v9502, %v9506
        %v9508 = vshrl.u32 %v9132, 16
        %v9510 = vrot.slane %v9508, 4
        %v9511 = vor.u32 %v9510, %v9506
        %v9512 = vrot.slane %v9511, 4
        %v9514 = vshll.u32 %v9133, 16
        %v9516 = vrot.slane %v9514, 5
        %v9517 = vsel %vm1444, %v9512, %v9516
        %s9518 = scalar_lea.vmem [#allocation4], 320
        %v9519 = vld [vmem:[%s9518] sm:$0xf]
        %v9520 = vld [vmem:[%s9518 + $0x4] sm:$0xf]
        %v9521 = vld [vmem:[%s9518 + $0x8] sm:$0xf]
        %v9522 = vld [vmem:[%s9518 + $0xc] sm:$0xf]
        %v9523 = vld [vmem:[%s9518 + $0x10] sm:$0xf]
        %v9524 = vld [vmem:[%s9518 + $0x14] sm:$0xf]
        %v9525 = vld [vmem:[%s9518 + $0x18] sm:$0xf]
        %v9526 = vld [vmem:[%s9518 + $0x1c] sm:$0xf]
        %v9527 = vld [vmem:[%s9518 + $0x20] sm:$0xf]
        %v9528 = vld [vmem:[%s9518 + $0x24] sm:$0xf]
        %v9529 = vld [vmem:[%s9518 + $0x28] sm:$0xf]
        %v9530 = vld [vmem:[%s9518 + $0x2c] sm:$0xf]
        %v9531 = vld [vmem:[%s9518 + $0x30] sm:$0xf]
        %v9532 = vld [vmem:[%s9518 + $0x34] sm:$0xf]
        %v9533 = vld [vmem:[%s9518 + $0x38] sm:$0xf]
        %v9534 = vld [vmem:[%s9518 + $0x3c] sm:$0xf]
        %v9535 = vunpack.c.l.b16 %v9147
        %v9536 = vunpack.c.l.b16 %v9157
        %v9537 = vunpack.c.l.b16 %v9171
        %v9538 = vunpack.c.l.b16 %v9181
        %v9539 = vunpack.c.l.b16 %v9195
        %v9540 = vunpack.c.l.b16 %v9205
        %v9541 = vunpack.c.l.b16 %v9219
        %v9542 = vunpack.c.l.b16 %v9229
        %v9543 = vunpack.c.l.b16 %v9243
        %v9544 = vunpack.c.l.b16 %v9253
        %v9545 = vunpack.c.l.b16 %v9267
        %v9546 = vunpack.c.l.b16 %v9277
        %v9547 = vunpack.c.l.b16 %v9291
        %v9548 = vunpack.c.l.b16 %v9301
        %v9549 = vunpack.c.l.b16 %v9315
        %v9550 = vunpack.c.l.b16 %v9325
        %v9551 = vunpack.c.l.b16 %v9339
        %v9552 = vunpack.c.l.b16 %v9349
        %v9553 = vunpack.c.l.b16 %v9363
        %v9554 = vunpack.c.l.b16 %v9373
        %v9555 = vunpack.c.l.b16 %v9387
        %v9556 = vunpack.c.l.b16 %v9397
        %v9557 = vunpack.c.l.b16 %v9411
        %v9558 = vunpack.c.l.b16 %v9421
        %v9559 = vunpack.c.l.b16 %v9435
        %v9560 = vunpack.c.l.b16 %v9445
        %v9561 = vunpack.c.l.b16 %v9459
        %v9562 = vunpack.c.l.b16 %v9469
        %v9563 = vunpack.c.l.b16 %v9483
        %v9564 = vunpack.c.l.b16 %v9493
        %v9565 = vunpack.c.l.b16 %v9507
        %v9566 = vunpack.c.l.b16 %v9517
        %v9567 = vpack.c.b16 %v9536, %v9535
        %v9568 = vpack.c.b16 %v9538, %v9537
        %v9569 = vpack.c.b16 %v9540, %v9539
        %v9570 = vpack.c.b16 %v9542, %v9541
        %v9571 = vpack.c.b16 %v9544, %v9543
        %v9572 = vpack.c.b16 %v9546, %v9545
        %v9573 = vpack.c.b16 %v9548, %v9547
        %v9574 = vpack.c.b16 %v9550, %v9549
        %v9575 = vpack.c.b16 %v9552, %v9551
        %v9576 = vpack.c.b16 %v9554, %v9553
        %v9577 = vpack.c.b16 %v9556, %v9555
        %v9578 = vpack.c.b16 %v9558, %v9557
        %v9579 = vpack.c.b16 %v9560, %v9559
        %v9580 = vpack.c.b16 %v9562, %v9561
        %v9581 = vpack.c.b16 %v9564, %v9563
        %v9582 = vpack.c.b16 %v9566, %v9565
        %v9615 = vunpack.c.l.b16 %v9519
        %v9616 = vunpack.c.l.b16 %v9520
        %v9617 = vunpack.c.l.b16 %v9521
        %v9618 = vunpack.c.l.b16 %v9522
        %v9619 = vunpack.c.l.b16 %v9523
        %v9620 = vunpack.c.l.b16 %v9524
        %v9621 = vunpack.c.l.b16 %v9525
        %v9622 = vunpack.c.l.b16 %v9526
        %v9623 = vunpack.c.l.b16 %v9527
        %v9624 = vunpack.c.l.b16 %v9528
        %v9625 = vunpack.c.l.b16 %v9529
        %v9626 = vunpack.c.l.b16 %v9530
        %v9627 = vunpack.c.l.b16 %v9531
        %v9628 = vunpack.c.l.b16 %v9532
        %v9629 = vunpack.c.l.b16 %v9533
        %v9630 = vunpack.c.l.b16 %v9534
        %v9631 = vpack.c.b16 %v9616, %v9615
        %v9632 = vpack.c.b16 %v9618, %v9617
        %v9633 = vpack.c.b16 %v9620, %v9619
        %v9634 = vpack.c.b16 %v9622, %v9621
        %v9635 = vpack.c.b16 %v9624, %v9623
        %v9636 = vpack.c.b16 %v9626, %v9625
        %v9637 = vpack.c.b16 %v9628, %v9627
        %v9638 = vpack.c.b16 %v9630, %v9629
        %9647 = vmatprep.subr.bf16.mxu0 0
        %9648 = vmatpush1.bf16.msra.mxu0 %v9631
        %9649 = vmatprep.subr.bf16.mxu0 0
        %9650 = vmatpush1.bf16.msra.mxu0 %v9632
        %9651 = vmatprep.subr.bf16.mxu0 0
        %9652 = vmatpush1.bf16.msra.mxu0 %v9633
        %9653 = vmatprep.subr.bf16.mxu0 0
        %9654 = vmatpush1.bf16.msra.mxu0 %v9634
        %9655 = vmatprep.subr.bf16.mxu0 0
        %9656 = vmatpush1.bf16.msra.mxu0 %v9635
        %9657 = vmatprep.subr.bf16.mxu0 0
        %9658 = vmatpush1.bf16.msra.mxu0 %v9636
        %9659 = vmatprep.subr.bf16.mxu0 0
        %9660 = vmatpush1.bf16.msra.mxu0 %v9637
        %9661 = vmatprep.subr.bf16.mxu0 0
        %9662 = vmatpush1.bf16.msra.mxu0 %v9638
        %9663 = vmatprep.subr.bf16.mxu0 0
        %9664 = vmatpush1.bf16.msra.mxu0 0
        %9665 = vmatprep.subr.bf16.mxu0 0
        %9666 = vmatpush1.bf16.msra.mxu0 0
        %9667 = vmatprep.subr.bf16.mxu0 0
        %9668 = vmatpush1.bf16.msra.mxu0 0
        %9669 = vmatprep.subr.bf16.mxu0 0
        %9670 = vmatpush1.bf16.msra.mxu0 0
        %9671 = vmatprep.subr.bf16.mxu0 0
        %9672 = vmatpush1.bf16.msra.mxu0 0
        %9673 = vmatprep.subr.bf16.mxu0 0
        %9674 = vmatpush1.bf16.msra.mxu0 0
        %9675 = vmatprep.subr.bf16.mxu0 0
        %9676 = vmatpush1.bf16.msra.mxu0 0
        %9677 = vmatprep.subr.bf16.mxu0 0
        %9678 = vmatpush1.bf16.msra.mxu0 0
        %9679 = vmatprep.mubr.bf16.mxu0 0
        %9680 = vmatmul.mubr.bf16.gmra.mrb[0].mxu0 %v9567
        %v9681 = vpop.f32.mrb[0].mxu0
        %v9682 = vadd.f32 0.0, %v9681
        %v9683 = vpop.f32.mrb[0].mxu0
        %v9684 = vpop.f32.mrb[0].mxu0
        %v9685 = vadd.f32 0.0, %v9684
        %v9686 = vpop.f32.mrb[0].mxu0
        %9687 = vmatprep.mubr.bf16.mxu0 0
        %9688 = vmatmul.mubr.bf16.gmra.mrb[0].mxu0 %v9568
        %v9689 = vpop.f32.mrb[0].mxu0
        %v9690 = vadd.f32 0.0, %v9689
        %v9691 = vpop.f32.mrb[0].mxu0
        %v9692 = vpop.f32.mrb[0].mxu0
        %v9693 = vadd.f32 0.0, %v9692
        %v9694 = vpop.f32.mrb[0].mxu0
        %9695 = vmatprep.mubr.bf16.mxu0 0
        %9696 = vmatmul.mubr.bf16.gmra.mrb[0].mxu0 %v9569
        %v9697 = vpop.f32.mrb[0].mxu0
        %v9698 = vadd.f32 0.0, %v9697
        %v9699 = vpop.f32.mrb[0].mxu0
        %v9700 = vpop.f32.mrb[0].mxu0
        %v9701 = vadd.f32 0.0, %v9700
        %v9702 = vpop.f32.mrb[0].mxu0
        %9703 = vmatprep.mubr.bf16.mxu0 0
        %9704 = vmatmul.mubr.bf16.gmra.mrb[0].mxu0 %v9570
        %v9705 = vpop.f32.mrb[0].mxu0
        %v9706 = vadd.f32 0.0, %v9705
        %v9707 = vpop.f32.mrb[0].mxu0
        %v9708 = vpop.f32.mrb[0].mxu0
        %v9709 = vadd.f32 0.0, %v9708
        %v9710 = vpop.f32.mrb[0].mxu0
        %9711 = vmatprep.mubr.bf16.mxu0 0
        %9712 = vmatmul.mubr.bf16.gmra.mrb[0].mxu0 %v9571
        %v9713 = vpop.f32.mrb[0].mxu0
        %v9714 = vadd.f32 0.0, %v9713
        %v9715 = vpop.f32.mrb[0].mxu0
        %v9716 = vpop.f32.mrb[0].mxu0
        %v9717 = vadd.f32 0.0, %v9716
        %v9718 = vpop.f32.mrb[0].mxu0
        %9719 = vmatprep.mubr.bf16.mxu0 0
        %9720 = vmatmul.mubr.bf16.gmra.mrb[0].mxu0 %v9572
        %v9721 = vpop.f32.mrb[0].mxu0
        %v9722 = vadd.f32 0.0, %v9721
        %v9723 = vpop.f32.mrb[0].mxu0
        %v9724 = vpop.f32.mrb[0].mxu0
        %v9725 = vadd.f32 0.0, %v9724
        %v9726 = vpop.f32.mrb[0].mxu0
        %9727 = vmatprep.mubr.bf16.mxu0 0
        %9728 = vmatmul.mubr.bf16.gmra.mrb[0].mxu0 %v9573
        %v9729 = vpop.f32.mrb[0].mxu0
        %v9730 = vadd.f32 0.0, %v9729
        %v9731 = vpop.f32.mrb[0].mxu0
        %v9732 = vpop.f32.mrb[0].mxu0
        %v9733 = vadd.f32 0.0, %v9732
        %v9734 = vpop.f32.mrb[0].mxu0
        %9735 = vmatprep.mubr.bf16.mxu0 0
        %9736 = vmatmul.mubr.bf16.gmra.mrb[0].mxu0 %v9574
        %v9737 = vpop.f32.mrb[0].mxu0
        %v9738 = vadd.f32 0.0, %v9737
        %v9739 = vpop.f32.mrb[0].mxu0
        %v9740 = vpop.f32.mrb[0].mxu0
        %v9741 = vadd.f32 0.0, %v9740
        %v9742 = vpop.f32.mrb[0].mxu0
        %9743 = vmatprep.mubr.bf16.mxu0 0
        %9744 = vmatmul.mubr.bf16.gmra.mrb[0].mxu0 %v9575
        %v9745 = vpop.f32.mrb[0].mxu0
        %v9746 = vadd.f32 0.0, %v9745
        %v9747 = vpop.f32.mrb[0].mxu0
        %v9748 = vpop.f32.mrb[0].mxu0
        %v9749 = vadd.f32 0.0, %v9748
        %v9750 = vpop.f32.mrb[0].mxu0
        %9751 = vmatprep.mubr.bf16.mxu0 0
        %9752 = vmatmul.mubr.bf16.gmra.mrb[0].mxu0 %v9576
        %v9753 = vpop.f32.mrb[0].mxu0
        %v9754 = vadd.f32 0.0, %v9753
        %v9755 = vpop.f32.mrb[0].mxu0
        %v9756 = vpop.f32.mrb[0].mxu0
        %v9757 = vadd.f32 0.0, %v9756
        %v9758 = vpop.f32.mrb[0].mxu0
        %9759 = vmatprep.mubr.bf16.mxu0 0
        %9760 = vmatmul.mubr.bf16.gmra.mrb[0].mxu0 %v9577
        %v9761 = vpop.f32.mrb[0].mxu0
        %v9762 = vadd.f32 0.0, %v9761
        %v9763 = vpop.f32.mrb[0].mxu0
        %v9764 = vpop.f32.mrb[0].mxu0
        %v9765 = vadd.f32 0.0, %v9764
        %v9766 = vpop.f32.mrb[0].mxu0
        %9767 = vmatprep.mubr.bf16.mxu0 0
        %9768 = vmatmul.mubr.bf16.gmra.mrb[0].mxu0 %v9578
        %v9769 = vpop.f32.mrb[0].mxu0
        %v9770 = vadd.f32 0.0, %v9769
        %v9771 = vpop.f32.mrb[0].mxu0
        %v9772 = vpop.f32.mrb[0].mxu0
        %v9773 = vadd.f32 0.0, %v9772
        %v9774 = vpop.f32.mrb[0].mxu0
        %9775 = vmatprep.mubr.bf16.mxu0 0
        %9776 = vmatmul.mubr.bf16.gmra.mrb[0].mxu0 %v9579
        %v9777 = vpop.f32.mrb[0].mxu0
        %v9778 = vadd.f32 0.0, %v9777
        %v9779 = vpop.f32.mrb[0].mxu0
        %v9780 = vpop.f32.mrb[0].mxu0
        %v9781 = vadd.f32 0.0, %v9780
        %v9782 = vpop.f32.mrb[0].mxu0
        %9783 = vmatprep.mubr.bf16.mxu0 0
        %9784 = vmatmul.mubr.bf16.gmra.mrb[0].mxu0 %v9580
        %v9785 = vpop.f32.mrb[0].mxu0
        %v9786 = vadd.f32 0.0, %v9785
        %v9787 = vpop.f32.mrb[0].mxu0
        %v9788 = vpop.f32.mrb[0].mxu0
        %v9789 = vadd.f32 0.0, %v9788
        %v9790 = vpop.f32.mrb[0].mxu0
        %9791 = vmatprep.mubr.bf16.mxu0 0
        %9792 = vmatmul.mubr.bf16.gmra.mrb[0].mxu0 %v9581
        %v9793 = vpop.f32.mrb[0].mxu0
        %v9794 = vadd.f32 0.0, %v9793
        %v9795 = vpop.f32.mrb[0].mxu0
        %v9796 = vpop.f32.mrb[0].mxu0
        %v9797 = vadd.f32 0.0, %v9796
        %v9798 = vpop.f32.mrb[0].mxu0
        %9799 = vmatprep.mubr.bf16.mxu0 0
        %9800 = vmatmul.mubr.bf16.gmra.mrb[0].mxu0 %v9582
        %v9801 = vpop.f32.mrb[0].mxu0
        %v9802 = vadd.f32 0.0, %v9801
        %v9803 = vpop.f32.mrb[0].mxu0
        %v9804 = vpop.f32.mrb[0].mxu0
        %v9805 = vadd.f32 0.0, %v9804
        %v9806 = vpop.f32.mrb[0].mxu0
        %9807 = vdwg.mxu0
        %v9808 = vadd.f32 %v9054, %v9682
        %v9809 = vadd.f32 %v9055, %v9685
        %v9810 = vadd.f32 %v9056, %v9690
        %v9811 = vadd.f32 %v9057, %v9693
        %v9812 = vadd.f32 %v9058, %v9698
        %v9813 = vadd.f32 %v9059, %v9701
        %v9814 = vadd.f32 %v9060, %v9706
        %v9815 = vadd.f32 %v9061, %v9709
        %v9816 = vadd.f32 %v9062, %v9714
        %v9817 = vadd.f32 %v9063, %v9717
        %v9818 = vadd.f32 %v9064, %v9722
        %v9819 = vadd.f32 %v9065, %v9725
        %v9820 = vadd.f32 %v9066, %v9730
        %v9821 = vadd.f32 %v9067, %v9733
        %v9822 = vadd.f32 %v9068, %v9738
        %v9823 = vadd.f32 %v9069, %v9741
        %v9824 = vadd.f32 %v9070, %v9746
        %v9825 = vadd.f32 %v9071, %v9749
        %v9826 = vadd.f32 %v9072, %v9754
        %v9827 = vadd.f32 %v9073, %v9757
        %v9828 = vadd.f32 %v9074, %v9762
        %v9829 = vadd.f32 %v9075, %v9765
        %v9830 = vadd.f32 %v9076, %v9770
        %v9831 = vadd.f32 %v9077, %v9773
        %v9832 = vadd.f32 %v9078, %v9778
        %v9833 = vadd.f32 %v9079, %v9781
        %v9834 = vadd.f32 %v9080, %v9786
        %v9835 = vadd.f32 %v9081, %v9789
        %v9836 = vadd.f32 %v9082, %v9794
        %v9837 = vadd.f32 %v9083, %v9797
        %v9838 = vadd.f32 %v9084, %v9802
        %v9839 = vadd.f32 %v9085, %v9805
        %s9840 = scalar_lea.vmem [#allocation3], 40
        %v9841 = vld [vmem:[%s9840 + $0x4] sm:$0x8]
        %v9842 = vld [vmem:[%s9840 + $0x8] sm:$0xf]
        %v9843 = vld [vmem:[%s9840 + $0xc] sm:$0xf]
        %v9844 = vld [vmem:[%s9840 + $0x18] sm:$0x8]
        %v9845 = vld [vmem:[%s9840 + $0x1c] sm:$0xf]
        %v9846 = vld [vmem:[%s9840 + $0x20] sm:$0xf]
        %v9847 = vld [vmem:[%s9840 + $0x2c] sm:$0x8]
        %v9848 = vld [vmem:[%s9840 + $0x30] sm:$0xf]
        %v9849 = vld [vmem:[%s9840 + $0x34] sm:$0xf]
        %v9850 = vld [vmem:[%s9840 + $0x40] sm:$0x8]
        %v9851 = vld [vmem:[%s9840 + $0x44] sm:$0xf]
        %v9852 = vld [vmem:[%s9840 + $0x48] sm:$0xf]
        %v9853 = vld [vmem:[%s9840 + $0x54] sm:$0x8]
        %v9854 = vld [vmem:[%s9840 + $0x58] sm:$0xf]
        %v9855 = vld [vmem:[%s9840 + $0x5c] sm:$0xf]
        %v9856 = vld [vmem:[%s9840 + $0x68] sm:$0x8]
        %v9857 = vld [vmem:[%s9840 + $0x6c] sm:$0xf]
        %v9858 = vld [vmem:[%s9840 + $0x70] sm:$0xf]
        %v9859 = vld [vmem:[%s9840 + $0x7c] sm:$0x8]
        %v9860 = vld [vmem:[%s9840 + $0x80] sm:$0xf]
        %v9861 = vld [vmem:[%s9840 + $0x84] sm:$0xf]
        %v9862 = vld [vmem:[%s9840 + $0x90] sm:$0x8]
        %v9863 = vld [vmem:[%s9840 + $0x94] sm:$0xf]
        %v9864 = vld [vmem:[%s9840 + $0x98] sm:$0xf]
        %v9865 = vld [vmem:[%s9840 + $0xa4] sm:$0x8]
        %v9866 = vld [vmem:[%s9840 + $0xa8] sm:$0xf]
        %v9867 = vld [vmem:[%s9840 + $0xac] sm:$0xf]
        %v9868 = vld [vmem:[%s9840 + $0xb8] sm:$0x8]
        %v9869 = vld [vmem:[%s9840 + $0xbc] sm:$0xf]
        %v9870 = vld [vmem:[%s9840 + $0xc0] sm:$0xf]
        %v9871 = vld [vmem:[%s9840 + $0xcc] sm:$0x8]
        %v9872 = vld [vmem:[%s9840 + $0xd0] sm:$0xf]
        %v9873 = vld [vmem:[%s9840 + $0xd4] sm:$0xf]
        %v9874 = vld [vmem:[%s9840 + $0xe0] sm:$0x8]
        %v9875 = vld [vmem:[%s9840 + $0xe4] sm:$0xf]
        %v9876 = vld [vmem:[%s9840 + $0xe8] sm:$0xf]
        %v9877 = vld [vmem:[%s9840 + $0xf4] sm:$0x8]
        %v9878 = vld [vmem:[%s9840 + $0xf8] sm:$0xf]
        %v9879 = vld [vmem:[%s9840 + $0xfc] sm:$0xf]
        %v9880 = vld [vmem:[%s9840 + $0x108] sm:$0x8]
        %v9881 = vld [vmem:[%s9840 + $0x10c] sm:$0xf]
        %v9882 = vld [vmem:[%s9840 + $0x110] sm:$0xf]
        %v9883 = vld [vmem:[%s9840 + $0x11c] sm:$0x8]
        %v9884 = vld [vmem:[%s9840 + $0x120] sm:$0xf]
        %v9885 = vld [vmem:[%s9840 + $0x124] sm:$0xf]
        %v9886 = vld [vmem:[%s9840 + $0x130] sm:$0x8]
        %v9887 = vld [vmem:[%s9840 + $0x134] sm:$0xf]
        %v9888 = vld [vmem:[%s9840 + $0x138] sm:$0xf]
        %v9890 = vshrl.u32 %v9841, 16
        %v9892 = vrot.slane %v9890, 7
        %v9893 = vrot.slane %v9892, 4
        %v9895 = vshrl.u32 %v9842, 16
        %v9897 = vrot.slane %v9895, 7
        %v9898 = vshll.u32 %v9842, 16
        %v9900 = vor.u32 %v9897, %v9898
        %v9901 = vsel %vm484, %v9893, %v9900
        %v9902 = vrot.slane %v9897, 4
        %v9904 = vshrl.u32 %v9843, 16
        %v9906 = vrot.slane %v9904, 7
        %v9907 = vshll.u32 %v9843, 16
        %v9909 = vor.u32 %v9906, %v9907
        %v9910 = vsel %vm484, %v9902, %v9909
        %v9912 = vshrl.u32 %v9844, 16
        %v9914 = vrot.slane %v9912, 7
        %v9915 = vrot.slane %v9914, 4
        %v9917 = vshrl.u32 %v9845, 16
        %v9919 = vrot.slane %v9917, 7
        %v9920 = vshll.u32 %v9845, 16
        %v9922 = vor.u32 %v9919, %v9920
        %v9923 = vsel %vm484, %v9915, %v9922
        %v9924 = vrot.slane %v9919, 4
        %v9926 = vshrl.u32 %v9846, 16
        %v9928 = vrot.slane %v9926, 7
        %v9929 = vshll.u32 %v9846, 16
        %v9931 = vor.u32 %v9928, %v9929
        %v9932 = vsel %vm484, %v9924, %v9931
        %v9934 = vshrl.u32 %v9847, 16
        %v9936 = vrot.slane %v9934, 7
        %v9937 = vrot.slane %v9936, 4
        %v9939 = vshrl.u32 %v9848, 16
        %v9941 = vrot.slane %v9939, 7
        %v9942 = vshll.u32 %v9848, 16
        %v9944 = vor.u32 %v9941, %v9942
        %v9945 = vsel %vm484, %v9937, %v9944
        %v9946 = vrot.slane %v9941, 4
        %v9948 = vshrl.u32 %v9849, 16
        %v9950 = vrot.slane %v9948, 7
        %v9951 = vshll.u32 %v9849, 16
        %v9953 = vor.u32 %v9950, %v9951
        %v9954 = vsel %vm484, %v9946, %v9953
        %v9956 = vshrl.u32 %v9850, 16
        %v9958 = vrot.slane %v9956, 7
        %v9959 = vrot.slane %v9958, 4
        %v9961 = vshrl.u32 %v9851, 16
        %v9963 = vrot.slane %v9961, 7
        %v9964 = vshll.u32 %v9851, 16
        %v9966 = vor.u32 %v9963, %v9964
        %v9967 = vsel %vm484, %v9959, %v9966
        %v9968 = vrot.slane %v9963, 4
        %v9970 = vshrl.u32 %v9852, 16
        %v9972 = vrot.slane %v9970, 7
        %v9973 = vshll.u32 %v9852, 16
        %v9975 = vor.u32 %v9972, %v9973
        %v9976 = vsel %vm484, %v9968, %v9975
        %v9978 = vshrl.u32 %v9853, 16
        %v9980 = vrot.slane %v9978, 7
        %v9981 = vrot.slane %v9980, 4
        %v9983 = vshrl.u32 %v9854, 16
        %v9985 = vrot.slane %v9983, 7
        %v9986 = vshll.u32 %v9854, 16
        %v9988 = vor.u32 %v9985, %v9986
        %v9989 = vsel %vm484, %v9981, %v9988
        %v9990 = vrot.slane %v9985, 4
        %v9992 = vshrl.u32 %v9855, 16
        %v9994 = vrot.slane %v9992, 7
        %v9995 = vshll.u32 %v9855, 16
        %v9997 = vor.u32 %v9994, %v9995
        %v9998 = vsel %vm484, %v9990, %v9997
        %v10000 = vshrl.u32 %v9856, 16
        %v10002 = vrot.slane %v10000, 7
        %v10003 = vrot.slane %v10002, 4
        %v10005 = vshrl.u32 %v9857, 16
        %v10007 = vrot.slane %v10005, 7
        %v10008 = vshll.u32 %v9857, 16
        %v10010 = vor.u32 %v10007, %v10008
        %v10011 = vsel %vm484, %v10003, %v10010
        %v10012 = vrot.slane %v10007, 4
        %v10014 = vshrl.u32 %v9858, 16
        %v10016 = vrot.slane %v10014, 7
        %v10017 = vshll.u32 %v9858, 16
        %v10019 = vor.u32 %v10016, %v10017
        %v10020 = vsel %vm484, %v10012, %v10019
        %v10022 = vshrl.u32 %v9859, 16
        %v10024 = vrot.slane %v10022, 7
        %v10025 = vrot.slane %v10024, 4
        %v10027 = vshrl.u32 %v9860, 16
        %v10029 = vrot.slane %v10027, 7
        %v10030 = vshll.u32 %v9860, 16
        %v10032 = vor.u32 %v10029, %v10030
        %v10033 = vsel %vm484, %v10025, %v10032
        %v10034 = vrot.slane %v10029, 4
        %v10036 = vshrl.u32 %v9861, 16
        %v10038 = vrot.slane %v10036, 7
        %v10039 = vshll.u32 %v9861, 16
        %v10041 = vor.u32 %v10038, %v10039
        %v10042 = vsel %vm484, %v10034, %v10041
        %v10044 = vshrl.u32 %v9862, 16
        %v10046 = vrot.slane %v10044, 7
        %v10047 = vrot.slane %v10046, 4
        %v10049 = vshrl.u32 %v9863, 16
        %v10051 = vrot.slane %v10049, 7
        %v10052 = vshll.u32 %v9863, 16
        %v10054 = vor.u32 %v10051, %v10052
        %v10055 = vsel %vm484, %v10047, %v10054
        %v10056 = vrot.slane %v10051, 4
        %v10058 = vshrl.u32 %v9864, 16
        %v10060 = vrot.slane %v10058, 7
        %v10061 = vshll.u32 %v9864, 16
        %v10063 = vor.u32 %v10060, %v10061
        %v10064 = vsel %vm484, %v10056, %v10063
        %v10066 = vshrl.u32 %v9865, 16
        %v10068 = vrot.slane %v10066, 7
        %v10069 = vrot.slane %v10068, 4
        %v10071 = vshrl.u32 %v9866, 16
        %v10073 = vrot.slane %v10071, 7
        %v10074 = vshll.u32 %v9866, 16
        %v10076 = vor.u32 %v10073, %v10074
        %v10077 = vsel %vm484, %v10069, %v10076
        %v10078 = vrot.slane %v10073, 4
        %v10080 = vshrl.u32 %v9867, 16
        %v10082 = vrot.slane %v10080, 7
        %v10083 = vshll.u32 %v9867, 16
        %v10085 = vor.u32 %v10082, %v10083
        %v10086 = vsel %vm484, %v10078, %v10085
        %v10088 = vshrl.u32 %v9868, 16
        %v10090 = vrot.slane %v10088, 7
        %v10091 = vrot.slane %v10090, 4
        %v10093 = vshrl.u32 %v9869, 16
        %v10095 = vrot.slane %v10093, 7
        %v10096 = vshll.u32 %v9869, 16
        %v10098 = vor.u32 %v10095, %v10096
        %v10099 = vsel %vm484, %v10091, %v10098
        %v10100 = vrot.slane %v10095, 4
        %v10102 = vshrl.u32 %v9870, 16
        %v10104 = vrot.slane %v10102, 7
        %v10105 = vshll.u32 %v9870, 16
        %v10107 = vor.u32 %v10104, %v10105
        %v10108 = vsel %vm484, %v10100, %v10107
        %v10110 = vshrl.u32 %v9871, 16
        %v10112 = vrot.slane %v10110, 7
        %v10113 = vrot.slane %v10112, 4
        %v10115 = vshrl.u32 %v9872, 16
        %v10117 = vrot.slane %v10115, 7
        %v10118 = vshll.u32 %v9872, 16
        %v10120 = vor.u32 %v10117, %v10118
        %v10121 = vsel %vm484, %v10113, %v10120
        %v10122 = vrot.slane %v10117, 4
        %v10124 = vshrl.u32 %v9873, 16
        %v10126 = vrot.slane %v10124, 7
        %v10127 = vshll.u32 %v9873, 16
        %v10129 = vor.u32 %v10126, %v10127
        %v10130 = vsel %vm484, %v10122, %v10129
        %v10132 = vshrl.u32 %v9874, 16
        %v10134 = vrot.slane %v10132, 7
        %v10135 = vrot.slane %v10134, 4
        %v10137 = vshrl.u32 %v9875, 16
        %v10139 = vrot.slane %v10137, 7
        %v10140 = vshll.u32 %v9875, 16
        %v10142 = vor.u32 %v10139, %v10140
        %v10143 = vsel %vm484, %v10135, %v10142
        %v10144 = vrot.slane %v10139, 4
        %v10146 = vshrl.u32 %v9876, 16
        %v10148 = vrot.slane %v10146, 7
        %v10149 = vshll.u32 %v9876, 16
        %v10151 = vor.u32 %v10148, %v10149
        %v10152 = vsel %vm484, %v10144, %v10151
        %v10154 = vshrl.u32 %v9877, 16
        %v10156 = vrot.slane %v10154, 7
        %v10157 = vrot.slane %v10156, 4
        %v10159 = vshrl.u32 %v9878, 16
        %v10161 = vrot.slane %v10159, 7
        %v10162 = vshll.u32 %v9878, 16
        %v10164 = vor.u32 %v10161, %v10162
        %v10165 = vsel %vm484, %v10157, %v10164
        %v10166 = vrot.slane %v10161, 4
        %v10168 = vshrl.u32 %v9879, 16
        %v10170 = vrot.slane %v10168, 7
        %v10171 = vshll.u32 %v9879, 16
        %v10173 = vor.u32 %v10170, %v10171
        %v10174 = vsel %vm484, %v10166, %v10173
        %v10176 = vshrl.u32 %v9880, 16
        %v10178 = vrot.slane %v10176, 7
        %v10179 = vrot.slane %v10178, 4
        %v10181 = vshrl.u32 %v9881, 16
        %v10183 = vrot.slane %v10181, 7
        %v10184 = vshll.u32 %v9881, 16
        %v10186 = vor.u32 %v10183, %v10184
        %v10187 = vsel %vm484, %v10179, %v10186
        %v10188 = vrot.slane %v10183, 4
        %v10190 = vshrl.u32 %v9882, 16
        %v10192 = vrot.slane %v10190, 7
        %v10193 = vshll.u32 %v9882, 16
        %v10195 = vor.u32 %v10192, %v10193
        %v10196 = vsel %vm484, %v10188, %v10195
        %v10198 = vshrl.u32 %v9883, 16
        %v10200 = vrot.slane %v10198, 7
        %v10201 = vrot.slane %v10200, 4
        %v10203 = vshrl.u32 %v9884, 16
        %v10205 = vrot.slane %v10203, 7
        %v10206 = vshll.u32 %v9884, 16
        %v10208 = vor.u32 %v10205, %v10206
        %v10209 = vsel %vm484, %v10201, %v10208
        %v10210 = vrot.slane %v10205, 4
        %v10212 = vshrl.u32 %v9885, 16
        %v10214 = vrot.slane %v10212, 7
        %v10215 = vshll.u32 %v9885, 16
        %v10217 = vor.u32 %v10214, %v10215
        %v10218 = vsel %vm484, %v10210, %v10217
        %v10220 = vshrl.u32 %v9886, 16
        %v10222 = vrot.slane %v10220, 7
        %v10223 = vrot.slane %v10222, 4
        %v10225 = vshrl.u32 %v9887, 16
        %v10227 = vrot.slane %v10225, 7
        %v10228 = vshll.u32 %v9887, 16
        %v10230 = vor.u32 %v10227, %v10228
        %v10231 = vsel %vm484, %v10223, %v10230
        %v10232 = vrot.slane %v10227, 4
        %v10234 = vshrl.u32 %v9888, 16
        %v10236 = vrot.slane %v10234, 7
        %v10237 = vshll.u32 %v9888, 16
        %v10239 = vor.u32 %v10236, %v10237
        %v10240 = vsel %vm484, %v10232, %v10239
        %s10241 = scalar_lea.vmem [#allocation4], 384
        %v10242 = vld [vmem:[%s10241] sm:$0xf]
        %v10243 = vld [vmem:[%s10241 + $0x4] sm:$0xf]
        %v10244 = vld [vmem:[%s10241 + $0x8] sm:$0xf]
        %v10245 = vld [vmem:[%s10241 + $0xc] sm:$0xf]
        %v10246 = vld [vmem:[%s10241 + $0x10] sm:$0xf]
        %v10247 = vld [vmem:[%s10241 + $0x14] sm:$0xf]
        %v10248 = vld [vmem:[%s10241 + $0x18] sm:$0xf]
        %v10249 = vld [vmem:[%s10241 + $0x1c] sm:$0xf]
        %v10250 = vld [vmem:[%s10241 + $0x20] sm:$0xf]
        %v10251 = vld [vmem:[%s10241 + $0x24] sm:$0xf]
        %v10252 = vld [vmem:[%s10241 + $0x28] sm:$0xf]
        %v10253 = vld [vmem:[%s10241 + $0x2c] sm:$0xf]
        %v10254 = vld [vmem:[%s10241 + $0x30] sm:$0xf]
        %v10255 = vld [vmem:[%s10241 + $0x34] sm:$0xf]
        %v10256 = vld [vmem:[%s10241 + $0x38] sm:$0xf]
        %v10257 = vld [vmem:[%s10241 + $0x3c] sm:$0xf]
        %v10258 = vunpack.c.l.b16 %v9901
        %v10259 = vunpack.c.l.b16 %v9910
        %v10260 = vunpack.c.l.b16 %v9923
        %v10261 = vunpack.c.l.b16 %v9932
        %v10262 = vunpack.c.l.b16 %v9945
        %v10263 = vunpack.c.l.b16 %v9954
        %v10264 = vunpack.c.l.b16 %v9967
        %v10265 = vunpack.c.l.b16 %v9976
        %v10266 = vunpack.c.l.b16 %v9989
        %v10267 = vunpack.c.l.b16 %v9998
        %v10268 = vunpack.c.l.b16 %v10011
        %v10269 = vunpack.c.l.b16 %v10020
        %v10270 = vunpack.c.l.b16 %v10033
        %v10271 = vunpack.c.l.b16 %v10042
        %v10272 = vunpack.c.l.b16 %v10055
        %v10273 = vunpack.c.l.b16 %v10064
        %v10274 = vunpack.c.l.b16 %v10077
        %v10275 = vunpack.c.l.b16 %v10086
        %v10276 = vunpack.c.l.b16 %v10099
        %v10277 = vunpack.c.l.b16 %v10108
        %v10278 = vunpack.c.l.b16 %v10121
        %v10279 = vunpack.c.l.b16 %v10130
        %v10280 = vunpack.c.l.b16 %v10143
        %v10281 = vunpack.c.l.b16 %v10152
        %v10282 = vunpack.c.l.b16 %v10165
        %v10283 = vunpack.c.l.b16 %v10174
        %v10284 = vunpack.c.l.b16 %v10187
        %v10285 = vunpack.c.l.b16 %v10196
        %v10286 = vunpack.c.l.b16 %v10209
        %v10287 = vunpack.c.l.b16 %v10218
        %v10288 = vunpack.c.l.b16 %v10231
        %v10289 = vunpack.c.l.b16 %v10240
        %v10290 = vpack.c.b16 %v10259, %v10258
        %v10291 = vpack.c.b16 %v10261, %v10260
        %v10292 = vpack.c.b16 %v10263, %v10262
        %v10293 = vpack.c.b16 %v10265, %v10264
        %v10294 = vpack.c.b16 %v10267, %v10266
        %v10295 = vpack.c.b16 %v10269, %v10268
        %v10296 = vpack.c.b16 %v10271, %v10270
        %v10297 = vpack.c.b16 %v10273, %v10272
        %v10298 = vpack.c.b16 %v10275, %v10274
        %v10299 = vpack.c.b16 %v10277, %v10276
        %v10300 = vpack.c.b16 %v10279, %v10278
        %v10301 = vpack.c.b16 %v10281, %v10280
        %v10302 = vpack.c.b16 %v10283, %v10282
        %v10303 = vpack.c.b16 %v10285, %v10284
        %v10304 = vpack.c.b16 %v10287, %v10286
        %v10305 = vpack.c.b16 %v10289, %v10288
        %v10338 = vunpack.c.l.b16 %v10242
        %v10339 = vunpack.c.l.b16 %v10243
        %v10340 = vunpack.c.l.b16 %v10244
        %v10341 = vunpack.c.l.b16 %v10245
        %v10342 = vunpack.c.l.b16 %v10246
        %v10343 = vunpack.c.l.b16 %v10247
        %v10344 = vunpack.c.l.b16 %v10248
        %v10345 = vunpack.c.l.b16 %v10249
        %v10346 = vunpack.c.l.b16 %v10250
        %v10347 = vunpack.c.l.b16 %v10251
        %v10348 = vunpack.c.l.b16 %v10252
        %v10349 = vunpack.c.l.b16 %v10253
        %v10350 = vunpack.c.l.b16 %v10254
        %v10351 = vunpack.c.l.b16 %v10255
        %v10352 = vunpack.c.l.b16 %v10256
        %v10353 = vunpack.c.l.b16 %v10257
        %v10354 = vpack.c.b16 %v10339, %v10338
        %v10355 = vpack.c.b16 %v10341, %v10340
        %v10356 = vpack.c.b16 %v10343, %v10342
        %v10357 = vpack.c.b16 %v10345, %v10344
        %v10358 = vpack.c.b16 %v10347, %v10346
        %v10359 = vpack.c.b16 %v10349, %v10348
        %v10360 = vpack.c.b16 %v10351, %v10350
        %v10361 = vpack.c.b16 %v10353, %v10352
        %10370 = vmatprep.subr.bf16.mxu0 0
        %10371 = vmatpush1.bf16.msra.mxu0 %v10354
        %10372 = vmatprep.subr.bf16.mxu0 0
        %10373 = vmatpush1.bf16.msra.mxu0 %v10355
        %10374 = vmatprep.subr.bf16.mxu0 0
        %10375 = vmatpush1.bf16.msra.mxu0 %v10356
        %10376 = vmatprep.subr.bf16.mxu0 0
        %10377 = vmatpush1.bf16.msra.mxu0 %v10357
        %10378 = vmatprep.subr.bf16.mxu0 0
        %10379 = vmatpush1.bf16.msra.mxu0 %v10358
        %10380 = vmatprep.subr.bf16.mxu0 0
        %10381 = vmatpush1.bf16.msra.mxu0 %v10359
        %10382 = vmatprep.subr.bf16.mxu0 0
        %10383 = vmatpush1.bf16.msra.mxu0 %v10360
        %10384 = vmatprep.subr.bf16.mxu0 0
        %10385 = vmatpush1.bf16.msra.mxu0 %v10361
        %10386 = vmatprep.subr.bf16.mxu0 0
        %10387 = vmatpush1.bf16.msra.mxu0 0
        %10388 = vmatprep.subr.bf16.mxu0 0
        %10389 = vmatpush1.bf16.msra.mxu0 0
        %10390 = vmatprep.subr.bf16.mxu0 0
        %10391 = vmatpush1.bf16.msra.mxu0 0
        %10392 = vmatprep.subr.bf16.mxu0 0
        %10393 = vmatpush1.bf16.msra.mxu0 0
        %10394 = vmatprep.subr.bf16.mxu0 0
        %10395 = vmatpush1.bf16.msra.mxu0 0
        %10396 = vmatprep.subr.bf16.mxu0 0
        %10397 = vmatpush1.bf16.msra.mxu0 0
        %10398 = vmatprep.subr.bf16.mxu0 0
        %10399 = vmatpush1.bf16.msra.mxu0 0
        %10400 = vmatprep.subr.bf16.mxu0 0
        %10401 = vmatpush1.bf16.msra.mxu0 0
        %10402 = vmatprep.mubr.bf16.mxu0 0
        %10403 = vmatmul.mubr.bf16.gmra.mrb[0].mxu0 %v10290
        %v10404 = vpop.f32.mrb[0].mxu0
        %v10405 = vadd.f32 0.0, %v10404
        %v10406 = vpop.f32.mrb[0].mxu0
        %v10407 = vpop.f32.mrb[0].mxu0
        %v10408 = vadd.f32 0.0, %v10407
        %v10409 = vpop.f32.mrb[0].mxu0
        %10410 = vmatprep.mubr.bf16.mxu0 0
        %10411 = vmatmul.mubr.bf16.gmra.mrb[0].mxu0 %v10291
        %v10412 = vpop.f32.mrb[0].mxu0
        %v10413 = vadd.f32 0.0, %v10412
        %v10414 = vpop.f32.mrb[0].mxu0
        %v10415 = vpop.f32.mrb[0].mxu0
        %v10416 = vadd.f32 0.0, %v10415
        %v10417 = vpop.f32.mrb[0].mxu0
        %10418 = vmatprep.mubr.bf16.mxu0 0
        %10419 = vmatmul.mubr.bf16.gmra.mrb[0].mxu0 %v10292
        %v10420 = vpop.f32.mrb[0].mxu0
        %v10421 = vadd.f32 0.0, %v10420
        %v10422 = vpop.f32.mrb[0].mxu0
        %v10423 = vpop.f32.mrb[0].mxu0
        %v10424 = vadd.f32 0.0, %v10423
        %v10425 = vpop.f32.mrb[0].mxu0
        %10426 = vmatprep.mubr.bf16.mxu0 0
        %10427 = vmatmul.mubr.bf16.gmra.mrb[0].mxu0 %v10293
        %v10428 = vpop.f32.mrb[0].mxu0
        %v10429 = vadd.f32 0.0, %v10428
        %v10430 = vpop.f32.mrb[0].mxu0
        %v10431 = vpop.f32.mrb[0].mxu0
        %v10432 = vadd.f32 0.0, %v10431
        %v10433 = vpop.f32.mrb[0].mxu0
        %10434 = vmatprep.mubr.bf16.mxu0 0
        %10435 = vmatmul.mubr.bf16.gmra.mrb[0].mxu0 %v10294
        %v10436 = vpop.f32.mrb[0].mxu0
        %v10437 = vadd.f32 0.0, %v10436
        %v10438 = vpop.f32.mrb[0].mxu0
        %v10439 = vpop.f32.mrb[0].mxu0
        %v10440 = vadd.f32 0.0, %v10439
        %v10441 = vpop.f32.mrb[0].mxu0
        %10442 = vmatprep.mubr.bf16.mxu0 0
        %10443 = vmatmul.mubr.bf16.gmra.mrb[0].mxu0 %v10295
        %v10444 = vpop.f32.mrb[0].mxu0
        %v10445 = vadd.f32 0.0, %v10444
        %v10446 = vpop.f32.mrb[0].mxu0
        %v10447 = vpop.f32.mrb[0].mxu0
        %v10448 = vadd.f32 0.0, %v10447
        %v10449 = vpop.f32.mrb[0].mxu0
        %10450 = vmatprep.mubr.bf16.mxu0 0
        %10451 = vmatmul.mubr.bf16.gmra.mrb[0].mxu0 %v10296
        %v10452 = vpop.f32.mrb[0].mxu0
        %v10453 = vadd.f32 0.0, %v10452
        %v10454 = vpop.f32.mrb[0].mxu0
        %v10455 = vpop.f32.mrb[0].mxu0
        %v10456 = vadd.f32 0.0, %v10455
        %v10457 = vpop.f32.mrb[0].mxu0
        %10458 = vmatprep.mubr.bf16.mxu0 0
        %10459 = vmatmul.mubr.bf16.gmra.mrb[0].mxu0 %v10297
        %v10460 = vpop.f32.mrb[0].mxu0
        %v10461 = vadd.f32 0.0, %v10460
        %v10462 = vpop.f32.mrb[0].mxu0
        %v10463 = vpop.f32.mrb[0].mxu0
        %v10464 = vadd.f32 0.0, %v10463
        %v10465 = vpop.f32.mrb[0].mxu0
        %10466 = vmatprep.mubr.bf16.mxu0 0
        %10467 = vmatmul.mubr.bf16.gmra.mrb[0].mxu0 %v10298
        %v10468 = vpop.f32.mrb[0].mxu0
        %v10469 = vadd.f32 0.0, %v10468
        %v10470 = vpop.f32.mrb[0].mxu0
        %v10471 = vpop.f32.mrb[0].mxu0
        %v10472 = vadd.f32 0.0, %v10471
        %v10473 = vpop.f32.mrb[0].mxu0
        %10474 = vmatprep.mubr.bf16.mxu0 0
        %10475 = vmatmul.mubr.bf16.gmra.mrb[0].mxu0 %v10299
        %v10476 = vpop.f32.mrb[0].mxu0
        %v10477 = vadd.f32 0.0, %v10476
        %v10478 = vpop.f32.mrb[0].mxu0
        %v10479 = vpop.f32.mrb[0].mxu0
        %v10480 = vadd.f32 0.0, %v10479
        %v10481 = vpop.f32.mrb[0].mxu0
        %10482 = vmatprep.mubr.bf16.mxu0 0
        %10483 = vmatmul.mubr.bf16.gmra.mrb[0].mxu0 %v10300
        %v10484 = vpop.f32.mrb[0].mxu0
        %v10485 = vadd.f32 0.0, %v10484
        %v10486 = vpop.f32.mrb[0].mxu0
        %v10487 = vpop.f32.mrb[0].mxu0
        %v10488 = vadd.f32 0.0, %v10487
        %v10489 = vpop.f32.mrb[0].mxu0
        %10490 = vmatprep.mubr.bf16.mxu0 0
        %10491 = vmatmul.mubr.bf16.gmra.mrb[0].mxu0 %v10301
        %v10492 = vpop.f32.mrb[0].mxu0
        %v10493 = vadd.f32 0.0, %v10492
        %v10494 = vpop.f32.mrb[0].mxu0
        %v10495 = vpop.f32.mrb[0].mxu0
        %v10496 = vadd.f32 0.0, %v10495
        %v10497 = vpop.f32.mrb[0].mxu0
        %10498 = vmatprep.mubr.bf16.mxu0 0
        %10499 = vmatmul.mubr.bf16.gmra.mrb[0].mxu0 %v10302
        %v10500 = vpop.f32.mrb[0].mxu0
        %v10501 = vadd.f32 0.0, %v10500
        %v10502 = vpop.f32.mrb[0].mxu0
        %v10503 = vpop.f32.mrb[0].mxu0
        %v10504 = vadd.f32 0.0, %v10503
        %v10505 = vpop.f32.mrb[0].mxu0
        %10506 = vmatprep.mubr.bf16.mxu0 0
        %10507 = vmatmul.mubr.bf16.gmra.mrb[0].mxu0 %v10303
        %v10508 = vpop.f32.mrb[0].mxu0
        %v10509 = vadd.f32 0.0, %v10508
        %v10510 = vpop.f32.mrb[0].mxu0
        %v10511 = vpop.f32.mrb[0].mxu0
        %v10512 = vadd.f32 0.0, %v10511
        %v10513 = vpop.f32.mrb[0].mxu0
        %10514 = vmatprep.mubr.bf16.mxu0 0
        %10515 = vmatmul.mubr.bf16.gmra.mrb[0].mxu0 %v10304
        %v10516 = vpop.f32.mrb[0].mxu0
        %v10517 = vadd.f32 0.0, %v10516
        %v10518 = vpop.f32.mrb[0].mxu0
        %v10519 = vpop.f32.mrb[0].mxu0
        %v10520 = vadd.f32 0.0, %v10519
        %v10521 = vpop.f32.mrb[0].mxu0
        %10522 = vmatprep.mubr.bf16.mxu0 0
        %10523 = vmatmul.mubr.bf16.gmra.mrb[0].mxu0 %v10305
        %v10524 = vpop.f32.mrb[0].mxu0
        %v10525 = vadd.f32 0.0, %v10524
        %v10526 = vpop.f32.mrb[0].mxu0
        %v10527 = vpop.f32.mrb[0].mxu0
        %v10528 = vadd.f32 0.0, %v10527
        %v10529 = vpop.f32.mrb[0].mxu0
        %10530 = vdwg.mxu0
        %v10531 = vadd.f32 %v9808, %v10405
        %v10532 = vadd.f32 %v9809, %v10408
        %v10533 = vadd.f32 %v9810, %v10413
        %v10534 = vadd.f32 %v9811, %v10416
        %v10535 = vadd.f32 %v9812, %v10421
        %v10536 = vadd.f32 %v9813, %v10424
        %v10537 = vadd.f32 %v9814, %v10429
        %v10538 = vadd.f32 %v9815, %v10432
        %v10539 = vadd.f32 %v9816, %v10437
        %v10540 = vadd.f32 %v9817, %v10440
        %v10541 = vadd.f32 %v9818, %v10445
        %v10542 = vadd.f32 %v9819, %v10448
        %v10543 = vadd.f32 %v9820, %v10453
        %v10544 = vadd.f32 %v9821, %v10456
        %v10545 = vadd.f32 %v9822, %v10461
        %v10546 = vadd.f32 %v9823, %v10464
        %v10547 = vadd.f32 %v9824, %v10469
        %v10548 = vadd.f32 %v9825, %v10472
        %v10549 = vadd.f32 %v9826, %v10477
        %v10550 = vadd.f32 %v9827, %v10480
        %v10551 = vadd.f32 %v9828, %v10485
        %v10552 = vadd.f32 %v9829, %v10488
        %v10553 = vadd.f32 %v9830, %v10493
        %v10554 = vadd.f32 %v9831, %v10496
        %v10555 = vadd.f32 %v9832, %v10501
        %v10556 = vadd.f32 %v9833, %v10504
        %v10557 = vadd.f32 %v9834, %v10509
        %v10558 = vadd.f32 %v9835, %v10512
        %v10559 = vadd.f32 %v9836, %v10517
        %v10560 = vadd.f32 %v9837, %v10520
        %v10561 = vadd.f32 %v9838, %v10525
        %v10562 = vadd.f32 %v9839, %v10528
        %s10563 = scalar_lea.vmem [#allocation4], 448
        %v10564 = vld [vmem:[%s10563] sm:$0xf]
        %v10565 = vld [vmem:[%s10563 + $0x4] sm:$0xf]
        %v10566 = vld [vmem:[%s10563 + $0x8] sm:$0xf]
        %v10567 = vld [vmem:[%s10563 + $0xc] sm:$0xf]
        %v10568 = vld [vmem:[%s10563 + $0x10] sm:$0xf]
        %v10569 = vld [vmem:[%s10563 + $0x14] sm:$0xf]
        %v10570 = vld [vmem:[%s10563 + $0x18] sm:$0xf]
        %v10571 = vld [vmem:[%s10563 + $0x1c] sm:$0xf]
        %v10572 = vld [vmem:[%s10563 + $0x20] sm:$0xf]
        %v10573 = vld [vmem:[%s10563 + $0x24] sm:$0xf]
        %v10574 = vld [vmem:[%s10563 + $0x28] sm:$0xf]
        %v10575 = vld [vmem:[%s10563 + $0x2c] sm:$0xf]
        %v10576 = vld [vmem:[%s10563 + $0x30] sm:$0xf]
        %v10577 = vld [vmem:[%s10563 + $0x34] sm:$0xf]
        %v10578 = vld [vmem:[%s10563 + $0x38] sm:$0xf]
        %v10579 = vld [vmem:[%s10563 + $0x3c] sm:$0xf]
        %v10612 = vunpack.c.l.b16 %v9842
        %v10613 = vunpack.c.l.b16 %v9843
        %v10614 = vunpack.c.l.b16 %v9845
        %v10615 = vunpack.c.l.b16 %v9846
        %v10616 = vunpack.c.l.b16 %v9848
        %v10617 = vunpack.c.l.b16 %v9849
        %v10618 = vunpack.c.l.b16 %v9851
        %v10619 = vunpack.c.l.b16 %v9852
        %v10620 = vunpack.c.l.b16 %v9854
        %v10621 = vunpack.c.l.b16 %v9855
        %v10622 = vunpack.c.l.b16 %v9857
        %v10623 = vunpack.c.l.b16 %v9858
        %v10624 = vunpack.c.l.b16 %v9860
        %v10625 = vunpack.c.l.b16 %v9861
        %v10626 = vunpack.c.l.b16 %v9863
        %v10627 = vunpack.c.l.b16 %v9864
        %v10628 = vunpack.c.l.b16 %v9866
        %v10629 = vunpack.c.l.b16 %v9867
        %v10630 = vunpack.c.l.b16 %v9869
        %v10631 = vunpack.c.l.b16 %v9870
        %v10632 = vunpack.c.l.b16 %v9872
        %v10633 = vunpack.c.l.b16 %v9873
        %v10634 = vunpack.c.l.b16 %v9875
        %v10635 = vunpack.c.l.b16 %v9876
        %v10636 = vunpack.c.l.b16 %v9878
        %v10637 = vunpack.c.l.b16 %v9879
        %v10638 = vunpack.c.l.b16 %v9881
        %v10639 = vunpack.c.l.b16 %v9882
        %v10640 = vunpack.c.l.b16 %v9884
        %v10641 = vunpack.c.l.b16 %v9885
        %v10642 = vunpack.c.l.b16 %v9887
        %v10643 = vunpack.c.l.b16 %v9888
        %v10644 = vpack.c.b16 %v10613, %v10612
        %v10645 = vpack.c.b16 %v10615, %v10614
        %v10646 = vpack.c.b16 %v10617, %v10616
        %v10647 = vpack.c.b16 %v10619, %v10618
        %v10648 = vpack.c.b16 %v10621, %v10620
        %v10649 = vpack.c.b16 %v10623, %v10622
        %v10650 = vpack.c.b16 %v10625, %v10624
        %v10651 = vpack.c.b16 %v10627, %v10626
        %v10652 = vpack.c.b16 %v10629, %v10628
        %v10653 = vpack.c.b16 %v10631, %v10630
        %v10654 = vpack.c.b16 %v10633, %v10632
        %v10655 = vpack.c.b16 %v10635, %v10634
        %v10656 = vpack.c.b16 %v10637, %v10636
        %v10657 = vpack.c.b16 %v10639, %v10638
        %v10658 = vpack.c.b16 %v10641, %v10640
        %v10659 = vpack.c.b16 %v10643, %v10642
        %v10692 = vunpack.c.l.b16 %v10564
        %v10693 = vunpack.c.l.b16 %v10565
        %v10694 = vunpack.c.l.b16 %v10566
        %v10695 = vunpack.c.l.b16 %v10567
        %v10696 = vunpack.c.l.b16 %v10568
        %v10697 = vunpack.c.l.b16 %v10569
        %v10698 = vunpack.c.l.b16 %v10570
        %v10699 = vunpack.c.l.b16 %v10571
        %v10700 = vunpack.c.l.b16 %v10572
        %v10701 = vunpack.c.l.b16 %v10573
        %v10702 = vunpack.c.l.b16 %v10574
        %v10703 = vunpack.c.l.b16 %v10575
        %v10704 = vunpack.c.l.b16 %v10576
        %v10705 = vunpack.c.l.b16 %v10577
        %v10706 = vunpack.c.l.b16 %v10578
        %v10707 = vunpack.c.l.b16 %v10579
        %v10708 = vpack.c.b16 %v10693, %v10692
        %v10709 = vpack.c.b16 %v10695, %v10694
        %v10710 = vpack.c.b16 %v10697, %v10696
        %v10711 = vpack.c.b16 %v10699, %v10698
        %v10712 = vpack.c.b16 %v10701, %v10700
        %v10713 = vpack.c.b16 %v10703, %v10702
        %v10714 = vpack.c.b16 %v10705, %v10704
        %v10715 = vpack.c.b16 %v10707, %v10706
        %10724 = vmatprep.subr.bf16.mxu0 0
        %10725 = vmatpush1.bf16.msra.mxu0 %v10708
        %10726 = vmatprep.subr.bf16.mxu0 0
        %10727 = vmatpush1.bf16.msra.mxu0 %v10709
        %10728 = vmatprep.subr.bf16.mxu0 0
        %10729 = vmatpush1.bf16.msra.mxu0 %v10710
        %10730 = vmatprep.subr.bf16.mxu0 0
        %10731 = vmatpush1.bf16.msra.mxu0 %v10711
        %10732 = vmatprep.subr.bf16.mxu0 0
        %10733 = vmatpush1.bf16.msra.mxu0 %v10712
        %10734 = vmatprep.subr.bf16.mxu0 0
        %10735 = vmatpush1.bf16.msra.mxu0 %v10713
        %10736 = vmatprep.subr.bf16.mxu0 0
        %10737 = vmatpush1.bf16.msra.mxu0 %v10714
        %10738 = vmatprep.subr.bf16.mxu0 0
        %10739 = vmatpush1.bf16.msra.mxu0 %v10715
        %10740 = vmatprep.subr.bf16.mxu0 0
        %10741 = vmatpush1.bf16.msra.mxu0 0
        %10742 = vmatprep.subr.bf16.mxu0 0
        %10743 = vmatpush1.bf16.msra.mxu0 0
        %10744 = vmatprep.subr.bf16.mxu0 0
        %10745 = vmatpush1.bf16.msra.mxu0 0
        %10746 = vmatprep.subr.bf16.mxu0 0
        %10747 = vmatpush1.bf16.msra.mxu0 0
        %10748 = vmatprep.subr.bf16.mxu0 0
        %10749 = vmatpush1.bf16.msra.mxu0 0
        %10750 = vmatprep.subr.bf16.mxu0 0
        %10751 = vmatpush1.bf16.msra.mxu0 0
        %10752 = vmatprep.subr.bf16.mxu0 0
        %10753 = vmatpush1.bf16.msra.mxu0 0
        %10754 = vmatprep.subr.bf16.mxu0 0
        %10755 = vmatpush1.bf16.msra.mxu0 0
        %10756 = vmatprep.mubr.bf16.mxu0 0
        %10757 = vmatmul.mubr.bf16.gmra.mrb[0].mxu0 %v10644
        %v10758 = vpop.f32.mrb[0].mxu0
        %v10759 = vadd.f32 0.0, %v10758
        %v10760 = vpop.f32.mrb[0].mxu0
        %v10761 = vpop.f32.mrb[0].mxu0
        %v10762 = vadd.f32 0.0, %v10761
        %v10763 = vpop.f32.mrb[0].mxu0
        %10764 = vmatprep.mubr.bf16.mxu0 0
        %10765 = vmatmul.mubr.bf16.gmra.mrb[0].mxu0 %v10645
        %v10766 = vpop.f32.mrb[0].mxu0
        %v10767 = vadd.f32 0.0, %v10766
        %v10768 = vpop.f32.mrb[0].mxu0
        %v10769 = vpop.f32.mrb[0].mxu0
        %v10770 = vadd.f32 0.0, %v10769
        %v10771 = vpop.f32.mrb[0].mxu0
        %10772 = vmatprep.mubr.bf16.mxu0 0
        %10773 = vmatmul.mubr.bf16.gmra.mrb[0].mxu0 %v10646
        %v10774 = vpop.f32.mrb[0].mxu0
        %v10775 = vadd.f32 0.0, %v10774
        %v10776 = vpop.f32.mrb[0].mxu0
        %v10777 = vpop.f32.mrb[0].mxu0
        %v10778 = vadd.f32 0.0, %v10777
        %v10779 = vpop.f32.mrb[0].mxu0
        %10780 = vmatprep.mubr.bf16.mxu0 0
        %10781 = vmatmul.mubr.bf16.gmra.mrb[0].mxu0 %v10647
        %v10782 = vpop.f32.mrb[0].mxu0
        %v10783 = vadd.f32 0.0, %v10782
        %v10784 = vpop.f32.mrb[0].mxu0
        %v10785 = vpop.f32.mrb[0].mxu0
        %v10786 = vadd.f32 0.0, %v10785
        %v10787 = vpop.f32.mrb[0].mxu0
        %10788 = vmatprep.mubr.bf16.mxu0 0
        %10789 = vmatmul.mubr.bf16.gmra.mrb[0].mxu0 %v10648
        %v10790 = vpop.f32.mrb[0].mxu0
        %v10791 = vadd.f32 0.0, %v10790
        %v10792 = vpop.f32.mrb[0].mxu0
        %v10793 = vpop.f32.mrb[0].mxu0
        %v10794 = vadd.f32 0.0, %v10793
        %v10795 = vpop.f32.mrb[0].mxu0
        %10796 = vmatprep.mubr.bf16.mxu0 0
        %10797 = vmatmul.mubr.bf16.gmra.mrb[0].mxu0 %v10649
        %v10798 = vpop.f32.mrb[0].mxu0
        %v10799 = vadd.f32 0.0, %v10798
        %v10800 = vpop.f32.mrb[0].mxu0
        %v10801 = vpop.f32.mrb[0].mxu0
        %v10802 = vadd.f32 0.0, %v10801
        %v10803 = vpop.f32.mrb[0].mxu0
        %10804 = vmatprep.mubr.bf16.mxu0 0
        %10805 = vmatmul.mubr.bf16.gmra.mrb[0].mxu0 %v10650
        %v10806 = vpop.f32.mrb[0].mxu0
        %v10807 = vadd.f32 0.0, %v10806
        %v10808 = vpop.f32.mrb[0].mxu0
        %v10809 = vpop.f32.mrb[0].mxu0
        %v10810 = vadd.f32 0.0, %v10809
        %v10811 = vpop.f32.mrb[0].mxu0
        %10812 = vmatprep.mubr.bf16.mxu0 0
        %10813 = vmatmul.mubr.bf16.gmra.mrb[0].mxu0 %v10651
        %v10814 = vpop.f32.mrb[0].mxu0
        %v10815 = vadd.f32 0.0, %v10814
        %v10816 = vpop.f32.mrb[0].mxu0
        %v10817 = vpop.f32.mrb[0].mxu0
        %v10818 = vadd.f32 0.0, %v10817
        %v10819 = vpop.f32.mrb[0].mxu0
        %10820 = vmatprep.mubr.bf16.mxu0 0
        %10821 = vmatmul.mubr.bf16.gmra.mrb[0].mxu0 %v10652
        %v10822 = vpop.f32.mrb[0].mxu0
        %v10823 = vadd.f32 0.0, %v10822
        %v10824 = vpop.f32.mrb[0].mxu0
        %v10825 = vpop.f32.mrb[0].mxu0
        %v10826 = vadd.f32 0.0, %v10825
        %v10827 = vpop.f32.mrb[0].mxu0
        %10828 = vmatprep.mubr.bf16.mxu0 0
        %10829 = vmatmul.mubr.bf16.gmra.mrb[0].mxu0 %v10653
        %v10830 = vpop.f32.mrb[0].mxu0
        %v10831 = vadd.f32 0.0, %v10830
        %v10832 = vpop.f32.mrb[0].mxu0
        %v10833 = vpop.f32.mrb[0].mxu0
        %v10834 = vadd.f32 0.0, %v10833
        %v10835 = vpop.f32.mrb[0].mxu0
        %10836 = vmatprep.mubr.bf16.mxu0 0
        %10837 = vmatmul.mubr.bf16.gmra.mrb[0].mxu0 %v10654
        %v10838 = vpop.f32.mrb[0].mxu0
        %v10839 = vadd.f32 0.0, %v10838
        %v10840 = vpop.f32.mrb[0].mxu0
        %v10841 = vpop.f32.mrb[0].mxu0
        %v10842 = vadd.f32 0.0, %v10841
        %v10843 = vpop.f32.mrb[0].mxu0
        %10844 = vmatprep.mubr.bf16.mxu0 0
        %10845 = vmatmul.mubr.bf16.gmra.mrb[0].mxu0 %v10655
        %v10846 = vpop.f32.mrb[0].mxu0
        %v10847 = vadd.f32 0.0, %v10846
        %v10848 = vpop.f32.mrb[0].mxu0
        %v10849 = vpop.f32.mrb[0].mxu0
        %v10850 = vadd.f32 0.0, %v10849
        %v10851 = vpop.f32.mrb[0].mxu0
        %10852 = vmatprep.mubr.bf16.mxu0 0
        %10853 = vmatmul.mubr.bf16.gmra.mrb[0].mxu0 %v10656
        %v10854 = vpop.f32.mrb[0].mxu0
        %v10855 = vadd.f32 0.0, %v10854
        %v10856 = vpop.f32.mrb[0].mxu0
        %v10857 = vpop.f32.mrb[0].mxu0
        %v10858 = vadd.f32 0.0, %v10857
        %v10859 = vpop.f32.mrb[0].mxu0
        %10860 = vmatprep.mubr.bf16.mxu0 0
        %10861 = vmatmul.mubr.bf16.gmra.mrb[0].mxu0 %v10657
        %v10862 = vpop.f32.mrb[0].mxu0
        %v10863 = vadd.f32 0.0, %v10862
        %v10864 = vpop.f32.mrb[0].mxu0
        %v10865 = vpop.f32.mrb[0].mxu0
        %v10866 = vadd.f32 0.0, %v10865
        %v10867 = vpop.f32.mrb[0].mxu0
        %10868 = vmatprep.mubr.bf16.mxu0 0
        %10869 = vmatmul.mubr.bf16.gmra.mrb[0].mxu0 %v10658
        %v10870 = vpop.f32.mrb[0].mxu0
        %v10871 = vadd.f32 0.0, %v10870
        %v10872 = vpop.f32.mrb[0].mxu0
        %v10873 = vpop.f32.mrb[0].mxu0
        %v10874 = vadd.f32 0.0, %v10873
        %v10875 = vpop.f32.mrb[0].mxu0
        %10876 = vmatprep.mubr.bf16.mxu0 0
        %10877 = vmatmul.mubr.bf16.gmra.mrb[0].mxu0 %v10659
        %v10878 = vpop.f32.mrb[0].mxu0
        %v10879 = vadd.f32 0.0, %v10878
        %v10880 = vpop.f32.mrb[0].mxu0
        %v10881 = vpop.f32.mrb[0].mxu0
        %v10882 = vadd.f32 0.0, %v10881
        %v10883 = vpop.f32.mrb[0].mxu0
        %10884 = vdwg.mxu0
        %v10885 = vadd.f32 %v10531, %v10759
        %v10886 = vadd.f32 %v10532, %v10762
        %v10887 = vadd.f32 %v10533, %v10767
        %v10888 = vadd.f32 %v10534, %v10770
        %v10889 = vadd.f32 %v10535, %v10775
        %v10890 = vadd.f32 %v10536, %v10778
        %v10891 = vadd.f32 %v10537, %v10783
        %v10892 = vadd.f32 %v10538, %v10786
        %v10893 = vadd.f32 %v10539, %v10791
        %v10894 = vadd.f32 %v10540, %v10794
        %v10895 = vadd.f32 %v10541, %v10799
        %v10896 = vadd.f32 %v10542, %v10802
        %v10897 = vadd.f32 %v10543, %v10807
        %v10898 = vadd.f32 %v10544, %v10810
        %v10899 = vadd.f32 %v10545, %v10815
        %v10900 = vadd.f32 %v10546, %v10818
        %v10901 = vadd.f32 %v10547, %v10823
        %v10902 = vadd.f32 %v10548, %v10826
        %v10903 = vadd.f32 %v10549, %v10831
        %v10904 = vadd.f32 %v10550, %v10834
        %v10905 = vadd.f32 %v10551, %v10839
        %v10906 = vadd.f32 %v10552, %v10842
        %v10907 = vadd.f32 %v10553, %v10847
        %v10908 = vadd.f32 %v10554, %v10850
        %v10909 = vadd.f32 %v10555, %v10855
        %v10910 = vadd.f32 %v10556, %v10858
        %v10911 = vadd.f32 %v10557, %v10863
        %v10912 = vadd.f32 %v10558, %v10866
        %v10913 = vadd.f32 %v10559, %v10871
        %v10914 = vadd.f32 %v10560, %v10874
        %v10915 = vadd.f32 %v10561, %v10879
        %v10916 = vadd.f32 %v10562, %v10882
        %v10917 = vld [vmem:[%s9840 + $0x8] sm:$0xf]
        %v10918 = vld [vmem:[%s9840 + $0xc] sm:$0xf]
        %v10919 = vld [vmem:[%s9840 + $0x10] sm:$0x1]
        %v10920 = vld [vmem:[%s9840 + $0x1c] sm:$0xf]
        %v10921 = vld [vmem:[%s9840 + $0x20] sm:$0xf]
        %v10922 = vld [vmem:[%s9840 + $0x24] sm:$0x1]
        %v10923 = vld [vmem:[%s9840 + $0x30] sm:$0xf]
        %v10924 = vld [vmem:[%s9840 + $0x34] sm:$0xf]
        %v10925 = vld [vmem:[%s9840 + $0x38] sm:$0x1]
        %v10926 = vld [vmem:[%s9840 + $0x44] sm:$0xf]
        %v10927 = vld [vmem:[%s9840 + $0x48] sm:$0xf]
        %v10928 = vld [vmem:[%s9840 + $0x4c] sm:$0x1]
        %v10929 = vld [vmem:[%s9840 + $0x58] sm:$0xf]
        %v10930 = vld [vmem:[%s9840 + $0x5c] sm:$0xf]
        %v10931 = vld [vmem:[%s9840 + $0x60] sm:$0x1]
        %v10932 = vld [vmem:[%s9840 + $0x6c] sm:$0xf]
        %v10933 = vld [vmem:[%s9840 + $0x70] sm:$0xf]
        %v10934 = vld [vmem:[%s9840 + $0x74] sm:$0x1]
        %v10935 = vld [vmem:[%s9840 + $0x80] sm:$0xf]
        %v10936 = vld [vmem:[%s9840 + $0x84] sm:$0xf]
        %v10937 = vld [vmem:[%s9840 + $0x88] sm:$0x1]
        %v10938 = vld [vmem:[%s9840 + $0x94] sm:$0xf]
        %v10939 = vld [vmem:[%s9840 + $0x98] sm:$0xf]
        %v10940 = vld [vmem:[%s9840 + $0x9c] sm:$0x1]
        %v10941 = vld [vmem:[%s9840 + $0xa8] sm:$0xf]
        %v10942 = vld [vmem:[%s9840 + $0xac] sm:$0xf]
        %v10943 = vld [vmem:[%s9840 + $0xb0] sm:$0x1]
        %v10944 = vld [vmem:[%s9840 + $0xbc] sm:$0xf]
        %v10945 = vld [vmem:[%s9840 + $0xc0] sm:$0xf]
        %v10946 = vld [vmem:[%s9840 + $0xc4] sm:$0x1]
        %v10947 = vld [vmem:[%s9840 + $0xd0] sm:$0xf]
        %v10948 = vld [vmem:[%s9840 + $0xd4] sm:$0xf]
        %v10949 = vld [vmem:[%s9840 + $0xd8] sm:$0x1]
        %v10950 = vld [vmem:[%s9840 + $0xe4] sm:$0xf]
        %v10951 = vld [vmem:[%s9840 + $0xe8] sm:$0xf]
        %v10952 = vld [vmem:[%s9840 + $0xec] sm:$0x1]
        %v10953 = vld [vmem:[%s9840 + $0xf8] sm:$0xf]
        %v10954 = vld [vmem:[%s9840 + $0xfc] sm:$0xf]
        %v10955 = vld [vmem:[%s9840 + $0x100] sm:$0x1]
        %v10956 = vld [vmem:[%s9840 + $0x10c] sm:$0xf]
        %v10957 = vld [vmem:[%s9840 + $0x110] sm:$0xf]
        %v10958 = vld [vmem:[%s9840 + $0x114] sm:$0x1]
        %v10959 = vld [vmem:[%s9840 + $0x120] sm:$0xf]
        %v10960 = vld [vmem:[%s9840 + $0x124] sm:$0xf]
        %v10961 = vld [vmem:[%s9840 + $0x128] sm:$0x1]
        %v10962 = vld [vmem:[%s9840 + $0x134] sm:$0xf]
        %v10963 = vld [vmem:[%s9840 + $0x138] sm:$0xf]
        %v10964 = vld [vmem:[%s9840 + $0x13c] sm:$0x1]
        %v10966 = vshrl.u32 %v10917, 16
        %v10968 = vrot.slane %v10966, 4
        %v10969 = vshll.u32 %v10917, 16
        %v10971 = vrot.slane %v10969, 5
        %v10972 = vor.u32 %v10968, %v10971
        %v10973 = vrot.slane %v10972, 4
        %v10975 = vshll.u32 %v10918, 16
        %v10977 = vrot.slane %v10975, 5
        %v10978 = vsel %vm1444, %v10973, %v10977
        %v10979 = vshrl.u32 %v10918, 16
        %v10981 = vrot.slane %v10979, 4
        %v10982 = vor.u32 %v10981, %v10977
        %v10983 = vrot.slane %v10982, 4
        %v10985 = vshll.u32 %v10919, 16
        %v10987 = vrot.slane %v10985, 5
        %v10988 = vsel %vm1444, %v10983, %v10987
        %v10990 = vshrl.u32 %v10920, 16
        %v10992 = vrot.slane %v10990, 4
        %v10993 = vshll.u32 %v10920, 16
        %v10995 = vrot.slane %v10993, 5
        %v10996 = vor.u32 %v10992, %v10995
        %v10997 = vrot.slane %v10996, 4
        %v10999 = vshll.u32 %v10921, 16
        %v11001 = vrot.slane %v10999, 5
        %v11002 = vsel %vm1444, %v10997, %v11001
        %v11003 = vshrl.u32 %v10921, 16
        %v11005 = vrot.slane %v11003, 4
        %v11006 = vor.u32 %v11005, %v11001
        %v11007 = vrot.slane %v11006, 4
        %v11009 = vshll.u32 %v10922, 16
        %v11011 = vrot.slane %v11009, 5
        %v11012 = vsel %vm1444, %v11007, %v11011
        %v11014 = vshrl.u32 %v10923, 16
        %v11016 = vrot.slane %v11014, 4
        %v11017 = vshll.u32 %v10923, 16
        %v11019 = vrot.slane %v11017, 5
        %v11020 = vor.u32 %v11016, %v11019
        %v11021 = vrot.slane %v11020, 4
        %v11023 = vshll.u32 %v10924, 16
        %v11025 = vrot.slane %v11023, 5
        %v11026 = vsel %vm1444, %v11021, %v11025
        %v11027 = vshrl.u32 %v10924, 16
        %v11029 = vrot.slane %v11027, 4
        %v11030 = vor.u32 %v11029, %v11025
        %v11031 = vrot.slane %v11030, 4
        %v11033 = vshll.u32 %v10925, 16
        %v11035 = vrot.slane %v11033, 5
        %v11036 = vsel %vm1444, %v11031, %v11035
        %v11038 = vshrl.u32 %v10926, 16
        %v11040 = vrot.slane %v11038, 4
        %v11041 = vshll.u32 %v10926, 16
        %v11043 = vrot.slane %v11041, 5
        %v11044 = vor.u32 %v11040, %v11043
        %v11045 = vrot.slane %v11044, 4
        %v11047 = vshll.u32 %v10927, 16
        %v11049 = vrot.slane %v11047, 5
        %v11050 = vsel %vm1444, %v11045, %v11049
        %v11051 = vshrl.u32 %v10927, 16
        %v11053 = vrot.slane %v11051, 4
        %v11054 = vor.u32 %v11053, %v11049
        %v11055 = vrot.slane %v11054, 4
        %v11057 = vshll.u32 %v10928, 16
        %v11059 = vrot.slane %v11057, 5
        %v11060 = vsel %vm1444, %v11055, %v11059
        %v11062 = vshrl.u32 %v10929, 16
        %v11064 = vrot.slane %v11062, 4
        %v11065 = vshll.u32 %v10929, 16
        %v11067 = vrot.slane %v11065, 5
        %v11068 = vor.u32 %v11064, %v11067
        %v11069 = vrot.slane %v11068, 4
        %v11071 = vshll.u32 %v10930, 16
        %v11073 = vrot.slane %v11071, 5
        %v11074 = vsel %vm1444, %v11069, %v11073
        %v11075 = vshrl.u32 %v10930, 16
        %v11077 = vrot.slane %v11075, 4
        %v11078 = vor.u32 %v11077, %v11073
        %v11079 = vrot.slane %v11078, 4
        %v11081 = vshll.u32 %v10931, 16
        %v11083 = vrot.slane %v11081, 5
        %v11084 = vsel %vm1444, %v11079, %v11083
        %v11086 = vshrl.u32 %v10932, 16
        %v11088 = vrot.slane %v11086, 4
        %v11089 = vshll.u32 %v10932, 16
        %v11091 = vrot.slane %v11089, 5
        %v11092 = vor.u32 %v11088, %v11091
        %v11093 = vrot.slane %v11092, 4
        %v11095 = vshll.u32 %v10933, 16
        %v11097 = vrot.slane %v11095, 5
        %v11098 = vsel %vm1444, %v11093, %v11097
        %v11099 = vshrl.u32 %v10933, 16
        %v11101 = vrot.slane %v11099, 4
        %v11102 = vor.u32 %v11101, %v11097
        %v11103 = vrot.slane %v11102, 4
        %v11105 = vshll.u32 %v10934, 16
        %v11107 = vrot.slane %v11105, 5
        %v11108 = vsel %vm1444, %v11103, %v11107
        %v11110 = vshrl.u32 %v10935, 16
        %v11112 = vrot.slane %v11110, 4
        %v11113 = vshll.u32 %v10935, 16
        %v11115 = vrot.slane %v11113, 5
        %v11116 = vor.u32 %v11112, %v11115
        %v11117 = vrot.slane %v11116, 4
        %v11119 = vshll.u32 %v10936, 16
        %v11121 = vrot.slane %v11119, 5
        %v11122 = vsel %vm1444, %v11117, %v11121
        %v11123 = vshrl.u32 %v10936, 16
        %v11125 = vrot.slane %v11123, 4
        %v11126 = vor.u32 %v11125, %v11121
        %v11127 = vrot.slane %v11126, 4
        %v11129 = vshll.u32 %v10937, 16
        %v11131 = vrot.slane %v11129, 5
        %v11132 = vsel %vm1444, %v11127, %v11131
        %v11134 = vshrl.u32 %v10938, 16
        %v11136 = vrot.slane %v11134, 4
        %v11137 = vshll.u32 %v10938, 16
        %v11139 = vrot.slane %v11137, 5
        %v11140 = vor.u32 %v11136, %v11139
        %v11141 = vrot.slane %v11140, 4
        %v11143 = vshll.u32 %v10939, 16
        %v11145 = vrot.slane %v11143, 5
        %v11146 = vsel %vm1444, %v11141, %v11145
        %v11147 = vshrl.u32 %v10939, 16
        %v11149 = vrot.slane %v11147, 4
        %v11150 = vor.u32 %v11149, %v11145
        %v11151 = vrot.slane %v11150, 4
        %v11153 = vshll.u32 %v10940, 16
        %v11155 = vrot.slane %v11153, 5
        %v11156 = vsel %vm1444, %v11151, %v11155
        %v11158 = vshrl.u32 %v10941, 16
        %v11160 = vrot.slane %v11158, 4
        %v11161 = vshll.u32 %v10941, 16
        %v11163 = vrot.slane %v11161, 5
        %v11164 = vor.u32 %v11160, %v11163
        %v11165 = vrot.slane %v11164, 4
        %v11167 = vshll.u32 %v10942, 16
        %v11169 = vrot.slane %v11167, 5
        %v11170 = vsel %vm1444, %v11165, %v11169
        %v11171 = vshrl.u32 %v10942, 16
        %v11173 = vrot.slane %v11171, 4
        %v11174 = vor.u32 %v11173, %v11169
        %v11175 = vrot.slane %v11174, 4
        %v11177 = vshll.u32 %v10943, 16
        %v11179 = vrot.slane %v11177, 5
        %v11180 = vsel %vm1444, %v11175, %v11179
        %v11182 = vshrl.u32 %v10944, 16
        %v11184 = vrot.slane %v11182, 4
        %v11185 = vshll.u32 %v10944, 16
        %v11187 = vrot.slane %v11185, 5
        %v11188 = vor.u32 %v11184, %v11187
        %v11189 = vrot.slane %v11188, 4
        %v11191 = vshll.u32 %v10945, 16
        %v11193 = vrot.slane %v11191, 5
        %v11194 = vsel %vm1444, %v11189, %v11193
        %v11195 = vshrl.u32 %v10945, 16
        %v11197 = vrot.slane %v11195, 4
        %v11198 = vor.u32 %v11197, %v11193
        %v11199 = vrot.slane %v11198, 4
        %v11201 = vshll.u32 %v10946, 16
        %v11203 = vrot.slane %v11201, 5
        %v11204 = vsel %vm1444, %v11199, %v11203
        %v11206 = vshrl.u32 %v10947, 16
        %v11208 = vrot.slane %v11206, 4
        %v11209 = vshll.u32 %v10947, 16
        %v11211 = vrot.slane %v11209, 5
        %v11212 = vor.u32 %v11208, %v11211
        %v11213 = vrot.slane %v11212, 4
        %v11215 = vshll.u32 %v10948, 16
        %v11217 = vrot.slane %v11215, 5
        %v11218 = vsel %vm1444, %v11213, %v11217
        %v11219 = vshrl.u32 %v10948, 16
        %v11221 = vrot.slane %v11219, 4
        %v11222 = vor.u32 %v11221, %v11217
        %v11223 = vrot.slane %v11222, 4
        %v11225 = vshll.u32 %v10949, 16
        %v11227 = vrot.slane %v11225, 5
        %v11228 = vsel %vm1444, %v11223, %v11227
        %v11230 = vshrl.u32 %v10950, 16
        %v11232 = vrot.slane %v11230, 4
        %v11233 = vshll.u32 %v10950, 16
        %v11235 = vrot.slane %v11233, 5
        %v11236 = vor.u32 %v11232, %v11235
        %v11237 = vrot.slane %v11236, 4
        %v11239 = vshll.u32 %v10951, 16
        %v11241 = vrot.slane %v11239, 5
        %v11242 = vsel %vm1444, %v11237, %v11241
        %v11243 = vshrl.u32 %v10951, 16
        %v11245 = vrot.slane %v11243, 4
        %v11246 = vor.u32 %v11245, %v11241
        %v11247 = vrot.slane %v11246, 4
        %v11249 = vshll.u32 %v10952, 16
        %v11251 = vrot.slane %v11249, 5
        %v11252 = vsel %vm1444, %v11247, %v11251
        %v11254 = vshrl.u32 %v10953, 16
        %v11256 = vrot.slane %v11254, 4
        %v11257 = vshll.u32 %v10953, 16
        %v11259 = vrot.slane %v11257, 5
        %v11260 = vor.u32 %v11256, %v11259
        %v11261 = vrot.slane %v11260, 4
        %v11263 = vshll.u32 %v10954, 16
        %v11265 = vrot.slane %v11263, 5
        %v11266 = vsel %vm1444, %v11261, %v11265
        %v11267 = vshrl.u32 %v10954, 16
        %v11269 = vrot.slane %v11267, 4
        %v11270 = vor.u32 %v11269, %v11265
        %v11271 = vrot.slane %v11270, 4
        %v11273 = vshll.u32 %v10955, 16
        %v11275 = vrot.slane %v11273, 5
        %v11276 = vsel %vm1444, %v11271, %v11275
        %v11278 = vshrl.u32 %v10956, 16
        %v11280 = vrot.slane %v11278, 4
        %v11281 = vshll.u32 %v10956, 16
        %v11283 = vrot.slane %v11281, 5
        %v11284 = vor.u32 %v11280, %v11283
        %v11285 = vrot.slane %v11284, 4
        %v11287 = vshll.u32 %v10957, 16
        %v11289 = vrot.slane %v11287, 5
        %v11290 = vsel %vm1444, %v11285, %v11289
        %v11291 = vshrl.u32 %v10957, 16
        %v11293 = vrot.slane %v11291, 4
        %v11294 = vor.u32 %v11293, %v11289
        %v11295 = vrot.slane %v11294, 4
        %v11297 = vshll.u32 %v10958, 16
        %v11299 = vrot.slane %v11297, 5
        %v11300 = vsel %vm1444, %v11295, %v11299
        %v11302 = vshrl.u32 %v10959, 16
        %v11304 = vrot.slane %v11302, 4
        %v11305 = vshll.u32 %v10959, 16
        %v11307 = vrot.slane %v11305, 5
        %v11308 = vor.u32 %v11304, %v11307
        %v11309 = vrot.slane %v11308, 4
        %v11311 = vshll.u32 %v10960, 16
        %v11313 = vrot.slane %v11311, 5
        %v11314 = vsel %vm1444, %v11309, %v11313
        %v11315 = vshrl.u32 %v10960, 16
        %v11317 = vrot.slane %v11315, 4
        %v11318 = vor.u32 %v11317, %v11313
        %v11319 = vrot.slane %v11318, 4
        %v11321 = vshll.u32 %v10961, 16
        %v11323 = vrot.slane %v11321, 5
        %v11324 = vsel %vm1444, %v11319, %v11323
        %v11326 = vshrl.u32 %v10962, 16
        %v11328 = vrot.slane %v11326, 4
        %v11329 = vshll.u32 %v10962, 16
        %v11331 = vrot.slane %v11329, 5
        %v11332 = vor.u32 %v11328, %v11331
        %v11333 = vrot.slane %v11332, 4
        %v11335 = vshll.u32 %v10963, 16
        %v11337 = vrot.slane %v11335, 5
        %v11338 = vsel %vm1444, %v11333, %v11337
        %v11339 = vshrl.u32 %v10963, 16
        %v11341 = vrot.slane %v11339, 4
        %v11342 = vor.u32 %v11341, %v11337
        %v11343 = vrot.slane %v11342, 4
        %v11345 = vshll.u32 %v10964, 16
        %v11347 = vrot.slane %v11345, 5
        %v11348 = vsel %vm1444, %v11343, %v11347
        %s11349 = scalar_lea.vmem [#allocation4], 512
        %v11350 = vld [vmem:[%s11349] sm:$0xf]
        %v11351 = vld [vmem:[%s11349 + $0x4] sm:$0xf]
        %v11352 = vld [vmem:[%s11349 + $0x8] sm:$0xf]
        %v11353 = vld [vmem:[%s11349 + $0xc] sm:$0xf]
        %v11354 = vld [vmem:[%s11349 + $0x10] sm:$0xf]
        %v11355 = vld [vmem:[%s11349 + $0x14] sm:$0xf]
        %v11356 = vld [vmem:[%s11349 + $0x18] sm:$0xf]
        %v11357 = vld [vmem:[%s11349 + $0x1c] sm:$0xf]
        %v11358 = vld [vmem:[%s11349 + $0x20] sm:$0xf]
        %v11359 = vld [vmem:[%s11349 + $0x24] sm:$0xf]
        %v11360 = vld [vmem:[%s11349 + $0x28] sm:$0xf]
        %v11361 = vld [vmem:[%s11349 + $0x2c] sm:$0xf]
        %v11362 = vld [vmem:[%s11349 + $0x30] sm:$0xf]
        %v11363 = vld [vmem:[%s11349 + $0x34] sm:$0xf]
        %v11364 = vld [vmem:[%s11349 + $0x38] sm:$0xf]
        %v11365 = vld [vmem:[%s11349 + $0x3c] sm:$0xf]
        %v11366 = vunpack.c.l.b16 %v10978
        %v11367 = vunpack.c.l.b16 %v10988
        %v11368 = vunpack.c.l.b16 %v11002
        %v11369 = vunpack.c.l.b16 %v11012
        %v11370 = vunpack.c.l.b16 %v11026
        %v11371 = vunpack.c.l.b16 %v11036
        %v11372 = vunpack.c.l.b16 %v11050
        %v11373 = vunpack.c.l.b16 %v11060
        %v11374 = vunpack.c.l.b16 %v11074
        %v11375 = vunpack.c.l.b16 %v11084
        %v11376 = vunpack.c.l.b16 %v11098
        %v11377 = vunpack.c.l.b16 %v11108
        %v11378 = vunpack.c.l.b16 %v11122
        %v11379 = vunpack.c.l.b16 %v11132
        %v11380 = vunpack.c.l.b16 %v11146
        %v11381 = vunpack.c.l.b16 %v11156
        %v11382 = vunpack.c.l.b16 %v11170
        %v11383 = vunpack.c.l.b16 %v11180
        %v11384 = vunpack.c.l.b16 %v11194
        %v11385 = vunpack.c.l.b16 %v11204
        %v11386 = vunpack.c.l.b16 %v11218
        %v11387 = vunpack.c.l.b16 %v11228
        %v11388 = vunpack.c.l.b16 %v11242
        %v11389 = vunpack.c.l.b16 %v11252
        %v11390 = vunpack.c.l.b16 %v11266
        %v11391 = vunpack.c.l.b16 %v11276
        %v11392 = vunpack.c.l.b16 %v11290
        %v11393 = vunpack.c.l.b16 %v11300
        %v11394 = vunpack.c.l.b16 %v11314
        %v11395 = vunpack.c.l.b16 %v11324
        %v11396 = vunpack.c.l.b16 %v11338
        %v11397 = vunpack.c.l.b16 %v11348
        %v11398 = vpack.c.b16 %v11367, %v11366
        %v11399 = vpack.c.b16 %v11369, %v11368
        %v11400 = vpack.c.b16 %v11371, %v11370
        %v11401 = vpack.c.b16 %v11373, %v11372
        %v11402 = vpack.c.b16 %v11375, %v11374
        %v11403 = vpack.c.b16 %v11377, %v11376
        %v11404 = vpack.c.b16 %v11379, %v11378
        %v11405 = vpack.c.b16 %v11381, %v11380
        %v11406 = vpack.c.b16 %v11383, %v11382
        %v11407 = vpack.c.b16 %v11385, %v11384
        %v11408 = vpack.c.b16 %v11387, %v11386
        %v11409 = vpack.c.b16 %v11389, %v11388
        %v11410 = vpack.c.b16 %v11391, %v11390
        %v11411 = vpack.c.b16 %v11393, %v11392
        %v11412 = vpack.c.b16 %v11395, %v11394
        %v11413 = vpack.c.b16 %v11397, %v11396
        %v11446 = vunpack.c.l.b16 %v11350
        %v11447 = vunpack.c.l.b16 %v11351
        %v11448 = vunpack.c.l.b16 %v11352
        %v11449 = vunpack.c.l.b16 %v11353
        %v11450 = vunpack.c.l.b16 %v11354
        %v11451 = vunpack.c.l.b16 %v11355
        %v11452 = vunpack.c.l.b16 %v11356
        %v11453 = vunpack.c.l.b16 %v11357
        %v11454 = vunpack.c.l.b16 %v11358
        %v11455 = vunpack.c.l.b16 %v11359
        %v11456 = vunpack.c.l.b16 %v11360
        %v11457 = vunpack.c.l.b16 %v11361
        %v11458 = vunpack.c.l.b16 %v11362
        %v11459 = vunpack.c.l.b16 %v11363
        %v11460 = vunpack.c.l.b16 %v11364
        %v11461 = vunpack.c.l.b16 %v11365
        %v11462 = vpack.c.b16 %v11447, %v11446
        %v11463 = vpack.c.b16 %v11449, %v11448
        %v11464 = vpack.c.b16 %v11451, %v11450
        %v11465 = vpack.c.b16 %v11453, %v11452
        %v11466 = vpack.c.b16 %v11455, %v11454
        %v11467 = vpack.c.b16 %v11457, %v11456
        %v11468 = vpack.c.b16 %v11459, %v11458
        %v11469 = vpack.c.b16 %v11461, %v11460
        %11478 = vmatprep.subr.bf16.mxu0 0
        %11479 = vmatpush1.bf16.msra.mxu0 %v11462
        %11480 = vmatprep.subr.bf16.mxu0 0
        %11481 = vmatpush1.bf16.msra.mxu0 %v11463
        %11482 = vmatprep.subr.bf16.mxu0 0
        %11483 = vmatpush1.bf16.msra.mxu0 %v11464
        %11484 = vmatprep.subr.bf16.mxu0 0
        %11485 = vmatpush1.bf16.msra.mxu0 %v11465
        %11486 = vmatprep.subr.bf16.mxu0 0
        %11487 = vmatpush1.bf16.msra.mxu0 %v11466
        %11488 = vmatprep.subr.bf16.mxu0 0
        %11489 = vmatpush1.bf16.msra.mxu0 %v11467
        %11490 = vmatprep.subr.bf16.mxu0 0
        %11491 = vmatpush1.bf16.msra.mxu0 %v11468
        %11492 = vmatprep.subr.bf16.mxu0 0
        %11493 = vmatpush1.bf16.msra.mxu0 %v11469
        %11494 = vmatprep.subr.bf16.mxu0 0
        %11495 = vmatpush1.bf16.msra.mxu0 0
        %11496 = vmatprep.subr.bf16.mxu0 0
        %11497 = vmatpush1.bf16.msra.mxu0 0
        %11498 = vmatprep.subr.bf16.mxu0 0
        %11499 = vmatpush1.bf16.msra.mxu0 0
        %11500 = vmatprep.subr.bf16.mxu0 0
        %11501 = vmatpush1.bf16.msra.mxu0 0
        %11502 = vmatprep.subr.bf16.mxu0 0
        %11503 = vmatpush1.bf16.msra.mxu0 0
        %11504 = vmatprep.subr.bf16.mxu0 0
        %11505 = vmatpush1.bf16.msra.mxu0 0
        %11506 = vmatprep.subr.bf16.mxu0 0
        %11507 = vmatpush1.bf16.msra.mxu0 0
        %11508 = vmatprep.subr.bf16.mxu0 0
        %11509 = vmatpush1.bf16.msra.mxu0 0
        %11510 = vmatprep.mubr.bf16.mxu0 0
        %11511 = vmatmul.mubr.bf16.gmra.mrb[0].mxu0 %v11398
        %v11512 = vpop.f32.mrb[0].mxu0
        %v11513 = vadd.f32 0.0, %v11512
        %v11514 = vpop.f32.mrb[0].mxu0
        %v11515 = vpop.f32.mrb[0].mxu0
        %v11516 = vadd.f32 0.0, %v11515
        %v11517 = vpop.f32.mrb[0].mxu0
        %11518 = vmatprep.mubr.bf16.mxu0 0
        %11519 = vmatmul.mubr.bf16.gmra.mrb[0].mxu0 %v11399
        %v11520 = vpop.f32.mrb[0].mxu0
        %v11521 = vadd.f32 0.0, %v11520
        %v11522 = vpop.f32.mrb[0].mxu0
        %v11523 = vpop.f32.mrb[0].mxu0
        %v11524 = vadd.f32 0.0, %v11523
        %v11525 = vpop.f32.mrb[0].mxu0
        %11526 = vmatprep.mubr.bf16.mxu0 0
        %11527 = vmatmul.mubr.bf16.gmra.mrb[0].mxu0 %v11400
        %v11528 = vpop.f32.mrb[0].mxu0
        %v11529 = vadd.f32 0.0, %v11528
        %v11530 = vpop.f32.mrb[0].mxu0
        %v11531 = vpop.f32.mrb[0].mxu0
        %v11532 = vadd.f32 0.0, %v11531
        %v11533 = vpop.f32.mrb[0].mxu0
        %11534 = vmatprep.mubr.bf16.mxu0 0
        %11535 = vmatmul.mubr.bf16.gmra.mrb[0].mxu0 %v11401
        %v11536 = vpop.f32.mrb[0].mxu0
        %v11537 = vadd.f32 0.0, %v11536
        %v11538 = vpop.f32.mrb[0].mxu0
        %v11539 = vpop.f32.mrb[0].mxu0
        %v11540 = vadd.f32 0.0, %v11539
        %v11541 = vpop.f32.mrb[0].mxu0
        %11542 = vmatprep.mubr.bf16.mxu0 0
        %11543 = vmatmul.mubr.bf16.gmra.mrb[0].mxu0 %v11402
        %v11544 = vpop.f32.mrb[0].mxu0
        %v11545 = vadd.f32 0.0, %v11544
        %v11546 = vpop.f32.mrb[0].mxu0
        %v11547 = vpop.f32.mrb[0].mxu0
        %v11548 = vadd.f32 0.0, %v11547
        %v11549 = vpop.f32.mrb[0].mxu0
        %11550 = vmatprep.mubr.bf16.mxu0 0
        %11551 = vmatmul.mubr.bf16.gmra.mrb[0].mxu0 %v11403
        %v11552 = vpop.f32.mrb[0].mxu0
        %v11553 = vadd.f32 0.0, %v11552
        %v11554 = vpop.f32.mrb[0].mxu0
        %v11555 = vpop.f32.mrb[0].mxu0
        %v11556 = vadd.f32 0.0, %v11555
        %v11557 = vpop.f32.mrb[0].mxu0
        %11558 = vmatprep.mubr.bf16.mxu0 0
        %11559 = vmatmul.mubr.bf16.gmra.mrb[0].mxu0 %v11404
        %v11560 = vpop.f32.mrb[0].mxu0
        %v11561 = vadd.f32 0.0, %v11560
        %v11562 = vpop.f32.mrb[0].mxu0
        %v11563 = vpop.f32.mrb[0].mxu0
        %v11564 = vadd.f32 0.0, %v11563
        %v11565 = vpop.f32.mrb[0].mxu0
        %11566 = vmatprep.mubr.bf16.mxu0 0
        %11567 = vmatmul.mubr.bf16.gmra.mrb[0].mxu0 %v11405
        %v11568 = vpop.f32.mrb[0].mxu0
        %v11569 = vadd.f32 0.0, %v11568
        %v11570 = vpop.f32.mrb[0].mxu0
        %v11571 = vpop.f32.mrb[0].mxu0
        %v11572 = vadd.f32 0.0, %v11571
        %v11573 = vpop.f32.mrb[0].mxu0
        %11574 = vmatprep.mubr.bf16.mxu0 0
        %11575 = vmatmul.mubr.bf16.gmra.mrb[0].mxu0 %v11406
        %v11576 = vpop.f32.mrb[0].mxu0
        %v11577 = vadd.f32 0.0, %v11576
        %v11578 = vpop.f32.mrb[0].mxu0
        %v11579 = vpop.f32.mrb[0].mxu0
        %v11580 = vadd.f32 0.0, %v11579
        %v11581 = vpop.f32.mrb[0].mxu0
        %11582 = vmatprep.mubr.bf16.mxu0 0
        %11583 = vmatmul.mubr.bf16.gmra.mrb[0].mxu0 %v11407
        %v11584 = vpop.f32.mrb[0].mxu0
        %v11585 = vadd.f32 0.0, %v11584
        %v11586 = vpop.f32.mrb[0].mxu0
        %v11587 = vpop.f32.mrb[0].mxu0
        %v11588 = vadd.f32 0.0, %v11587
        %v11589 = vpop.f32.mrb[0].mxu0
        %11590 = vmatprep.mubr.bf16.mxu0 0
        %11591 = vmatmul.mubr.bf16.gmra.mrb[0].mxu0 %v11408
        %v11592 = vpop.f32.mrb[0].mxu0
        %v11593 = vadd.f32 0.0, %v11592
        %v11594 = vpop.f32.mrb[0].mxu0
        %v11595 = vpop.f32.mrb[0].mxu0
        %v11596 = vadd.f32 0.0, %v11595
        %v11597 = vpop.f32.mrb[0].mxu0
        %11598 = vmatprep.mubr.bf16.mxu0 0
        %11599 = vmatmul.mubr.bf16.gmra.mrb[0].mxu0 %v11409
        %v11600 = vpop.f32.mrb[0].mxu0
        %v11601 = vadd.f32 0.0, %v11600
        %v11602 = vpop.f32.mrb[0].mxu0
        %v11603 = vpop.f32.mrb[0].mxu0
        %v11604 = vadd.f32 0.0, %v11603
        %v11605 = vpop.f32.mrb[0].mxu0
        %11606 = vmatprep.mubr.bf16.mxu0 0
        %11607 = vmatmul.mubr.bf16.gmra.mrb[0].mxu0 %v11410
        %v11608 = vpop.f32.mrb[0].mxu0
        %v11609 = vadd.f32 0.0, %v11608
        %v11610 = vpop.f32.mrb[0].mxu0
        %v11611 = vpop.f32.mrb[0].mxu0
        %v11612 = vadd.f32 0.0, %v11611
        %v11613 = vpop.f32.mrb[0].mxu0
        %11614 = vmatprep.mubr.bf16.mxu0 0
        %11615 = vmatmul.mubr.bf16.gmra.mrb[0].mxu0 %v11411
        %v11616 = vpop.f32.mrb[0].mxu0
        %v11617 = vadd.f32 0.0, %v11616
        %v11618 = vpop.f32.mrb[0].mxu0
        %v11619 = vpop.f32.mrb[0].mxu0
        %v11620 = vadd.f32 0.0, %v11619
        %v11621 = vpop.f32.mrb[0].mxu0
        %11622 = vmatprep.mubr.bf16.mxu0 0
        %11623 = vmatmul.mubr.bf16.gmra.mrb[0].mxu0 %v11412
        %v11624 = vpop.f32.mrb[0].mxu0
        %v11625 = vadd.f32 0.0, %v11624
        %v11626 = vpop.f32.mrb[0].mxu0
        %v11627 = vpop.f32.mrb[0].mxu0
        %v11628 = vadd.f32 0.0, %v11627
        %v11629 = vpop.f32.mrb[0].mxu0
        %11630 = vmatprep.mubr.bf16.mxu0 0
        %11631 = vmatmul.mubr.bf16.gmra.mrb[0].mxu0 %v11413
        %v11632 = vpop.f32.mrb[0].mxu0
        %v11633 = vadd.f32 0.0, %v11632
        %v11634 = vpop.f32.mrb[0].mxu0
        %v11635 = vpop.f32.mrb[0].mxu0
        %v11636 = vadd.f32 0.0, %v11635
        %v11637 = vpop.f32.mrb[0].mxu0
        %11638 = vdwg.mxu0
        %v11639 = vadd.f32 %v10885, %v11513
        %v11640 = vadd.f32 %v10886, %v11516
        %v11641 = vadd.f32 %v10887, %v11521
        %v11642 = vadd.f32 %v10888, %v11524
        %v11643 = vadd.f32 %v10889, %v11529
        %v11644 = vadd.f32 %v10890, %v11532
        %v11645 = vadd.f32 %v10891, %v11537
        %v11646 = vadd.f32 %v10892, %v11540
        %v11647 = vadd.f32 %v10893, %v11545
        %v11648 = vadd.f32 %v10894, %v11548
        %v11649 = vadd.f32 %v10895, %v11553
        %v11650 = vadd.f32 %v10896, %v11556
        %v11651 = vadd.f32 %v10897, %v11561
        %v11652 = vadd.f32 %v10898, %v11564
        %v11653 = vadd.f32 %v10899, %v11569
        %v11654 = vadd.f32 %v10900, %v11572
        %v11655 = vadd.f32 %v10901, %v11577
        %v11656 = vadd.f32 %v10902, %v11580
        %v11657 = vadd.f32 %v10903, %v11585
        %v11658 = vadd.f32 %v10904, %v11588
        %v11659 = vadd.f32 %v10905, %v11593
        %v11660 = vadd.f32 %v10906, %v11596
        %v11661 = vadd.f32 %v10907, %v11601
        %v11662 = vadd.f32 %v10908, %v11604
        %v11663 = vadd.f32 %v10909, %v11609
        %v11664 = vadd.f32 %v10910, %v11612
        %v11665 = vadd.f32 %v10911, %v11617
        %v11666 = vadd.f32 %v10912, %v11620
        %v11667 = vadd.f32 %v10913, %v11625
        %v11668 = vadd.f32 %v10914, %v11628
        %v11669 = vadd.f32 %v10915, %v11633
        %v11670 = vadd.f32 %v10916, %v11636
        %v11671 = vlaneseq
        %v11672 = vshrl.u32 %v11671, 7
        %v11673 = vsub.s32 2, %v11672
        %v11674 = vrot.slane %v434, %v11673
        %v11675 = vmul.f32 %v11639, %v11674
        %v11676 = vmul.f32 %v11640, %v11674
        %v11677 = vmul.f32 %v11641, %v11674
        %v11678 = vmul.f32 %v11642, %v11674
        %v11679 = vmul.f32 %v11643, %v11674
        %v11680 = vmul.f32 %v11644, %v11674
        %v11681 = vmul.f32 %v11645, %v11674
        %v11682 = vmul.f32 %v11646, %v11674
        %v11683 = vmul.f32 %v11647, %v11674
        %v11684 = vmul.f32 %v11648, %v11674
        %v11685 = vmul.f32 %v11649, %v11674
        %v11686 = vmul.f32 %v11650, %v11674
        %v11687 = vmul.f32 %v11651, %v11674
        %v11688 = vmul.f32 %v11652, %v11674
        %v11689 = vmul.f32 %v11653, %v11674
        %v11690 = vmul.f32 %v11654, %v11674
        %v11691 = vmul.f32 %v11655, %v11674
        %v11692 = vmul.f32 %v11656, %v11674
        %v11693 = vmul.f32 %v11657, %v11674
        %v11694 = vmul.f32 %v11658, %v11674
        %v11695 = vmul.f32 %v11659, %v11674
        %v11696 = vmul.f32 %v11660, %v11674
        %v11697 = vmul.f32 %v11661, %v11674
        %v11698 = vmul.f32 %v11662, %v11674
        %v11699 = vmul.f32 %v11663, %v11674
        %v11700 = vmul.f32 %v11664, %v11674
        %v11701 = vmul.f32 %v11665, %v11674
        %v11702 = vmul.f32 %v11666, %v11674
        %v11703 = vmul.f32 %v11667, %v11674
        %v11704 = vmul.f32 %v11668, %v11674
        %v11705 = vmul.f32 %v11669, %v11674
        %v11706 = vmul.f32 %v11670, %v11674
        %v11707 = vlaneseq
        %v11708 = vshrl.u32 %v11707, 7
        %v11709 = vsub.s32 3, %v11708
        %v11710 = vrot.slane %v434, %v11709
        %v11711 = vadd.f32 %v11675, %v11710
        %v11712 = vadd.f32 %v11676, %v11710
        %v11713 = vadd.f32 %v11677, %v11710
        %v11714 = vadd.f32 %v11678, %v11710
        %v11715 = vadd.f32 %v11679, %v11710
        %v11716 = vadd.f32 %v11680, %v11710
        %v11717 = vadd.f32 %v11681, %v11710
        %v11718 = vadd.f32 %v11682, %v11710
        %v11719 = vadd.f32 %v11683, %v11710
        %v11720 = vadd.f32 %v11684, %v11710
        %v11721 = vadd.f32 %v11685, %v11710
        %v11722 = vadd.f32 %v11686, %v11710
        %v11723 = vadd.f32 %v11687, %v11710
        %v11724 = vadd.f32 %v11688, %v11710
        %v11725 = vadd.f32 %v11689, %v11710
        %v11726 = vadd.f32 %v11690, %v11710
        %v11727 = vadd.f32 %v11691, %v11710
        %v11728 = vadd.f32 %v11692, %v11710
        %v11729 = vadd.f32 %v11693, %v11710
        %v11730 = vadd.f32 %v11694, %v11710
        %v11731 = vadd.f32 %v11695, %v11710
        %v11732 = vadd.f32 %v11696, %v11710
        %v11733 = vadd.f32 %v11697, %v11710
        %v11734 = vadd.f32 %v11698, %v11710
        %v11735 = vadd.f32 %v11699, %v11710
        %v11736 = vadd.f32 %v11700, %v11710
        %v11737 = vadd.f32 %v11701, %v11710
        %v11738 = vadd.f32 %v11702, %v11710
        %v11739 = vadd.f32 %v11703, %v11710
        %v11740 = vadd.f32 %v11704, %v11710
        %v11741 = vadd.f32 %v11705, %v11710
        %v11742 = vadd.f32 %v11706, %v11710
        %v11743 = vadd.f32 %v11711, %v5925
        %v11744 = vadd.f32 %v11712, %v5926
        %v11745 = vadd.f32 %v11713, %v5927
        %v11746 = vadd.f32 %v11714, %v5928
        %v11747 = vadd.f32 %v11715, %v5929
        %v11748 = vadd.f32 %v11716, %v5930
        %v11749 = vadd.f32 %v11717, %v5931
        %v11750 = vadd.f32 %v11718, %v5932
        %v11751 = vadd.f32 %v11719, %v5933
        %v11752 = vadd.f32 %v11720, %v5934
        %v11753 = vadd.f32 %v11721, %v5935
        %v11754 = vadd.f32 %v11722, %v5936
        %v11755 = vadd.f32 %v11723, %v5937
        %v11756 = vadd.f32 %v11724, %v5938
        %v11757 = vadd.f32 %v11725, %v5939
        %v11758 = vadd.f32 %v11726, %v5940
        %v11759 = vadd.f32 %v11727, %v5941
        %v11760 = vadd.f32 %v11728, %v5942
        %v11761 = vadd.f32 %v11729, %v5943
        %v11762 = vadd.f32 %v11730, %v5944
        %v11763 = vadd.f32 %v11731, %v5945
        %v11764 = vadd.f32 %v11732, %v5946
        %v11765 = vadd.f32 %v11733, %v5947
        %v11766 = vadd.f32 %v11734, %v5948
        %v11767 = vadd.f32 %v11735, %v5949
        %v11768 = vadd.f32 %v11736, %v5950
        %v11769 = vadd.f32 %v11737, %v5951
        %v11770 = vadd.f32 %v11738, %v5952
        %v11771 = vadd.f32 %v11739, %v5953
        %v11772 = vadd.f32 %v11740, %v5954
        %v11773 = vadd.f32 %v11741, %v5955
        %v11774 = vadd.f32 %v11742, %v5956
        %v11775 = vmax.f32 %v11743, 0.0
        %v11776 = vmax.f32 %v11744, 0.0
        %v11777 = vmax.f32 %v11745, 0.0
        %v11778 = vmax.f32 %v11746, 0.0
        %v11779 = vmax.f32 %v11747, 0.0
        %v11780 = vmax.f32 %v11748, 0.0
        %v11781 = vmax.f32 %v11749, 0.0
        %v11782 = vmax.f32 %v11750, 0.0
        %v11783 = vmax.f32 %v11751, 0.0
        %v11784 = vmax.f32 %v11752, 0.0
        %v11785 = vmax.f32 %v11753, 0.0
        %v11786 = vmax.f32 %v11754, 0.0
        %v11787 = vmax.f32 %v11755, 0.0
        %v11788 = vmax.f32 %v11756, 0.0
        %v11789 = vmax.f32 %v11757, 0.0
        %v11790 = vmax.f32 %v11758, 0.0
        %v11791 = vmax.f32 %v11759, 0.0
        %v11792 = vmax.f32 %v11760, 0.0
        %v11793 = vmax.f32 %v11761, 0.0
        %v11794 = vmax.f32 %v11762, 0.0
        %v11795 = vmax.f32 %v11763, 0.0
        %v11796 = vmax.f32 %v11764, 0.0
        %v11797 = vmax.f32 %v11765, 0.0
        %v11798 = vmax.f32 %v11766, 0.0
        %v11799 = vmax.f32 %v11767, 0.0
        %v11800 = vmax.f32 %v11768, 0.0
        %v11801 = vmax.f32 %v11769, 0.0
        %v11802 = vmax.f32 %v11770, 0.0
        %v11803 = vmax.f32 %v11771, 0.0
        %v11804 = vmax.f32 %v11772, 0.0
        %v11805 = vmax.f32 %v11773, 0.0
        %v11806 = vmax.f32 %v11774, 0.0
        %11807 = vst [vmem:[%s232] sm:$0xff] %v11775
        %11808 = vst [vmem:[%s232 + $0x8] sm:$0xff] %v11776
        %11809 = vst [vmem:[%s232 + $0x10] sm:$0xff] %v11777
        %11810 = vst [vmem:[%s232 + $0x18] sm:$0xff] %v11778
        %11811 = vst [vmem:[%s232 + $0x20] sm:$0xff] %v11779
        %11812 = vst [vmem:[%s232 + $0x28] sm:$0xff] %v11780
        %11813 = vst [vmem:[%s232 + $0x30] sm:$0xff] %v11781
        %11814 = vst [vmem:[%s232 + $0x38] sm:$0xff] %v11782
        %11815 = vst [vmem:[%s232 + $0x40] sm:$0xff] %v11783
        %11816 = vst [vmem:[%s232 + $0x48] sm:$0xff] %v11784
        %11817 = vst [vmem:[%s232 + $0x50] sm:$0xff] %v11785
        %11818 = vst [vmem:[%s232 + $0x58] sm:$0xff] %v11786
        %11819 = vst [vmem:[%s232 + $0x60] sm:$0xff] %v11787
        %11820 = vst [vmem:[%s232 + $0x68] sm:$0xff] %v11788
        %11821 = vst [vmem:[%s232 + $0x70] sm:$0xff] %v11789
        %11822 = vst [vmem:[%s232 + $0x78] sm:$0xff] %v11790
        %11823 = vst [vmem:[%s232 + $0x80] sm:$0xff] %v11791
        %11824 = vst [vmem:[%s232 + $0x88] sm:$0xff] %v11792
        %11825 = vst [vmem:[%s232 + $0x90] sm:$0xff] %v11793
        %11826 = vst [vmem:[%s232 + $0x98] sm:$0xff] %v11794
        %11827 = vst [vmem:[%s232 + $0xa0] sm:$0xff] %v11795
        %11828 = vst [vmem:[%s232 + $0xa8] sm:$0xff] %v11796
        %11829 = vst [vmem:[%s232 + $0xb0] sm:$0xff] %v11797
        %11830 = vst [vmem:[%s232 + $0xb8] sm:$0xff] %v11798
        %11831 = vst [vmem:[%s232 + $0xc0] sm:$0xff] %v11799
        %11832 = vst [vmem:[%s232 + $0xc8] sm:$0xff] %v11800
        %11833 = vst [vmem:[%s232 + $0xd0] sm:$0xff] %v11801
        %11834 = vst [vmem:[%s232 + $0xd8] sm:$0xff] %v11802
        %11835 = vst [vmem:[%s232 + $0xe0] sm:$0xff] %v11803
        %11836 = vst [vmem:[%s232 + $0xe8] sm:$0xff] %v11804
        %11837 = vst [vmem:[%s232 + $0xf0] sm:$0xff] %v11805
        %11838 = vst [vmem:[%s232 + $0xf8] sm:$0xff] %v11806
        %s11839 = sand.u32 %s138, 1
        %s11840 = scalar_lea.sflag [#allocation6], %s11839
        %s11841 = sand.u32 %s138, 1
        %s11842 = smul.addr %s11841, 256
        %s11843 = scalar_lea.vmem [#allocation7], %s11842
        // Predicated region
        $region45: #{tpu_custom_call.1} parent=39 // pred_check
          %p11844 = pneg %p148
        $region46: #{tpu_custom_call.1} parent=39 // pred_check_branch
          %11846 = sbr.rel (%p11844) target = $region48
        $region47: #{tpu_custom_call.1} parent=39 // pred_region
          %s11848 = ssub.s32 4096, 4096
          %11849 = vsyncadd %s11840, %s11848
          %s11850 = smul.addr %s20, 32
          %s11851 = smul.addr %s11850, 128
          %s11852 = scalar_lea.hbm %s5, %s11851
          %s11853 = sshll.u32 %s11843, 4
          %s11854 = int_to_ptr.vmem [resolvable:$true] %s11853
          %11859 = dma.vmem_to_hbm [thread:$0]  %s11854, 4096, %s11852, %s11840, 128, 128, 8
        $region48: #{tpu_custom_call.1} parent=39 // pred_fallthru
          _
      $region40: #{tpu_custom_call.1} parent=5 // pred_fallthru
        _
      %p11860 = scmp.le.s32.totalorder 2, %s15
      // Predicated region
      $region49: #{tpu_custom_call.1} parent=5 // pred_check
        %p11861 = pneg %p11860
      $region50: #{tpu_custom_call.1} parent=5 // pred_check_branch
        %11863 = sbr.rel (%p11861) target = $region52
      $region51: #{tpu_custom_call.1} parent=5 // pred_region
        %s11864 = ssub.s32 %s15, 2
        // Predicated region
        $region53: #{tpu_custom_call.1} parent=51 // pred_check
          %p11865 = pneg %p154
        $region54: #{tpu_custom_call.1} parent=51 // pred_check_branch
          %11867 = sbr.rel (%p11865) target = $region56
        $region55: #{tpu_custom_call.1} parent=51 // pred_region
          %s11868 = sand.u32 %s139, 1
          %s11869 = scalar_lea.sflag [#allocation6], %s11868
          %s11870 = sand.u32 %s139, 1
          %s11871 = smul.addr %s11870, 256
          %s11872 = scalar_lea.vmem [#allocation7], %s11871
          %11873 = dma.done %s11869, 4096
        $region56: #{tpu_custom_call.1} parent=51 // pred_fallthru
          _
      $region52: #{tpu_custom_call.1} parent=5 // pred_fallthru
        _
    $region6: #{tpu_custom_call.1} parent=1 // loop_footer
      %s19 = sadd.s32 1, %s15
    $region7: #{tpu_custom_call.1} parent=1 // loop_footer_branch
      %14 = sbr.rel target = $region3
    $region8: #{tpu_custom_call.1} parent=1 // loop_exit
      _
    %11874 = vsyncpa [#allocation5], 1
    %s11875 = scalar_lea.sflag [#allocation5], 1
    %11876 = vsyncpa %s11875, 1
    %11877 = vsyncpa [#allocation6], 1
    %s11878 = scalar_lea.sflag [#allocation6], 1
    %11879 = vsyncpa %s11878, 1

</llo_original>
